<compile_context>
chip_gen: v7x
topology: tpu7x:2x2x1
jax: 0.10.0
libtpu: 0.0.40
codegen_flags: <defaults>
</compile_context>

<pallas_src>
import jax
import jax.numpy as jnp
from jax.experimental import pallas as pl
from jax.experimental.pallas import tpu as pltpu

VMEM_LIMIT = 32 * 1024 * 1024  # <= v7x 64 MiB physical VMEM; plenty of headroom


# ---------------------------------------------------------------------------
# Kernel 1: fused conv1 + ReLU + maxpool + conv2 + ReLU  (one grid step = one
# batch element; all intermediates stay in VMEM scratch)
# ---------------------------------------------------------------------------
def _conv_stack_kernel(p_ref, w1_ref, b1_ref, w2_ref, b2_ref, o_ref,
                       h1_ref, pool_ref):
    # p_ref    : (1, 16, 64, 12) bf16  conv1 im2col patches; dim1 = (ih%4)*4+(iw%4)
    #                                  phase, dim2 = (ih//4)*8+(iw//4), features (cin,kh,kw)
    # w1_ref   : (12, 20)  bf16        conv1 weight (cin*kh*kw, cout)
    # b1_ref   : (1, 20)   f32
    # w2_ref   : (16, 20, 40) bf16     conv2 weight per tap (kh*4+kw, cin, cout)
    # b2_ref   : (1, 40)   f32
    # o_ref    : (1, 6, 6, 40) f32     conv2 output (NHWC)
    # h1_ref   : (4, 4, 8, 8, 20) f32  conv1 out  [ih%4, iw%4, ih//4, iw//4, c]
    # pool_ref : (2, 2, 8, 8, 20) f32  pool out   [oh%2, ow%2, oh//2, ow//2, c]
    w1 = w1_ref[...]
    b1 = b1_ref[...]

    # ---- Conv1 (k=2, s=4) + ReLU: one small matmul per (ih%4, iw%4) phase ----
    for ihr in range(4):
        for iwr in range(4):
            lhs = p_ref[0, ihr * 4 + iwr]                           # (64, 12)
            h = jnp.dot(lhs, w1, preferred_element_type=jnp.float32)
            h = jnp.maximum(h + b1, 0.0)                            # (64, 20)
            h1_ref[ihr, iwr] = h.reshape(8, 8, 20)                  # layout-preserving

    # ---- MaxPool2d(k=3, s=2): 32x32 -> 15x15, stored in parity-phase form ----
    # pool[P, Q, A, B, :] = pooled output at (2A+P, 2B+Q).  Conv2 only reads
    # A, B <= 6; the unused pad row/col of the odd phases is zero-filled.
    for P in range(2):
        for Q in range(2):
            nA = 8 if P == 0 else 7
            nB = 8 if Q == 0 else 7
            acc = None
            for kh in range(3):
                r = 2 * P + kh                 # conv1 row index = 4*(A+dh) + ihr
                ihr, dh = r % 4, r // 4
                for kw in range(3):
                    s = 2 * Q + kw
                    iwr, dw = s % 4, s // 4
                    tap = h1_ref[ihr, iwr, dh:dh + nA, dw:dw + nB, :]
                    acc = tap if acc is None else jnp.maximum(acc, tap)
            if nA < 8 or nB < 8:
                pool_ref[P, Q] = jnp.zeros((8, 8, 20), jnp.float32)
            pool_ref[P, Q, 0:nA, 0:nB, :] = acc

    # ---- Conv2 (k=4, s=2) + ReLU: 15x15x20 -> 6x6x40 -------------------------
    # Tap (kh, kw): phase (P, Q) = (kh%2, kw%2), window offset (dA, dB) = (kh//2, kw//2)
    # out[oh, ow, :] += pool_phase[P, Q][oh+dA, ow+dB, :] @ w2[tap]
    acc2 = jnp.zeros((6, 6, 40), jnp.float32)
    for kh in range(4):
        P, dA = kh % 2, kh // 2
        for kw in range(4):
            Q, dB = kw % 2, kw // 2
            lhs = pool_ref[P, Q].reshape(64, 20).astype(jnp.bfloat16)
            y = jnp.dot(lhs, w2_ref[kh * 4 + kw],
                        preferred_element_type=jnp.float32)          # (64, 40)
            y = y.reshape(8, 8, 40)
            acc2 = acc2 + y[dA:dA + 6, dB:dB + 6, :]
    o_ref[0] = jnp.maximum(acc2 + b2_ref[...], 0.0)


def conv_stack(patches, w1, b1, w2, b2):
    B = patches.shape[0]
    return pl.pallas_call(
        _conv_stack_kernel,
        out_shape=jax.ShapeDtypeStruct((B, 6, 6, 40), jnp.float32),
        grid=(B,),
        in_specs=[
            pl.BlockSpec((1, 16, 64, 12), lambda b: (b, 0, 0, 0)),
            pl.BlockSpec((12, 20), lambda b: (0, 0)),
            pl.BlockSpec((1, 20), lambda b: (0, 0)),
            pl.BlockSpec((16, 20, 40), lambda b: (0, 0, 0)),
            pl.BlockSpec((1, 40), lambda b: (0, 0)),
        ],
        out_specs=pl.BlockSpec((1, 6, 6, 40), lambda b: (b, 0, 0, 0)),
        scratch_shapes=[
            pltpu.VMEM((4, 4, 8, 8, 20), jnp.float32),   # conv1 output
            pltpu.VMEM((2, 2, 8, 8, 20), jnp.float32),   # pooled output
        ],
        compiler_params=pltpu.CompilerParams(
            dimension_semantics=("parallel",),           # shards batch over v7x's 2 TCs
            vmem_limit_bytes=VMEM_LIMIT),
    )(patches, w1, b1, w2, b2)


# ---------------------------------------------------------------------------
# Kernel 2: fused classifier  Linear(1440,720)+ReLU -> Linear(720,360) -> Linear(360,18)
# (whole batch at once, each weight loaded from HBM exactly once, bf16 MXU)
# ---------------------------------------------------------------------------
def _classifier_kernel(x_ref, w1_ref, b1_ref, w2_ref, b2_ref, w3_ref, b3_ref, o_ref):
    h = jnp.dot(x_ref[...], w1_ref[...], preferred_element_type=jnp.float32) + b1_ref[...]
    h = jnp.maximum(h, 0.0).astype(jnp.bfloat16)
    h = jnp.dot(h, w2_ref[...], preferred_element_type=jnp.float32) + b2_ref[...]
    o_ref[...] = (jnp.dot(h.astype(jnp.bfloat16), w3_ref[...],
                          preferred_element_type=jnp.float32) + b3_ref[...])


def classifier_mlp(x, w1, b1, w2, b2, w3, b3):
    M = x.shape[0]

    def full(shape):
        return pl.BlockSpec(shape, lambda i, _n=len(shape): (0,) * _n)

    return pl.pallas_call(
        _classifier_kernel,
        out_shape=jax.ShapeDtypeStruct((M, 18), jnp.float32),
        grid=(1,),
        in_specs=[full(x.shape), full(w1.shape), full(b1.shape),
                  full(w2.shape), full(b2.shape), full(w3.shape), full(b3.shape)],
        out_specs=full((M, 18)),
        compiler_params=pltpu.CompilerParams(
            dimension_semantics=("arbitrary",),
            vmem_limit_bytes=VMEM_LIMIT),
    )(x, w1, b1, w2, b2, w3, b3)


# ---------------------------------------------------------------------------
# Forward pass: XLA does only cheap, non-replicating layout glue.
# ---------------------------------------------------------------------------
def multiclass_cnn_forward(x, p):
    B = x.shape[0]
    assert x.shape[1:] == (3, 128, 128), "spatial size fixed by Linear(in_features=1440)"

    # conv1 im2col (stride 4 > kernel 2 so this DOWN-samples: no replication).
    # Row order is phase-major (ih%4, iw%4, ih//4, iw//4); features (cin, kh, kw).
    xr = x.reshape(B, 3, 8, 4, 4, 8, 4, 4)[:, :, :, :, :2, :, :, :2]   # (B,3,8,4,2,8,4,2)
    patches = xr.transpose(0, 3, 6, 2, 5, 1, 4, 7).reshape(B, 16, 64, 12)
    patches = patches.astype(jnp.bfloat16)

    # fused conv1 + ReLU + maxpool + conv2 + ReLU (single Pallas kernel)
    h2 = conv_stack(patches, p["w1m"], p["b1"], p["w2t"], p["b2"])     # (B, 6, 6, 40)

    # classifier: the torch NCHW-flatten permutation is folded into fw1's rows
    # at init, so a plain reshape of the tiny (B,6,6,40) tensor is all we need.
    feat = h2.reshape(B, 1440).astype(jnp.bfloat16)
    return classifier_mlp(feat, p["fw1"], p["fb1"], p["fw2"], p["fb2"],
                          p["fw3"], p["fb3"])


# ---------------------------------------------------------------------------
# Deterministic parameter init (PyTorch-default-style uniform bounds)
# ---------------------------------------------------------------------------
def init_params(key):
    ks = jax.random.split(key, 10)

    def uni(k, shape, fan_in):
        bound = 1.0 / jnp.sqrt(jnp.float32(fan_in))
        return jax.random.uniform(k, shape, jnp.float32, -bound, bound)

    w1 = uni(ks[0], (20, 3, 2, 2), 3 * 2 * 2)       # torch Conv2d weight layout
    b1 = uni(ks[1], (20,), 3 * 2 * 2)
    w2 = uni(ks[2], (40, 20, 4, 4), 20 * 4 * 4)
    b2 = uni(ks[3], (40,), 20 * 4 * 4)
    fw1 = uni(ks[4], (720, 1440), 1440)             # torch Linear weight = (out, in)
    fb1 = uni(ks[5], (720,), 1440)
    fw2 = uni(ks[6], (360, 720), 720)
    fb2 = uni(ks[7], (360,), 720)
    fw3 = uni(ks[8], (18, 360), 360)
    fb3 = uni(ks[9], (18,), 360)

    # Fold the torch NCHW flatten (feature index c*36 + j) into fw1 so the
    # kernel-side feature order (j*40 + c, with j = oh*6 + ow) can be used.
    fw1_rows = fw1.T.reshape(40, 36, 720).transpose(1, 0, 2).reshape(1440, 720)

    return dict(
        w1m=w1.reshape(20, 12).T.astype(jnp.bfloat16),               # (12, 20)
        b1=b1.reshape(1, 20),
        w2t=w2.transpose(2, 3, 1, 0).reshape(16, 20, 40).astype(jnp.bfloat16),
        b2=b2.reshape(1, 40),
        fw1=fw1_rows.astype(jnp.bfloat16), fb1=fb1.reshape(1, 720),
        fw2=fw2.T.astype(jnp.bfloat16),    fb2=fb2.reshape(1, 360),
        fw3=fw3.T.astype(jnp.bfloat16),    fb3=fb3.reshape(1, 18),
    )


if __name__ == "__main__":
    key = jax.random.PRNGKey(0)
    pkey, xkey = jax.random.split(key)
    params = init_params(pkey)

    # Smallest spatial size compatible with Linear(in_features=1440): 128x128
    # NCHW input gives 32 -> 15 -> 6 spatial, 40*6*6 = 1440.
    x = jax.random.normal(xkey, (2, 3, 128, 128), jnp.float32)

    fwd = jax.jit(multiclass_cnn_forward)
    out = jax.block_until_ready(fwd(x, params))
    assert out.shape == (2, 18) and out.dtype == jnp.float32
    print("KERNEL_OK")
</pallas_src>

<mosaic_0001>
module attributes {stable_mosaic.version = 11 : i64} {
  func.func @_conv_stack_kernel(%arg0: i32, %arg1: memref<1x16x64x12xbf16, #tpu.memory_space<vmem>>, %arg2: memref<12x20xbf16, #tpu.memory_space<vmem>>, %arg3: memref<1x20xf32, #tpu.memory_space<vmem>>, %arg4: memref<16x20x40xbf16, #tpu.memory_space<vmem>>, %arg5: memref<1x40xf32, #tpu.memory_space<vmem>>, %arg6: memref<1x6x6x40xf32, #tpu.memory_space<vmem>>, %arg7: memref<4x4x8x8x20xf32, #tpu.memory_space<vmem>>, %arg8: memref<2x2x8x8x20xf32, #tpu.memory_space<vmem>>) attributes {dimension_semantics = [#tpu.dimension_semantics<parallel>], iteration_bounds = array<i64: 2>, scalar_prefetch = 0 : i64, scratch_operands = 2 : i64, tpu.core_type = #tpu.core_type<tc>, window_params = [{transform_indices = @transform_0, window_bounds = array<i64: 1, 16, 64, 12>}, {pipeline_mode = #tpu.pipeline_mode<synchronous>, transform_indices = @transform_1, window_bounds = array<i64: 12, 20>}, {pipeline_mode = #tpu.pipeline_mode<synchronous>, transform_indices = @transform_2, window_bounds = array<i64: 1, 20>}, {pipeline_mode = #tpu.pipeline_mode<synchronous>, transform_indices = @transform_3, window_bounds = array<i64: 16, 20, 40>}, {pipeline_mode = #tpu.pipeline_mode<synchronous>, transform_indices = @transform_4, window_bounds = array<i64: 1, 40>}, {transform_indices = @transform_5, window_bounds = array<i64: 1, 6, 6, 40>}]} {
    %c0 = arith.constant 0 : index
    %c0_0 = arith.constant 0 : index
    %0 = vector.load %arg2[%c0, %c0_0] : memref<12x20xbf16, #tpu.memory_space<vmem>>, vector<12x20xbf16>
    %c0_1 = arith.constant 0 : index
    %c0_2 = arith.constant 0 : index
    %1 = vector.load %arg3[%c0_1, %c0_2] : memref<1x20xf32, #tpu.memory_space<vmem>>, vector<1x20xf32>
    %c0_3 = arith.constant 0 : index
    %c0_4 = arith.constant 0 : index
    %c0_5 = arith.constant 0 : index
    %c0_6 = arith.constant 0 : index
    %2 = vector.load %arg1[%c0_3, %c0_4, %c0_5, %c0_6] : memref<1x16x64x12xbf16, #tpu.memory_space<vmem>>, vector<1x1x64x12xbf16>
    %3 = vector.shape_cast %2 : vector<1x1x64x12xbf16> to vector<64x12xbf16>
    %cst = arith.constant dense<0.000000e+00> : vector<64x20xf32>
    %4 = tpu.matmul %3, %0, %cst {dimension_numbers = #tpu.dot_dimension_numbers<[1], [0], [0], [1], [0, 0, 1, 1], [], []>} : vector<64x12xbf16>, vector<12x20xbf16>, vector<64x20xf32> -> vector<64x20xf32>
    %5 = vector.broadcast %1 : vector<1x20xf32> to vector<64x20xf32>
    %6 = arith.addf %4, %5 : vector<64x20xf32>
    %cst_7 = arith.constant 0.000000e+00 : f32
    %7 = vector.broadcast %cst_7 : f32 to vector<64x20xf32>
    %8 = arith.maximumf %6, %7 : vector<64x20xf32>
    %9 = vector.shape_cast %8 : vector<64x20xf32> to vector<8x8x20xf32>
    %c0_8 = arith.constant 0 : index
    %c0_9 = arith.constant 0 : index
    %c0_10 = arith.constant 0 : index
    %c0_11 = arith.constant 0 : index
    %c0_12 = arith.constant 0 : index
    %10 = vector.load %arg7[%c0_8, %c0_9, %c0_10, %c0_11, %c0_12] : memref<4x4x8x8x20xf32, #tpu.memory_space<vmem>>, vector<1x1x8x8x20xf32>
    %11 = vector.shape_cast %10 : vector<1x1x8x8x20xf32> to vector<8x8x20xf32>
    %12 = vector.shape_cast %9 : vector<8x8x20xf32> to vector<1x1x8x8x20xf32>
    tpu.vector_store %arg7[%c0_8, %c0_9, %c0_10, %c0_11, %c0_12], %12 {strides = array<i32>} : memref<4x4x8x8x20xf32, #tpu.memory_space<vmem>>, vector<1x1x8x8x20xf32>,
    %c0_13 = arith.constant 0 : index
    %c1 = arith.constant 1 : index
    %c0_14 = arith.constant 0 : index
    %c0_15 = arith.constant 0 : index
    %13 = vector.load %arg1[%c0_13, %c1, %c0_14, %c0_15] : memref<1x16x64x12xbf16, #tpu.memory_space<vmem>>, vector<1x1x64x12xbf16>
    %14 = vector.shape_cast %13 : vector<1x1x64x12xbf16> to vector<64x12xbf16>
    %cst_16 = arith.constant dense<0.000000e+00> : vector<64x20xf32>
    %15 = tpu.matmul %14, %0, %cst_16 {dimension_numbers = #tpu.dot_dimension_numbers<[1], [0], [0], [1], [0, 0, 1, 1], [], []>} : vector<64x12xbf16>, vector<12x20xbf16>, vector<64x20xf32> -> vector<64x20xf32>
    %16 = vector.broadcast %1 : vector<1x20xf32> to vector<64x20xf32>
    %17 = arith.addf %15, %16 : vector<64x20xf32>
    %cst_17 = arith.constant 0.000000e+00 : f32
    %18 = vector.broadcast %cst_17 : f32 to vector<64x20xf32>
    %19 = arith.maximumf %17, %18 : vector<64x20xf32>
    %20 = vector.shape_cast %19 : vector<64x20xf32> to vector<8x8x20xf32>
    %c0_18 = arith.constant 0 : index
    %c1_19 = arith.constant 1 : index
    %c0_20 = arith.constant 0 : index
    %c0_21 = arith.constant 0 : index
    %c0_22 = arith.constant 0 : index
    %21 = vector.load %arg7[%c0_18, %c1_19, %c0_20, %c0_21, %c0_22] : memref<4x4x8x8x20xf32, #tpu.memory_space<vmem>>, vector<1x1x8x8x20xf32>
    %22 = vector.shape_cast %21 : vector<1x1x8x8x20xf32> to vector<8x8x20xf32>
    %23 = vector.shape_cast %20 : vector<8x8x20xf32> to vector<1x1x8x8x20xf32>
    tpu.vector_store %arg7[%c0_18, %c1_19, %c0_20, %c0_21, %c0_22], %23 {strides = array<i32>} : memref<4x4x8x8x20xf32, #tpu.memory_space<vmem>>, vector<1x1x8x8x20xf32>,
    %c0_23 = arith.constant 0 : index
    %c2 = arith.constant 2 : index
    %c0_24 = arith.constant 0 : index
    %c0_25 = arith.constant 0 : index
    %24 = vector.load %arg1[%c0_23, %c2, %c0_24, %c0_25] : memref<1x16x64x12xbf16, #tpu.memory_space<vmem>>, vector<1x1x64x12xbf16>
    %25 = vector.shape_cast %24 : vector<1x1x64x12xbf16> to vector<64x12xbf16>
    %cst_26 = arith.constant dense<0.000000e+00> : vector<64x20xf32>
    %26 = tpu.matmul %25, %0, %cst_26 {dimension_numbers = #tpu.dot_dimension_numbers<[1], [0], [0], [1], [0, 0, 1, 1], [], []>} : vector<64x12xbf16>, vector<12x20xbf16>, vector<64x20xf32> -> vector<64x20xf32>
    %27 = vector.broadcast %1 : vector<1x20xf32> to vector<64x20xf32>
    %28 = arith.addf %26, %27 : vector<64x20xf32>
    %cst_27 = arith.constant 0.000000e+00 : f32
    %29 = vector.broadcast %cst_27 : f32 to vector<64x20xf32>
    %30 = arith.maximumf %28, %29 : vector<64x20xf32>
    %31 = vector.shape_cast %30 : vector<64x20xf32> to vector<8x8x20xf32>
    %c0_28 = arith.constant 0 : index
    %c2_29 = arith.constant 2 : index
    %c0_30 = arith.constant 0 : index
    %c0_31 = arith.constant 0 : index
    %c0_32 = arith.constant 0 : index
    %32 = vector.load %arg7[%c0_28, %c2_29, %c0_30, %c0_31, %c0_32] : memref<4x4x8x8x20xf32, #tpu.memory_space<vmem>>, vector<1x1x8x8x20xf32>
    %33 = vector.shape_cast %32 : vector<1x1x8x8x20xf32> to vector<8x8x20xf32>
    %34 = vector.shape_cast %31 : vector<8x8x20xf32> to vector<1x1x8x8x20xf32>
    tpu.vector_store %arg7[%c0_28, %c2_29, %c0_30, %c0_31, %c0_32], %34 {strides = array<i32>} : memref<4x4x8x8x20xf32, #tpu.memory_space<vmem>>, vector<1x1x8x8x20xf32>,
    %c0_33 = arith.constant 0 : index
    %c3 = arith.constant 3 : index
    %c0_34 = arith.constant 0 : index
    %c0_35 = arith.constant 0 : index
    %35 = vector.load %arg1[%c0_33, %c3, %c0_34, %c0_35] : memref<1x16x64x12xbf16, #tpu.memory_space<vmem>>, vector<1x1x64x12xbf16>
    %36 = vector.shape_cast %35 : vector<1x1x64x12xbf16> to vector<64x12xbf16>
    %cst_36 = arith.constant dense<0.000000e+00> : vector<64x20xf32>
    %37 = tpu.matmul %36, %0, %cst_36 {dimension_numbers = #tpu.dot_dimension_numbers<[1], [0], [0], [1], [0, 0, 1, 1], [], []>} : vector<64x12xbf16>, vector<12x20xbf16>, vector<64x20xf32> -> vector<64x20xf32>
    %38 = vector.broadcast %1 : vector<1x20xf32> to vector<64x20xf32>
    %39 = arith.addf %37, %38 : vector<64x20xf32>
    %cst_37 = arith.constant 0.000000e+00 : f32
    %40 = vector.broadcast %cst_37 : f32 to vector<64x20xf32>
    %41 = arith.maximumf %39, %40 : vector<64x20xf32>
    %42 = vector.shape_cast %41 : vector<64x20xf32> to vector<8x8x20xf32>
    %c0_38 = arith.constant 0 : index
    %c3_39 = arith.constant 3 : index
    %c0_40 = arith.constant 0 : index
    %c0_41 = arith.constant 0 : index
    %c0_42 = arith.constant 0 : index
    %43 = vector.load %arg7[%c0_38, %c3_39, %c0_40, %c0_41, %c0_42] : memref<4x4x8x8x20xf32, #tpu.memory_space<vmem>>, vector<1x1x8x8x20xf32>
    %44 = vector.shape_cast %43 : vector<1x1x8x8x20xf32> to vector<8x8x20xf32>
    %45 = vector.shape_cast %42 : vector<8x8x20xf32> to vector<1x1x8x8x20xf32>
    tpu.vector_store %arg7[%c0_38, %c3_39, %c0_40, %c0_41, %c0_42], %45 {strides = array<i32>} : memref<4x4x8x8x20xf32, #tpu.memory_space<vmem>>, vector<1x1x8x8x20xf32>,
    %c0_43 = arith.constant 0 : index
    %c4 = arith.constant 4 : index
    %c0_44 = arith.constant 0 : index
    %c0_45 = arith.constant 0 : index
    %46 = vector.load %arg1[%c0_43, %c4, %c0_44, %c0_45] : memref<1x16x64x12xbf16, #tpu.memory_space<vmem>>, vector<1x1x64x12xbf16>
    %47 = vector.shape_cast %46 : vector<1x1x64x12xbf16> to vector<64x12xbf16>
    %cst_46 = arith.constant dense<0.000000e+00> : vector<64x20xf32>
    %48 = tpu.matmul %47, %0, %cst_46 {dimension_numbers = #tpu.dot_dimension_numbers<[1], [0], [0], [1], [0, 0, 1, 1], [], []>} : vector<64x12xbf16>, vector<12x20xbf16>, vector<64x20xf32> -> vector<64x20xf32>
    %49 = vector.broadcast %1 : vector<1x20xf32> to vector<64x20xf32>
    %50 = arith.addf %48, %49 : vector<64x20xf32>
    %cst_47 = arith.constant 0.000000e+00 : f32
    %51 = vector.broadcast %cst_47 : f32 to vector<64x20xf32>
    %52 = arith.maximumf %50, %51 : vector<64x20xf32>
    %53 = vector.shape_cast %52 : vector<64x20xf32> to vector<8x8x20xf32>
    %c1_48 = arith.constant 1 : index
    %c0_49 = arith.constant 0 : index
    %c0_50 = arith.constant 0 : index
    %c0_51 = arith.constant 0 : index
    %c0_52 = arith.constant 0 : index
    %54 = vector.load %arg7[%c1_48, %c0_49, %c0_50, %c0_51, %c0_52] : memref<4x4x8x8x20xf32, #tpu.memory_space<vmem>>, vector<1x1x8x8x20xf32>
    %55 = vector.shape_cast %54 : vector<1x1x8x8x20xf32> to vector<8x8x20xf32>
    %56 = vector.shape_cast %53 : vector<8x8x20xf32> to vector<1x1x8x8x20xf32>
    tpu.vector_store %arg7[%c1_48, %c0_49, %c0_50, %c0_51, %c0_52], %56 {strides = array<i32>} : memref<4x4x8x8x20xf32, #tpu.memory_space<vmem>>, vector<1x1x8x8x20xf32>,
    %c0_53 = arith.constant 0 : index
    %c5 = arith.constant 5 : index
    %c0_54 = arith.constant 0 : index
    %c0_55 = arith.constant 0 : index
    %57 = vector.load %arg1[%c0_53, %c5, %c0_54, %c0_55] : memref<1x16x64x12xbf16, #tpu.memory_space<vmem>>, vector<1x1x64x12xbf16>
    %58 = vector.shape_cast %57 : vector<1x1x64x12xbf16> to vector<64x12xbf16>
    %cst_56 = arith.constant dense<0.000000e+00> : vector<64x20xf32>
    %59 = tpu.matmul %58, %0, %cst_56 {dimension_numbers = #tpu.dot_dimension_numbers<[1], [0], [0], [1], [0, 0, 1, 1], [], []>} : vector<64x12xbf16>, vector<12x20xbf16>, vector<64x20xf32> -> vector<64x20xf32>
    %60 = vector.broadcast %1 : vector<1x20xf32> to vector<64x20xf32>
    %61 = arith.addf %59, %60 : vector<64x20xf32>
    %cst_57 = arith.constant 0.000000e+00 : f32
    %62 = vector.broadcast %cst_57 : f32 to vector<64x20xf32>
    %63 = arith.maximumf %61, %62 : vector<64x20xf32>
    %64 = vector.shape_cast %63 : vector<64x20xf32> to vector<8x8x20xf32>
    %c1_58 = arith.constant 1 : index
    %c1_59 = arith.constant 1 : index
    %c0_60 = arith.constant 0 : index
    %c0_61 = arith.constant 0 : index
    %c0_62 = arith.constant 0 : index
    %65 = vector.load %arg7[%c1_58, %c1_59, %c0_60, %c0_61, %c0_62] : memref<4x4x8x8x20xf32, #tpu.memory_space<vmem>>, vector<1x1x8x8x20xf32>
    %66 = vector.shape_cast %65 : vector<1x1x8x8x20xf32> to vector<8x8x20xf32>
    %67 = vector.shape_cast %64 : vector<8x8x20xf32> to vector<1x1x8x8x20xf32>
    tpu.vector_store %arg7[%c1_58, %c1_59, %c0_60, %c0_61, %c0_62], %67 {strides = array<i32>} : memref<4x4x8x8x20xf32, #tpu.memory_space<vmem>>, vector<1x1x8x8x20xf32>,
    %c0_63 = arith.constant 0 : index
    %c6 = arith.constant 6 : index
    %c0_64 = arith.constant 0 : index
    %c0_65 = arith.constant 0 : index
    %68 = vector.load %arg1[%c0_63, %c6, %c0_64, %c0_65] : memref<1x16x64x12xbf16, #tpu.memory_space<vmem>>, vector<1x1x64x12xbf16>
    %69 = vector.shape_cast %68 : vector<1x1x64x12xbf16> to vector<64x12xbf16>
    %cst_66 = arith.constant dense<0.000000e+00> : vector<64x20xf32>
    %70 = tpu.matmul %69, %0, %cst_66 {dimension_numbers = #tpu.dot_dimension_numbers<[1], [0], [0], [1], [0, 0, 1, 1], [], []>} : vector<64x12xbf16>, vector<12x20xbf16>, vector<64x20xf32> -> vector<64x20xf32>
    %71 = vector.broadcast %1 : vector<1x20xf32> to vector<64x20xf32>
    %72 = arith.addf %70, %71 : vector<64x20xf32>
    %cst_67 = arith.constant 0.000000e+00 : f32
    %73 = vector.broadcast %cst_67 : f32 to vector<64x20xf32>
    %74 = arith.maximumf %72, %73 : vector<64x20xf32>
    %75 = vector.shape_cast %74 : vector<64x20xf32> to vector<8x8x20xf32>
    %c1_68 = arith.constant 1 : index
    %c2_69 = arith.constant 2 : index
    %c0_70 = arith.constant 0 : index
    %c0_71 = arith.constant 0 : index
    %c0_72 = arith.constant 0 : index
    %76 = vector.load %arg7[%c1_68, %c2_69, %c0_70, %c0_71, %c0_72] : memref<4x4x8x8x20xf32, #tpu.memory_space<vmem>>, vector<1x1x8x8x20xf32>
    %77 = vector.shape_cast %76 : vector<1x1x8x8x20xf32> to vector<8x8x20xf32>
    %78 = vector.shape_cast %75 : vector<8x8x20xf32> to vector<1x1x8x8x20xf32>
    tpu.vector_store %arg7[%c1_68, %c2_69, %c0_70, %c0_71, %c0_72], %78 {strides = array<i32>} : memref<4x4x8x8x20xf32, #tpu.memory_space<vmem>>, vector<1x1x8x8x20xf32>,
    %c0_73 = arith.constant 0 : index
    %c7 = arith.constant 7 : index
    %c0_74 = arith.constant 0 : index
    %c0_75 = arith.constant 0 : index
    %79 = vector.load %arg1[%c0_73, %c7, %c0_74, %c0_75] : memref<1x16x64x12xbf16, #tpu.memory_space<vmem>>, vector<1x1x64x12xbf16>
    %80 = vector.shape_cast %79 : vector<1x1x64x12xbf16> to vector<64x12xbf16>
    %cst_76 = arith.constant dense<0.000000e+00> : vector<64x20xf32>
    %81 = tpu.matmul %80, %0, %cst_76 {dimension_numbers = #tpu.dot_dimension_numbers<[1], [0], [0], [1], [0, 0, 1, 1], [], []>} : vector<64x12xbf16>, vector<12x20xbf16>, vector<64x20xf32> -> vector<64x20xf32>
    %82 = vector.broadcast %1 : vector<1x20xf32> to vector<64x20xf32>
    %83 = arith.addf %81, %82 : vector<64x20xf32>
    %cst_77 = arith.constant 0.000000e+00 : f32
    %84 = vector.broadcast %cst_77 : f32 to vector<64x20xf32>
    %85 = arith.maximumf %83, %84 : vector<64x20xf32>
    %86 = vector.shape_cast %85 : vector<64x20xf32> to vector<8x8x20xf32>
    %c1_78 = arith.constant 1 : index
    %c3_79 = arith.constant 3 : index
    %c0_80 = arith.constant 0 : index
    %c0_81 = arith.constant 0 : index
    %c0_82 = arith.constant 0 : index
    %87 = vector.load %arg7[%c1_78, %c3_79, %c0_80, %c0_81, %c0_82] : memref<4x4x8x8x20xf32, #tpu.memory_space<vmem>>, vector<1x1x8x8x20xf32>
    %88 = vector.shape_cast %87 : vector<1x1x8x8x20xf32> to vector<8x8x20xf32>
    %89 = vector.shape_cast %86 : vector<8x8x20xf32> to vector<1x1x8x8x20xf32>
    tpu.vector_store %arg7[%c1_78, %c3_79, %c0_80, %c0_81, %c0_82], %89 {strides = array<i32>} : memref<4x4x8x8x20xf32, #tpu.memory_space<vmem>>, vector<1x1x8x8x20xf32>,
    %c0_83 = arith.constant 0 : index
    %c8 = arith.constant 8 : index
    %c0_84 = arith.constant 0 : index
    %c0_85 = arith.constant 0 : index
    %90 = vector.load %arg1[%c0_83, %c8, %c0_84, %c0_85] : memref<1x16x64x12xbf16, #tpu.memory_space<vmem>>, vector<1x1x64x12xbf16>
    %91 = vector.shape_cast %90 : vector<1x1x64x12xbf16> to vector<64x12xbf16>
    %cst_86 = arith.constant dense<0.000000e+00> : vector<64x20xf32>
    %92 = tpu.matmul %91, %0, %cst_86 {dimension_numbers = #tpu.dot_dimension_numbers<[1], [0], [0], [1], [0, 0, 1, 1], [], []>} : vector<64x12xbf16>, vector<12x20xbf16>, vector<64x20xf32> -> vector<64x20xf32>
    %93 = vector.broadcast %1 : vector<1x20xf32> to vector<64x20xf32>
    %94 = arith.addf %92, %93 : vector<64x20xf32>
    %cst_87 = arith.constant 0.000000e+00 : f32
    %95 = vector.broadcast %cst_87 : f32 to vector<64x20xf32>
    %96 = arith.maximumf %94, %95 : vector<64x20xf32>
    %97 = vector.shape_cast %96 : vector<64x20xf32> to vector<8x8x20xf32>
    %c2_88 = arith.constant 2 : index
    %c0_89 = arith.constant 0 : index
    %c0_90 = arith.constant 0 : index
    %c0_91 = arith.constant 0 : index
    %c0_92 = arith.constant 0 : index
    %98 = vector.load %arg7[%c2_88, %c0_89, %c0_90, %c0_91, %c0_92] : memref<4x4x8x8x20xf32, #tpu.memory_space<vmem>>, vector<1x1x8x8x20xf32>
    %99 = vector.shape_cast %98 : vector<1x1x8x8x20xf32> to vector<8x8x20xf32>
    %100 = vector.shape_cast %97 : vector<8x8x20xf32> to vector<1x1x8x8x20xf32>
    tpu.vector_store %arg7[%c2_88, %c0_89, %c0_90, %c0_91, %c0_92], %100 {strides = array<i32>} : memref<4x4x8x8x20xf32, #tpu.memory_space<vmem>>, vector<1x1x8x8x20xf32>,
    %c0_93 = arith.constant 0 : index
    %c9 = arith.constant 9 : index
    %c0_94 = arith.constant 0 : index
    %c0_95 = arith.constant 0 : index
    %101 = vector.load %arg1[%c0_93, %c9, %c0_94, %c0_95] : memref<1x16x64x12xbf16, #tpu.memory_space<vmem>>, vector<1x1x64x12xbf16>
    %102 = vector.shape_cast %101 : vector<1x1x64x12xbf16> to vector<64x12xbf16>
    %cst_96 = arith.constant dense<0.000000e+00> : vector<64x20xf32>
    %103 = tpu.matmul %102, %0, %cst_96 {dimension_numbers = #tpu.dot_dimension_numbers<[1], [0], [0], [1], [0, 0, 1, 1], [], []>} : vector<64x12xbf16>, vector<12x20xbf16>, vector<64x20xf32> -> vector<64x20xf32>
    %104 = vector.broadcast %1 : vector<1x20xf32> to vector<64x20xf32>
    %105 = arith.addf %103, %104 : vector<64x20xf32>
    %cst_97 = arith.constant 0.000000e+00 : f32
    %106 = vector.broadcast %cst_97 : f32 to vector<64x20xf32>
    %107 = arith.maximumf %105, %106 : vector<64x20xf32>
    %108 = vector.shape_cast %107 : vector<64x20xf32> to vector<8x8x20xf32>
    %c2_98 = arith.constant 2 : index
    %c1_99 = arith.constant 1 : index
    %c0_100 = arith.constant 0 : index
    %c0_101 = arith.constant 0 : index
    %c0_102 = arith.constant 0 : index
    %109 = vector.load %arg7[%c2_98, %c1_99, %c0_100, %c0_101, %c0_102] : memref<4x4x8x8x20xf32, #tpu.memory_space<vmem>>, vector<1x1x8x8x20xf32>
    %110 = vector.shape_cast %109 : vector<1x1x8x8x20xf32> to vector<8x8x20xf32>
    %111 = vector.shape_cast %108 : vector<8x8x20xf32> to vector<1x1x8x8x20xf32>
    tpu.vector_store %arg7[%c2_98, %c1_99, %c0_100, %c0_101, %c0_102], %111 {strides = array<i32>} : memref<4x4x8x8x20xf32, #tpu.memory_space<vmem>>, vector<1x1x8x8x20xf32>,
    %c0_103 = arith.constant 0 : index
    %c10 = arith.constant 10 : index
    %c0_104 = arith.constant 0 : index
    %c0_105 = arith.constant 0 : index
    %112 = vector.load %arg1[%c0_103, %c10, %c0_104, %c0_105] : memref<1x16x64x12xbf16, #tpu.memory_space<vmem>>, vector<1x1x64x12xbf16>
    %113 = vector.shape_cast %112 : vector<1x1x64x12xbf16> to vector<64x12xbf16>
    %cst_106 = arith.constant dense<0.000000e+00> : vector<64x20xf32>
    %114 = tpu.matmul %113, %0, %cst_106 {dimension_numbers = #tpu.dot_dimension_numbers<[1], [0], [0], [1], [0, 0, 1, 1], [], []>} : vector<64x12xbf16>, vector<12x20xbf16>, vector<64x20xf32> -> vector<64x20xf32>
    %115 = vector.broadcast %1 : vector<1x20xf32> to vector<64x20xf32>
    %116 = arith.addf %114, %115 : vector<64x20xf32>
    %cst_107 = arith.constant 0.000000e+00 : f32
    %117 = vector.broadcast %cst_107 : f32 to vector<64x20xf32>
    %118 = arith.maximumf %116, %117 : vector<64x20xf32>
    %119 = vector.shape_cast %118 : vector<64x20xf32> to vector<8x8x20xf32>
    %c2_108 = arith.constant 2 : index
    %c2_109 = arith.constant 2 : index
    %c0_110 = arith.constant 0 : index
    %c0_111 = arith.constant 0 : index
    %c0_112 = arith.constant 0 : index
    %120 = vector.load %arg7[%c2_108, %c2_109, %c0_110, %c0_111, %c0_112] : memref<4x4x8x8x20xf32, #tpu.memory_space<vmem>>, vector<1x1x8x8x20xf32>
    %121 = vector.shape_cast %120 : vector<1x1x8x8x20xf32> to vector<8x8x20xf32>
    %122 = vector.shape_cast %119 : vector<8x8x20xf32> to vector<1x1x8x8x20xf32>
    tpu.vector_store %arg7[%c2_108, %c2_109, %c0_110, %c0_111, %c0_112], %122 {strides = array<i32>} : memref<4x4x8x8x20xf32, #tpu.memory_space<vmem>>, vector<1x1x8x8x20xf32>,
    %c0_113 = arith.constant 0 : index
    %c11 = arith.constant 11 : index
    %c0_114 = arith.constant 0 : index
    %c0_115 = arith.constant 0 : index
    %123 = vector.load %arg1[%c0_113, %c11, %c0_114, %c0_115] : memref<1x16x64x12xbf16, #tpu.memory_space<vmem>>, vector<1x1x64x12xbf16>
    %124 = vector.shape_cast %123 : vector<1x1x64x12xbf16> to vector<64x12xbf16>
    %cst_116 = arith.constant dense<0.000000e+00> : vector<64x20xf32>
    %125 = tpu.matmul %124, %0, %cst_116 {dimension_numbers = #tpu.dot_dimension_numbers<[1], [0], [0], [1], [0, 0, 1, 1], [], []>} : vector<64x12xbf16>, vector<12x20xbf16>, vector<64x20xf32> -> vector<64x20xf32>
    %126 = vector.broadcast %1 : vector<1x20xf32> to vector<64x20xf32>
    %127 = arith.addf %125, %126 : vector<64x20xf32>
    %cst_117 = arith.constant 0.000000e+00 : f32
    %128 = vector.broadcast %cst_117 : f32 to vector<64x20xf32>
    %129 = arith.maximumf %127, %128 : vector<64x20xf32>
    %130 = vector.shape_cast %129 : vector<64x20xf32> to vector<8x8x20xf32>
    %c2_118 = arith.constant 2 : index
    %c3_119 = arith.constant 3 : index
    %c0_120 = arith.constant 0 : index
    %c0_121 = arith.constant 0 : index
    %c0_122 = arith.constant 0 : index
    %131 = vector.load %arg7[%c2_118, %c3_119, %c0_120, %c0_121, %c0_122] : memref<4x4x8x8x20xf32, #tpu.memory_space<vmem>>, vector<1x1x8x8x20xf32>
    %132 = vector.shape_cast %131 : vector<1x1x8x8x20xf32> to vector<8x8x20xf32>
    %133 = vector.shape_cast %130 : vector<8x8x20xf32> to vector<1x1x8x8x20xf32>
    tpu.vector_store %arg7[%c2_118, %c3_119, %c0_120, %c0_121, %c0_122], %133 {strides = array<i32>} : memref<4x4x8x8x20xf32, #tpu.memory_space<vmem>>, vector<1x1x8x8x20xf32>,
    %c0_123 = arith.constant 0 : index
    %c12 = arith.constant 12 : index
    %c0_124 = arith.constant 0 : index
    %c0_125 = arith.constant 0 : index
    %134 = vector.load %arg1[%c0_123, %c12, %c0_124, %c0_125] : memref<1x16x64x12xbf16, #tpu.memory_space<vmem>>, vector<1x1x64x12xbf16>
    %135 = vector.shape_cast %134 : vector<1x1x64x12xbf16> to vector<64x12xbf16>
    %cst_126 = arith.constant dense<0.000000e+00> : vector<64x20xf32>
    %136 = tpu.matmul %135, %0, %cst_126 {dimension_numbers = #tpu.dot_dimension_numbers<[1], [0], [0], [1], [0, 0, 1, 1], [], []>} : vector<64x12xbf16>, vector<12x20xbf16>, vector<64x20xf32> -> vector<64x20xf32>
    %137 = vector.broadcast %1 : vector<1x20xf32> to vector<64x20xf32>
    %138 = arith.addf %136, %137 : vector<64x20xf32>
    %cst_127 = arith.constant 0.000000e+00 : f32
    %139 = vector.broadcast %cst_127 : f32 to vector<64x20xf32>
    %140 = arith.maximumf %138, %139 : vector<64x20xf32>
    %141 = vector.shape_cast %140 : vector<64x20xf32> to vector<8x8x20xf32>
    %c3_128 = arith.constant 3 : index
    %c0_129 = arith.constant 0 : index
    %c0_130 = arith.constant 0 : index
    %c0_131 = arith.constant 0 : index
    %c0_132 = arith.constant 0 : index
    %142 = vector.load %arg7[%c3_128, %c0_129, %c0_130, %c0_131, %c0_132] : memref<4x4x8x8x20xf32, #tpu.memory_space<vmem>>, vector<1x1x8x8x20xf32>
    %143 = vector.shape_cast %142 : vector<1x1x8x8x20xf32> to vector<8x8x20xf32>
    %144 = vector.shape_cast %141 : vector<8x8x20xf32> to vector<1x1x8x8x20xf32>
    tpu.vector_store %arg7[%c3_128, %c0_129, %c0_130, %c0_131, %c0_132], %144 {strides = array<i32>} : memref<4x4x8x8x20xf32, #tpu.memory_space<vmem>>, vector<1x1x8x8x20xf32>,
    %c0_133 = arith.constant 0 : index
    %c13 = arith.constant 13 : index
    %c0_134 = arith.constant 0 : index
    %c0_135 = arith.constant 0 : index
    %145 = vector.load %arg1[%c0_133, %c13, %c0_134, %c0_135] : memref<1x16x64x12xbf16, #tpu.memory_space<vmem>>, vector<1x1x64x12xbf16>
    %146 = vector.shape_cast %145 : vector<1x1x64x12xbf16> to vector<64x12xbf16>
    %cst_136 = arith.constant dense<0.000000e+00> : vector<64x20xf32>
    %147 = tpu.matmul %146, %0, %cst_136 {dimension_numbers = #tpu.dot_dimension_numbers<[1], [0], [0], [1], [0, 0, 1, 1], [], []>} : vector<64x12xbf16>, vector<12x20xbf16>, vector<64x20xf32> -> vector<64x20xf32>
    %148 = vector.broadcast %1 : vector<1x20xf32> to vector<64x20xf32>
    %149 = arith.addf %147, %148 : vector<64x20xf32>
    %cst_137 = arith.constant 0.000000e+00 : f32
    %150 = vector.broadcast %cst_137 : f32 to vector<64x20xf32>
    %151 = arith.maximumf %149, %150 : vector<64x20xf32>
    %152 = vector.shape_cast %151 : vector<64x20xf32> to vector<8x8x20xf32>
    %c3_138 = arith.constant 3 : index
    %c1_139 = arith.constant 1 : index
    %c0_140 = arith.constant 0 : index
    %c0_141 = arith.constant 0 : index
    %c0_142 = arith.constant 0 : index
    %153 = vector.load %arg7[%c3_138, %c1_139, %c0_140, %c0_141, %c0_142] : memref<4x4x8x8x20xf32, #tpu.memory_space<vmem>>, vector<1x1x8x8x20xf32>
    %154 = vector.shape_cast %153 : vector<1x1x8x8x20xf32> to vector<8x8x20xf32>
    %155 = vector.shape_cast %152 : vector<8x8x20xf32> to vector<1x1x8x8x20xf32>
    tpu.vector_store %arg7[%c3_138, %c1_139, %c0_140, %c0_141, %c0_142], %155 {strides = array<i32>} : memref<4x4x8x8x20xf32, #tpu.memory_space<vmem>>, vector<1x1x8x8x20xf32>,
    %c0_143 = arith.constant 0 : index
    %c14 = arith.constant 14 : index
    %c0_144 = arith.constant 0 : index
    %c0_145 = arith.constant 0 : index
    %156 = vector.load %arg1[%c0_143, %c14, %c0_144, %c0_145] : memref<1x16x64x12xbf16, #tpu.memory_space<vmem>>, vector<1x1x64x12xbf16>
    %157 = vector.shape_cast %156 : vector<1x1x64x12xbf16> to vector<64x12xbf16>
    %cst_146 = arith.constant dense<0.000000e+00> : vector<64x20xf32>
    %158 = tpu.matmul %157, %0, %cst_146 {dimension_numbers = #tpu.dot_dimension_numbers<[1], [0], [0], [1], [0, 0, 1, 1], [], []>} : vector<64x12xbf16>, vector<12x20xbf16>, vector<64x20xf32> -> vector<64x20xf32>
    %159 = vector.broadcast %1 : vector<1x20xf32> to vector<64x20xf32>
    %160 = arith.addf %158, %159 : vector<64x20xf32>
    %cst_147 = arith.constant 0.000000e+00 : f32
    %161 = vector.broadcast %cst_147 : f32 to vector<64x20xf32>
    %162 = arith.maximumf %160, %161 : vector<64x20xf32>
    %163 = vector.shape_cast %162 : vector<64x20xf32> to vector<8x8x20xf32>
    %c3_148 = arith.constant 3 : index
    %c2_149 = arith.constant 2 : index
    %c0_150 = arith.constant 0 : index
    %c0_151 = arith.constant 0 : index
    %c0_152 = arith.constant 0 : index
    %164 = vector.load %arg7[%c3_148, %c2_149, %c0_150, %c0_151, %c0_152] : memref<4x4x8x8x20xf32, #tpu.memory_space<vmem>>, vector<1x1x8x8x20xf32>
    %165 = vector.shape_cast %164 : vector<1x1x8x8x20xf32> to vector<8x8x20xf32>
    %166 = vector.shape_cast %163 : vector<8x8x20xf32> to vector<1x1x8x8x20xf32>
    tpu.vector_store %arg7[%c3_148, %c2_149, %c0_150, %c0_151, %c0_152], %166 {strides = array<i32>} : memref<4x4x8x8x20xf32, #tpu.memory_space<vmem>>, vector<1x1x8x8x20xf32>,
    %c0_153 = arith.constant 0 : index
    %c15 = arith.constant 15 : index
    %c0_154 = arith.constant 0 : index
    %c0_155 = arith.constant 0 : index
    %167 = vector.load %arg1[%c0_153, %c15, %c0_154, %c0_155] : memref<1x16x64x12xbf16, #tpu.memory_space<vmem>>, vector<1x1x64x12xbf16>
    %168 = vector.shape_cast %167 : vector<1x1x64x12xbf16> to vector<64x12xbf16>
    %cst_156 = arith.constant dense<0.000000e+00> : vector<64x20xf32>
    %169 = tpu.matmul %168, %0, %cst_156 {dimension_numbers = #tpu.dot_dimension_numbers<[1], [0], [0], [1], [0, 0, 1, 1], [], []>} : vector<64x12xbf16>, vector<12x20xbf16>, vector<64x20xf32> -> vector<64x20xf32>
    %170 = vector.broadcast %1 : vector<1x20xf32> to vector<64x20xf32>
    %171 = arith.addf %169, %170 : vector<64x20xf32>
    %cst_157 = arith.constant 0.000000e+00 : f32
    %172 = vector.broadcast %cst_157 : f32 to vector<64x20xf32>
    %173 = arith.maximumf %171, %172 : vector<64x20xf32>
    %174 = vector.shape_cast %173 : vector<64x20xf32> to vector<8x8x20xf32>
    %c3_158 = arith.constant 3 : index
    %c3_159 = arith.constant 3 : index
    %c0_160 = arith.constant 0 : index
    %c0_161 = arith.constant 0 : index
    %c0_162 = arith.constant 0 : index
    %175 = vector.load %arg7[%c3_158, %c3_159, %c0_160, %c0_161, %c0_162] : memref<4x4x8x8x20xf32, #tpu.memory_space<vmem>>, vector<1x1x8x8x20xf32>
    %176 = vector.shape_cast %175 : vector<1x1x8x8x20xf32> to vector<8x8x20xf32>
    %177 = vector.shape_cast %174 : vector<8x8x20xf32> to vector<1x1x8x8x20xf32>
    tpu.vector_store %arg7[%c3_158, %c3_159, %c0_160, %c0_161, %c0_162], %177 {strides = array<i32>} : memref<4x4x8x8x20xf32, #tpu.memory_space<vmem>>, vector<1x1x8x8x20xf32>,
    %c0_163 = arith.constant 0 : index
    %c0_164 = arith.constant 0 : index
    %c0_165 = arith.constant 0 : index
    %c0_166 = arith.constant 0 : index
    %c0_167 = arith.constant 0 : index
    %178 = vector.load %arg7[%c0_163, %c0_164, %c0_165, %c0_166, %c0_167] : memref<4x4x8x8x20xf32, #tpu.memory_space<vmem>>, vector<1x1x8x8x20xf32>
    %179 = vector.shape_cast %178 : vector<1x1x8x8x20xf32> to vector<8x8x20xf32>
    %c0_168 = arith.constant 0 : index
    %c1_169 = arith.constant 1 : index
    %c0_170 = arith.constant 0 : index
    %c0_171 = arith.constant 0 : index
    %c0_172 = arith.constant 0 : index
    %180 = vector.load %arg7[%c0_168, %c1_169, %c0_170, %c0_171, %c0_172] : memref<4x4x8x8x20xf32, #tpu.memory_space<vmem>>, vector<1x1x8x8x20xf32>
    %181 = vector.shape_cast %180 : vector<1x1x8x8x20xf32> to vector<8x8x20xf32>
    %182 = arith.maximumf %179, %181 : vector<8x8x20xf32>
    %c0_173 = arith.constant 0 : index
    %c2_174 = arith.constant 2 : index
    %c0_175 = arith.constant 0 : index
    %c0_176 = arith.constant 0 : index
    %c0_177 = arith.constant 0 : index
    %183 = vector.load %arg7[%c0_173, %c2_174, %c0_175, %c0_176, %c0_177] : memref<4x4x8x8x20xf32, #tpu.memory_space<vmem>>, vector<1x1x8x8x20xf32>
    %184 = vector.shape_cast %183 : vector<1x1x8x8x20xf32> to vector<8x8x20xf32>
    %185 = arith.maximumf %182, %184 : vector<8x8x20xf32>
    %c1_178 = arith.constant 1 : index
    %c0_179 = arith.constant 0 : index
    %c0_180 = arith.constant 0 : index
    %c0_181 = arith.constant 0 : index
    %c0_182 = arith.constant 0 : index
    %186 = vector.load %arg7[%c1_178, %c0_179, %c0_180, %c0_181, %c0_182] : memref<4x4x8x8x20xf32, #tpu.memory_space<vmem>>, vector<1x1x8x8x20xf32>
    %187 = vector.shape_cast %186 : vector<1x1x8x8x20xf32> to vector<8x8x20xf32>
    %188 = arith.maximumf %185, %187 : vector<8x8x20xf32>
    %c1_183 = arith.constant 1 : index
    %c1_184 = arith.constant 1 : index
    %c0_185 = arith.constant 0 : index
    %c0_186 = arith.constant 0 : index
    %c0_187 = arith.constant 0 : index
    %189 = vector.load %arg7[%c1_183, %c1_184, %c0_185, %c0_186, %c0_187] : memref<4x4x8x8x20xf32, #tpu.memory_space<vmem>>, vector<1x1x8x8x20xf32>
    %190 = vector.shape_cast %189 : vector<1x1x8x8x20xf32> to vector<8x8x20xf32>
    %191 = arith.maximumf %188, %190 : vector<8x8x20xf32>
    %c1_188 = arith.constant 1 : index
    %c2_189 = arith.constant 2 : index
    %c0_190 = arith.constant 0 : index
    %c0_191 = arith.constant 0 : index
    %c0_192 = arith.constant 0 : index
    %192 = vector.load %arg7[%c1_188, %c2_189, %c0_190, %c0_191, %c0_192] : memref<4x4x8x8x20xf32, #tpu.memory_space<vmem>>, vector<1x1x8x8x20xf32>
    %193 = vector.shape_cast %192 : vector<1x1x8x8x20xf32> to vector<8x8x20xf32>
    %194 = arith.maximumf %191, %193 : vector<8x8x20xf32>
    %c2_193 = arith.constant 2 : index
    %c0_194 = arith.constant 0 : index
    %c0_195 = arith.constant 0 : index
    %c0_196 = arith.constant 0 : index
    %c0_197 = arith.constant 0 : index
    %195 = vector.load %arg7[%c2_193, %c0_194, %c0_195, %c0_196, %c0_197] : memref<4x4x8x8x20xf32, #tpu.memory_space<vmem>>, vector<1x1x8x8x20xf32>
    %196 = vector.shape_cast %195 : vector<1x1x8x8x20xf32> to vector<8x8x20xf32>
    %197 = arith.maximumf %194, %196 : vector<8x8x20xf32>
    %c2_198 = arith.constant 2 : index
    %c1_199 = arith.constant 1 : index
    %c0_200 = arith.constant 0 : index
    %c0_201 = arith.constant 0 : index
    %c0_202 = arith.constant 0 : index
    %198 = vector.load %arg7[%c2_198, %c1_199, %c0_200, %c0_201, %c0_202] : memref<4x4x8x8x20xf32, #tpu.memory_space<vmem>>, vector<1x1x8x8x20xf32>
    %199 = vector.shape_cast %198 : vector<1x1x8x8x20xf32> to vector<8x8x20xf32>
    %200 = arith.maximumf %197, %199 : vector<8x8x20xf32>
    %c2_203 = arith.constant 2 : index
    %c2_204 = arith.constant 2 : index
    %c0_205 = arith.constant 0 : index
    %c0_206 = arith.constant 0 : index
    %c0_207 = arith.constant 0 : index
    %201 = vector.load %arg7[%c2_203, %c2_204, %c0_205, %c0_206, %c0_207] : memref<4x4x8x8x20xf32, #tpu.memory_space<vmem>>, vector<1x1x8x8x20xf32>
    %202 = vector.shape_cast %201 : vector<1x1x8x8x20xf32> to vector<8x8x20xf32>
    %203 = arith.maximumf %200, %202 : vector<8x8x20xf32>
    %c0_208 = arith.constant 0 : index
    %c0_209 = arith.constant 0 : index
    %c0_210 = arith.constant 0 : index
    %c0_211 = arith.constant 0 : index
    %c0_212 = arith.constant 0 : index
    %204 = vector.load %arg8[%c0_208, %c0_209, %c0_210, %c0_211, %c0_212] : memref<2x2x8x8x20xf32, #tpu.memory_space<vmem>>, vector<1x1x8x8x20xf32>
    %205 = vector.shape_cast %204 : vector<1x1x8x8x20xf32> to vector<8x8x20xf32>
    %206 = vector.shape_cast %203 : vector<8x8x20xf32> to vector<1x1x8x8x20xf32>
    tpu.vector_store %arg8[%c0_208, %c0_209, %c0_210, %c0_211, %c0_212], %206 {strides = array<i32>} : memref<2x2x8x8x20xf32, #tpu.memory_space<vmem>>, vector<1x1x8x8x20xf32>,
    %c0_213 = arith.constant 0 : index
    %c2_214 = arith.constant 2 : index
    %c0_215 = arith.constant 0 : index
    %c0_216 = arith.constant 0 : index
    %c0_217 = arith.constant 0 : index
    %207 = vector.load %arg7[%c0_213, %c2_214, %c0_215, %c0_216, %c0_217] : memref<4x4x8x8x20xf32, #tpu.memory_space<vmem>>, vector<1x1x8x7x20xf32>
    %208 = vector.shape_cast %207 : vector<1x1x8x7x20xf32> to vector<8x7x20xf32>
    %c0_218 = arith.constant 0 : index
    %c3_219 = arith.constant 3 : index
    %c0_220 = arith.constant 0 : index
    %c0_221 = arith.constant 0 : index
    %c0_222 = arith.constant 0 : index
    %209 = vector.load %arg7[%c0_218, %c3_219, %c0_220, %c0_221, %c0_222] : memref<4x4x8x8x20xf32, #tpu.memory_space<vmem>>, vector<1x1x8x7x20xf32>
    %210 = vector.shape_cast %209 : vector<1x1x8x7x20xf32> to vector<8x7x20xf32>
    %211 = arith.maximumf %208, %210 : vector<8x7x20xf32>
    %c0_223 = arith.constant 0 : index
    %c0_224 = arith.constant 0 : index
    %c0_225 = arith.constant 0 : index
    %c1_226 = arith.constant 1 : index
    %c0_227 = arith.constant 0 : index
    %212 = vector.load %arg7[%c0_223, %c0_224, %c0_225, %c1_226, %c0_227] : memref<4x4x8x8x20xf32, #tpu.memory_space<vmem>>, vector<1x1x8x7x20xf32>
    %213 = vector.shape_cast %212 : vector<1x1x8x7x20xf32> to vector<8x7x20xf32>
    %214 = arith.maximumf %211, %213 : vector<8x7x20xf32>
    %c1_228 = arith.constant 1 : index
    %c2_229 = arith.constant 2 : index
    %c0_230 = arith.constant 0 : index
    %c0_231 = arith.constant 0 : index
    %c0_232 = arith.constant 0 : index
    %215 = vector.load %arg7[%c1_228, %c2_229, %c0_230, %c0_231, %c0_232] : memref<4x4x8x8x20xf32, #tpu.memory_space<vmem>>, vector<1x1x8x7x20xf32>
    %216 = vector.shape_cast %215 : vector<1x1x8x7x20xf32> to vector<8x7x20xf32>
    %217 = arith.maximumf %214, %216 : vector<8x7x20xf32>
    %c1_233 = arith.constant 1 : index
    %c3_234 = arith.constant 3 : index
    %c0_235 = arith.constant 0 : index
    %c0_236 = arith.constant 0 : index
    %c0_237 = arith.constant 0 : index
    %218 = vector.load %arg7[%c1_233, %c3_234, %c0_235, %c0_236, %c0_237] : memref<4x4x8x8x20xf32, #tpu.memory_space<vmem>>, vector<1x1x8x7x20xf32>
    %219 = vector.shape_cast %218 : vector<1x1x8x7x20xf32> to vector<8x7x20xf32>
    %220 = arith.maximumf %217, %219 : vector<8x7x20xf32>
    %c1_238 = arith.constant 1 : index
    %c0_239 = arith.constant 0 : index
    %c0_240 = arith.constant 0 : index
    %c1_241 = arith.constant 1 : index
    %c0_242 = arith.constant 0 : index
    %221 = vector.load %arg7[%c1_238, %c0_239, %c0_240, %c1_241, %c0_242] : memref<4x4x8x8x20xf32, #tpu.memory_space<vmem>>, vector<1x1x8x7x20xf32>
    %222 = vector.shape_cast %221 : vector<1x1x8x7x20xf32> to vector<8x7x20xf32>
    %223 = arith.maximumf %220, %222 : vector<8x7x20xf32>
    %c2_243 = arith.constant 2 : index
    %c2_244 = arith.constant 2 : index
    %c0_245 = arith.constant 0 : index
    %c0_246 = arith.constant 0 : index
    %c0_247 = arith.constant 0 : index
    %224 = vector.load %arg7[%c2_243, %c2_244, %c0_245, %c0_246, %c0_247] : memref<4x4x8x8x20xf32, #tpu.memory_space<vmem>>, vector<1x1x8x7x20xf32>
    %225 = vector.shape_cast %224 : vector<1x1x8x7x20xf32> to vector<8x7x20xf32>
    %226 = arith.maximumf %223, %225 : vector<8x7x20xf32>
    %c2_248 = arith.constant 2 : index
    %c3_249 = arith.constant 3 : index
    %c0_250 = arith.constant 0 : index
    %c0_251 = arith.constant 0 : index
    %c0_252 = arith.constant 0 : index
    %227 = vector.load %arg7[%c2_248, %c3_249, %c0_250, %c0_251, %c0_252] : memref<4x4x8x8x20xf32, #tpu.memory_space<vmem>>, vector<1x1x8x7x20xf32>
    %228 = vector.shape_cast %227 : vector<1x1x8x7x20xf32> to vector<8x7x20xf32>
    %229 = arith.maximumf %226, %228 : vector<8x7x20xf32>
    %c2_253 = arith.constant 2 : index
    %c0_254 = arith.constant 0 : index
    %c0_255 = arith.constant 0 : index
    %c1_256 = arith.constant 1 : index
    %c0_257 = arith.constant 0 : index
    %230 = vector.load %arg7[%c2_253, %c0_254, %c0_255, %c1_256, %c0_257] : memref<4x4x8x8x20xf32, #tpu.memory_space<vmem>>, vector<1x1x8x7x20xf32>
    %231 = vector.shape_cast %230 : vector<1x1x8x7x20xf32> to vector<8x7x20xf32>
    %232 = arith.maximumf %229, %231 : vector<8x7x20xf32>
    %cst_258 = arith.constant 0.000000e+00 : f32
    %233 = vector.broadcast %cst_258 : f32 to vector<8x8x20xf32>
    %c0_259 = arith.constant 0 : index
    %c1_260 = arith.constant 1 : index
    %c0_261 = arith.constant 0 : index
    %c0_262 = arith.constant 0 : index
    %c0_263 = arith.constant 0 : index
    %234 = vector.load %arg8[%c0_259, %c1_260, %c0_261, %c0_262, %c0_263] : memref<2x2x8x8x20xf32, #tpu.memory_space<vmem>>, vector<1x1x8x8x20xf32>
    %235 = vector.shape_cast %234 : vector<1x1x8x8x20xf32> to vector<8x8x20xf32>
    %236 = vector.shape_cast %233 : vector<8x8x20xf32> to vector<1x1x8x8x20xf32>
    tpu.vector_store %arg8[%c0_259, %c1_260, %c0_261, %c0_262, %c0_263], %236 {strides = array<i32>} : memref<2x2x8x8x20xf32, #tpu.memory_space<vmem>>, vector<1x1x8x8x20xf32>,
    %c0_264 = arith.constant 0 : index
    %c1_265 = arith.constant 1 : index
    %c0_266 = arith.constant 0 : index
    %c0_267 = arith.constant 0 : index
    %c0_268 = arith.constant 0 : index
    %237 = vector.load %arg8[%c0_264, %c1_265, %c0_266, %c0_267, %c0_268] : memref<2x2x8x8x20xf32, #tpu.memory_space<vmem>>, vector<1x1x8x7x20xf32>
    %238 = vector.shape_cast %237 : vector<1x1x8x7x20xf32> to vector<8x7x20xf32>
    %239 = vector.shape_cast %232 : vector<8x7x20xf32> to vector<1x1x8x7x20xf32>
    tpu.vector_store %arg8[%c0_264, %c1_265, %c0_266, %c0_267, %c0_268], %239 {strides = array<i32>} : memref<2x2x8x8x20xf32, #tpu.memory_space<vmem>>, vector<1x1x8x7x20xf32>,
    %c2_269 = arith.constant 2 : index
    %c0_270 = arith.constant 0 : index
    %c0_271 = arith.constant 0 : index
    %c0_272 = arith.constant 0 : index
    %c0_273 = arith.constant 0 : index
    %240 = vector.load %arg7[%c2_269, %c0_270, %c0_271, %c0_272, %c0_273] : memref<4x4x8x8x20xf32, #tpu.memory_space<vmem>>, vector<1x1x7x8x20xf32>
    %241 = vector.shape_cast %240 : vector<1x1x7x8x20xf32> to vector<7x8x20xf32>
    %c2_274 = arith.constant 2 : index
    %c1_275 = arith.constant 1 : index
    %c0_276 = arith.constant 0 : index
    %c0_277 = arith.constant 0 : index
    %c0_278 = arith.constant 0 : index
    %242 = vector.load %arg7[%c2_274, %c1_275, %c0_276, %c0_277, %c0_278] : memref<4x4x8x8x20xf32, #tpu.memory_space<vmem>>, vector<1x1x7x8x20xf32>
    %243 = vector.shape_cast %242 : vector<1x1x7x8x20xf32> to vector<7x8x20xf32>
    %244 = arith.maximumf %241, %243 : vector<7x8x20xf32>
    %c2_279 = arith.constant 2 : index
    %c2_280 = arith.constant 2 : index
    %c0_281 = arith.constant 0 : index
    %c0_282 = arith.constant 0 : index
    %c0_283 = arith.constant 0 : index
    %245 = vector.load %arg7[%c2_279, %c2_280, %c0_281, %c0_282, %c0_283] : memref<4x4x8x8x20xf32, #tpu.memory_space<vmem>>, vector<1x1x7x8x20xf32>
    %246 = vector.shape_cast %245 : vector<1x1x7x8x20xf32> to vector<7x8x20xf32>
    %247 = arith.maximumf %244, %246 : vector<7x8x20xf32>
    %c3_284 = arith.constant 3 : index
    %c0_285 = arith.constant 0 : index
    %c0_286 = arith.constant 0 : index
    %c0_287 = arith.constant 0 : index
    %c0_288 = arith.constant 0 : index
    %248 = vector.load %arg7[%c3_284, %c0_285, %c0_286, %c0_287, %c0_288] : memref<4x4x8x8x20xf32, #tpu.memory_space<vmem>>, vector<1x1x7x8x20xf32>
    %249 = vector.shape_cast %248 : vector<1x1x7x8x20xf32> to vector<7x8x20xf32>
    %250 = arith.maximumf %247, %249 : vector<7x8x20xf32>
    %c3_289 = arith.constant 3 : index
    %c1_290 = arith.constant 1 : index
    %c0_291 = arith.constant 0 : index
    %c0_292 = arith.constant 0 : index
    %c0_293 = arith.constant 0 : index
    %251 = vector.load %arg7[%c3_289, %c1_290, %c0_291, %c0_292, %c0_293] : memref<4x4x8x8x20xf32, #tpu.memory_space<vmem>>, vector<1x1x7x8x20xf32>
    %252 = vector.shape_cast %251 : vector<1x1x7x8x20xf32> to vector<7x8x20xf32>
    %253 = arith.maximumf %250, %252 : vector<7x8x20xf32>
    %c3_294 = arith.constant 3 : index
    %c2_295 = arith.constant 2 : index
    %c0_296 = arith.constant 0 : index
    %c0_297 = arith.constant 0 : index
    %c0_298 = arith.constant 0 : index
    %254 = vector.load %arg7[%c3_294, %c2_295, %c0_296, %c0_297, %c0_298] : memref<4x4x8x8x20xf32, #tpu.memory_space<vmem>>, vector<1x1x7x8x20xf32>
    %255 = vector.shape_cast %254 : vector<1x1x7x8x20xf32> to vector<7x8x20xf32>
    %256 = arith.maximumf %253, %255 : vector<7x8x20xf32>
    %c0_299 = arith.constant 0 : index
    %c0_300 = arith.constant 0 : index
    %c1_301 = arith.constant 1 : index
    %c0_302 = arith.constant 0 : index
    %c0_303 = arith.constant 0 : index
    %257 = vector.load %arg7[%c0_299, %c0_300, %c1_301, %c0_302, %c0_303] : memref<4x4x8x8x20xf32, #tpu.memory_space<vmem>>, vector<1x1x7x8x20xf32>
    %258 = vector.shape_cast %257 : vector<1x1x7x8x20xf32> to vector<7x8x20xf32>
    %259 = arith.maximumf %256, %258 : vector<7x8x20xf32>
    %c0_304 = arith.constant 0 : index
    %c1_305 = arith.constant 1 : index
    %c1_306 = arith.constant 1 : index
    %c0_307 = arith.constant 0 : index
    %c0_308 = arith.constant 0 : index
    %260 = vector.load %arg7[%c0_304, %c1_305, %c1_306, %c0_307, %c0_308] : memref<4x4x8x8x20xf32, #tpu.memory_space<vmem>>, vector<1x1x7x8x20xf32>
    %261 = vector.shape_cast %260 : vector<1x1x7x8x20xf32> to vector<7x8x20xf32>
    %262 = arith.maximumf %259, %261 : vector<7x8x20xf32>
    %c0_309 = arith.constant 0 : index
    %c2_310 = arith.constant 2 : index
    %c1_311 = arith.constant 1 : index
    %c0_312 = arith.constant 0 : index
    %c0_313 = arith.constant 0 : index
    %263 = vector.load %arg7[%c0_309, %c2_310, %c1_311, %c0_312, %c0_313] : memref<4x4x8x8x20xf32, #tpu.memory_space<vmem>>, vector<1x1x7x8x20xf32>
    %264 = vector.shape_cast %263 : vector<1x1x7x8x20xf32> to vector<7x8x20xf32>
    %265 = arith.maximumf %262, %264 : vector<7x8x20xf32>
    %cst_314 = arith.constant 0.000000e+00 : f32
    %266 = vector.broadcast %cst_314 : f32 to vector<8x8x20xf32>
    %c1_315 = arith.constant 1 : index
    %c0_316 = arith.constant 0 : index
    %c0_317 = arith.constant 0 : index
    %c0_318 = arith.constant 0 : index
    %c0_319 = arith.constant 0 : index
    %267 = vector.load %arg8[%c1_315, %c0_316, %c0_317, %c0_318, %c0_319] : memref<2x2x8x8x20xf32, #tpu.memory_space<vmem>>, vector<1x1x8x8x20xf32>
    %268 = vector.shape_cast %267 : vector<1x1x8x8x20xf32> to vector<8x8x20xf32>
    %269 = vector.shape_cast %266 : vector<8x8x20xf32> to vector<1x1x8x8x20xf32>
    tpu.vector_store %arg8[%c1_315, %c0_316, %c0_317, %c0_318, %c0_319], %269 {strides = array<i32>} : memref<2x2x8x8x20xf32, #tpu.memory_space<vmem>>, vector<1x1x8x8x20xf32>,
    %c1_320 = arith.constant 1 : index
    %c0_321 = arith.constant 0 : index
    %c0_322 = arith.constant 0 : index
    %c0_323 = arith.constant 0 : index
    %c0_324 = arith.constant 0 : index
    %270 = vector.load %arg8[%c1_320, %c0_321, %c0_322, %c0_323, %c0_324] : memref<2x2x8x8x20xf32, #tpu.memory_space<vmem>>, vector<1x1x7x8x20xf32>
    %271 = vector.shape_cast %270 : vector<1x1x7x8x20xf32> to vector<7x8x20xf32>
    %272 = vector.shape_cast %265 : vector<7x8x20xf32> to vector<1x1x7x8x20xf32>
    tpu.vector_store %arg8[%c1_320, %c0_321, %c0_322, %c0_323, %c0_324], %272 {strides = array<i32>} : memref<2x2x8x8x20xf32, #tpu.memory_space<vmem>>, vector<1x1x7x8x20xf32>,
    %c2_325 = arith.constant 2 : index
    %c2_326 = arith.constant 2 : index
    %c0_327 = arith.constant 0 : index
    %c0_328 = arith.constant 0 : index
    %c0_329 = arith.constant 0 : index
    %273 = vector.load %arg7[%c2_325, %c2_326, %c0_327, %c0_328, %c0_329] : memref<4x4x8x8x20xf32, #tpu.memory_space<vmem>>, vector<1x1x7x7x20xf32>
    %274 = vector.shape_cast %273 : vector<1x1x7x7x20xf32> to vector<7x7x20xf32>
    %c2_330 = arith.constant 2 : index
    %c3_331 = arith.constant 3 : index
    %c0_332 = arith.constant 0 : index
    %c0_333 = arith.constant 0 : index
    %c0_334 = arith.constant 0 : index
    %275 = vector.load %arg7[%c2_330, %c3_331, %c0_332, %c0_333, %c0_334] : memref<4x4x8x8x20xf32, #tpu.memory_space<vmem>>, vector<1x1x7x7x20xf32>
    %276 = vector.shape_cast %275 : vector<1x1x7x7x20xf32> to vector<7x7x20xf32>
    %277 = arith.maximumf %274, %276 : vector<7x7x20xf32>
    %c2_335 = arith.constant 2 : index
    %c0_336 = arith.constant 0 : index
    %c0_337 = arith.constant 0 : index
    %c1_338 = arith.constant 1 : index
    %c0_339 = arith.constant 0 : index
    %278 = vector.load %arg7[%c2_335, %c0_336, %c0_337, %c1_338, %c0_339] : memref<4x4x8x8x20xf32, #tpu.memory_space<vmem>>, vector<1x1x7x7x20xf32>
    %279 = vector.shape_cast %278 : vector<1x1x7x7x20xf32> to vector<7x7x20xf32>
    %280 = arith.maximumf %277, %279 : vector<7x7x20xf32>
    %c3_340 = arith.constant 3 : index
    %c2_341 = arith.constant 2 : index
    %c0_342 = arith.constant 0 : index
    %c0_343 = arith.constant 0 : index
    %c0_344 = arith.constant 0 : index
    %281 = vector.load %arg7[%c3_340, %c2_341, %c0_342, %c0_343, %c0_344] : memref<4x4x8x8x20xf32, #tpu.memory_space<vmem>>, vector<1x1x7x7x20xf32>
    %282 = vector.shape_cast %281 : vector<1x1x7x7x20xf32> to vector<7x7x20xf32>
    %283 = arith.maximumf %280, %282 : vector<7x7x20xf32>
    %c3_345 = arith.constant 3 : index
    %c3_346 = arith.constant 3 : index
    %c0_347 = arith.constant 0 : index
    %c0_348 = arith.constant 0 : index
    %c0_349 = arith.constant 0 : index
    %284 = vector.load %arg7[%c3_345, %c3_346, %c0_347, %c0_348, %c0_349] : memref<4x4x8x8x20xf32, #tpu.memory_space<vmem>>, vector<1x1x7x7x20xf32>
    %285 = vector.shape_cast %284 : vector<1x1x7x7x20xf32> to vector<7x7x20xf32>
    %286 = arith.maximumf %283, %285 : vector<7x7x20xf32>
    %c3_350 = arith.constant 3 : index
    %c0_351 = arith.constant 0 : index
    %c0_352 = arith.constant 0 : index
    %c1_353 = arith.constant 1 : index
    %c0_354 = arith.constant 0 : index
    %287 = vector.load %arg7[%c3_350, %c0_351, %c0_352, %c1_353, %c0_354] : memref<4x4x8x8x20xf32, #tpu.memory_space<vmem>>, vector<1x1x7x7x20xf32>
    %288 = vector.shape_cast %287 : vector<1x1x7x7x20xf32> to vector<7x7x20xf32>
    %289 = arith.maximumf %286, %288 : vector<7x7x20xf32>
    %c0_355 = arith.constant 0 : index
    %c2_356 = arith.constant 2 : index
    %c1_357 = arith.constant 1 : index
    %c0_358 = arith.constant 0 : index
    %c0_359 = arith.constant 0 : index
    %290 = vector.load %arg7[%c0_355, %c2_356, %c1_357, %c0_358, %c0_359] : memref<4x4x8x8x20xf32, #tpu.memory_space<vmem>>, vector<1x1x7x7x20xf32>
    %291 = vector.shape_cast %290 : vector<1x1x7x7x20xf32> to vector<7x7x20xf32>
    %292 = arith.maximumf %289, %291 : vector<7x7x20xf32>
    %c0_360 = arith.constant 0 : index
    %c3_361 = arith.constant 3 : index
    %c1_362 = arith.constant 1 : index
    %c0_363 = arith.constant 0 : index
    %c0_364 = arith.constant 0 : index
    %293 = vector.load %arg7[%c0_360, %c3_361, %c1_362, %c0_363, %c0_364] : memref<4x4x8x8x20xf32, #tpu.memory_space<vmem>>, vector<1x1x7x7x20xf32>
    %294 = vector.shape_cast %293 : vector<1x1x7x7x20xf32> to vector<7x7x20xf32>
    %295 = arith.maximumf %292, %294 : vector<7x7x20xf32>
    %c0_365 = arith.constant 0 : index
    %c0_366 = arith.constant 0 : index
    %c1_367 = arith.constant 1 : index
    %c1_368 = arith.constant 1 : index
    %c0_369 = arith.constant 0 : index
    %296 = vector.load %arg7[%c0_365, %c0_366, %c1_367, %c1_368, %c0_369] : memref<4x4x8x8x20xf32, #tpu.memory_space<vmem>>, vector<1x1x7x7x20xf32>
    %297 = vector.shape_cast %296 : vector<1x1x7x7x20xf32> to vector<7x7x20xf32>
    %298 = arith.maximumf %295, %297 : vector<7x7x20xf32>
    %cst_370 = arith.constant 0.000000e+00 : f32
    %299 = vector.broadcast %cst_370 : f32 to vector<8x8x20xf32>
    %c1_371 = arith.constant 1 : index
    %c1_372 = arith.constant 1 : index
    %c0_373 = arith.constant 0 : index
    %c0_374 = arith.constant 0 : index
    %c0_375 = arith.constant 0 : index
    %300 = vector.load %arg8[%c1_371, %c1_372, %c0_373, %c0_374, %c0_375] : memref<2x2x8x8x20xf32, #tpu.memory_space<vmem>>, vector<1x1x8x8x20xf32>
    %301 = vector.shape_cast %300 : vector<1x1x8x8x20xf32> to vector<8x8x20xf32>
    %302 = vector.shape_cast %299 : vector<8x8x20xf32> to vector<1x1x8x8x20xf32>
    tpu.vector_store %arg8[%c1_371, %c1_372, %c0_373, %c0_374, %c0_375], %302 {strides = array<i32>} : memref<2x2x8x8x20xf32, #tpu.memory_space<vmem>>, vector<1x1x8x8x20xf32>,
    %c1_376 = arith.constant 1 : index
    %c1_377 = arith.constant 1 : index
    %c0_378 = arith.constant 0 : index
    %c0_379 = arith.constant 0 : index
    %c0_380 = arith.constant 0 : index
    %303 = vector.load %arg8[%c1_376, %c1_377, %c0_378, %c0_379, %c0_380] : memref<2x2x8x8x20xf32, #tpu.memory_space<vmem>>, vector<1x1x7x7x20xf32>
    %304 = vector.shape_cast %303 : vector<1x1x7x7x20xf32> to vector<7x7x20xf32>
    %305 = vector.shape_cast %298 : vector<7x7x20xf32> to vector<1x1x7x7x20xf32>
    tpu.vector_store %arg8[%c1_376, %c1_377, %c0_378, %c0_379, %c0_380], %305 {strides = array<i32>} : memref<2x2x8x8x20xf32, #tpu.memory_space<vmem>>, vector<1x1x7x7x20xf32>,
    %cst_381 = arith.constant 0.000000e+00 : f32
    %306 = vector.broadcast %cst_381 : f32 to vector<6x6x40xf32>
    %c0_382 = arith.constant 0 : index
    %c0_383 = arith.constant 0 : index
    %c0_384 = arith.constant 0 : index
    %c0_385 = arith.constant 0 : index
    %c0_386 = arith.constant 0 : index
    %307 = vector.load %arg8[%c0_382, %c0_383, %c0_384, %c0_385, %c0_386] : memref<2x2x8x8x20xf32, #tpu.memory_space<vmem>>, vector<1x1x8x8x20xf32>
    %308 = vector.shape_cast %307 : vector<1x1x8x8x20xf32> to vector<8x8x20xf32>
    %309 = vector.shape_cast %308 : vector<8x8x20xf32> to vector<64x20xf32>
    %310 = arith.truncf %309 : vector<64x20xf32> to vector<64x20xbf16>
    %c0_387 = arith.constant 0 : index
    %c0_388 = arith.constant 0 : index
    %c0_389 = arith.constant 0 : index
    %311 = vector.load %arg4[%c0_387, %c0_388, %c0_389] : memref<16x20x40xbf16, #tpu.memory_space<vmem>>, vector<1x20x40xbf16>
    %312 = vector.shape_cast %311 : vector<1x20x40xbf16> to vector<20x40xbf16>
    %cst_390 = arith.constant dense<0.000000e+00> : vector<64x40xf32>
    %313 = tpu.matmul %310, %312, %cst_390 {dimension_numbers = #tpu.dot_dimension_numbers<[1], [0], [0], [1], [0, 0, 1, 1], [], []>} : vector<64x20xbf16>, vector<20x40xbf16>, vector<64x40xf32> -> vector<64x40xf32>
    %314 = vector.shape_cast %313 : vector<64x40xf32> to vector<8x8x40xf32>
    %315 = vector.extract_strided_slice %314 {offsets = [0, 0, 0], sizes = [6, 6, 40], strides = [1, 1, 1]} : vector<8x8x40xf32> to vector<6x6x40xf32>
    %316 = arith.addf %306, %315 : vector<6x6x40xf32>
    %c0_391 = arith.constant 0 : index
    %c1_392 = arith.constant 1 : index
    %c0_393 = arith.constant 0 : index
    %c0_394 = arith.constant 0 : index
    %c0_395 = arith.constant 0 : index
    %317 = vector.load %arg8[%c0_391, %c1_392, %c0_393, %c0_394, %c0_395] : memref<2x2x8x8x20xf32, #tpu.memory_space<vmem>>, vector<1x1x8x8x20xf32>
    %318 = vector.shape_cast %317 : vector<1x1x8x8x20xf32> to vector<8x8x20xf32>
    %319 = vector.shape_cast %318 : vector<8x8x20xf32> to vector<64x20xf32>
    %320 = arith.truncf %319 : vector<64x20xf32> to vector<64x20xbf16>
    %c1_396 = arith.constant 1 : index
    %c0_397 = arith.constant 0 : index
    %c0_398 = arith.constant 0 : index
    %321 = vector.load %arg4[%c1_396, %c0_397, %c0_398] : memref<16x20x40xbf16, #tpu.memory_space<vmem>>, vector<1x20x40xbf16>
    %322 = vector.shape_cast %321 : vector<1x20x40xbf16> to vector<20x40xbf16>
    %cst_399 = arith.constant dense<0.000000e+00> : vector<64x40xf32>
    %323 = tpu.matmul %320, %322, %cst_399 {dimension_numbers = #tpu.dot_dimension_numbers<[1], [0], [0], [1], [0, 0, 1, 1], [], []>} : vector<64x20xbf16>, vector<20x40xbf16>, vector<64x40xf32> -> vector<64x40xf32>
    %324 = vector.shape_cast %323 : vector<64x40xf32> to vector<8x8x40xf32>
    %325 = vector.extract_strided_slice %324 {offsets = [0, 0, 0], sizes = [6, 6, 40], strides = [1, 1, 1]} : vector<8x8x40xf32> to vector<6x6x40xf32>
    %326 = arith.addf %316, %325 : vector<6x6x40xf32>
    %c0_400 = arith.constant 0 : index
    %c0_401 = arith.constant 0 : index
    %c0_402 = arith.constant 0 : index
    %c0_403 = arith.constant 0 : index
    %c0_404 = arith.constant 0 : index
    %327 = vector.load %arg8[%c0_400, %c0_401, %c0_402, %c0_403, %c0_404] : memref<2x2x8x8x20xf32, #tpu.memory_space<vmem>>, vector<1x1x8x8x20xf32>
    %328 = vector.shape_cast %327 : vector<1x1x8x8x20xf32> to vector<8x8x20xf32>
    %329 = vector.shape_cast %328 : vector<8x8x20xf32> to vector<64x20xf32>
    %330 = arith.truncf %329 : vector<64x20xf32> to vector<64x20xbf16>
    %c2_405 = arith.constant 2 : index
    %c0_406 = arith.constant 0 : index
    %c0_407 = arith.constant 0 : index
    %331 = vector.load %arg4[%c2_405, %c0_406, %c0_407] : memref<16x20x40xbf16, #tpu.memory_space<vmem>>, vector<1x20x40xbf16>
    %332 = vector.shape_cast %331 : vector<1x20x40xbf16> to vector<20x40xbf16>
    %cst_408 = arith.constant dense<0.000000e+00> : vector<64x40xf32>
    %333 = tpu.matmul %330, %332, %cst_408 {dimension_numbers = #tpu.dot_dimension_numbers<[1], [0], [0], [1], [0, 0, 1, 1], [], []>} : vector<64x20xbf16>, vector<20x40xbf16>, vector<64x40xf32> -> vector<64x40xf32>
    %334 = vector.shape_cast %333 : vector<64x40xf32> to vector<8x8x40xf32>
    %335 = vector.extract_strided_slice %334 {offsets = [0, 1, 0], sizes = [6, 6, 40], strides = [1, 1, 1]} : vector<8x8x40xf32> to vector<6x6x40xf32>
    %336 = arith.addf %326, %335 : vector<6x6x40xf32>
    %c0_409 = arith.constant 0 : index
    %c1_410 = arith.constant 1 : index
    %c0_411 = arith.constant 0 : index
    %c0_412 = arith.constant 0 : index
    %c0_413 = arith.constant 0 : index
    %337 = vector.load %arg8[%c0_409, %c1_410, %c0_411, %c0_412, %c0_413] : memref<2x2x8x8x20xf32, #tpu.memory_space<vmem>>, vector<1x1x8x8x20xf32>
    %338 = vector.shape_cast %337 : vector<1x1x8x8x20xf32> to vector<8x8x20xf32>
    %339 = vector.shape_cast %338 : vector<8x8x20xf32> to vector<64x20xf32>
    %340 = arith.truncf %339 : vector<64x20xf32> to vector<64x20xbf16>
    %c3_414 = arith.constant 3 : index
    %c0_415 = arith.constant 0 : index
    %c0_416 = arith.constant 0 : index
    %341 = vector.load %arg4[%c3_414, %c0_415, %c0_416] : memref<16x20x40xbf16, #tpu.memory_space<vmem>>, vector<1x20x40xbf16>
    %342 = vector.shape_cast %341 : vector<1x20x40xbf16> to vector<20x40xbf16>
    %cst_417 = arith.constant dense<0.000000e+00> : vector<64x40xf32>
    %343 = tpu.matmul %340, %342, %cst_417 {dimension_numbers = #tpu.dot_dimension_numbers<[1], [0], [0], [1], [0, 0, 1, 1], [], []>} : vector<64x20xbf16>, vector<20x40xbf16>, vector<64x40xf32> -> vector<64x40xf32>
    %344 = vector.shape_cast %343 : vector<64x40xf32> to vector<8x8x40xf32>
    %345 = vector.extract_strided_slice %344 {offsets = [0, 1, 0], sizes = [6, 6, 40], strides = [1, 1, 1]} : vector<8x8x40xf32> to vector<6x6x40xf32>
    %346 = arith.addf %336, %345 : vector<6x6x40xf32>
    %c1_418 = arith.constant 1 : index
    %c0_419 = arith.constant 0 : index
    %c0_420 = arith.constant 0 : index
    %c0_421 = arith.constant 0 : index
    %c0_422 = arith.constant 0 : index
    %347 = vector.load %arg8[%c1_418, %c0_419, %c0_420, %c0_421, %c0_422] : memref<2x2x8x8x20xf32, #tpu.memory_space<vmem>>, vector<1x1x8x8x20xf32>
    %348 = vector.shape_cast %347 : vector<1x1x8x8x20xf32> to vector<8x8x20xf32>
    %349 = vector.shape_cast %348 : vector<8x8x20xf32> to vector<64x20xf32>
    %350 = arith.truncf %349 : vector<64x20xf32> to vector<64x20xbf16>
    %c4_423 = arith.constant 4 : index
    %c0_424 = arith.constant 0 : index
    %c0_425 = arith.constant 0 : index
    %351 = vector.load %arg4[%c4_423, %c0_424, %c0_425] : memref<16x20x40xbf16, #tpu.memory_space<vmem>>, vector<1x20x40xbf16>
    %352 = vector.shape_cast %351 : vector<1x20x40xbf16> to vector<20x40xbf16>
    %cst_426 = arith.constant dense<0.000000e+00> : vector<64x40xf32>
    %353 = tpu.matmul %350, %352, %cst_426 {dimension_numbers = #tpu.dot_dimension_numbers<[1], [0], [0], [1], [0, 0, 1, 1], [], []>} : vector<64x20xbf16>, vector<20x40xbf16>, vector<64x40xf32> -> vector<64x40xf32>
    %354 = vector.shape_cast %353 : vector<64x40xf32> to vector<8x8x40xf32>
    %355 = vector.extract_strided_slice %354 {offsets = [0, 0, 0], sizes = [6, 6, 40], strides = [1, 1, 1]} : vector<8x8x40xf32> to vector<6x6x40xf32>
    %356 = arith.addf %346, %355 : vector<6x6x40xf32>
    %c1_427 = arith.constant 1 : index
    %c1_428 = arith.constant 1 : index
    %c0_429 = arith.constant 0 : index
    %c0_430 = arith.constant 0 : index
    %c0_431 = arith.constant 0 : index
    %357 = vector.load %arg8[%c1_427, %c1_428, %c0_429, %c0_430, %c0_431] : memref<2x2x8x8x20xf32, #tpu.memory_space<vmem>>, vector<1x1x8x8x20xf32>
    %358 = vector.shape_cast %357 : vector<1x1x8x8x20xf32> to vector<8x8x20xf32>
    %359 = vector.shape_cast %358 : vector<8x8x20xf32> to vector<64x20xf32>
    %360 = arith.truncf %359 : vector<64x20xf32> to vector<64x20xbf16>
    %c5_432 = arith.constant 5 : index
    %c0_433 = arith.constant 0 : index
    %c0_434 = arith.constant 0 : index
    %361 = vector.load %arg4[%c5_432, %c0_433, %c0_434] : memref<16x20x40xbf16, #tpu.memory_space<vmem>>, vector<1x20x40xbf16>
    %362 = vector.shape_cast %361 : vector<1x20x40xbf16> to vector<20x40xbf16>
    %cst_435 = arith.constant dense<0.000000e+00> : vector<64x40xf32>
    %363 = tpu.matmul %360, %362, %cst_435 {dimension_numbers = #tpu.dot_dimension_numbers<[1], [0], [0], [1], [0, 0, 1, 1], [], []>} : vector<64x20xbf16>, vector<20x40xbf16>, vector<64x40xf32> -> vector<64x40xf32>
    %364 = vector.shape_cast %363 : vector<64x40xf32> to vector<8x8x40xf32>
    %365 = vector.extract_strided_slice %364 {offsets = [0, 0, 0], sizes = [6, 6, 40], strides = [1, 1, 1]} : vector<8x8x40xf32> to vector<6x6x40xf32>
    %366 = arith.addf %356, %365 : vector<6x6x40xf32>
    %c1_436 = arith.constant 1 : index
    %c0_437 = arith.constant 0 : index
    %c0_438 = arith.constant 0 : index
    %c0_439 = arith.constant 0 : index
    %c0_440 = arith.constant 0 : index
    %367 = vector.load %arg8[%c1_436, %c0_437, %c0_438, %c0_439, %c0_440] : memref<2x2x8x8x20xf32, #tpu.memory_space<vmem>>, vector<1x1x8x8x20xf32>
    %368 = vector.shape_cast %367 : vector<1x1x8x8x20xf32> to vector<8x8x20xf32>
    %369 = vector.shape_cast %368 : vector<8x8x20xf32> to vector<64x20xf32>
    %370 = arith.truncf %369 : vector<64x20xf32> to vector<64x20xbf16>
    %c6_441 = arith.constant 6 : index
    %c0_442 = arith.constant 0 : index
    %c0_443 = arith.constant 0 : index
    %371 = vector.load %arg4[%c6_441, %c0_442, %c0_443] : memref<16x20x40xbf16, #tpu.memory_space<vmem>>, vector<1x20x40xbf16>
    %372 = vector.shape_cast %371 : vector<1x20x40xbf16> to vector<20x40xbf16>
    %cst_444 = arith.constant dense<0.000000e+00> : vector<64x40xf32>
    %373 = tpu.matmul %370, %372, %cst_444 {dimension_numbers = #tpu.dot_dimension_numbers<[1], [0], [0], [1], [0, 0, 1, 1], [], []>} : vector<64x20xbf16>, vector<20x40xbf16>, vector<64x40xf32> -> vector<64x40xf32>
    %374 = vector.shape_cast %373 : vector<64x40xf32> to vector<8x8x40xf32>
    %375 = vector.extract_strided_slice %374 {offsets = [0, 1, 0], sizes = [6, 6, 40], strides = [1, 1, 1]} : vector<8x8x40xf32> to vector<6x6x40xf32>
    %376 = arith.addf %366, %375 : vector<6x6x40xf32>
    %c1_445 = arith.constant 1 : index
    %c1_446 = arith.constant 1 : index
    %c0_447 = arith.constant 0 : index
    %c0_448 = arith.constant 0 : index
    %c0_449 = arith.constant 0 : index
    %377 = vector.load %arg8[%c1_445, %c1_446, %c0_447, %c0_448, %c0_449] : memref<2x2x8x8x20xf32, #tpu.memory_space<vmem>>, vector<1x1x8x8x20xf32>
    %378 = vector.shape_cast %377 : vector<1x1x8x8x20xf32> to vector<8x8x20xf32>
    %379 = vector.shape_cast %378 : vector<8x8x20xf32> to vector<64x20xf32>
    %380 = arith.truncf %379 : vector<64x20xf32> to vector<64x20xbf16>
    %c7_450 = arith.constant 7 : index
    %c0_451 = arith.constant 0 : index
    %c0_452 = arith.constant 0 : index
    %381 = vector.load %arg4[%c7_450, %c0_451, %c0_452] : memref<16x20x40xbf16, #tpu.memory_space<vmem>>, vector<1x20x40xbf16>
    %382 = vector.shape_cast %381 : vector<1x20x40xbf16> to vector<20x40xbf16>
    %cst_453 = arith.constant dense<0.000000e+00> : vector<64x40xf32>
    %383 = tpu.matmul %380, %382, %cst_453 {dimension_numbers = #tpu.dot_dimension_numbers<[1], [0], [0], [1], [0, 0, 1, 1], [], []>} : vector<64x20xbf16>, vector<20x40xbf16>, vector<64x40xf32> -> vector<64x40xf32>
    %384 = vector.shape_cast %383 : vector<64x40xf32> to vector<8x8x40xf32>
    %385 = vector.extract_strided_slice %384 {offsets = [0, 1, 0], sizes = [6, 6, 40], strides = [1, 1, 1]} : vector<8x8x40xf32> to vector<6x6x40xf32>
    %386 = arith.addf %376, %385 : vector<6x6x40xf32>
    %c0_454 = arith.constant 0 : index
    %c0_455 = arith.constant 0 : index
    %c0_456 = arith.constant 0 : index
    %c0_457 = arith.constant 0 : index
    %c0_458 = arith.constant 0 : index
    %387 = vector.load %arg8[%c0_454, %c0_455, %c0_456, %c0_457, %c0_458] : memref<2x2x8x8x20xf32, #tpu.memory_space<vmem>>, vector<1x1x8x8x20xf32>
    %388 = vector.shape_cast %387 : vector<1x1x8x8x20xf32> to vector<8x8x20xf32>
    %389 = vector.shape_cast %388 : vector<8x8x20xf32> to vector<64x20xf32>
    %390 = arith.truncf %389 : vector<64x20xf32> to vector<64x20xbf16>
    %c8_459 = arith.constant 8 : index
    %c0_460 = arith.constant 0 : index
    %c0_461 = arith.constant 0 : index
    %391 = vector.load %arg4[%c8_459, %c0_460, %c0_461] : memref<16x20x40xbf16, #tpu.memory_space<vmem>>, vector<1x20x40xbf16>
    %392 = vector.shape_cast %391 : vector<1x20x40xbf16> to vector<20x40xbf16>
    %cst_462 = arith.constant dense<0.000000e+00> : vector<64x40xf32>
    %393 = tpu.matmul %390, %392, %cst_462 {dimension_numbers = #tpu.dot_dimension_numbers<[1], [0], [0], [1], [0, 0, 1, 1], [], []>} : vector<64x20xbf16>, vector<20x40xbf16>, vector<64x40xf32> -> vector<64x40xf32>
    %394 = vector.shape_cast %393 : vector<64x40xf32> to vector<8x8x40xf32>
    %395 = vector.extract_strided_slice %394 {offsets = [1, 0, 0], sizes = [6, 6, 40], strides = [1, 1, 1]} : vector<8x8x40xf32> to vector<6x6x40xf32>
    %396 = arith.addf %386, %395 : vector<6x6x40xf32>
    %c0_463 = arith.constant 0 : index
    %c1_464 = arith.constant 1 : index
    %c0_465 = arith.constant 0 : index
    %c0_466 = arith.constant 0 : index
    %c0_467 = arith.constant 0 : index
    %397 = vector.load %arg8[%c0_463, %c1_464, %c0_465, %c0_466, %c0_467] : memref<2x2x8x8x20xf32, #tpu.memory_space<vmem>>, vector<1x1x8x8x20xf32>
    %398 = vector.shape_cast %397 : vector<1x1x8x8x20xf32> to vector<8x8x20xf32>
    %399 = vector.shape_cast %398 : vector<8x8x20xf32> to vector<64x20xf32>
    %400 = arith.truncf %399 : vector<64x20xf32> to vector<64x20xbf16>
    %c9_468 = arith.constant 9 : index
    %c0_469 = arith.constant 0 : index
    %c0_470 = arith.constant 0 : index
    %401 = vector.load %arg4[%c9_468, %c0_469, %c0_470] : memref<16x20x40xbf16, #tpu.memory_space<vmem>>, vector<1x20x40xbf16>
    %402 = vector.shape_cast %401 : vector<1x20x40xbf16> to vector<20x40xbf16>
    %cst_471 = arith.constant dense<0.000000e+00> : vector<64x40xf32>
    %403 = tpu.matmul %400, %402, %cst_471 {dimension_numbers = #tpu.dot_dimension_numbers<[1], [0], [0], [1], [0, 0, 1, 1], [], []>} : vector<64x20xbf16>, vector<20x40xbf16>, vector<64x40xf32> -> vector<64x40xf32>
    %404 = vector.shape_cast %403 : vector<64x40xf32> to vector<8x8x40xf32>
    %405 = vector.extract_strided_slice %404 {offsets = [1, 0, 0], sizes = [6, 6, 40], strides = [1, 1, 1]} : vector<8x8x40xf32> to vector<6x6x40xf32>
    %406 = arith.addf %396, %405 : vector<6x6x40xf32>
    %c0_472 = arith.constant 0 : index
    %c0_473 = arith.constant 0 : index
    %c0_474 = arith.constant 0 : index
    %c0_475 = arith.constant 0 : index
    %c0_476 = arith.constant 0 : index
    %407 = vector.load %arg8[%c0_472, %c0_473, %c0_474, %c0_475, %c0_476] : memref<2x2x8x8x20xf32, #tpu.memory_space<vmem>>, vector<1x1x8x8x20xf32>
    %408 = vector.shape_cast %407 : vector<1x1x8x8x20xf32> to vector<8x8x20xf32>
    %409 = vector.shape_cast %408 : vector<8x8x20xf32> to vector<64x20xf32>
    %410 = arith.truncf %409 : vector<64x20xf32> to vector<64x20xbf16>
    %c10_477 = arith.constant 10 : index
    %c0_478 = arith.constant 0 : index
    %c0_479 = arith.constant 0 : index
    %411 = vector.load %arg4[%c10_477, %c0_478, %c0_479] : memref<16x20x40xbf16, #tpu.memory_space<vmem>>, vector<1x20x40xbf16>
    %412 = vector.shape_cast %411 : vector<1x20x40xbf16> to vector<20x40xbf16>
    %cst_480 = arith.constant dense<0.000000e+00> : vector<64x40xf32>
    %413 = tpu.matmul %410, %412, %cst_480 {dimension_numbers = #tpu.dot_dimension_numbers<[1], [0], [0], [1], [0, 0, 1, 1], [], []>} : vector<64x20xbf16>, vector<20x40xbf16>, vector<64x40xf32> -> vector<64x40xf32>
    %414 = vector.shape_cast %413 : vector<64x40xf32> to vector<8x8x40xf32>
    %415 = vector.extract_strided_slice %414 {offsets = [1, 1, 0], sizes = [6, 6, 40], strides = [1, 1, 1]} : vector<8x8x40xf32> to vector<6x6x40xf32>
    %416 = arith.addf %406, %415 : vector<6x6x40xf32>
    %c0_481 = arith.constant 0 : index
    %c1_482 = arith.constant 1 : index
    %c0_483 = arith.constant 0 : index
    %c0_484 = arith.constant 0 : index
    %c0_485 = arith.constant 0 : index
    %417 = vector.load %arg8[%c0_481, %c1_482, %c0_483, %c0_484, %c0_485] : memref<2x2x8x8x20xf32, #tpu.memory_space<vmem>>, vector<1x1x8x8x20xf32>
    %418 = vector.shape_cast %417 : vector<1x1x8x8x20xf32> to vector<8x8x20xf32>
    %419 = vector.shape_cast %418 : vector<8x8x20xf32> to vector<64x20xf32>
    %420 = arith.truncf %419 : vector<64x20xf32> to vector<64x20xbf16>
    %c11_486 = arith.constant 11 : index
    %c0_487 = arith.constant 0 : index
    %c0_488 = arith.constant 0 : index
    %421 = vector.load %arg4[%c11_486, %c0_487, %c0_488] : memref<16x20x40xbf16, #tpu.memory_space<vmem>>, vector<1x20x40xbf16>
    %422 = vector.shape_cast %421 : vector<1x20x40xbf16> to vector<20x40xbf16>
    %cst_489 = arith.constant dense<0.000000e+00> : vector<64x40xf32>
    %423 = tpu.matmul %420, %422, %cst_489 {dimension_numbers = #tpu.dot_dimension_numbers<[1], [0], [0], [1], [0, 0, 1, 1], [], []>} : vector<64x20xbf16>, vector<20x40xbf16>, vector<64x40xf32> -> vector<64x40xf32>
    %424 = vector.shape_cast %423 : vector<64x40xf32> to vector<8x8x40xf32>
    %425 = vector.extract_strided_slice %424 {offsets = [1, 1, 0], sizes = [6, 6, 40], strides = [1, 1, 1]} : vector<8x8x40xf32> to vector<6x6x40xf32>
    %426 = arith.addf %416, %425 : vector<6x6x40xf32>
    %c1_490 = arith.constant 1 : index
    %c0_491 = arith.constant 0 : index
    %c0_492 = arith.constant 0 : index
    %c0_493 = arith.constant 0 : index
    %c0_494 = arith.constant 0 : index
    %427 = vector.load %arg8[%c1_490, %c0_491, %c0_492, %c0_493, %c0_494] : memref<2x2x8x8x20xf32, #tpu.memory_space<vmem>>, vector<1x1x8x8x20xf32>
    %428 = vector.shape_cast %427 : vector<1x1x8x8x20xf32> to vector<8x8x20xf32>
    %429 = vector.shape_cast %428 : vector<8x8x20xf32> to vector<64x20xf32>
    %430 = arith.truncf %429 : vector<64x20xf32> to vector<64x20xbf16>
    %c12_495 = arith.constant 12 : index
    %c0_496 = arith.constant 0 : index
    %c0_497 = arith.constant 0 : index
    %431 = vector.load %arg4[%c12_495, %c0_496, %c0_497] : memref<16x20x40xbf16, #tpu.memory_space<vmem>>, vector<1x20x40xbf16>
    %432 = vector.shape_cast %431 : vector<1x20x40xbf16> to vector<20x40xbf16>
    %cst_498 = arith.constant dense<0.000000e+00> : vector<64x40xf32>
    %433 = tpu.matmul %430, %432, %cst_498 {dimension_numbers = #tpu.dot_dimension_numbers<[1], [0], [0], [1], [0, 0, 1, 1], [], []>} : vector<64x20xbf16>, vector<20x40xbf16>, vector<64x40xf32> -> vector<64x40xf32>
    %434 = vector.shape_cast %433 : vector<64x40xf32> to vector<8x8x40xf32>
    %435 = vector.extract_strided_slice %434 {offsets = [1, 0, 0], sizes = [6, 6, 40], strides = [1, 1, 1]} : vector<8x8x40xf32> to vector<6x6x40xf32>
    %436 = arith.addf %426, %435 : vector<6x6x40xf32>
    %c1_499 = arith.constant 1 : index
    %c1_500 = arith.constant 1 : index
    %c0_501 = arith.constant 0 : index
    %c0_502 = arith.constant 0 : index
    %c0_503 = arith.constant 0 : index
    %437 = vector.load %arg8[%c1_499, %c1_500, %c0_501, %c0_502, %c0_503] : memref<2x2x8x8x20xf32, #tpu.memory_space<vmem>>, vector<1x1x8x8x20xf32>
    %438 = vector.shape_cast %437 : vector<1x1x8x8x20xf32> to vector<8x8x20xf32>
    %439 = vector.shape_cast %438 : vector<8x8x20xf32> to vector<64x20xf32>
    %440 = arith.truncf %439 : vector<64x20xf32> to vector<64x20xbf16>
    %c13_504 = arith.constant 13 : index
    %c0_505 = arith.constant 0 : index
    %c0_506 = arith.constant 0 : index
    %441 = vector.load %arg4[%c13_504, %c0_505, %c0_506] : memref<16x20x40xbf16, #tpu.memory_space<vmem>>, vector<1x20x40xbf16>
    %442 = vector.shape_cast %441 : vector<1x20x40xbf16> to vector<20x40xbf16>
    %cst_507 = arith.constant dense<0.000000e+00> : vector<64x40xf32>
    %443 = tpu.matmul %440, %442, %cst_507 {dimension_numbers = #tpu.dot_dimension_numbers<[1], [0], [0], [1], [0, 0, 1, 1], [], []>} : vector<64x20xbf16>, vector<20x40xbf16>, vector<64x40xf32> -> vector<64x40xf32>
    %444 = vector.shape_cast %443 : vector<64x40xf32> to vector<8x8x40xf32>
    %445 = vector.extract_strided_slice %444 {offsets = [1, 0, 0], sizes = [6, 6, 40], strides = [1, 1, 1]} : vector<8x8x40xf32> to vector<6x6x40xf32>
    %446 = arith.addf %436, %445 : vector<6x6x40xf32>
    %c1_508 = arith.constant 1 : index
    %c0_509 = arith.constant 0 : index
    %c0_510 = arith.constant 0 : index
    %c0_511 = arith.constant 0 : index
    %c0_512 = arith.constant 0 : index
    %447 = vector.load %arg8[%c1_508, %c0_509, %c0_510, %c0_511, %c0_512] : memref<2x2x8x8x20xf32, #tpu.memory_space<vmem>>, vector<1x1x8x8x20xf32>
    %448 = vector.shape_cast %447 : vector<1x1x8x8x20xf32> to vector<8x8x20xf32>
    %449 = vector.shape_cast %448 : vector<8x8x20xf32> to vector<64x20xf32>
    %450 = arith.truncf %449 : vector<64x20xf32> to vector<64x20xbf16>
    %c14_513 = arith.constant 14 : index
    %c0_514 = arith.constant 0 : index
    %c0_515 = arith.constant 0 : index
    %451 = vector.load %arg4[%c14_513, %c0_514, %c0_515] : memref<16x20x40xbf16, #tpu.memory_space<vmem>>, vector<1x20x40xbf16>
    %452 = vector.shape_cast %451 : vector<1x20x40xbf16> to vector<20x40xbf16>
    %cst_516 = arith.constant dense<0.000000e+00> : vector<64x40xf32>
    %453 = tpu.matmul %450, %452, %cst_516 {dimension_numbers = #tpu.dot_dimension_numbers<[1], [0], [0], [1], [0, 0, 1, 1], [], []>} : vector<64x20xbf16>, vector<20x40xbf16>, vector<64x40xf32> -> vector<64x40xf32>
    %454 = vector.shape_cast %453 : vector<64x40xf32> to vector<8x8x40xf32>
    %455 = vector.extract_strided_slice %454 {offsets = [1, 1, 0], sizes = [6, 6, 40], strides = [1, 1, 1]} : vector<8x8x40xf32> to vector<6x6x40xf32>
    %456 = arith.addf %446, %455 : vector<6x6x40xf32>
    %c1_517 = arith.constant 1 : index
    %c1_518 = arith.constant 1 : index
    %c0_519 = arith.constant 0 : index
    %c0_520 = arith.constant 0 : index
    %c0_521 = arith.constant 0 : index
    %457 = vector.load %arg8[%c1_517, %c1_518, %c0_519, %c0_520, %c0_521] : memref<2x2x8x8x20xf32, #tpu.memory_space<vmem>>, vector<1x1x8x8x20xf32>
    %458 = vector.shape_cast %457 : vector<1x1x8x8x20xf32> to vector<8x8x20xf32>
    %459 = vector.shape_cast %458 : vector<8x8x20xf32> to vector<64x20xf32>
    %460 = arith.truncf %459 : vector<64x20xf32> to vector<64x20xbf16>
    %c15_522 = arith.constant 15 : index
    %c0_523 = arith.constant 0 : index
    %c0_524 = arith.constant 0 : index
    %461 = vector.load %arg4[%c15_522, %c0_523, %c0_524] : memref<16x20x40xbf16, #tpu.memory_space<vmem>>, vector<1x20x40xbf16>
    %462 = vector.shape_cast %461 : vector<1x20x40xbf16> to vector<20x40xbf16>
    %cst_525 = arith.constant dense<0.000000e+00> : vector<64x40xf32>
    %463 = tpu.matmul %460, %462, %cst_525 {dimension_numbers = #tpu.dot_dimension_numbers<[1], [0], [0], [1], [0, 0, 1, 1], [], []>} : vector<64x20xbf16>, vector<20x40xbf16>, vector<64x40xf32> -> vector<64x40xf32>
    %464 = vector.shape_cast %463 : vector<64x40xf32> to vector<8x8x40xf32>
    %465 = vector.extract_strided_slice %464 {offsets = [1, 1, 0], sizes = [6, 6, 40], strides = [1, 1, 1]} : vector<8x8x40xf32> to vector<6x6x40xf32>
    %466 = arith.addf %456, %465 : vector<6x6x40xf32>
    %c0_526 = arith.constant 0 : index
    %c0_527 = arith.constant 0 : index
    %467 = vector.load %arg5[%c0_526, %c0_527] : memref<1x40xf32, #tpu.memory_space<vmem>>, vector<1x40xf32>
    %468 = vector.shape_cast %467 : vector<1x40xf32> to vector<1x1x40xf32>
    %469 = vector.broadcast %468 : vector<1x1x40xf32> to vector<6x6x40xf32>
    %470 = arith.addf %466, %469 : vector<6x6x40xf32>
    %cst_528 = arith.constant 0.000000e+00 : f32
    %471 = vector.broadcast %cst_528 : f32 to vector<6x6x40xf32>
    %472 = arith.maximumf %470, %471 : vector<6x6x40xf32>
    %c0_529 = arith.constant 0 : index
    %c0_530 = arith.constant 0 : index
    %c0_531 = arith.constant 0 : index
    %c0_532 = arith.constant 0 : index
    %473 = vector.load %arg6[%c0_529, %c0_530, %c0_531, %c0_532] : memref<1x6x6x40xf32, #tpu.memory_space<vmem>>, vector<1x6x6x40xf32>
    %474 = vector.shape_cast %473 : vector<1x6x6x40xf32> to vector<6x6x40xf32>
    %475 = vector.shape_cast %472 : vector<6x6x40xf32> to vector<1x6x6x40xf32>
    tpu.vector_store %arg6[%c0_529, %c0_530, %c0_531, %c0_532], %475 {strides = array<i32>} : memref<1x6x6x40xf32, #tpu.memory_space<vmem>>, vector<1x6x6x40xf32>,
    return
  }
  func.func @transform_0(%arg0: i32) -> (i32, i32, i32, i32) {
    %c0_i32 = arith.constant 0 : i32
    %c0_i32_0 = arith.constant 0 : i32
    %c0_i32_1 = arith.constant 0 : i32
    %c0_i32_2 = arith.constant 0 : i32
    return %arg0, %c0_i32, %c0_i32_0, %c0_i32_1 : i32, i32, i32, i32
  }
  func.func @transform_1(%arg0: i32) -> (i32, i32) {
    %c0_i32 = arith.constant 0 : i32
    %c0_i32_0 = arith.constant 0 : i32
    %c0_i32_1 = arith.constant 0 : i32
    return %c0_i32, %c0_i32_0 : i32, i32
  }
  func.func @transform_2(%arg0: i32) -> (i32, i32) {
    %c0_i32 = arith.constant 0 : i32
    %c0_i32_0 = arith.constant 0 : i32
    %c0_i32_1 = arith.constant 0 : i32
    return %c0_i32, %c0_i32_0 : i32, i32
  }
  func.func @transform_3(%arg0: i32) -> (i32, i32, i32) {
    %c0_i32 = arith.constant 0 : i32
    %c0_i32_0 = arith.constant 0 : i32
    %c0_i32_1 = arith.constant 0 : i32
    %c0_i32_2 = arith.constant 0 : i32
    return %c0_i32, %c0_i32_0, %c0_i32_1 : i32, i32, i32
  }
  func.func @transform_4(%arg0: i32) -> (i32, i32) {
    %c0_i32 = arith.constant 0 : i32
    %c0_i32_0 = arith.constant 0 : i32
    %c0_i32_1 = arith.constant 0 : i32
    return %c0_i32, %c0_i32_0 : i32, i32
  }
  func.func @transform_5(%arg0: i32) -> (i32, i32, i32, i32) {
    %c0_i32 = arith.constant 0 : i32
    %c0_i32_0 = arith.constant 0 : i32
    %c0_i32_1 = arith.constant 0 : i32
    %c0_i32_2 = arith.constant 0 : i32
    return %arg0, %c0_i32, %c0_i32_0, %c0_i32_1 : i32, i32, i32, i32
  }
}

module attributes {stable_mosaic.version = 11 : i64} {
  func.func @_classifier_kernel(%arg0: i32, %arg1: memref<2x1440xbf16, #tpu.memory_space<vmem>>, %arg2: memref<1440x720xbf16, #tpu.memory_space<vmem>>, %arg3: memref<1x720xf32, #tpu.memory_space<vmem>>, %arg4: memref<720x360xbf16, #tpu.memory_space<vmem>>, %arg5: memref<1x360xf32, #tpu.memory_space<vmem>>, %arg6: memref<360x18xbf16, #tpu.memory_space<vmem>>, %arg7: memref<1x18xf32, #tpu.memory_space<vmem>>, %arg8: memref<2x18xf32, #tpu.memory_space<vmem>>) attributes {dimension_semantics = [#tpu.dimension_semantics<arbitrary>], iteration_bounds = array<i64: 1>, scalar_prefetch = 0 : i64, scratch_operands = 0 : i64, tpu.core_type = #tpu.core_type<tc>, window_params = [{pipeline_mode = #tpu.pipeline_mode<synchronous>, transform_indices = @transform_0, window_bounds = array<i64: 2, 1440>}, {pipeline_mode = #tpu.pipeline_mode<synchronous>, transform_indices = @transform_1, window_bounds = array<i64: 1440, 720>}, {pipeline_mode = #tpu.pipeline_mode<synchronous>, transform_indices = @transform_2, window_bounds = array<i64: 1, 720>}, {pipeline_mode = #tpu.pipeline_mode<synchronous>, transform_indices = @transform_3, window_bounds = array<i64: 720, 360>}, {pipeline_mode = #tpu.pipeline_mode<synchronous>, transform_indices = @transform_4, window_bounds = array<i64: 1, 360>}, {pipeline_mode = #tpu.pipeline_mode<synchronous>, transform_indices = @transform_5, window_bounds = array<i64: 360, 18>}, {pipeline_mode = #tpu.pipeline_mode<synchronous>, transform_indices = @transform_6, window_bounds = array<i64: 1, 18>}, {pipeline_mode = #tpu.pipeline_mode<synchronous>, transform_indices = @transform_7, window_bounds = array<i64: 2, 18>}]} {
    %c0 = arith.constant 0 : index
    %c0_0 = arith.constant 0 : index
    %0 = vector.load %arg1[%c0, %c0_0] : memref<2x1440xbf16, #tpu.memory_space<vmem>>, vector<2x1440xbf16>
    %c0_1 = arith.constant 0 : index
    %c0_2 = arith.constant 0 : index
    %1 = vector.load %arg2[%c0_1, %c0_2] : memref<1440x720xbf16, #tpu.memory_space<vmem>>, vector<1440x720xbf16>
    %cst = arith.constant dense<0.000000e+00> : vector<2x720xf32>
    %2 = tpu.matmul %0, %1, %cst {dimension_numbers = #tpu.dot_dimension_numbers<[1], [0], [0], [1], [0, 0, 1, 1], [], []>} : vector<2x1440xbf16>, vector<1440x720xbf16>, vector<2x720xf32> -> vector<2x720xf32>
    %c0_3 = arith.constant 0 : index
    %c0_4 = arith.constant 0 : index
    %3 = vector.load %arg3[%c0_3, %c0_4] : memref<1x720xf32, #tpu.memory_space<vmem>>, vector<1x720xf32>
    %4 = vector.broadcast %3 : vector<1x720xf32> to vector<2x720xf32>
    %5 = arith.addf %2, %4 : vector<2x720xf32>
    %cst_5 = arith.constant 0.000000e+00 : f32
    %6 = vector.broadcast %cst_5 : f32 to vector<2x720xf32>
    %7 = arith.maximumf %5, %6 : vector<2x720xf32>
    %8 = arith.truncf %7 : vector<2x720xf32> to vector<2x720xbf16>
    %c0_6 = arith.constant 0 : index
    %c0_7 = arith.constant 0 : index
    %9 = vector.load %arg4[%c0_6, %c0_7] : memref<720x360xbf16, #tpu.memory_space<vmem>>, vector<720x360xbf16>
    %cst_8 = arith.constant dense<0.000000e+00> : vector<2x360xf32>
    %10 = tpu.matmul %8, %9, %cst_8 {dimension_numbers = #tpu.dot_dimension_numbers<[1], [0], [0], [1], [0, 0, 1, 1], [], []>} : vector<2x720xbf16>, vector<720x360xbf16>, vector<2x360xf32> -> vector<2x360xf32>
    %c0_9 = arith.constant 0 : index
    %c0_10 = arith.constant 0 : index
    %11 = vector.load %arg5[%c0_9, %c0_10] : memref<1x360xf32, #tpu.memory_space<vmem>>, vector<1x360xf32>
    %12 = vector.broadcast %11 : vector<1x360xf32> to vector<2x360xf32>
    %13 = arith.addf %10, %12 : vector<2x360xf32>
    %14 = arith.truncf %13 : vector<2x360xf32> to vector<2x360xbf16>
    %c0_11 = arith.constant 0 : index
    %c0_12 = arith.constant 0 : index
    %15 = vector.load %arg6[%c0_11, %c0_12] : memref<360x18xbf16, #tpu.memory_space<vmem>>, vector<360x18xbf16>
    %cst_13 = arith.constant dense<0.000000e+00> : vector<2x18xf32>
    %16 = tpu.matmul %14, %15, %cst_13 {dimension_numbers = #tpu.dot_dimension_numbers<[1], [0], [0], [1], [0, 0, 1, 1], [], []>} : vector<2x360xbf16>, vector<360x18xbf16>, vector<2x18xf32> -> vector<2x18xf32>
    %c0_14 = arith.constant 0 : index
    %c0_15 = arith.constant 0 : index
    %17 = vector.load %arg7[%c0_14, %c0_15] : memref<1x18xf32, #tpu.memory_space<vmem>>, vector<1x18xf32>
    %18 = vector.broadcast %17 : vector<1x18xf32> to vector<2x18xf32>
    %19 = arith.addf %16, %18 : vector<2x18xf32>
    %c0_16 = arith.constant 0 : index
    %c0_17 = arith.constant 0 : index
    %20 = vector.load %arg8[%c0_16, %c0_17] : memref<2x18xf32, #tpu.memory_space<vmem>>, vector<2x18xf32>
    tpu.vector_store %arg8[%c0_16, %c0_17], %19 {strides = array<i32>} : memref<2x18xf32, #tpu.memory_space<vmem>>, vector<2x18xf32>,
    return
  }
  func.func @transform_0(%arg0: i32) -> (i32, i32) {
    %c0_i32 = arith.constant 0 : i32
    %c0_i32_0 = arith.constant 0 : i32
    %c0_i32_1 = arith.constant 0 : i32
    return %c0_i32, %c0_i32_0 : i32, i32
  }
  func.func @transform_1(%arg0: i32) -> (i32, i32) {
    %c0_i32 = arith.constant 0 : i32
    %c0_i32_0 = arith.constant 0 : i32
    %c0_i32_1 = arith.constant 0 : i32
    return %c0_i32, %c0_i32_0 : i32, i32
  }
  func.func @transform_2(%arg0: i32) -> (i32, i32) {
    %c0_i32 = arith.constant 0 : i32
    %c0_i32_0 = arith.constant 0 : i32
    %c0_i32_1 = arith.constant 0 : i32
    return %c0_i32, %c0_i32_0 : i32, i32
  }
  func.func @transform_3(%arg0: i32) -> (i32, i32) {
    %c0_i32 = arith.constant 0 : i32
    %c0_i32_0 = arith.constant 0 : i32
    %c0_i32_1 = arith.constant 0 : i32
    return %c0_i32, %c0_i32_0 : i32, i32
  }
  func.func @transform_4(%arg0: i32) -> (i32, i32) {
    %c0_i32 = arith.constant 0 : i32
    %c0_i32_0 = arith.constant 0 : i32
    %c0_i32_1 = arith.constant 0 : i32
    return %c0_i32, %c0_i32_0 : i32, i32
  }
  func.func @transform_5(%arg0: i32) -> (i32, i32) {
    %c0_i32 = arith.constant 0 : i32
    %c0_i32_0 = arith.constant 0 : i32
    %c0_i32_1 = arith.constant 0 : i32
    return %c0_i32, %c0_i32_0 : i32, i32
  }
  func.func @transform_6(%arg0: i32) -> (i32, i32) {
    %c0_i32 = arith.constant 0 : i32
    %c0_i32_0 = arith.constant 0 : i32
    %c0_i32_1 = arith.constant 0 : i32
    return %c0_i32, %c0_i32_0 : i32, i32
  }
  func.func @transform_7(%arg0: i32) -> (i32, i32) {
    %c0_i32 = arith.constant 0 : i32
    %c0_i32_0 = arith.constant 0 : i32
    %c0_i32_1 = arith.constant 0 : i32
    return %c0_i32, %c0_i32_0 : i32, i32
  }
}

</mosaic_0001>

<llo_original>
// kernel: multiclass_cnn_forward.2
$region0: #{multiclass_cnn_forward.2}
  #allocation0 [shape = 'u32[]', space=smem, size = 0x4, offset = 0x4, fixed_abs, tag = 'smem constant byte address 0x4 - core index']
  #allocation1 [shape = 'u32[144,128]{1,0:T(1,128)}', space=vmem, size = 0x12000, scoped, tag = 'internal scratch']
  #allocation2 [shape = 'f32[4,4,8,8,20]{4,3,2,1,0:T(8,128)}', space=vmem, size = 0x80000, scoped, tag = 'scratch operand']
  #allocation3 [shape = 'f32[2,2,8,8,20]{4,3,2,1,0:T(8,128)}', space=vmem, size = 0x20000, scoped, tag = 'scratch operand']
  %s0 = inlined_call_operand.vmem [shape: bf16[2,16,64,12], index: 0, kind: input, shape index: {}]
  %s1 = inlined_call_operand.vmem [shape: bf16[12,20], index: 1, kind: input, shape index: {}]
  %s2 = inlined_call_operand.vmem [shape: f32[1,20], index: 2, kind: input, shape index: {}]
  %s3 = inlined_call_operand.vmem [shape: bf16[16,20,40], index: 3, kind: input, shape index: {}]
  %s4 = inlined_call_operand.vmem [shape: f32[1,40], index: 4, kind: input, shape index: {}]
  %s5 = inlined_call_operand.vmem [shape: f32[2,6,6,40], index: 5, kind: output, shape index: {}]
  %s6 = sld [smem:[#allocation0]]
  $region53: #{multiclass_cnn_forward.2} parent=0
    _
  %s8 = ssub.s32 1, %s6
  %s9 = scalar_select 0, %s8, %s6
  loop: start=0, step=1, limit=4
  $region2: #{multiclass_cnn_forward.2} parent=0 // loop_pre_header
    _
  $region3: #{multiclass_cnn_forward.2} parent=0 // loop_header
    %s11 = sphi 0, %s15
    %p12 = scmp.ge.s32.totalorder %s11, 4
    %s21 = sphi 0, %s23
    %s24 = sphi 0, %s21
    %s25 = sphi 0, %s24
    %s41 = sphi 0, %s25
    %s45 = sphi 0, %s45
    %s47 = sphi 0, %s45
    %s48 = sphi 0, %s47
    %s62 = sphi 0, %s48
    %s66 = sphi 0, %s66
    %s68 = sphi 0, %s66
    %s69 = sphi 0, %s68
    %s83 = sphi 0, %s69
    %s87 = sphi 0, %s87
    %s89 = sphi 0, %s87
    %s90 = sphi 0, %s89
    %s104 = sphi 0, %s90
    %s108 = sphi 0, %s108
    %s110 = sphi 0, %s108
    %s111 = sphi 0, %s110
    %s125 = sphi 0, %s111
    %s131 = sphi 0, %s133
    %s134 = sphi 0, %s131
    %s135 = sphi 0, %s134
    %s151 = sphi 0, %s135
  $region4: #{multiclass_cnn_forward.2} parent=0 // loop_header_branch
    %14 = sbr.rel (%p12) target = $region8
  $region5: #{multiclass_cnn_forward.2} parent=0 // loop_body
    %s16 = ssub.s32 %s11, 1
    %s17 = ssub.s32 %s11, 2
    %s18 = sadd.s32 %s11, 1
    %s19 = ssub.s32 %s11, %s18
    %p20 = scmp.eq.s32.totalorder %s19, 0
    %s22 = sadd.s32 %s21, 1
    %s23 = scalar_select %p20, %s21, %s22
    %p26 = pneg %p20
    %p27 = scmp.eq.s32.totalorder %s11, 1
    %p28 = por %p26, %p27
    %p29 = scmp.ne.s32.totalorder %s21, %s24
    %p30 = scmp.eq.s32.totalorder %s11, 0
    %p31 = por %p29, %p30
    %p32 = scmp.ne.s32.totalorder %s21, %s24
    %p33 = scmp.eq.s32.totalorder %s16, 1
    %p34 = por %p32, %p33
    %p35 = scmp.ne.s32.totalorder %s24, %s25
    %p36 = scmp.eq.s32.totalorder %s16, 0
    %p37 = por %p35, %p36
    %p38 = scmp.ne.s32.totalorder %s24, %s25
    %p39 = scmp.eq.s32.totalorder %s17, 1
    %p40 = por %p38, %p39
    %p42 = scmp.ne.s32.totalorder %s25, %s41
    %p43 = scmp.eq.s32.totalorder %s17, 0
    %p44 = por %p42, %p43
    %s46 = sadd.s32 %s45, 1
    %p49 = scmp.eq.s32.totalorder %s11, 1
    %p50 = scmp.ne.s32.totalorder %s45, %s47
    %p51 = scmp.eq.s32.totalorder %s11, 0
    %p52 = por %p50, %p51
    %p53 = scmp.ne.s32.totalorder %s45, %s47
    %p54 = scmp.eq.s32.totalorder %s16, 1
    %p55 = por %p53, %p54
    %p56 = scmp.ne.s32.totalorder %s47, %s48
    %p57 = scmp.eq.s32.totalorder %s16, 0
    %p58 = por %p56, %p57
    %p59 = scmp.ne.s32.totalorder %s47, %s48
    %p60 = scmp.eq.s32.totalorder %s17, 1
    %p61 = por %p59, %p60
    %p63 = scmp.ne.s32.totalorder %s48, %s62
    %p64 = scmp.eq.s32.totalorder %s17, 0
    %p65 = por %p63, %p64
    %s67 = sadd.s32 %s66, 1
    %p70 = scmp.eq.s32.totalorder %s11, 1
    %p71 = scmp.ne.s32.totalorder %s66, %s68
    %p72 = scmp.eq.s32.totalorder %s11, 0
    %p73 = por %p71, %p72
    %p74 = scmp.ne.s32.totalorder %s66, %s68
    %p75 = scmp.eq.s32.totalorder %s16, 1
    %p76 = por %p74, %p75
    %p77 = scmp.ne.s32.totalorder %s68, %s69
    %p78 = scmp.eq.s32.totalorder %s16, 0
    %p79 = por %p77, %p78
    %p80 = scmp.ne.s32.totalorder %s68, %s69
    %p81 = scmp.eq.s32.totalorder %s17, 1
    %p82 = por %p80, %p81
    %p84 = scmp.ne.s32.totalorder %s69, %s83
    %p85 = scmp.eq.s32.totalorder %s17, 0
    %p86 = por %p84, %p85
    %s88 = sadd.s32 %s87, 1
    %p91 = scmp.eq.s32.totalorder %s11, 1
    %p92 = scmp.ne.s32.totalorder %s87, %s89
    %p93 = scmp.eq.s32.totalorder %s11, 0
    %p94 = por %p92, %p93
    %p95 = scmp.ne.s32.totalorder %s87, %s89
    %p96 = scmp.eq.s32.totalorder %s16, 1
    %p97 = por %p95, %p96
    %p98 = scmp.ne.s32.totalorder %s89, %s90
    %p99 = scmp.eq.s32.totalorder %s16, 0
    %p100 = por %p98, %p99
    %p101 = scmp.ne.s32.totalorder %s89, %s90
    %p102 = scmp.eq.s32.totalorder %s17, 1
    %p103 = por %p101, %p102
    %p105 = scmp.ne.s32.totalorder %s90, %s104
    %p106 = scmp.eq.s32.totalorder %s17, 0
    %p107 = por %p105, %p106
    %s109 = sadd.s32 %s108, 1
    %p112 = scmp.eq.s32.totalorder %s11, 1
    %p113 = scmp.ne.s32.totalorder %s108, %s110
    %p114 = scmp.eq.s32.totalorder %s11, 0
    %p115 = por %p113, %p114
    %p116 = scmp.ne.s32.totalorder %s108, %s110
    %p117 = scmp.eq.s32.totalorder %s16, 1
    %p118 = por %p116, %p117
    %p119 = scmp.ne.s32.totalorder %s110, %s111
    %p120 = scmp.eq.s32.totalorder %s16, 0
    %p121 = por %p119, %p120
    %p122 = scmp.ne.s32.totalorder %s110, %s111
    %p123 = scmp.eq.s32.totalorder %s17, 1
    %p124 = por %p122, %p123
    %p126 = scmp.ne.s32.totalorder %s111, %s125
    %p127 = scmp.eq.s32.totalorder %s17, 0
    %p128 = por %p126, %p127
    %s129 = ssub.s32 %s11, %s18
    %p130 = scmp.eq.s32.totalorder %s129, 0
    %s132 = sadd.s32 %s131, 1
    %s133 = scalar_select %p130, %s131, %s132
    %p136 = pneg %p130
    %p137 = scmp.eq.s32.totalorder %s11, 1
    %p138 = por %p136, %p137
    %p139 = scmp.ne.s32.totalorder %s131, %s134
    %p140 = scmp.eq.s32.totalorder %s11, 0
    %p141 = por %p139, %p140
    %p142 = scmp.ne.s32.totalorder %s131, %s134
    %p143 = scmp.eq.s32.totalorder %s16, 1
    %p144 = por %p142, %p143
    %p145 = scmp.ne.s32.totalorder %s134, %s135
    %p146 = scmp.eq.s32.totalorder %s16, 0
    %p147 = por %p145, %p146
    %p148 = scmp.ne.s32.totalorder %s134, %s135
    %p149 = scmp.eq.s32.totalorder %s17, 1
    %p150 = por %p148, %p149
    %p152 = scmp.ne.s32.totalorder %s135, %s151
    %p153 = scmp.eq.s32.totalorder %s17, 0
    %p154 = por %p152, %p153
    %p155 = scmp.le.s32.totalorder 1, %s11
    %p156 = scmp.lt.s32.totalorder %s11, 3
    %p157 = pnand %p155, %p156
    %p158 = pneg %p157
    // Predicated region
    $region9: #{multiclass_cnn_forward.2} parent=5 // pred_check
      _
    $region10: #{multiclass_cnn_forward.2} parent=5 // pred_check_branch
      %160 = sbr.rel (%p157) target = $region12
    $region11: #{multiclass_cnn_forward.2} parent=5 // pred_region
      %s161 = ssub.s32 %s11, 1
      // Predicated region
      $region13: #{multiclass_cnn_forward.2} parent=11 // pred_check
        %p162 = pneg %p58
      $region14: #{multiclass_cnn_forward.2} parent=11 // pred_check_branch
        %164 = sbr.rel (%p162) target = $region16
      $region15: #{multiclass_cnn_forward.2} parent=11 // pred_region
        _
      $region16: #{multiclass_cnn_forward.2} parent=11 // pred_fallthru
        _
      // Predicated region
      $region17: #{multiclass_cnn_forward.2} parent=11 // pred_check
        %p165 = pneg %p79
      $region18: #{multiclass_cnn_forward.2} parent=11 // pred_check_branch
        %167 = sbr.rel (%p165) target = $region20
      $region19: #{multiclass_cnn_forward.2} parent=11 // pred_region
        _
      $region20: #{multiclass_cnn_forward.2} parent=11 // pred_fallthru
        _
      // Predicated region
      $region21: #{multiclass_cnn_forward.2} parent=11 // pred_check
        %p168 = pneg %p100
      $region22: #{multiclass_cnn_forward.2} parent=11 // pred_check_branch
        %170 = sbr.rel (%p168) target = $region24
      $region23: #{multiclass_cnn_forward.2} parent=11 // pred_region
        _
      $region24: #{multiclass_cnn_forward.2} parent=11 // pred_fallthru
        _
      // Predicated region
      $region25: #{multiclass_cnn_forward.2} parent=11 // pred_check
        %p171 = pneg %p121
      $region26: #{multiclass_cnn_forward.2} parent=11 // pred_check_branch
        %173 = sbr.rel (%p171) target = $region28
      $region27: #{multiclass_cnn_forward.2} parent=11 // pred_region
        _
      $region28: #{multiclass_cnn_forward.2} parent=11 // pred_fallthru
        _
    $region12: #{multiclass_cnn_forward.2} parent=5 // pred_fallthru
      _
    %p174 = scmp.lt.s32.totalorder %s11, 2
    // Predicated region
    $region29: #{multiclass_cnn_forward.2} parent=5 // pred_check
      %p175 = pneg %p174
    $region30: #{multiclass_cnn_forward.2} parent=5 // pred_check_branch
      %177 = sbr.rel (%p175) target = $region32
    $region31: #{multiclass_cnn_forward.2} parent=5 // pred_region
      // Predicated region
      $region33: #{multiclass_cnn_forward.2} parent=31 // pred_check
        %p178 = pneg %p31
      $region34: #{multiclass_cnn_forward.2} parent=31 // pred_check_branch
        %180 = sbr.rel (%p178) target = $region36
      $region35: #{multiclass_cnn_forward.2} parent=31 // pred_region
        %p181 = scmp.lt.s32.totalorder %s11, 1
        %s182 = scalar_select %p181, %s11, 1
        %s183 = smul.addr %s182, 128
        %s184 = smul.addr %s183, 4
        %s185 = scalar_lea.vmem %s0, %s184
      $region36: #{multiclass_cnn_forward.2} parent=31 // pred_fallthru
        _
    $region32: #{multiclass_cnn_forward.2} parent=5 // pred_fallthru
      _
    %p186 = scmp.le.s32.totalorder 1, %s11
    %p187 = scmp.lt.s32.totalorder %s11, 3
    %p188 = pnand %p186, %p187
    %p189 = pneg %p188
    // Predicated region
    $region37: #{multiclass_cnn_forward.2} parent=5 // pred_check
      _
    $region38: #{multiclass_cnn_forward.2} parent=5 // pred_check_branch
      %191 = sbr.rel (%p188) target = $region40
    $region39: #{multiclass_cnn_forward.2} parent=5 // pred_region
      %s192 = ssub.s32 %s11, 1
      %p193 = scmp.lt.s32.totalorder %s16, 1
      %s194 = scalar_select %p193, %s16, 1
      %s195 = smul.addr %s194, 128
      %s196 = smul.addr %s195, 4
      %s197 = scalar_lea.vmem %s0, %s196
      %p198 = pneg %p37
      %p199 = pneg %p34
      %p200 = pneg %p58
      %p201 = pneg %p55
      %p202 = pneg %p79
      %p203 = pneg %p76
      %p204 = pneg %p100
      %p205 = pneg %p97
      %p206 = pneg %p121
      %p207 = pneg %p118
      %p208 = pneg %p147
      %p209 = pneg %p144
      %p210 = scmp.lt.s32.totalorder %s16, 1
      %s211 = scalar_select %p210, %s16, 1
      %s212 = smul.addr %s211, 6
      %s213 = smul.addr %s212, 8
      %s214 = scalar_lea.vmem %s5, %s213
      %p215 = scmp.lt.s32.totalorder %s16, 1
      %s216 = scalar_select %p215, %s16, 1
      %s217 = smul.addr %s216, 128
      %s218 = smul.addr %s217, 4
      %s219 = scalar_lea.vmem %s0, %s218
      %p220 = scmp.lt.s32.totalorder %s16, 1
      %s221 = scalar_select %p220, %s16, 1
      %s222 = smul.addr %s221, 6
      %s223 = smul.addr %s222, 8
      %s224 = scalar_lea.vmem %s5, %s223
      %v226 = vld [vmem:[%s1] sm:$0xf]
      %v227 = vld [vmem:[%s1 + $0x4] sm:$0x3]
      %v228 = vld [vmem:[%s2] sm:$0x1]
      %v229 = vld [vmem:[%s219] sm:$0xf]
      %v230 = vld [vmem:[%s219 + $0x4] sm:$0xf]
      %v231 = vld [vmem:[%s219 + $0x8] sm:$0xf]
      %v232 = vld [vmem:[%s219 + $0xc] sm:$0xf]
      %v233 = vld [vmem:[%s219 + $0x10] sm:$0xf]
      %v234 = vld [vmem:[%s219 + $0x14] sm:$0xf]
      %v235 = vld [vmem:[%s219 + $0x18] sm:$0xf]
      %v236 = vld [vmem:[%s219 + $0x1c] sm:$0xf]
      %v238 = vlaneseq
      %v239 = vshrl.u32 %v238, 7
      %v240 = vsub.s32 0, %v239
      %v241 = vrot.slane %v228, %v240
      %v251 = vunpack.c.l.b16 %v229
      %v252 = vunpack.c.l.b16 %v230
      %v253 = vunpack.c.l.b16 %v231
      %v254 = vunpack.c.l.b16 %v232
      %v255 = vunpack.c.l.b16 %v233
      %v256 = vunpack.c.l.b16 %v234
      %v257 = vunpack.c.l.b16 %v235
      %v258 = vunpack.c.l.b16 %v236
      %v259 = vpack.c.b16 %v252, %v251
      %v260 = vpack.c.b16 %v254, %v253
      %v261 = vpack.c.b16 %v256, %v255
      %v262 = vpack.c.b16 %v258, %v257
      %v265 = vunpack.c.l.b16 %v226
      %v266 = vunpack.c.l.b16 %v227
      %v267 = vpack.c.b16 %v266, %v265
      %vm268 = vcmask 97280
      %v270 = vsel %vm268, %v259, 0
      %v273 = vsel %vm268, %v260, 0
      %v276 = vsel %vm268, %v261, 0
      %v279 = vsel %vm268, %v262, 0
      %vm281 = vcmask 1045504
      %v283 = vsel %vm281, %v267, 0
      %285 = vmatprep.subr.bf16.mxu0 0
      %286 = vmatpush1.bf16.msra.mxu0 %v283
      %287 = vmatprep.subr.bf16.mxu0 0
      %288 = vmatpush1.bf16.msra.mxu0 0
      %289 = vmatprep.subr.bf16.mxu0 0
      %290 = vmatpush1.bf16.msra.mxu0 0
      %291 = vmatprep.subr.bf16.mxu0 0
      %292 = vmatpush1.bf16.msra.mxu0 0
      %293 = vmatprep.subr.bf16.mxu0 0
      %294 = vmatpush1.bf16.msra.mxu0 0
      %295 = vmatprep.subr.bf16.mxu0 0
      %296 = vmatpush1.bf16.msra.mxu0 0
      %297 = vmatprep.subr.bf16.mxu0 0
      %298 = vmatpush1.bf16.msra.mxu0 0
      %299 = vmatprep.subr.bf16.mxu0 0
      %300 = vmatpush1.bf16.msra.mxu0 0
      %301 = vmatprep.subr.bf16.mxu0 0
      %302 = vmatpush1.bf16.msra.mxu0 0
      %303 = vmatprep.subr.bf16.mxu0 0
      %304 = vmatpush1.bf16.msra.mxu0 0
      %305 = vmatprep.subr.bf16.mxu0 0
      %306 = vmatpush1.bf16.msra.mxu0 0
      %307 = vmatprep.subr.bf16.mxu0 0
      %308 = vmatpush1.bf16.msra.mxu0 0
      %309 = vmatprep.subr.bf16.mxu0 0
      %310 = vmatpush1.bf16.msra.mxu0 0
      %311 = vmatprep.subr.bf16.mxu0 0
      %312 = vmatpush1.bf16.msra.mxu0 0
      %313 = vmatprep.subr.bf16.mxu0 0
      %314 = vmatpush1.bf16.msra.mxu0 0
      %315 = vmatprep.subr.bf16.mxu0 0
      %316 = vmatpush1.bf16.msra.mxu0 0
      %317 = vmatprep.mubr.bf16.mxu0 0
      %318 = vmatmul.mubr.bf16.gmra.mrb[0].mxu0 %v270
      %v319 = vpop.f32.mrb[0].mxu0
      %v320 = vadd.f32 %v241, %v319
      %v321 = vpop.f32.mrb[0].mxu0
      %v322 = vpop.f32.mrb[0].mxu0
      %v323 = vadd.f32 %v241, %v322
      %v324 = vpop.f32.mrb[0].mxu0
      %325 = vmatprep.mubr.bf16.mxu0 0
      %326 = vmatmul.mubr.bf16.gmra.mrb[0].mxu0 %v273
      %v327 = vpop.f32.mrb[0].mxu0
      %v328 = vadd.f32 %v241, %v327
      %v329 = vpop.f32.mrb[0].mxu0
      %v330 = vpop.f32.mrb[0].mxu0
      %v331 = vadd.f32 %v241, %v330
      %v332 = vpop.f32.mrb[0].mxu0
      %333 = vmatprep.mubr.bf16.mxu0 0
      %334 = vmatmul.mubr.bf16.gmra.mrb[0].mxu0 %v276
      %v335 = vpop.f32.mrb[0].mxu0
      %v336 = vadd.f32 %v241, %v335
      %v337 = vpop.f32.mrb[0].mxu0
      %v338 = vpop.f32.mrb[0].mxu0
      %v339 = vadd.f32 %v241, %v338
      %v340 = vpop.f32.mrb[0].mxu0
      %341 = vmatprep.mubr.bf16.mxu0 0
      %342 = vmatmul.mubr.bf16.gmra.mrb[0].mxu0 %v279
      %v343 = vpop.f32.mrb[0].mxu0
      %v344 = vadd.f32 %v241, %v343
      %v345 = vpop.f32.mrb[0].mxu0
      %v346 = vpop.f32.mrb[0].mxu0
      %v347 = vadd.f32 %v241, %v346
      %v348 = vpop.f32.mrb[0].mxu0
      %349 = vdwg.mxu0
      %v350 = vmax.f32 %v320, 0.0
      %v351 = vmax.f32 %v323, 0.0
      %v352 = vmax.f32 %v328, 0.0
      %v353 = vmax.f32 %v331, 0.0
      %v354 = vmax.f32 %v336, 0.0
      %v355 = vmax.f32 %v339, 0.0
      %v356 = vmax.f32 %v344, 0.0
      %v357 = vmax.f32 %v347, 0.0
      %vm358 = vcmask 162816
      %359 = vst.msk [vmem:[#allocation2] sm:$0xff] %vm358, %v350
      %360 = vst.msk [vmem:[#allocation2 + $0x8] sm:$0xff] %vm358, %v351
      %361 = vst.msk [vmem:[#allocation2 + $0x10] sm:$0xff] %vm358, %v352
      %362 = vst.msk [vmem:[#allocation2 + $0x18] sm:$0xff] %vm358, %v353
      %363 = vst.msk [vmem:[#allocation2 + $0x20] sm:$0xff] %vm358, %v354
      %364 = vst.msk [vmem:[#allocation2 + $0x28] sm:$0xff] %vm358, %v355
      %365 = vst.msk [vmem:[#allocation2 + $0x30] sm:$0xff] %vm358, %v356
      %366 = vst.msk [vmem:[#allocation2 + $0x38] sm:$0xff] %vm358, %v357
      %s367 = scalar_lea.vmem %s219, 32
      %v368 = vld [vmem:[%s367] sm:$0xf]
      %v369 = vld [vmem:[%s367 + $0x4] sm:$0xf]
      %v370 = vld [vmem:[%s367 + $0x8] sm:$0xf]
      %v371 = vld [vmem:[%s367 + $0xc] sm:$0xf]
      %v372 = vld [vmem:[%s367 + $0x10] sm:$0xf]
      %v373 = vld [vmem:[%s367 + $0x14] sm:$0xf]
      %v374 = vld [vmem:[%s367 + $0x18] sm:$0xf]
      %v375 = vld [vmem:[%s367 + $0x1c] sm:$0xf]
      %v384 = vunpack.c.l.b16 %v368
      %v385 = vunpack.c.l.b16 %v369
      %v386 = vunpack.c.l.b16 %v370
      %v387 = vunpack.c.l.b16 %v371
      %v388 = vunpack.c.l.b16 %v372
      %v389 = vunpack.c.l.b16 %v373
      %v390 = vunpack.c.l.b16 %v374
      %v391 = vunpack.c.l.b16 %v375
      %v392 = vpack.c.b16 %v385, %v384
      %v393 = vpack.c.b16 %v387, %v386
      %v394 = vpack.c.b16 %v389, %v388
      %v395 = vpack.c.b16 %v391, %v390
      %v397 = vsel %vm268, %v392, 0
      %v400 = vsel %vm268, %v393, 0
      %v403 = vsel %vm268, %v394, 0
      %v406 = vsel %vm268, %v395, 0
      %408 = vmatprep.subr.bf16.mxu0 0
      %409 = vmatpush1.bf16.msra.mxu0 %v283
      %410 = vmatprep.subr.bf16.mxu0 0
      %411 = vmatpush1.bf16.msra.mxu0 0
      %412 = vmatprep.subr.bf16.mxu0 0
      %413 = vmatpush1.bf16.msra.mxu0 0
      %414 = vmatprep.subr.bf16.mxu0 0
      %415 = vmatpush1.bf16.msra.mxu0 0
      %416 = vmatprep.subr.bf16.mxu0 0
      %417 = vmatpush1.bf16.msra.mxu0 0
      %418 = vmatprep.subr.bf16.mxu0 0
      %419 = vmatpush1.bf16.msra.mxu0 0
      %420 = vmatprep.subr.bf16.mxu0 0
      %421 = vmatpush1.bf16.msra.mxu0 0
      %422 = vmatprep.subr.bf16.mxu0 0
      %423 = vmatpush1.bf16.msra.mxu0 0
      %424 = vmatprep.subr.bf16.mxu0 0
      %425 = vmatpush1.bf16.msra.mxu0 0
      %426 = vmatprep.subr.bf16.mxu0 0
      %427 = vmatpush1.bf16.msra.mxu0 0
      %428 = vmatprep.subr.bf16.mxu0 0
      %429 = vmatpush1.bf16.msra.mxu0 0
      %430 = vmatprep.subr.bf16.mxu0 0
      %431 = vmatpush1.bf16.msra.mxu0 0
      %432 = vmatprep.subr.bf16.mxu0 0
      %433 = vmatpush1.bf16.msra.mxu0 0
      %434 = vmatprep.subr.bf16.mxu0 0
      %435 = vmatpush1.bf16.msra.mxu0 0
      %436 = vmatprep.subr.bf16.mxu0 0
      %437 = vmatpush1.bf16.msra.mxu0 0
      %438 = vmatprep.subr.bf16.mxu0 0
      %439 = vmatpush1.bf16.msra.mxu0 0
      %440 = vmatprep.mubr.bf16.mxu0 0
      %441 = vmatmul.mubr.bf16.gmra.mrb[0].mxu0 %v397
      %v442 = vpop.f32.mrb[0].mxu0
      %v443 = vadd.f32 %v241, %v442
      %v444 = vpop.f32.mrb[0].mxu0
      %v445 = vpop.f32.mrb[0].mxu0
      %v446 = vadd.f32 %v241, %v445
      %v447 = vpop.f32.mrb[0].mxu0
      %448 = vmatprep.mubr.bf16.mxu0 0
      %449 = vmatmul.mubr.bf16.gmra.mrb[0].mxu0 %v400
      %v450 = vpop.f32.mrb[0].mxu0
      %v451 = vadd.f32 %v241, %v450
      %v452 = vpop.f32.mrb[0].mxu0
      %v453 = vpop.f32.mrb[0].mxu0
      %v454 = vadd.f32 %v241, %v453
      %v455 = vpop.f32.mrb[0].mxu0
      %456 = vmatprep.mubr.bf16.mxu0 0
      %457 = vmatmul.mubr.bf16.gmra.mrb[0].mxu0 %v403
      %v458 = vpop.f32.mrb[0].mxu0
      %v459 = vadd.f32 %v241, %v458
      %v460 = vpop.f32.mrb[0].mxu0
      %v461 = vpop.f32.mrb[0].mxu0
      %v462 = vadd.f32 %v241, %v461
      %v463 = vpop.f32.mrb[0].mxu0
      %464 = vmatprep.mubr.bf16.mxu0 0
      %465 = vmatmul.mubr.bf16.gmra.mrb[0].mxu0 %v406
      %v466 = vpop.f32.mrb[0].mxu0
      %v467 = vadd.f32 %v241, %v466
      %v468 = vpop.f32.mrb[0].mxu0
      %v469 = vpop.f32.mrb[0].mxu0
      %v470 = vadd.f32 %v241, %v469
      %v471 = vpop.f32.mrb[0].mxu0
      %472 = vdwg.mxu0
      %v473 = vmax.f32 %v443, 0.0
      %v474 = vmax.f32 %v446, 0.0
      %v475 = vmax.f32 %v451, 0.0
      %v476 = vmax.f32 %v454, 0.0
      %v477 = vmax.f32 %v459, 0.0
      %v478 = vmax.f32 %v462, 0.0
      %v479 = vmax.f32 %v467, 0.0
      %v480 = vmax.f32 %v470, 0.0
      %s481 = scalar_lea.vmem [#allocation2], 64
      %482 = vst.msk [vmem:[%s481] sm:$0xff] %vm358, %v473
      %483 = vst.msk [vmem:[%s481 + $0x8] sm:$0xff] %vm358, %v474
      %484 = vst.msk [vmem:[%s481 + $0x10] sm:$0xff] %vm358, %v475
      %485 = vst.msk [vmem:[%s481 + $0x18] sm:$0xff] %vm358, %v476
      %486 = vst.msk [vmem:[%s481 + $0x20] sm:$0xff] %vm358, %v477
      %487 = vst.msk [vmem:[%s481 + $0x28] sm:$0xff] %vm358, %v478
      %488 = vst.msk [vmem:[%s481 + $0x30] sm:$0xff] %vm358, %v479
      %489 = vst.msk [vmem:[%s481 + $0x38] sm:$0xff] %vm358, %v480
      %s490 = scalar_lea.vmem %s219, 64
      %v491 = vld [vmem:[%s490] sm:$0xf]
      %v492 = vld [vmem:[%s490 + $0x4] sm:$0xf]
      %v493 = vld [vmem:[%s490 + $0x8] sm:$0xf]
      %v494 = vld [vmem:[%s490 + $0xc] sm:$0xf]
      %v495 = vld [vmem:[%s490 + $0x10] sm:$0xf]
      %v496 = vld [vmem:[%s490 + $0x14] sm:$0xf]
      %v497 = vld [vmem:[%s490 + $0x18] sm:$0xf]
      %v498 = vld [vmem:[%s490 + $0x1c] sm:$0xf]
      %v507 = vunpack.c.l.b16 %v491
      %v508 = vunpack.c.l.b16 %v492
      %v509 = vunpack.c.l.b16 %v493
      %v510 = vunpack.c.l.b16 %v494
      %v511 = vunpack.c.l.b16 %v495
      %v512 = vunpack.c.l.b16 %v496
      %v513 = vunpack.c.l.b16 %v497
      %v514 = vunpack.c.l.b16 %v498
      %v515 = vpack.c.b16 %v508, %v507
      %v516 = vpack.c.b16 %v510, %v509
      %v517 = vpack.c.b16 %v512, %v511
      %v518 = vpack.c.b16 %v514, %v513
      %v520 = vsel %vm268, %v515, 0
      %v523 = vsel %vm268, %v516, 0
      %v526 = vsel %vm268, %v517, 0
      %v529 = vsel %vm268, %v518, 0
      %531 = vmatprep.subr.bf16.mxu0 0
      %532 = vmatpush1.bf16.msra.mxu0 %v283
      %533 = vmatprep.subr.bf16.mxu0 0
      %534 = vmatpush1.bf16.msra.mxu0 0
      %535 = vmatprep.subr.bf16.mxu0 0
      %536 = vmatpush1.bf16.msra.mxu0 0
      %537 = vmatprep.subr.bf16.mxu0 0
      %538 = vmatpush1.bf16.msra.mxu0 0
      %539 = vmatprep.subr.bf16.mxu0 0
      %540 = vmatpush1.bf16.msra.mxu0 0
      %541 = vmatprep.subr.bf16.mxu0 0
      %542 = vmatpush1.bf16.msra.mxu0 0
      %543 = vmatprep.subr.bf16.mxu0 0
      %544 = vmatpush1.bf16.msra.mxu0 0
      %545 = vmatprep.subr.bf16.mxu0 0
      %546 = vmatpush1.bf16.msra.mxu0 0
      %547 = vmatprep.subr.bf16.mxu0 0
      %548 = vmatpush1.bf16.msra.mxu0 0
      %549 = vmatprep.subr.bf16.mxu0 0
      %550 = vmatpush1.bf16.msra.mxu0 0
      %551 = vmatprep.subr.bf16.mxu0 0
      %552 = vmatpush1.bf16.msra.mxu0 0
      %553 = vmatprep.subr.bf16.mxu0 0
      %554 = vmatpush1.bf16.msra.mxu0 0
      %555 = vmatprep.subr.bf16.mxu0 0
      %556 = vmatpush1.bf16.msra.mxu0 0
      %557 = vmatprep.subr.bf16.mxu0 0
      %558 = vmatpush1.bf16.msra.mxu0 0
      %559 = vmatprep.subr.bf16.mxu0 0
      %560 = vmatpush1.bf16.msra.mxu0 0
      %561 = vmatprep.subr.bf16.mxu0 0
      %562 = vmatpush1.bf16.msra.mxu0 0
      %563 = vmatprep.mubr.bf16.mxu0 0
      %564 = vmatmul.mubr.bf16.gmra.mrb[0].mxu0 %v520
      %v565 = vpop.f32.mrb[0].mxu0
      %v566 = vadd.f32 %v241, %v565
      %v567 = vpop.f32.mrb[0].mxu0
      %v568 = vpop.f32.mrb[0].mxu0
      %v569 = vadd.f32 %v241, %v568
      %v570 = vpop.f32.mrb[0].mxu0
      %571 = vmatprep.mubr.bf16.mxu0 0
      %572 = vmatmul.mubr.bf16.gmra.mrb[0].mxu0 %v523
      %v573 = vpop.f32.mrb[0].mxu0
      %v574 = vadd.f32 %v241, %v573
      %v575 = vpop.f32.mrb[0].mxu0
      %v576 = vpop.f32.mrb[0].mxu0
      %v577 = vadd.f32 %v241, %v576
      %v578 = vpop.f32.mrb[0].mxu0
      %579 = vmatprep.mubr.bf16.mxu0 0
      %580 = vmatmul.mubr.bf16.gmra.mrb[0].mxu0 %v526
      %v581 = vpop.f32.mrb[0].mxu0
      %v582 = vadd.f32 %v241, %v581
      %v583 = vpop.f32.mrb[0].mxu0
      %v584 = vpop.f32.mrb[0].mxu0
      %v585 = vadd.f32 %v241, %v584
      %v586 = vpop.f32.mrb[0].mxu0
      %587 = vmatprep.mubr.bf16.mxu0 0
      %588 = vmatmul.mubr.bf16.gmra.mrb[0].mxu0 %v529
      %v589 = vpop.f32.mrb[0].mxu0
      %v590 = vadd.f32 %v241, %v589
      %v591 = vpop.f32.mrb[0].mxu0
      %v592 = vpop.f32.mrb[0].mxu0
      %v593 = vadd.f32 %v241, %v592
      %v594 = vpop.f32.mrb[0].mxu0
      %595 = vdwg.mxu0
      %v596 = vmax.f32 %v566, 0.0
      %v597 = vmax.f32 %v569, 0.0
      %v598 = vmax.f32 %v574, 0.0
      %v599 = vmax.f32 %v577, 0.0
      %v600 = vmax.f32 %v582, 0.0
      %v601 = vmax.f32 %v585, 0.0
      %v602 = vmax.f32 %v590, 0.0
      %v603 = vmax.f32 %v593, 0.0
      %s604 = scalar_lea.vmem [#allocation2], 128
      %605 = vst.msk [vmem:[%s604] sm:$0xff] %vm358, %v596
      %606 = vst.msk [vmem:[%s604 + $0x8] sm:$0xff] %vm358, %v597
      %607 = vst.msk [vmem:[%s604 + $0x10] sm:$0xff] %vm358, %v598
      %608 = vst.msk [vmem:[%s604 + $0x18] sm:$0xff] %vm358, %v599
      %609 = vst.msk [vmem:[%s604 + $0x20] sm:$0xff] %vm358, %v600
      %610 = vst.msk [vmem:[%s604 + $0x28] sm:$0xff] %vm358, %v601
      %611 = vst.msk [vmem:[%s604 + $0x30] sm:$0xff] %vm358, %v602
      %612 = vst.msk [vmem:[%s604 + $0x38] sm:$0xff] %vm358, %v603
      %s613 = scalar_lea.vmem %s219, 96
      %v614 = vld [vmem:[%s613] sm:$0xf]
      %v615 = vld [vmem:[%s613 + $0x4] sm:$0xf]
      %v616 = vld [vmem:[%s613 + $0x8] sm:$0xf]
      %v617 = vld [vmem:[%s613 + $0xc] sm:$0xf]
      %v618 = vld [vmem:[%s613 + $0x10] sm:$0xf]
      %v619 = vld [vmem:[%s613 + $0x14] sm:$0xf]
      %v620 = vld [vmem:[%s613 + $0x18] sm:$0xf]
      %v621 = vld [vmem:[%s613 + $0x1c] sm:$0xf]
      %v630 = vunpack.c.l.b16 %v614
      %v631 = vunpack.c.l.b16 %v615
      %v632 = vunpack.c.l.b16 %v616
      %v633 = vunpack.c.l.b16 %v617
      %v634 = vunpack.c.l.b16 %v618
      %v635 = vunpack.c.l.b16 %v619
      %v636 = vunpack.c.l.b16 %v620
      %v637 = vunpack.c.l.b16 %v621
      %v638 = vpack.c.b16 %v631, %v630
      %v639 = vpack.c.b16 %v633, %v632
      %v640 = vpack.c.b16 %v635, %v634
      %v641 = vpack.c.b16 %v637, %v636
      %v643 = vsel %vm268, %v638, 0
      %v646 = vsel %vm268, %v639, 0
      %v649 = vsel %vm268, %v640, 0
      %v652 = vsel %vm268, %v641, 0
      %654 = vmatprep.subr.bf16.mxu0 0
      %655 = vmatpush1.bf16.msra.mxu0 %v283
      %656 = vmatprep.subr.bf16.mxu0 0
      %657 = vmatpush1.bf16.msra.mxu0 0
      %658 = vmatprep.subr.bf16.mxu0 0
      %659 = vmatpush1.bf16.msra.mxu0 0
      %660 = vmatprep.subr.bf16.mxu0 0
      %661 = vmatpush1.bf16.msra.mxu0 0
      %662 = vmatprep.subr.bf16.mxu0 0
      %663 = vmatpush1.bf16.msra.mxu0 0
      %664 = vmatprep.subr.bf16.mxu0 0
      %665 = vmatpush1.bf16.msra.mxu0 0
      %666 = vmatprep.subr.bf16.mxu0 0
      %667 = vmatpush1.bf16.msra.mxu0 0
      %668 = vmatprep.subr.bf16.mxu0 0
      %669 = vmatpush1.bf16.msra.mxu0 0
      %670 = vmatprep.subr.bf16.mxu0 0
      %671 = vmatpush1.bf16.msra.mxu0 0
      %672 = vmatprep.subr.bf16.mxu0 0
      %673 = vmatpush1.bf16.msra.mxu0 0
      %674 = vmatprep.subr.bf16.mxu0 0
      %675 = vmatpush1.bf16.msra.mxu0 0
      %676 = vmatprep.subr.bf16.mxu0 0
      %677 = vmatpush1.bf16.msra.mxu0 0
      %678 = vmatprep.subr.bf16.mxu0 0
      %679 = vmatpush1.bf16.msra.mxu0 0
      %680 = vmatprep.subr.bf16.mxu0 0
      %681 = vmatpush1.bf16.msra.mxu0 0
      %682 = vmatprep.subr.bf16.mxu0 0
      %683 = vmatpush1.bf16.msra.mxu0 0
      %684 = vmatprep.subr.bf16.mxu0 0
      %685 = vmatpush1.bf16.msra.mxu0 0
      %686 = vmatprep.mubr.bf16.mxu0 0
      %687 = vmatmul.mubr.bf16.gmra.mrb[0].mxu0 %v643
      %v688 = vpop.f32.mrb[0].mxu0
      %v689 = vadd.f32 %v241, %v688
      %v690 = vpop.f32.mrb[0].mxu0
      %v691 = vpop.f32.mrb[0].mxu0
      %v692 = vadd.f32 %v241, %v691
      %v693 = vpop.f32.mrb[0].mxu0
      %694 = vmatprep.mubr.bf16.mxu0 0
      %695 = vmatmul.mubr.bf16.gmra.mrb[0].mxu0 %v646
      %v696 = vpop.f32.mrb[0].mxu0
      %v697 = vadd.f32 %v241, %v696
      %v698 = vpop.f32.mrb[0].mxu0
      %v699 = vpop.f32.mrb[0].mxu0
      %v700 = vadd.f32 %v241, %v699
      %v701 = vpop.f32.mrb[0].mxu0
      %702 = vmatprep.mubr.bf16.mxu0 0
      %703 = vmatmul.mubr.bf16.gmra.mrb[0].mxu0 %v649
      %v704 = vpop.f32.mrb[0].mxu0
      %v705 = vadd.f32 %v241, %v704
      %v706 = vpop.f32.mrb[0].mxu0
      %v707 = vpop.f32.mrb[0].mxu0
      %v708 = vadd.f32 %v241, %v707
      %v709 = vpop.f32.mrb[0].mxu0
      %710 = vmatprep.mubr.bf16.mxu0 0
      %711 = vmatmul.mubr.bf16.gmra.mrb[0].mxu0 %v652
      %v712 = vpop.f32.mrb[0].mxu0
      %v713 = vadd.f32 %v241, %v712
      %v714 = vpop.f32.mrb[0].mxu0
      %v715 = vpop.f32.mrb[0].mxu0
      %v716 = vadd.f32 %v241, %v715
      %v717 = vpop.f32.mrb[0].mxu0
      %718 = vdwg.mxu0
      %v719 = vmax.f32 %v689, 0.0
      %v720 = vmax.f32 %v692, 0.0
      %v721 = vmax.f32 %v697, 0.0
      %v722 = vmax.f32 %v700, 0.0
      %v723 = vmax.f32 %v705, 0.0
      %v724 = vmax.f32 %v708, 0.0
      %v725 = vmax.f32 %v713, 0.0
      %v726 = vmax.f32 %v716, 0.0
      %s727 = scalar_lea.vmem [#allocation2], 192
      %728 = vst.msk [vmem:[%s727] sm:$0xff] %vm358, %v719
      %729 = vst.msk [vmem:[%s727 + $0x8] sm:$0xff] %vm358, %v720
      %730 = vst.msk [vmem:[%s727 + $0x10] sm:$0xff] %vm358, %v721
      %731 = vst.msk [vmem:[%s727 + $0x18] sm:$0xff] %vm358, %v722
      %732 = vst.msk [vmem:[%s727 + $0x20] sm:$0xff] %vm358, %v723
      %733 = vst.msk [vmem:[%s727 + $0x28] sm:$0xff] %vm358, %v724
      %734 = vst.msk [vmem:[%s727 + $0x30] sm:$0xff] %vm358, %v725
      %735 = vst.msk [vmem:[%s727 + $0x38] sm:$0xff] %vm358, %v726
      %s736 = scalar_lea.vmem %s219, 128
      %v737 = vld [vmem:[%s736] sm:$0xf]
      %v738 = vld [vmem:[%s736 + $0x4] sm:$0xf]
      %v739 = vld [vmem:[%s736 + $0x8] sm:$0xf]
      %v740 = vld [vmem:[%s736 + $0xc] sm:$0xf]
      %v741 = vld [vmem:[%s736 + $0x10] sm:$0xf]
      %v742 = vld [vmem:[%s736 + $0x14] sm:$0xf]
      %v743 = vld [vmem:[%s736 + $0x18] sm:$0xf]
      %v744 = vld [vmem:[%s736 + $0x1c] sm:$0xf]
      %v753 = vunpack.c.l.b16 %v737
      %v754 = vunpack.c.l.b16 %v738
      %v755 = vunpack.c.l.b16 %v739
      %v756 = vunpack.c.l.b16 %v740
      %v757 = vunpack.c.l.b16 %v741
      %v758 = vunpack.c.l.b16 %v742
      %v759 = vunpack.c.l.b16 %v743
      %v760 = vunpack.c.l.b16 %v744
      %v761 = vpack.c.b16 %v754, %v753
      %v762 = vpack.c.b16 %v756, %v755
      %v763 = vpack.c.b16 %v758, %v757
      %v764 = vpack.c.b16 %v760, %v759
      %v766 = vsel %vm268, %v761, 0
      %v769 = vsel %vm268, %v762, 0
      %v772 = vsel %vm268, %v763, 0
      %v775 = vsel %vm268, %v764, 0
      %777 = vmatprep.subr.bf16.mxu0 0
      %778 = vmatpush1.bf16.msra.mxu0 %v283
      %779 = vmatprep.subr.bf16.mxu0 0
      %780 = vmatpush1.bf16.msra.mxu0 0
      %781 = vmatprep.subr.bf16.mxu0 0
      %782 = vmatpush1.bf16.msra.mxu0 0
      %783 = vmatprep.subr.bf16.mxu0 0
      %784 = vmatpush1.bf16.msra.mxu0 0
      %785 = vmatprep.subr.bf16.mxu0 0
      %786 = vmatpush1.bf16.msra.mxu0 0
      %787 = vmatprep.subr.bf16.mxu0 0
      %788 = vmatpush1.bf16.msra.mxu0 0
      %789 = vmatprep.subr.bf16.mxu0 0
      %790 = vmatpush1.bf16.msra.mxu0 0
      %791 = vmatprep.subr.bf16.mxu0 0
      %792 = vmatpush1.bf16.msra.mxu0 0
      %793 = vmatprep.subr.bf16.mxu0 0
      %794 = vmatpush1.bf16.msra.mxu0 0
      %795 = vmatprep.subr.bf16.mxu0 0
      %796 = vmatpush1.bf16.msra.mxu0 0
      %797 = vmatprep.subr.bf16.mxu0 0
      %798 = vmatpush1.bf16.msra.mxu0 0
      %799 = vmatprep.subr.bf16.mxu0 0
      %800 = vmatpush1.bf16.msra.mxu0 0
      %801 = vmatprep.subr.bf16.mxu0 0
      %802 = vmatpush1.bf16.msra.mxu0 0
      %803 = vmatprep.subr.bf16.mxu0 0
      %804 = vmatpush1.bf16.msra.mxu0 0
      %805 = vmatprep.subr.bf16.mxu0 0
      %806 = vmatpush1.bf16.msra.mxu0 0
      %807 = vmatprep.subr.bf16.mxu0 0
      %808 = vmatpush1.bf16.msra.mxu0 0
      %809 = vmatprep.mubr.bf16.mxu0 0
      %810 = vmatmul.mubr.bf16.gmra.mrb[0].mxu0 %v766
      %v811 = vpop.f32.mrb[0].mxu0
      %v812 = vadd.f32 %v241, %v811
      %v813 = vpop.f32.mrb[0].mxu0
      %v814 = vpop.f32.mrb[0].mxu0
      %v815 = vadd.f32 %v241, %v814
      %v816 = vpop.f32.mrb[0].mxu0
      %817 = vmatprep.mubr.bf16.mxu0 0
      %818 = vmatmul.mubr.bf16.gmra.mrb[0].mxu0 %v769
      %v819 = vpop.f32.mrb[0].mxu0
      %v820 = vadd.f32 %v241, %v819
      %v821 = vpop.f32.mrb[0].mxu0
      %v822 = vpop.f32.mrb[0].mxu0
      %v823 = vadd.f32 %v241, %v822
      %v824 = vpop.f32.mrb[0].mxu0
      %825 = vmatprep.mubr.bf16.mxu0 0
      %826 = vmatmul.mubr.bf16.gmra.mrb[0].mxu0 %v772
      %v827 = vpop.f32.mrb[0].mxu0
      %v828 = vadd.f32 %v241, %v827
      %v829 = vpop.f32.mrb[0].mxu0
      %v830 = vpop.f32.mrb[0].mxu0
      %v831 = vadd.f32 %v241, %v830
      %v832 = vpop.f32.mrb[0].mxu0
      %833 = vmatprep.mubr.bf16.mxu0 0
      %834 = vmatmul.mubr.bf16.gmra.mrb[0].mxu0 %v775
      %v835 = vpop.f32.mrb[0].mxu0
      %v836 = vadd.f32 %v241, %v835
      %v837 = vpop.f32.mrb[0].mxu0
      %v838 = vpop.f32.mrb[0].mxu0
      %v839 = vadd.f32 %v241, %v838
      %v840 = vpop.f32.mrb[0].mxu0
      %841 = vdwg.mxu0
      %v842 = vmax.f32 %v812, 0.0
      %v843 = vmax.f32 %v815, 0.0
      %v844 = vmax.f32 %v820, 0.0
      %v845 = vmax.f32 %v823, 0.0
      %v846 = vmax.f32 %v828, 0.0
      %v847 = vmax.f32 %v831, 0.0
      %v848 = vmax.f32 %v836, 0.0
      %v849 = vmax.f32 %v839, 0.0
      %s850 = scalar_lea.vmem [#allocation2], 256
      %851 = vst.msk [vmem:[%s850] sm:$0xff] %vm358, %v842
      %852 = vst.msk [vmem:[%s850 + $0x8] sm:$0xff] %vm358, %v843
      %853 = vst.msk [vmem:[%s850 + $0x10] sm:$0xff] %vm358, %v844
      %854 = vst.msk [vmem:[%s850 + $0x18] sm:$0xff] %vm358, %v845
      %855 = vst.msk [vmem:[%s850 + $0x20] sm:$0xff] %vm358, %v846
      %856 = vst.msk [vmem:[%s850 + $0x28] sm:$0xff] %vm358, %v847
      %857 = vst.msk [vmem:[%s850 + $0x30] sm:$0xff] %vm358, %v848
      %858 = vst.msk [vmem:[%s850 + $0x38] sm:$0xff] %vm358, %v849
      %s859 = scalar_lea.vmem %s219, 160
      %v860 = vld [vmem:[%s859] sm:$0xf]
      %v861 = vld [vmem:[%s859 + $0x4] sm:$0xf]
      %v862 = vld [vmem:[%s859 + $0x8] sm:$0xf]
      %v863 = vld [vmem:[%s859 + $0xc] sm:$0xf]
      %v864 = vld [vmem:[%s859 + $0x10] sm:$0xf]
      %v865 = vld [vmem:[%s859 + $0x14] sm:$0xf]
      %v866 = vld [vmem:[%s859 + $0x18] sm:$0xf]
      %v867 = vld [vmem:[%s859 + $0x1c] sm:$0xf]
      %v876 = vunpack.c.l.b16 %v860
      %v877 = vunpack.c.l.b16 %v861
      %v878 = vunpack.c.l.b16 %v862
      %v879 = vunpack.c.l.b16 %v863
      %v880 = vunpack.c.l.b16 %v864
      %v881 = vunpack.c.l.b16 %v865
      %v882 = vunpack.c.l.b16 %v866
      %v883 = vunpack.c.l.b16 %v867
      %v884 = vpack.c.b16 %v877, %v876
      %v885 = vpack.c.b16 %v879, %v878
      %v886 = vpack.c.b16 %v881, %v880
      %v887 = vpack.c.b16 %v883, %v882
      %v889 = vsel %vm268, %v884, 0
      %v892 = vsel %vm268, %v885, 0
      %v895 = vsel %vm268, %v886, 0
      %v898 = vsel %vm268, %v887, 0
      %900 = vmatprep.subr.bf16.mxu0 0
      %901 = vmatpush1.bf16.msra.mxu0 %v283
      %902 = vmatprep.subr.bf16.mxu0 0
      %903 = vmatpush1.bf16.msra.mxu0 0
      %904 = vmatprep.subr.bf16.mxu0 0
      %905 = vmatpush1.bf16.msra.mxu0 0
      %906 = vmatprep.subr.bf16.mxu0 0
      %907 = vmatpush1.bf16.msra.mxu0 0
      %908 = vmatprep.subr.bf16.mxu0 0
      %909 = vmatpush1.bf16.msra.mxu0 0
      %910 = vmatprep.subr.bf16.mxu0 0
      %911 = vmatpush1.bf16.msra.mxu0 0
      %912 = vmatprep.subr.bf16.mxu0 0
      %913 = vmatpush1.bf16.msra.mxu0 0
      %914 = vmatprep.subr.bf16.mxu0 0
      %915 = vmatpush1.bf16.msra.mxu0 0
      %916 = vmatprep.subr.bf16.mxu0 0
      %917 = vmatpush1.bf16.msra.mxu0 0
      %918 = vmatprep.subr.bf16.mxu0 0
      %919 = vmatpush1.bf16.msra.mxu0 0
      %920 = vmatprep.subr.bf16.mxu0 0
      %921 = vmatpush1.bf16.msra.mxu0 0
      %922 = vmatprep.subr.bf16.mxu0 0
      %923 = vmatpush1.bf16.msra.mxu0 0
      %924 = vmatprep.subr.bf16.mxu0 0
      %925 = vmatpush1.bf16.msra.mxu0 0
      %926 = vmatprep.subr.bf16.mxu0 0
      %927 = vmatpush1.bf16.msra.mxu0 0
      %928 = vmatprep.subr.bf16.mxu0 0
      %929 = vmatpush1.bf16.msra.mxu0 0
      %930 = vmatprep.subr.bf16.mxu0 0
      %931 = vmatpush1.bf16.msra.mxu0 0
      %932 = vmatprep.mubr.bf16.mxu0 0
      %933 = vmatmul.mubr.bf16.gmra.mrb[0].mxu0 %v889
      %v934 = vpop.f32.mrb[0].mxu0
      %v935 = vadd.f32 %v241, %v934
      %v936 = vpop.f32.mrb[0].mxu0
      %v937 = vpop.f32.mrb[0].mxu0
      %v938 = vadd.f32 %v241, %v937
      %v939 = vpop.f32.mrb[0].mxu0
      %940 = vmatprep.mubr.bf16.mxu0 0
      %941 = vmatmul.mubr.bf16.gmra.mrb[0].mxu0 %v892
      %v942 = vpop.f32.mrb[0].mxu0
      %v943 = vadd.f32 %v241, %v942
      %v944 = vpop.f32.mrb[0].mxu0
      %v945 = vpop.f32.mrb[0].mxu0
      %v946 = vadd.f32 %v241, %v945
      %v947 = vpop.f32.mrb[0].mxu0
      %948 = vmatprep.mubr.bf16.mxu0 0
      %949 = vmatmul.mubr.bf16.gmra.mrb[0].mxu0 %v895
      %v950 = vpop.f32.mrb[0].mxu0
      %v951 = vadd.f32 %v241, %v950
      %v952 = vpop.f32.mrb[0].mxu0
      %v953 = vpop.f32.mrb[0].mxu0
      %v954 = vadd.f32 %v241, %v953
      %v955 = vpop.f32.mrb[0].mxu0
      %956 = vmatprep.mubr.bf16.mxu0 0
      %957 = vmatmul.mubr.bf16.gmra.mrb[0].mxu0 %v898
      %v958 = vpop.f32.mrb[0].mxu0
      %v959 = vadd.f32 %v241, %v958
      %v960 = vpop.f32.mrb[0].mxu0
      %v961 = vpop.f32.mrb[0].mxu0
      %v962 = vadd.f32 %v241, %v961
      %v963 = vpop.f32.mrb[0].mxu0
      %964 = vdwg.mxu0
      %v965 = vmax.f32 %v935, 0.0
      %v966 = vmax.f32 %v938, 0.0
      %v967 = vmax.f32 %v943, 0.0
      %v968 = vmax.f32 %v946, 0.0
      %v969 = vmax.f32 %v951, 0.0
      %v970 = vmax.f32 %v954, 0.0
      %v971 = vmax.f32 %v959, 0.0
      %v972 = vmax.f32 %v962, 0.0
      %s973 = scalar_lea.vmem [#allocation2], 320
      %974 = vst.msk [vmem:[%s973] sm:$0xff] %vm358, %v965
      %975 = vst.msk [vmem:[%s973 + $0x8] sm:$0xff] %vm358, %v966
      %976 = vst.msk [vmem:[%s973 + $0x10] sm:$0xff] %vm358, %v967
      %977 = vst.msk [vmem:[%s973 + $0x18] sm:$0xff] %vm358, %v968
      %978 = vst.msk [vmem:[%s973 + $0x20] sm:$0xff] %vm358, %v969
      %979 = vst.msk [vmem:[%s973 + $0x28] sm:$0xff] %vm358, %v970
      %980 = vst.msk [vmem:[%s973 + $0x30] sm:$0xff] %vm358, %v971
      %981 = vst.msk [vmem:[%s973 + $0x38] sm:$0xff] %vm358, %v972
      %s982 = scalar_lea.vmem %s219, 192
      %v983 = vld [vmem:[%s982] sm:$0xf]
      %v984 = vld [vmem:[%s982 + $0x4] sm:$0xf]
      %v985 = vld [vmem:[%s982 + $0x8] sm:$0xf]
      %v986 = vld [vmem:[%s982 + $0xc] sm:$0xf]
      %v987 = vld [vmem:[%s982 + $0x10] sm:$0xf]
      %v988 = vld [vmem:[%s982 + $0x14] sm:$0xf]
      %v989 = vld [vmem:[%s982 + $0x18] sm:$0xf]
      %v990 = vld [vmem:[%s982 + $0x1c] sm:$0xf]
      %v999 = vunpack.c.l.b16 %v983
      %v1000 = vunpack.c.l.b16 %v984
      %v1001 = vunpack.c.l.b16 %v985
      %v1002 = vunpack.c.l.b16 %v986
      %v1003 = vunpack.c.l.b16 %v987
      %v1004 = vunpack.c.l.b16 %v988
      %v1005 = vunpack.c.l.b16 %v989
      %v1006 = vunpack.c.l.b16 %v990
      %v1007 = vpack.c.b16 %v1000, %v999
      %v1008 = vpack.c.b16 %v1002, %v1001
      %v1009 = vpack.c.b16 %v1004, %v1003
      %v1010 = vpack.c.b16 %v1006, %v1005
      %v1012 = vsel %vm268, %v1007, 0
      %v1015 = vsel %vm268, %v1008, 0
      %v1018 = vsel %vm268, %v1009, 0
      %v1021 = vsel %vm268, %v1010, 0
      %1023 = vmatprep.subr.bf16.mxu0 0
      %1024 = vmatpush1.bf16.msra.mxu0 %v283
      %1025 = vmatprep.subr.bf16.mxu0 0
      %1026 = vmatpush1.bf16.msra.mxu0 0
      %1027 = vmatprep.subr.bf16.mxu0 0
      %1028 = vmatpush1.bf16.msra.mxu0 0
      %1029 = vmatprep.subr.bf16.mxu0 0
      %1030 = vmatpush1.bf16.msra.mxu0 0
      %1031 = vmatprep.subr.bf16.mxu0 0
      %1032 = vmatpush1.bf16.msra.mxu0 0
      %1033 = vmatprep.subr.bf16.mxu0 0
      %1034 = vmatpush1.bf16.msra.mxu0 0
      %1035 = vmatprep.subr.bf16.mxu0 0
      %1036 = vmatpush1.bf16.msra.mxu0 0
      %1037 = vmatprep.subr.bf16.mxu0 0
      %1038 = vmatpush1.bf16.msra.mxu0 0
      %1039 = vmatprep.subr.bf16.mxu0 0
      %1040 = vmatpush1.bf16.msra.mxu0 0
      %1041 = vmatprep.subr.bf16.mxu0 0
      %1042 = vmatpush1.bf16.msra.mxu0 0
      %1043 = vmatprep.subr.bf16.mxu0 0
      %1044 = vmatpush1.bf16.msra.mxu0 0
      %1045 = vmatprep.subr.bf16.mxu0 0
      %1046 = vmatpush1.bf16.msra.mxu0 0
      %1047 = vmatprep.subr.bf16.mxu0 0
      %1048 = vmatpush1.bf16.msra.mxu0 0
      %1049 = vmatprep.subr.bf16.mxu0 0
      %1050 = vmatpush1.bf16.msra.mxu0 0
      %1051 = vmatprep.subr.bf16.mxu0 0
      %1052 = vmatpush1.bf16.msra.mxu0 0
      %1053 = vmatprep.subr.bf16.mxu0 0
      %1054 = vmatpush1.bf16.msra.mxu0 0
      %1055 = vmatprep.mubr.bf16.mxu0 0
      %1056 = vmatmul.mubr.bf16.gmra.mrb[0].mxu0 %v1012
      %v1057 = vpop.f32.mrb[0].mxu0
      %v1058 = vadd.f32 %v241, %v1057
      %v1059 = vpop.f32.mrb[0].mxu0
      %v1060 = vpop.f32.mrb[0].mxu0
      %v1061 = vadd.f32 %v241, %v1060
      %v1062 = vpop.f32.mrb[0].mxu0
      %1063 = vmatprep.mubr.bf16.mxu0 0
      %1064 = vmatmul.mubr.bf16.gmra.mrb[0].mxu0 %v1015
      %v1065 = vpop.f32.mrb[0].mxu0
      %v1066 = vadd.f32 %v241, %v1065
      %v1067 = vpop.f32.mrb[0].mxu0
      %v1068 = vpop.f32.mrb[0].mxu0
      %v1069 = vadd.f32 %v241, %v1068
      %v1070 = vpop.f32.mrb[0].mxu0
      %1071 = vmatprep.mubr.bf16.mxu0 0
      %1072 = vmatmul.mubr.bf16.gmra.mrb[0].mxu0 %v1018
      %v1073 = vpop.f32.mrb[0].mxu0
      %v1074 = vadd.f32 %v241, %v1073
      %v1075 = vpop.f32.mrb[0].mxu0
      %v1076 = vpop.f32.mrb[0].mxu0
      %v1077 = vadd.f32 %v241, %v1076
      %v1078 = vpop.f32.mrb[0].mxu0
      %1079 = vmatprep.mubr.bf16.mxu0 0
      %1080 = vmatmul.mubr.bf16.gmra.mrb[0].mxu0 %v1021
      %v1081 = vpop.f32.mrb[0].mxu0
      %v1082 = vadd.f32 %v241, %v1081
      %v1083 = vpop.f32.mrb[0].mxu0
      %v1084 = vpop.f32.mrb[0].mxu0
      %v1085 = vadd.f32 %v241, %v1084
      %v1086 = vpop.f32.mrb[0].mxu0
      %1087 = vdwg.mxu0
      %v1088 = vmax.f32 %v1058, 0.0
      %v1089 = vmax.f32 %v1061, 0.0
      %v1090 = vmax.f32 %v1066, 0.0
      %v1091 = vmax.f32 %v1069, 0.0
      %v1092 = vmax.f32 %v1074, 0.0
      %v1093 = vmax.f32 %v1077, 0.0
      %v1094 = vmax.f32 %v1082, 0.0
      %v1095 = vmax.f32 %v1085, 0.0
      %s1096 = scalar_lea.vmem [#allocation2], 384
      %1097 = vst.msk [vmem:[%s1096] sm:$0xff] %vm358, %v1088
      %1098 = vst.msk [vmem:[%s1096 + $0x8] sm:$0xff] %vm358, %v1089
      %1099 = vst.msk [vmem:[%s1096 + $0x10] sm:$0xff] %vm358, %v1090
      %1100 = vst.msk [vmem:[%s1096 + $0x18] sm:$0xff] %vm358, %v1091
      %1101 = vst.msk [vmem:[%s1096 + $0x20] sm:$0xff] %vm358, %v1092
      %1102 = vst.msk [vmem:[%s1096 + $0x28] sm:$0xff] %vm358, %v1093
      %1103 = vst.msk [vmem:[%s1096 + $0x30] sm:$0xff] %vm358, %v1094
      %1104 = vst.msk [vmem:[%s1096 + $0x38] sm:$0xff] %vm358, %v1095
      %s1105 = scalar_lea.vmem %s219, 224
      %v1106 = vld [vmem:[%s1105] sm:$0xf]
      %v1107 = vld [vmem:[%s1105 + $0x4] sm:$0xf]
      %v1108 = vld [vmem:[%s1105 + $0x8] sm:$0xf]
      %v1109 = vld [vmem:[%s1105 + $0xc] sm:$0xf]
      %v1110 = vld [vmem:[%s1105 + $0x10] sm:$0xf]
      %v1111 = vld [vmem:[%s1105 + $0x14] sm:$0xf]
      %v1112 = vld [vmem:[%s1105 + $0x18] sm:$0xf]
      %v1113 = vld [vmem:[%s1105 + $0x1c] sm:$0xf]
      %v1122 = vunpack.c.l.b16 %v1106
      %v1123 = vunpack.c.l.b16 %v1107
      %v1124 = vunpack.c.l.b16 %v1108
      %v1125 = vunpack.c.l.b16 %v1109
      %v1126 = vunpack.c.l.b16 %v1110
      %v1127 = vunpack.c.l.b16 %v1111
      %v1128 = vunpack.c.l.b16 %v1112
      %v1129 = vunpack.c.l.b16 %v1113
      %v1130 = vpack.c.b16 %v1123, %v1122
      %v1131 = vpack.c.b16 %v1125, %v1124
      %v1132 = vpack.c.b16 %v1127, %v1126
      %v1133 = vpack.c.b16 %v1129, %v1128
      %v1135 = vsel %vm268, %v1130, 0
      %v1138 = vsel %vm268, %v1131, 0
      %v1141 = vsel %vm268, %v1132, 0
      %v1144 = vsel %vm268, %v1133, 0
      %1146 = vmatprep.subr.bf16.mxu0 0
      %1147 = vmatpush1.bf16.msra.mxu0 %v283
      %1148 = vmatprep.subr.bf16.mxu0 0
      %1149 = vmatpush1.bf16.msra.mxu0 0
      %1150 = vmatprep.subr.bf16.mxu0 0
      %1151 = vmatpush1.bf16.msra.mxu0 0
      %1152 = vmatprep.subr.bf16.mxu0 0
      %1153 = vmatpush1.bf16.msra.mxu0 0
      %1154 = vmatprep.subr.bf16.mxu0 0
      %1155 = vmatpush1.bf16.msra.mxu0 0
      %1156 = vmatprep.subr.bf16.mxu0 0
      %1157 = vmatpush1.bf16.msra.mxu0 0
      %1158 = vmatprep.subr.bf16.mxu0 0
      %1159 = vmatpush1.bf16.msra.mxu0 0
      %1160 = vmatprep.subr.bf16.mxu0 0
      %1161 = vmatpush1.bf16.msra.mxu0 0
      %1162 = vmatprep.subr.bf16.mxu0 0
      %1163 = vmatpush1.bf16.msra.mxu0 0
      %1164 = vmatprep.subr.bf16.mxu0 0
      %1165 = vmatpush1.bf16.msra.mxu0 0
      %1166 = vmatprep.subr.bf16.mxu0 0
      %1167 = vmatpush1.bf16.msra.mxu0 0
      %1168 = vmatprep.subr.bf16.mxu0 0
      %1169 = vmatpush1.bf16.msra.mxu0 0
      %1170 = vmatprep.subr.bf16.mxu0 0
      %1171 = vmatpush1.bf16.msra.mxu0 0
      %1172 = vmatprep.subr.bf16.mxu0 0
      %1173 = vmatpush1.bf16.msra.mxu0 0
      %1174 = vmatprep.subr.bf16.mxu0 0
      %1175 = vmatpush1.bf16.msra.mxu0 0
      %1176 = vmatprep.subr.bf16.mxu0 0
      %1177 = vmatpush1.bf16.msra.mxu0 0
      %1178 = vmatprep.mubr.bf16.mxu0 0
      %1179 = vmatmul.mubr.bf16.gmra.mrb[0].mxu0 %v1135
      %v1180 = vpop.f32.mrb[0].mxu0
      %v1181 = vadd.f32 %v241, %v1180
      %v1182 = vpop.f32.mrb[0].mxu0
      %v1183 = vpop.f32.mrb[0].mxu0
      %v1184 = vadd.f32 %v241, %v1183
      %v1185 = vpop.f32.mrb[0].mxu0
      %1186 = vmatprep.mubr.bf16.mxu0 0
      %1187 = vmatmul.mubr.bf16.gmra.mrb[0].mxu0 %v1138
      %v1188 = vpop.f32.mrb[0].mxu0
      %v1189 = vadd.f32 %v241, %v1188
      %v1190 = vpop.f32.mrb[0].mxu0
      %v1191 = vpop.f32.mrb[0].mxu0
      %v1192 = vadd.f32 %v241, %v1191
      %v1193 = vpop.f32.mrb[0].mxu0
      %1194 = vmatprep.mubr.bf16.mxu0 0
      %1195 = vmatmul.mubr.bf16.gmra.mrb[0].mxu0 %v1141
      %v1196 = vpop.f32.mrb[0].mxu0
      %v1197 = vadd.f32 %v241, %v1196
      %v1198 = vpop.f32.mrb[0].mxu0
      %v1199 = vpop.f32.mrb[0].mxu0
      %v1200 = vadd.f32 %v241, %v1199
      %v1201 = vpop.f32.mrb[0].mxu0
      %1202 = vmatprep.mubr.bf16.mxu0 0
      %1203 = vmatmul.mubr.bf16.gmra.mrb[0].mxu0 %v1144
      %v1204 = vpop.f32.mrb[0].mxu0
      %v1205 = vadd.f32 %v241, %v1204
      %v1206 = vpop.f32.mrb[0].mxu0
      %v1207 = vpop.f32.mrb[0].mxu0
      %v1208 = vadd.f32 %v241, %v1207
      %v1209 = vpop.f32.mrb[0].mxu0
      %1210 = vdwg.mxu0
      %v1211 = vmax.f32 %v1181, 0.0
      %v1212 = vmax.f32 %v1184, 0.0
      %v1213 = vmax.f32 %v1189, 0.0
      %v1214 = vmax.f32 %v1192, 0.0
      %v1215 = vmax.f32 %v1197, 0.0
      %v1216 = vmax.f32 %v1200, 0.0
      %v1217 = vmax.f32 %v1205, 0.0
      %v1218 = vmax.f32 %v1208, 0.0
      %s1219 = scalar_lea.vmem [#allocation2], 448
      %1220 = vst.msk [vmem:[%s1219] sm:$0xff] %vm358, %v1211
      %1221 = vst.msk [vmem:[%s1219 + $0x8] sm:$0xff] %vm358, %v1212
      %1222 = vst.msk [vmem:[%s1219 + $0x10] sm:$0xff] %vm358, %v1213
      %1223 = vst.msk [vmem:[%s1219 + $0x18] sm:$0xff] %vm358, %v1214
      %1224 = vst.msk [vmem:[%s1219 + $0x20] sm:$0xff] %vm358, %v1215
      %1225 = vst.msk [vmem:[%s1219 + $0x28] sm:$0xff] %vm358, %v1216
      %1226 = vst.msk [vmem:[%s1219 + $0x30] sm:$0xff] %vm358, %v1217
      %1227 = vst.msk [vmem:[%s1219 + $0x38] sm:$0xff] %vm358, %v1218
      %s1228 = scalar_lea.vmem %s219, 256
      %v1229 = vld [vmem:[%s1228] sm:$0xf]
      %v1230 = vld [vmem:[%s1228 + $0x4] sm:$0xf]
      %v1231 = vld [vmem:[%s1228 + $0x8] sm:$0xf]
      %v1232 = vld [vmem:[%s1228 + $0xc] sm:$0xf]
      %v1233 = vld [vmem:[%s1228 + $0x10] sm:$0xf]
      %v1234 = vld [vmem:[%s1228 + $0x14] sm:$0xf]
      %v1235 = vld [vmem:[%s1228 + $0x18] sm:$0xf]
      %v1236 = vld [vmem:[%s1228 + $0x1c] sm:$0xf]
      %v1245 = vunpack.c.l.b16 %v1229
      %v1246 = vunpack.c.l.b16 %v1230
      %v1247 = vunpack.c.l.b16 %v1231
      %v1248 = vunpack.c.l.b16 %v1232
      %v1249 = vunpack.c.l.b16 %v1233
      %v1250 = vunpack.c.l.b16 %v1234
      %v1251 = vunpack.c.l.b16 %v1235
      %v1252 = vunpack.c.l.b16 %v1236
      %v1253 = vpack.c.b16 %v1246, %v1245
      %v1254 = vpack.c.b16 %v1248, %v1247
      %v1255 = vpack.c.b16 %v1250, %v1249
      %v1256 = vpack.c.b16 %v1252, %v1251
      %v1258 = vsel %vm268, %v1253, 0
      %v1261 = vsel %vm268, %v1254, 0
      %v1264 = vsel %vm268, %v1255, 0
      %v1267 = vsel %vm268, %v1256, 0
      %1269 = vmatprep.subr.bf16.mxu0 0
      %1270 = vmatpush1.bf16.msra.mxu0 %v283
      %1271 = vmatprep.subr.bf16.mxu0 0
      %1272 = vmatpush1.bf16.msra.mxu0 0
      %1273 = vmatprep.subr.bf16.mxu0 0
      %1274 = vmatpush1.bf16.msra.mxu0 0
      %1275 = vmatprep.subr.bf16.mxu0 0
      %1276 = vmatpush1.bf16.msra.mxu0 0
      %1277 = vmatprep.subr.bf16.mxu0 0
      %1278 = vmatpush1.bf16.msra.mxu0 0
      %1279 = vmatprep.subr.bf16.mxu0 0
      %1280 = vmatpush1.bf16.msra.mxu0 0
      %1281 = vmatprep.subr.bf16.mxu0 0
      %1282 = vmatpush1.bf16.msra.mxu0 0
      %1283 = vmatprep.subr.bf16.mxu0 0
      %1284 = vmatpush1.bf16.msra.mxu0 0
      %1285 = vmatprep.subr.bf16.mxu0 0
      %1286 = vmatpush1.bf16.msra.mxu0 0
      %1287 = vmatprep.subr.bf16.mxu0 0
      %1288 = vmatpush1.bf16.msra.mxu0 0
      %1289 = vmatprep.subr.bf16.mxu0 0
      %1290 = vmatpush1.bf16.msra.mxu0 0
      %1291 = vmatprep.subr.bf16.mxu0 0
      %1292 = vmatpush1.bf16.msra.mxu0 0
      %1293 = vmatprep.subr.bf16.mxu0 0
      %1294 = vmatpush1.bf16.msra.mxu0 0
      %1295 = vmatprep.subr.bf16.mxu0 0
      %1296 = vmatpush1.bf16.msra.mxu0 0
      %1297 = vmatprep.subr.bf16.mxu0 0
      %1298 = vmatpush1.bf16.msra.mxu0 0
      %1299 = vmatprep.subr.bf16.mxu0 0
      %1300 = vmatpush1.bf16.msra.mxu0 0
      %1301 = vmatprep.mubr.bf16.mxu0 0
      %1302 = vmatmul.mubr.bf16.gmra.mrb[0].mxu0 %v1258
      %v1303 = vpop.f32.mrb[0].mxu0
      %v1304 = vadd.f32 %v241, %v1303
      %v1305 = vpop.f32.mrb[0].mxu0
      %v1306 = vpop.f32.mrb[0].mxu0
      %v1307 = vadd.f32 %v241, %v1306
      %v1308 = vpop.f32.mrb[0].mxu0
      %1309 = vmatprep.mubr.bf16.mxu0 0
      %1310 = vmatmul.mubr.bf16.gmra.mrb[0].mxu0 %v1261
      %v1311 = vpop.f32.mrb[0].mxu0
      %v1312 = vadd.f32 %v241, %v1311
      %v1313 = vpop.f32.mrb[0].mxu0
      %v1314 = vpop.f32.mrb[0].mxu0
      %v1315 = vadd.f32 %v241, %v1314
      %v1316 = vpop.f32.mrb[0].mxu0
      %1317 = vmatprep.mubr.bf16.mxu0 0
      %1318 = vmatmul.mubr.bf16.gmra.mrb[0].mxu0 %v1264
      %v1319 = vpop.f32.mrb[0].mxu0
      %v1320 = vadd.f32 %v241, %v1319
      %v1321 = vpop.f32.mrb[0].mxu0
      %v1322 = vpop.f32.mrb[0].mxu0
      %v1323 = vadd.f32 %v241, %v1322
      %v1324 = vpop.f32.mrb[0].mxu0
      %1325 = vmatprep.mubr.bf16.mxu0 0
      %1326 = vmatmul.mubr.bf16.gmra.mrb[0].mxu0 %v1267
      %v1327 = vpop.f32.mrb[0].mxu0
      %v1328 = vadd.f32 %v241, %v1327
      %v1329 = vpop.f32.mrb[0].mxu0
      %v1330 = vpop.f32.mrb[0].mxu0
      %v1331 = vadd.f32 %v241, %v1330
      %v1332 = vpop.f32.mrb[0].mxu0
      %1333 = vdwg.mxu0
      %v1334 = vmax.f32 %v1304, 0.0
      %v1335 = vmax.f32 %v1307, 0.0
      %v1336 = vmax.f32 %v1312, 0.0
      %v1337 = vmax.f32 %v1315, 0.0
      %v1338 = vmax.f32 %v1320, 0.0
      %v1339 = vmax.f32 %v1323, 0.0
      %v1340 = vmax.f32 %v1328, 0.0
      %v1341 = vmax.f32 %v1331, 0.0
      %s1342 = scalar_lea.vmem [#allocation2], 512
      %1343 = vst.msk [vmem:[%s1342] sm:$0xff] %vm358, %v1334
      %1344 = vst.msk [vmem:[%s1342 + $0x8] sm:$0xff] %vm358, %v1335
      %1345 = vst.msk [vmem:[%s1342 + $0x10] sm:$0xff] %vm358, %v1336
      %1346 = vst.msk [vmem:[%s1342 + $0x18] sm:$0xff] %vm358, %v1337
      %1347 = vst.msk [vmem:[%s1342 + $0x20] sm:$0xff] %vm358, %v1338
      %1348 = vst.msk [vmem:[%s1342 + $0x28] sm:$0xff] %vm358, %v1339
      %1349 = vst.msk [vmem:[%s1342 + $0x30] sm:$0xff] %vm358, %v1340
      %1350 = vst.msk [vmem:[%s1342 + $0x38] sm:$0xff] %vm358, %v1341
      %s1351 = scalar_lea.vmem %s219, 288
      %v1352 = vld [vmem:[%s1351] sm:$0xf]
      %v1353 = vld [vmem:[%s1351 + $0x4] sm:$0xf]
      %v1354 = vld [vmem:[%s1351 + $0x8] sm:$0xf]
      %v1355 = vld [vmem:[%s1351 + $0xc] sm:$0xf]
      %v1356 = vld [vmem:[%s1351 + $0x10] sm:$0xf]
      %v1357 = vld [vmem:[%s1351 + $0x14] sm:$0xf]
      %v1358 = vld [vmem:[%s1351 + $0x18] sm:$0xf]
      %v1359 = vld [vmem:[%s1351 + $0x1c] sm:$0xf]
      %v1368 = vunpack.c.l.b16 %v1352
      %v1369 = vunpack.c.l.b16 %v1353
      %v1370 = vunpack.c.l.b16 %v1354
      %v1371 = vunpack.c.l.b16 %v1355
      %v1372 = vunpack.c.l.b16 %v1356
      %v1373 = vunpack.c.l.b16 %v1357
      %v1374 = vunpack.c.l.b16 %v1358
      %v1375 = vunpack.c.l.b16 %v1359
      %v1376 = vpack.c.b16 %v1369, %v1368
      %v1377 = vpack.c.b16 %v1371, %v1370
      %v1378 = vpack.c.b16 %v1373, %v1372
      %v1379 = vpack.c.b16 %v1375, %v1374
      %v1381 = vsel %vm268, %v1376, 0
      %v1384 = vsel %vm268, %v1377, 0
      %v1387 = vsel %vm268, %v1378, 0
      %v1390 = vsel %vm268, %v1379, 0
      %1392 = vmatprep.subr.bf16.mxu0 0
      %1393 = vmatpush1.bf16.msra.mxu0 %v283
      %1394 = vmatprep.subr.bf16.mxu0 0
      %1395 = vmatpush1.bf16.msra.mxu0 0
      %1396 = vmatprep.subr.bf16.mxu0 0
      %1397 = vmatpush1.bf16.msra.mxu0 0
      %1398 = vmatprep.subr.bf16.mxu0 0
      %1399 = vmatpush1.bf16.msra.mxu0 0
      %1400 = vmatprep.subr.bf16.mxu0 0
      %1401 = vmatpush1.bf16.msra.mxu0 0
      %1402 = vmatprep.subr.bf16.mxu0 0
      %1403 = vmatpush1.bf16.msra.mxu0 0
      %1404 = vmatprep.subr.bf16.mxu0 0
      %1405 = vmatpush1.bf16.msra.mxu0 0
      %1406 = vmatprep.subr.bf16.mxu0 0
      %1407 = vmatpush1.bf16.msra.mxu0 0
      %1408 = vmatprep.subr.bf16.mxu0 0
      %1409 = vmatpush1.bf16.msra.mxu0 0
      %1410 = vmatprep.subr.bf16.mxu0 0
      %1411 = vmatpush1.bf16.msra.mxu0 0
      %1412 = vmatprep.subr.bf16.mxu0 0
      %1413 = vmatpush1.bf16.msra.mxu0 0
      %1414 = vmatprep.subr.bf16.mxu0 0
      %1415 = vmatpush1.bf16.msra.mxu0 0
      %1416 = vmatprep.subr.bf16.mxu0 0
      %1417 = vmatpush1.bf16.msra.mxu0 0
      %1418 = vmatprep.subr.bf16.mxu0 0
      %1419 = vmatpush1.bf16.msra.mxu0 0
      %1420 = vmatprep.subr.bf16.mxu0 0
      %1421 = vmatpush1.bf16.msra.mxu0 0
      %1422 = vmatprep.subr.bf16.mxu0 0
      %1423 = vmatpush1.bf16.msra.mxu0 0
      %1424 = vmatprep.mubr.bf16.mxu0 0
      %1425 = vmatmul.mubr.bf16.gmra.mrb[0].mxu0 %v1381
      %v1426 = vpop.f32.mrb[0].mxu0
      %v1427 = vadd.f32 %v241, %v1426
      %v1428 = vpop.f32.mrb[0].mxu0
      %v1429 = vpop.f32.mrb[0].mxu0
      %v1430 = vadd.f32 %v241, %v1429
      %v1431 = vpop.f32.mrb[0].mxu0
      %1432 = vmatprep.mubr.bf16.mxu0 0
      %1433 = vmatmul.mubr.bf16.gmra.mrb[0].mxu0 %v1384
      %v1434 = vpop.f32.mrb[0].mxu0
      %v1435 = vadd.f32 %v241, %v1434
      %v1436 = vpop.f32.mrb[0].mxu0
      %v1437 = vpop.f32.mrb[0].mxu0
      %v1438 = vadd.f32 %v241, %v1437
      %v1439 = vpop.f32.mrb[0].mxu0
      %1440 = vmatprep.mubr.bf16.mxu0 0
      %1441 = vmatmul.mubr.bf16.gmra.mrb[0].mxu0 %v1387
      %v1442 = vpop.f32.mrb[0].mxu0
      %v1443 = vadd.f32 %v241, %v1442
      %v1444 = vpop.f32.mrb[0].mxu0
      %v1445 = vpop.f32.mrb[0].mxu0
      %v1446 = vadd.f32 %v241, %v1445
      %v1447 = vpop.f32.mrb[0].mxu0
      %1448 = vmatprep.mubr.bf16.mxu0 0
      %1449 = vmatmul.mubr.bf16.gmra.mrb[0].mxu0 %v1390
      %v1450 = vpop.f32.mrb[0].mxu0
      %v1451 = vadd.f32 %v241, %v1450
      %v1452 = vpop.f32.mrb[0].mxu0
      %v1453 = vpop.f32.mrb[0].mxu0
      %v1454 = vadd.f32 %v241, %v1453
      %v1455 = vpop.f32.mrb[0].mxu0
      %1456 = vdwg.mxu0
      %v1457 = vmax.f32 %v1427, 0.0
      %v1458 = vmax.f32 %v1430, 0.0
      %v1459 = vmax.f32 %v1435, 0.0
      %v1460 = vmax.f32 %v1438, 0.0
      %v1461 = vmax.f32 %v1443, 0.0
      %v1462 = vmax.f32 %v1446, 0.0
      %v1463 = vmax.f32 %v1451, 0.0
      %v1464 = vmax.f32 %v1454, 0.0
      %s1465 = scalar_lea.vmem [#allocation2], 576
      %1466 = vst.msk [vmem:[%s1465] sm:$0xff] %vm358, %v1457
      %1467 = vst.msk [vmem:[%s1465 + $0x8] sm:$0xff] %vm358, %v1458
      %1468 = vst.msk [vmem:[%s1465 + $0x10] sm:$0xff] %vm358, %v1459
      %1469 = vst.msk [vmem:[%s1465 + $0x18] sm:$0xff] %vm358, %v1460
      %1470 = vst.msk [vmem:[%s1465 + $0x20] sm:$0xff] %vm358, %v1461
      %1471 = vst.msk [vmem:[%s1465 + $0x28] sm:$0xff] %vm358, %v1462
      %1472 = vst.msk [vmem:[%s1465 + $0x30] sm:$0xff] %vm358, %v1463
      %1473 = vst.msk [vmem:[%s1465 + $0x38] sm:$0xff] %vm358, %v1464
      %s1474 = scalar_lea.vmem %s219, 320
      %v1475 = vld [vmem:[%s1474] sm:$0xf]
      %v1476 = vld [vmem:[%s1474 + $0x4] sm:$0xf]
      %v1477 = vld [vmem:[%s1474 + $0x8] sm:$0xf]
      %v1478 = vld [vmem:[%s1474 + $0xc] sm:$0xf]
      %v1479 = vld [vmem:[%s1474 + $0x10] sm:$0xf]
      %v1480 = vld [vmem:[%s1474 + $0x14] sm:$0xf]
      %v1481 = vld [vmem:[%s1474 + $0x18] sm:$0xf]
      %v1482 = vld [vmem:[%s1474 + $0x1c] sm:$0xf]
      %v1491 = vunpack.c.l.b16 %v1475
      %v1492 = vunpack.c.l.b16 %v1476
      %v1493 = vunpack.c.l.b16 %v1477
      %v1494 = vunpack.c.l.b16 %v1478
      %v1495 = vunpack.c.l.b16 %v1479
      %v1496 = vunpack.c.l.b16 %v1480
      %v1497 = vunpack.c.l.b16 %v1481
      %v1498 = vunpack.c.l.b16 %v1482
      %v1499 = vpack.c.b16 %v1492, %v1491
      %v1500 = vpack.c.b16 %v1494, %v1493
      %v1501 = vpack.c.b16 %v1496, %v1495
      %v1502 = vpack.c.b16 %v1498, %v1497
      %v1504 = vsel %vm268, %v1499, 0
      %v1507 = vsel %vm268, %v1500, 0
      %v1510 = vsel %vm268, %v1501, 0
      %v1513 = vsel %vm268, %v1502, 0
      %1515 = vmatprep.subr.bf16.mxu0 0
      %1516 = vmatpush1.bf16.msra.mxu0 %v283
      %1517 = vmatprep.subr.bf16.mxu0 0
      %1518 = vmatpush1.bf16.msra.mxu0 0
      %1519 = vmatprep.subr.bf16.mxu0 0
      %1520 = vmatpush1.bf16.msra.mxu0 0
      %1521 = vmatprep.subr.bf16.mxu0 0
      %1522 = vmatpush1.bf16.msra.mxu0 0
      %1523 = vmatprep.subr.bf16.mxu0 0
      %1524 = vmatpush1.bf16.msra.mxu0 0
      %1525 = vmatprep.subr.bf16.mxu0 0
      %1526 = vmatpush1.bf16.msra.mxu0 0
      %1527 = vmatprep.subr.bf16.mxu0 0
      %1528 = vmatpush1.bf16.msra.mxu0 0
      %1529 = vmatprep.subr.bf16.mxu0 0
      %1530 = vmatpush1.bf16.msra.mxu0 0
      %1531 = vmatprep.subr.bf16.mxu0 0
      %1532 = vmatpush1.bf16.msra.mxu0 0
      %1533 = vmatprep.subr.bf16.mxu0 0
      %1534 = vmatpush1.bf16.msra.mxu0 0
      %1535 = vmatprep.subr.bf16.mxu0 0
      %1536 = vmatpush1.bf16.msra.mxu0 0
      %1537 = vmatprep.subr.bf16.mxu0 0
      %1538 = vmatpush1.bf16.msra.mxu0 0
      %1539 = vmatprep.subr.bf16.mxu0 0
      %1540 = vmatpush1.bf16.msra.mxu0 0
      %1541 = vmatprep.subr.bf16.mxu0 0
      %1542 = vmatpush1.bf16.msra.mxu0 0
      %1543 = vmatprep.subr.bf16.mxu0 0
      %1544 = vmatpush1.bf16.msra.mxu0 0
      %1545 = vmatprep.subr.bf16.mxu0 0
      %1546 = vmatpush1.bf16.msra.mxu0 0
      %1547 = vmatprep.mubr.bf16.mxu0 0
      %1548 = vmatmul.mubr.bf16.gmra.mrb[0].mxu0 %v1504
      %v1549 = vpop.f32.mrb[0].mxu0
      %v1550 = vadd.f32 %v241, %v1549
      %v1551 = vpop.f32.mrb[0].mxu0
      %v1552 = vpop.f32.mrb[0].mxu0
      %v1553 = vadd.f32 %v241, %v1552
      %v1554 = vpop.f32.mrb[0].mxu0
      %1555 = vmatprep.mubr.bf16.mxu0 0
      %1556 = vmatmul.mubr.bf16.gmra.mrb[0].mxu0 %v1507
      %v1557 = vpop.f32.mrb[0].mxu0
      %v1558 = vadd.f32 %v241, %v1557
      %v1559 = vpop.f32.mrb[0].mxu0
      %v1560 = vpop.f32.mrb[0].mxu0
      %v1561 = vadd.f32 %v241, %v1560
      %v1562 = vpop.f32.mrb[0].mxu0
      %1563 = vmatprep.mubr.bf16.mxu0 0
      %1564 = vmatmul.mubr.bf16.gmra.mrb[0].mxu0 %v1510
      %v1565 = vpop.f32.mrb[0].mxu0
      %v1566 = vadd.f32 %v241, %v1565
      %v1567 = vpop.f32.mrb[0].mxu0
      %v1568 = vpop.f32.mrb[0].mxu0
      %v1569 = vadd.f32 %v241, %v1568
      %v1570 = vpop.f32.mrb[0].mxu0
      %1571 = vmatprep.mubr.bf16.mxu0 0
      %1572 = vmatmul.mubr.bf16.gmra.mrb[0].mxu0 %v1513
      %v1573 = vpop.f32.mrb[0].mxu0
      %v1574 = vadd.f32 %v241, %v1573
      %v1575 = vpop.f32.mrb[0].mxu0
      %v1576 = vpop.f32.mrb[0].mxu0
      %v1577 = vadd.f32 %v241, %v1576
      %v1578 = vpop.f32.mrb[0].mxu0
      %1579 = vdwg.mxu0
      %v1580 = vmax.f32 %v1550, 0.0
      %v1581 = vmax.f32 %v1553, 0.0
      %v1582 = vmax.f32 %v1558, 0.0
      %v1583 = vmax.f32 %v1561, 0.0
      %v1584 = vmax.f32 %v1566, 0.0
      %v1585 = vmax.f32 %v1569, 0.0
      %v1586 = vmax.f32 %v1574, 0.0
      %v1587 = vmax.f32 %v1577, 0.0
      %s1588 = scalar_lea.vmem [#allocation2], 640
      %1589 = vst.msk [vmem:[%s1588] sm:$0xff] %vm358, %v1580
      %1590 = vst.msk [vmem:[%s1588 + $0x8] sm:$0xff] %vm358, %v1581
      %1591 = vst.msk [vmem:[%s1588 + $0x10] sm:$0xff] %vm358, %v1582
      %1592 = vst.msk [vmem:[%s1588 + $0x18] sm:$0xff] %vm358, %v1583
      %1593 = vst.msk [vmem:[%s1588 + $0x20] sm:$0xff] %vm358, %v1584
      %1594 = vst.msk [vmem:[%s1588 + $0x28] sm:$0xff] %vm358, %v1585
      %1595 = vst.msk [vmem:[%s1588 + $0x30] sm:$0xff] %vm358, %v1586
      %1596 = vst.msk [vmem:[%s1588 + $0x38] sm:$0xff] %vm358, %v1587
      %s1597 = scalar_lea.vmem %s219, 352
      %v1598 = vld [vmem:[%s1597] sm:$0xf]
      %v1599 = vld [vmem:[%s1597 + $0x4] sm:$0xf]
      %v1600 = vld [vmem:[%s1597 + $0x8] sm:$0xf]
      %v1601 = vld [vmem:[%s1597 + $0xc] sm:$0xf]
      %v1602 = vld [vmem:[%s1597 + $0x10] sm:$0xf]
      %v1603 = vld [vmem:[%s1597 + $0x14] sm:$0xf]
      %v1604 = vld [vmem:[%s1597 + $0x18] sm:$0xf]
      %v1605 = vld [vmem:[%s1597 + $0x1c] sm:$0xf]
      %v1614 = vunpack.c.l.b16 %v1598
      %v1615 = vunpack.c.l.b16 %v1599
      %v1616 = vunpack.c.l.b16 %v1600
      %v1617 = vunpack.c.l.b16 %v1601
      %v1618 = vunpack.c.l.b16 %v1602
      %v1619 = vunpack.c.l.b16 %v1603
      %v1620 = vunpack.c.l.b16 %v1604
      %v1621 = vunpack.c.l.b16 %v1605
      %v1622 = vpack.c.b16 %v1615, %v1614
      %v1623 = vpack.c.b16 %v1617, %v1616
      %v1624 = vpack.c.b16 %v1619, %v1618
      %v1625 = vpack.c.b16 %v1621, %v1620
      %v1627 = vsel %vm268, %v1622, 0
      %v1630 = vsel %vm268, %v1623, 0
      %v1633 = vsel %vm268, %v1624, 0
      %v1636 = vsel %vm268, %v1625, 0
      %1638 = vmatprep.subr.bf16.mxu0 0
      %1639 = vmatpush1.bf16.msra.mxu0 %v283
      %1640 = vmatprep.subr.bf16.mxu0 0
      %1641 = vmatpush1.bf16.msra.mxu0 0
      %1642 = vmatprep.subr.bf16.mxu0 0
      %1643 = vmatpush1.bf16.msra.mxu0 0
      %1644 = vmatprep.subr.bf16.mxu0 0
      %1645 = vmatpush1.bf16.msra.mxu0 0
      %1646 = vmatprep.subr.bf16.mxu0 0
      %1647 = vmatpush1.bf16.msra.mxu0 0
      %1648 = vmatprep.subr.bf16.mxu0 0
      %1649 = vmatpush1.bf16.msra.mxu0 0
      %1650 = vmatprep.subr.bf16.mxu0 0
      %1651 = vmatpush1.bf16.msra.mxu0 0
      %1652 = vmatprep.subr.bf16.mxu0 0
      %1653 = vmatpush1.bf16.msra.mxu0 0
      %1654 = vmatprep.subr.bf16.mxu0 0
      %1655 = vmatpush1.bf16.msra.mxu0 0
      %1656 = vmatprep.subr.bf16.mxu0 0
      %1657 = vmatpush1.bf16.msra.mxu0 0
      %1658 = vmatprep.subr.bf16.mxu0 0
      %1659 = vmatpush1.bf16.msra.mxu0 0
      %1660 = vmatprep.subr.bf16.mxu0 0
      %1661 = vmatpush1.bf16.msra.mxu0 0
      %1662 = vmatprep.subr.bf16.mxu0 0
      %1663 = vmatpush1.bf16.msra.mxu0 0
      %1664 = vmatprep.subr.bf16.mxu0 0
      %1665 = vmatpush1.bf16.msra.mxu0 0
      %1666 = vmatprep.subr.bf16.mxu0 0
      %1667 = vmatpush1.bf16.msra.mxu0 0
      %1668 = vmatprep.subr.bf16.mxu0 0
      %1669 = vmatpush1.bf16.msra.mxu0 0
      %1670 = vmatprep.mubr.bf16.mxu0 0
      %1671 = vmatmul.mubr.bf16.gmra.mrb[0].mxu0 %v1627
      %v1672 = vpop.f32.mrb[0].mxu0
      %v1673 = vadd.f32 %v241, %v1672
      %v1674 = vpop.f32.mrb[0].mxu0
      %v1675 = vpop.f32.mrb[0].mxu0
      %v1676 = vadd.f32 %v241, %v1675
      %v1677 = vpop.f32.mrb[0].mxu0
      %1678 = vmatprep.mubr.bf16.mxu0 0
      %1679 = vmatmul.mubr.bf16.gmra.mrb[0].mxu0 %v1630
      %v1680 = vpop.f32.mrb[0].mxu0
      %v1681 = vadd.f32 %v241, %v1680
      %v1682 = vpop.f32.mrb[0].mxu0
      %v1683 = vpop.f32.mrb[0].mxu0
      %v1684 = vadd.f32 %v241, %v1683
      %v1685 = vpop.f32.mrb[0].mxu0
      %1686 = vmatprep.mubr.bf16.mxu0 0
      %1687 = vmatmul.mubr.bf16.gmra.mrb[0].mxu0 %v1633
      %v1688 = vpop.f32.mrb[0].mxu0
      %v1689 = vadd.f32 %v241, %v1688
      %v1690 = vpop.f32.mrb[0].mxu0
      %v1691 = vpop.f32.mrb[0].mxu0
      %v1692 = vadd.f32 %v241, %v1691
      %v1693 = vpop.f32.mrb[0].mxu0
      %1694 = vmatprep.mubr.bf16.mxu0 0
      %1695 = vmatmul.mubr.bf16.gmra.mrb[0].mxu0 %v1636
      %v1696 = vpop.f32.mrb[0].mxu0
      %v1697 = vadd.f32 %v241, %v1696
      %v1698 = vpop.f32.mrb[0].mxu0
      %v1699 = vpop.f32.mrb[0].mxu0
      %v1700 = vadd.f32 %v241, %v1699
      %v1701 = vpop.f32.mrb[0].mxu0
      %1702 = vdwg.mxu0
      %v1703 = vmax.f32 %v1673, 0.0
      %v1704 = vmax.f32 %v1676, 0.0
      %v1705 = vmax.f32 %v1681, 0.0
      %v1706 = vmax.f32 %v1684, 0.0
      %v1707 = vmax.f32 %v1689, 0.0
      %v1708 = vmax.f32 %v1692, 0.0
      %v1709 = vmax.f32 %v1697, 0.0
      %v1710 = vmax.f32 %v1700, 0.0
      %s1711 = scalar_lea.vmem [#allocation2], 704
      %1712 = vst.msk [vmem:[%s1711] sm:$0xff] %vm358, %v1703
      %1713 = vst.msk [vmem:[%s1711 + $0x8] sm:$0xff] %vm358, %v1704
      %1714 = vst.msk [vmem:[%s1711 + $0x10] sm:$0xff] %vm358, %v1705
      %1715 = vst.msk [vmem:[%s1711 + $0x18] sm:$0xff] %vm358, %v1706
      %1716 = vst.msk [vmem:[%s1711 + $0x20] sm:$0xff] %vm358, %v1707
      %1717 = vst.msk [vmem:[%s1711 + $0x28] sm:$0xff] %vm358, %v1708
      %1718 = vst.msk [vmem:[%s1711 + $0x30] sm:$0xff] %vm358, %v1709
      %1719 = vst.msk [vmem:[%s1711 + $0x38] sm:$0xff] %vm358, %v1710
      %s1720 = scalar_lea.vmem %s219, 384
      %v1721 = vld [vmem:[%s1720] sm:$0xf]
      %v1722 = vld [vmem:[%s1720 + $0x4] sm:$0xf]
      %v1723 = vld [vmem:[%s1720 + $0x8] sm:$0xf]
      %v1724 = vld [vmem:[%s1720 + $0xc] sm:$0xf]
      %v1725 = vld [vmem:[%s1720 + $0x10] sm:$0xf]
      %v1726 = vld [vmem:[%s1720 + $0x14] sm:$0xf]
      %v1727 = vld [vmem:[%s1720 + $0x18] sm:$0xf]
      %v1728 = vld [vmem:[%s1720 + $0x1c] sm:$0xf]
      %v1737 = vunpack.c.l.b16 %v1721
      %v1738 = vunpack.c.l.b16 %v1722
      %v1739 = vunpack.c.l.b16 %v1723
      %v1740 = vunpack.c.l.b16 %v1724
      %v1741 = vunpack.c.l.b16 %v1725
      %v1742 = vunpack.c.l.b16 %v1726
      %v1743 = vunpack.c.l.b16 %v1727
      %v1744 = vunpack.c.l.b16 %v1728
      %v1745 = vpack.c.b16 %v1738, %v1737
      %v1746 = vpack.c.b16 %v1740, %v1739
      %v1747 = vpack.c.b16 %v1742, %v1741
      %v1748 = vpack.c.b16 %v1744, %v1743
      %v1750 = vsel %vm268, %v1745, 0
      %v1753 = vsel %vm268, %v1746, 0
      %v1756 = vsel %vm268, %v1747, 0
      %v1759 = vsel %vm268, %v1748, 0
      %1761 = vmatprep.subr.bf16.mxu0 0
      %1762 = vmatpush1.bf16.msra.mxu0 %v283
      %1763 = vmatprep.subr.bf16.mxu0 0
      %1764 = vmatpush1.bf16.msra.mxu0 0
      %1765 = vmatprep.subr.bf16.mxu0 0
      %1766 = vmatpush1.bf16.msra.mxu0 0
      %1767 = vmatprep.subr.bf16.mxu0 0
      %1768 = vmatpush1.bf16.msra.mxu0 0
      %1769 = vmatprep.subr.bf16.mxu0 0
      %1770 = vmatpush1.bf16.msra.mxu0 0
      %1771 = vmatprep.subr.bf16.mxu0 0
      %1772 = vmatpush1.bf16.msra.mxu0 0
      %1773 = vmatprep.subr.bf16.mxu0 0
      %1774 = vmatpush1.bf16.msra.mxu0 0
      %1775 = vmatprep.subr.bf16.mxu0 0
      %1776 = vmatpush1.bf16.msra.mxu0 0
      %1777 = vmatprep.subr.bf16.mxu0 0
      %1778 = vmatpush1.bf16.msra.mxu0 0
      %1779 = vmatprep.subr.bf16.mxu0 0
      %1780 = vmatpush1.bf16.msra.mxu0 0
      %1781 = vmatprep.subr.bf16.mxu0 0
      %1782 = vmatpush1.bf16.msra.mxu0 0
      %1783 = vmatprep.subr.bf16.mxu0 0
      %1784 = vmatpush1.bf16.msra.mxu0 0
      %1785 = vmatprep.subr.bf16.mxu0 0
      %1786 = vmatpush1.bf16.msra.mxu0 0
      %1787 = vmatprep.subr.bf16.mxu0 0
      %1788 = vmatpush1.bf16.msra.mxu0 0
      %1789 = vmatprep.subr.bf16.mxu0 0
      %1790 = vmatpush1.bf16.msra.mxu0 0
      %1791 = vmatprep.subr.bf16.mxu0 0
      %1792 = vmatpush1.bf16.msra.mxu0 0
      %1793 = vmatprep.mubr.bf16.mxu0 0
      %1794 = vmatmul.mubr.bf16.gmra.mrb[0].mxu0 %v1750
      %v1795 = vpop.f32.mrb[0].mxu0
      %v1796 = vadd.f32 %v241, %v1795
      %v1797 = vpop.f32.mrb[0].mxu0
      %v1798 = vpop.f32.mrb[0].mxu0
      %v1799 = vadd.f32 %v241, %v1798
      %v1800 = vpop.f32.mrb[0].mxu0
      %1801 = vmatprep.mubr.bf16.mxu0 0
      %1802 = vmatmul.mubr.bf16.gmra.mrb[0].mxu0 %v1753
      %v1803 = vpop.f32.mrb[0].mxu0
      %v1804 = vadd.f32 %v241, %v1803
      %v1805 = vpop.f32.mrb[0].mxu0
      %v1806 = vpop.f32.mrb[0].mxu0
      %v1807 = vadd.f32 %v241, %v1806
      %v1808 = vpop.f32.mrb[0].mxu0
      %1809 = vmatprep.mubr.bf16.mxu0 0
      %1810 = vmatmul.mubr.bf16.gmra.mrb[0].mxu0 %v1756
      %v1811 = vpop.f32.mrb[0].mxu0
      %v1812 = vadd.f32 %v241, %v1811
      %v1813 = vpop.f32.mrb[0].mxu0
      %v1814 = vpop.f32.mrb[0].mxu0
      %v1815 = vadd.f32 %v241, %v1814
      %v1816 = vpop.f32.mrb[0].mxu0
      %1817 = vmatprep.mubr.bf16.mxu0 0
      %1818 = vmatmul.mubr.bf16.gmra.mrb[0].mxu0 %v1759
      %v1819 = vpop.f32.mrb[0].mxu0
      %v1820 = vadd.f32 %v241, %v1819
      %v1821 = vpop.f32.mrb[0].mxu0
      %v1822 = vpop.f32.mrb[0].mxu0
      %v1823 = vadd.f32 %v241, %v1822
      %v1824 = vpop.f32.mrb[0].mxu0
      %1825 = vdwg.mxu0
      %v1826 = vmax.f32 %v1796, 0.0
      %v1827 = vmax.f32 %v1799, 0.0
      %v1828 = vmax.f32 %v1804, 0.0
      %v1829 = vmax.f32 %v1807, 0.0
      %v1830 = vmax.f32 %v1812, 0.0
      %v1831 = vmax.f32 %v1815, 0.0
      %v1832 = vmax.f32 %v1820, 0.0
      %v1833 = vmax.f32 %v1823, 0.0
      %s1834 = scalar_lea.vmem [#allocation2], 768
      %1835 = vst.msk [vmem:[%s1834] sm:$0xff] %vm358, %v1826
      %1836 = vst.msk [vmem:[%s1834 + $0x8] sm:$0xff] %vm358, %v1827
      %1837 = vst.msk [vmem:[%s1834 + $0x10] sm:$0xff] %vm358, %v1828
      %1838 = vst.msk [vmem:[%s1834 + $0x18] sm:$0xff] %vm358, %v1829
      %1839 = vst.msk [vmem:[%s1834 + $0x20] sm:$0xff] %vm358, %v1830
      %1840 = vst.msk [vmem:[%s1834 + $0x28] sm:$0xff] %vm358, %v1831
      %1841 = vst.msk [vmem:[%s1834 + $0x30] sm:$0xff] %vm358, %v1832
      %1842 = vst.msk [vmem:[%s1834 + $0x38] sm:$0xff] %vm358, %v1833
      %s1843 = scalar_lea.vmem %s219, 416
      %v1844 = vld [vmem:[%s1843] sm:$0xf]
      %v1845 = vld [vmem:[%s1843 + $0x4] sm:$0xf]
      %v1846 = vld [vmem:[%s1843 + $0x8] sm:$0xf]
      %v1847 = vld [vmem:[%s1843 + $0xc] sm:$0xf]
      %v1848 = vld [vmem:[%s1843 + $0x10] sm:$0xf]
      %v1849 = vld [vmem:[%s1843 + $0x14] sm:$0xf]
      %v1850 = vld [vmem:[%s1843 + $0x18] sm:$0xf]
      %v1851 = vld [vmem:[%s1843 + $0x1c] sm:$0xf]
      %v1860 = vunpack.c.l.b16 %v1844
      %v1861 = vunpack.c.l.b16 %v1845
      %v1862 = vunpack.c.l.b16 %v1846
      %v1863 = vunpack.c.l.b16 %v1847
      %v1864 = vunpack.c.l.b16 %v1848
      %v1865 = vunpack.c.l.b16 %v1849
      %v1866 = vunpack.c.l.b16 %v1850
      %v1867 = vunpack.c.l.b16 %v1851
      %v1868 = vpack.c.b16 %v1861, %v1860
      %v1869 = vpack.c.b16 %v1863, %v1862
      %v1870 = vpack.c.b16 %v1865, %v1864
      %v1871 = vpack.c.b16 %v1867, %v1866
      %v1873 = vsel %vm268, %v1868, 0
      %v1876 = vsel %vm268, %v1869, 0
      %v1879 = vsel %vm268, %v1870, 0
      %v1882 = vsel %vm268, %v1871, 0
      %1884 = vmatprep.subr.bf16.mxu0 0
      %1885 = vmatpush1.bf16.msra.mxu0 %v283
      %1886 = vmatprep.subr.bf16.mxu0 0
      %1887 = vmatpush1.bf16.msra.mxu0 0
      %1888 = vmatprep.subr.bf16.mxu0 0
      %1889 = vmatpush1.bf16.msra.mxu0 0
      %1890 = vmatprep.subr.bf16.mxu0 0
      %1891 = vmatpush1.bf16.msra.mxu0 0
      %1892 = vmatprep.subr.bf16.mxu0 0
      %1893 = vmatpush1.bf16.msra.mxu0 0
      %1894 = vmatprep.subr.bf16.mxu0 0
      %1895 = vmatpush1.bf16.msra.mxu0 0
      %1896 = vmatprep.subr.bf16.mxu0 0
      %1897 = vmatpush1.bf16.msra.mxu0 0
      %1898 = vmatprep.subr.bf16.mxu0 0
      %1899 = vmatpush1.bf16.msra.mxu0 0
      %1900 = vmatprep.subr.bf16.mxu0 0
      %1901 = vmatpush1.bf16.msra.mxu0 0
      %1902 = vmatprep.subr.bf16.mxu0 0
      %1903 = vmatpush1.bf16.msra.mxu0 0
      %1904 = vmatprep.subr.bf16.mxu0 0
      %1905 = vmatpush1.bf16.msra.mxu0 0
      %1906 = vmatprep.subr.bf16.mxu0 0
      %1907 = vmatpush1.bf16.msra.mxu0 0
      %1908 = vmatprep.subr.bf16.mxu0 0
      %1909 = vmatpush1.bf16.msra.mxu0 0
      %1910 = vmatprep.subr.bf16.mxu0 0
      %1911 = vmatpush1.bf16.msra.mxu0 0
      %1912 = vmatprep.subr.bf16.mxu0 0
      %1913 = vmatpush1.bf16.msra.mxu0 0
      %1914 = vmatprep.subr.bf16.mxu0 0
      %1915 = vmatpush1.bf16.msra.mxu0 0
      %1916 = vmatprep.mubr.bf16.mxu0 0
      %1917 = vmatmul.mubr.bf16.gmra.mrb[0].mxu0 %v1873
      %v1918 = vpop.f32.mrb[0].mxu0
      %v1919 = vadd.f32 %v241, %v1918
      %v1920 = vpop.f32.mrb[0].mxu0
      %v1921 = vpop.f32.mrb[0].mxu0
      %v1922 = vadd.f32 %v241, %v1921
      %v1923 = vpop.f32.mrb[0].mxu0
      %1924 = vmatprep.mubr.bf16.mxu0 0
      %1925 = vmatmul.mubr.bf16.gmra.mrb[0].mxu0 %v1876
      %v1926 = vpop.f32.mrb[0].mxu0
      %v1927 = vadd.f32 %v241, %v1926
      %v1928 = vpop.f32.mrb[0].mxu0
      %v1929 = vpop.f32.mrb[0].mxu0
      %v1930 = vadd.f32 %v241, %v1929
      %v1931 = vpop.f32.mrb[0].mxu0
      %1932 = vmatprep.mubr.bf16.mxu0 0
      %1933 = vmatmul.mubr.bf16.gmra.mrb[0].mxu0 %v1879
      %v1934 = vpop.f32.mrb[0].mxu0
      %v1935 = vadd.f32 %v241, %v1934
      %v1936 = vpop.f32.mrb[0].mxu0
      %v1937 = vpop.f32.mrb[0].mxu0
      %v1938 = vadd.f32 %v241, %v1937
      %v1939 = vpop.f32.mrb[0].mxu0
      %1940 = vmatprep.mubr.bf16.mxu0 0
      %1941 = vmatmul.mubr.bf16.gmra.mrb[0].mxu0 %v1882
      %v1942 = vpop.f32.mrb[0].mxu0
      %v1943 = vadd.f32 %v241, %v1942
      %v1944 = vpop.f32.mrb[0].mxu0
      %v1945 = vpop.f32.mrb[0].mxu0
      %v1946 = vadd.f32 %v241, %v1945
      %v1947 = vpop.f32.mrb[0].mxu0
      %1948 = vdwg.mxu0
      %v1949 = vmax.f32 %v1919, 0.0
      %v1950 = vmax.f32 %v1922, 0.0
      %v1951 = vmax.f32 %v1927, 0.0
      %v1952 = vmax.f32 %v1930, 0.0
      %v1953 = vmax.f32 %v1935, 0.0
      %v1954 = vmax.f32 %v1938, 0.0
      %v1955 = vmax.f32 %v1943, 0.0
      %v1956 = vmax.f32 %v1946, 0.0
      %s1957 = scalar_lea.vmem [#allocation2], 832
      %1958 = vst.msk [vmem:[%s1957] sm:$0xff] %vm358, %v1949
      %1959 = vst.msk [vmem:[%s1957 + $0x8] sm:$0xff] %vm358, %v1950
      %1960 = vst.msk [vmem:[%s1957 + $0x10] sm:$0xff] %vm358, %v1951
      %1961 = vst.msk [vmem:[%s1957 + $0x18] sm:$0xff] %vm358, %v1952
      %1962 = vst.msk [vmem:[%s1957 + $0x20] sm:$0xff] %vm358, %v1953
      %1963 = vst.msk [vmem:[%s1957 + $0x28] sm:$0xff] %vm358, %v1954
      %1964 = vst.msk [vmem:[%s1957 + $0x30] sm:$0xff] %vm358, %v1955
      %1965 = vst.msk [vmem:[%s1957 + $0x38] sm:$0xff] %vm358, %v1956
      %s1966 = scalar_lea.vmem %s219, 448
      %v1967 = vld [vmem:[%s1966] sm:$0xf]
      %v1968 = vld [vmem:[%s1966 + $0x4] sm:$0xf]
      %v1969 = vld [vmem:[%s1966 + $0x8] sm:$0xf]
      %v1970 = vld [vmem:[%s1966 + $0xc] sm:$0xf]
      %v1971 = vld [vmem:[%s1966 + $0x10] sm:$0xf]
      %v1972 = vld [vmem:[%s1966 + $0x14] sm:$0xf]
      %v1973 = vld [vmem:[%s1966 + $0x18] sm:$0xf]
      %v1974 = vld [vmem:[%s1966 + $0x1c] sm:$0xf]
      %v1983 = vunpack.c.l.b16 %v1967
      %v1984 = vunpack.c.l.b16 %v1968
      %v1985 = vunpack.c.l.b16 %v1969
      %v1986 = vunpack.c.l.b16 %v1970
      %v1987 = vunpack.c.l.b16 %v1971
      %v1988 = vunpack.c.l.b16 %v1972
      %v1989 = vunpack.c.l.b16 %v1973
      %v1990 = vunpack.c.l.b16 %v1974
      %v1991 = vpack.c.b16 %v1984, %v1983
      %v1992 = vpack.c.b16 %v1986, %v1985
      %v1993 = vpack.c.b16 %v1988, %v1987
      %v1994 = vpack.c.b16 %v1990, %v1989
      %v1996 = vsel %vm268, %v1991, 0
      %v1999 = vsel %vm268, %v1992, 0
      %v2002 = vsel %vm268, %v1993, 0
      %v2005 = vsel %vm268, %v1994, 0
      %2007 = vmatprep.subr.bf16.mxu0 0
      %2008 = vmatpush1.bf16.msra.mxu0 %v283
      %2009 = vmatprep.subr.bf16.mxu0 0
      %2010 = vmatpush1.bf16.msra.mxu0 0
      %2011 = vmatprep.subr.bf16.mxu0 0
      %2012 = vmatpush1.bf16.msra.mxu0 0
      %2013 = vmatprep.subr.bf16.mxu0 0
      %2014 = vmatpush1.bf16.msra.mxu0 0
      %2015 = vmatprep.subr.bf16.mxu0 0
      %2016 = vmatpush1.bf16.msra.mxu0 0
      %2017 = vmatprep.subr.bf16.mxu0 0
      %2018 = vmatpush1.bf16.msra.mxu0 0
      %2019 = vmatprep.subr.bf16.mxu0 0
      %2020 = vmatpush1.bf16.msra.mxu0 0
      %2021 = vmatprep.subr.bf16.mxu0 0
      %2022 = vmatpush1.bf16.msra.mxu0 0
      %2023 = vmatprep.subr.bf16.mxu0 0
      %2024 = vmatpush1.bf16.msra.mxu0 0
      %2025 = vmatprep.subr.bf16.mxu0 0
      %2026 = vmatpush1.bf16.msra.mxu0 0
      %2027 = vmatprep.subr.bf16.mxu0 0
      %2028 = vmatpush1.bf16.msra.mxu0 0
      %2029 = vmatprep.subr.bf16.mxu0 0
      %2030 = vmatpush1.bf16.msra.mxu0 0
      %2031 = vmatprep.subr.bf16.mxu0 0
      %2032 = vmatpush1.bf16.msra.mxu0 0
      %2033 = vmatprep.subr.bf16.mxu0 0
      %2034 = vmatpush1.bf16.msra.mxu0 0
      %2035 = vmatprep.subr.bf16.mxu0 0
      %2036 = vmatpush1.bf16.msra.mxu0 0
      %2037 = vmatprep.subr.bf16.mxu0 0
      %2038 = vmatpush1.bf16.msra.mxu0 0
      %2039 = vmatprep.mubr.bf16.mxu0 0
      %2040 = vmatmul.mubr.bf16.gmra.mrb[0].mxu0 %v1996
      %v2041 = vpop.f32.mrb[0].mxu0
      %v2042 = vadd.f32 %v241, %v2041
      %v2043 = vpop.f32.mrb[0].mxu0
      %v2044 = vpop.f32.mrb[0].mxu0
      %v2045 = vadd.f32 %v241, %v2044
      %v2046 = vpop.f32.mrb[0].mxu0
      %2047 = vmatprep.mubr.bf16.mxu0 0
      %2048 = vmatmul.mubr.bf16.gmra.mrb[0].mxu0 %v1999
      %v2049 = vpop.f32.mrb[0].mxu0
      %v2050 = vadd.f32 %v241, %v2049
      %v2051 = vpop.f32.mrb[0].mxu0
      %v2052 = vpop.f32.mrb[0].mxu0
      %v2053 = vadd.f32 %v241, %v2052
      %v2054 = vpop.f32.mrb[0].mxu0
      %2055 = vmatprep.mubr.bf16.mxu0 0
      %2056 = vmatmul.mubr.bf16.gmra.mrb[0].mxu0 %v2002
      %v2057 = vpop.f32.mrb[0].mxu0
      %v2058 = vadd.f32 %v241, %v2057
      %v2059 = vpop.f32.mrb[0].mxu0
      %v2060 = vpop.f32.mrb[0].mxu0
      %v2061 = vadd.f32 %v241, %v2060
      %v2062 = vpop.f32.mrb[0].mxu0
      %2063 = vmatprep.mubr.bf16.mxu0 0
      %2064 = vmatmul.mubr.bf16.gmra.mrb[0].mxu0 %v2005
      %v2065 = vpop.f32.mrb[0].mxu0
      %v2066 = vadd.f32 %v241, %v2065
      %v2067 = vpop.f32.mrb[0].mxu0
      %v2068 = vpop.f32.mrb[0].mxu0
      %v2069 = vadd.f32 %v241, %v2068
      %v2070 = vpop.f32.mrb[0].mxu0
      %2071 = vdwg.mxu0
      %v2072 = vmax.f32 %v2042, 0.0
      %v2073 = vmax.f32 %v2045, 0.0
      %v2074 = vmax.f32 %v2050, 0.0
      %v2075 = vmax.f32 %v2053, 0.0
      %v2076 = vmax.f32 %v2058, 0.0
      %v2077 = vmax.f32 %v2061, 0.0
      %v2078 = vmax.f32 %v2066, 0.0
      %v2079 = vmax.f32 %v2069, 0.0
      %s2080 = scalar_lea.vmem [#allocation2], 896
      %2081 = vst.msk [vmem:[%s2080] sm:$0xff] %vm358, %v2072
      %2082 = vst.msk [vmem:[%s2080 + $0x8] sm:$0xff] %vm358, %v2073
      %2083 = vst.msk [vmem:[%s2080 + $0x10] sm:$0xff] %vm358, %v2074
      %2084 = vst.msk [vmem:[%s2080 + $0x18] sm:$0xff] %vm358, %v2075
      %2085 = vst.msk [vmem:[%s2080 + $0x20] sm:$0xff] %vm358, %v2076
      %2086 = vst.msk [vmem:[%s2080 + $0x28] sm:$0xff] %vm358, %v2077
      %2087 = vst.msk [vmem:[%s2080 + $0x30] sm:$0xff] %vm358, %v2078
      %2088 = vst.msk [vmem:[%s2080 + $0x38] sm:$0xff] %vm358, %v2079
      %s2089 = scalar_lea.vmem %s219, 480
      %v2090 = vld [vmem:[%s2089] sm:$0xf]
      %v2091 = vld [vmem:[%s2089 + $0x4] sm:$0xf]
      %v2092 = vld [vmem:[%s2089 + $0x8] sm:$0xf]
      %v2093 = vld [vmem:[%s2089 + $0xc] sm:$0xf]
      %v2094 = vld [vmem:[%s2089 + $0x10] sm:$0xf]
      %v2095 = vld [vmem:[%s2089 + $0x14] sm:$0xf]
      %v2096 = vld [vmem:[%s2089 + $0x18] sm:$0xf]
      %v2097 = vld [vmem:[%s2089 + $0x1c] sm:$0xf]
      %v2106 = vunpack.c.l.b16 %v2090
      %v2107 = vunpack.c.l.b16 %v2091
      %v2108 = vunpack.c.l.b16 %v2092
      %v2109 = vunpack.c.l.b16 %v2093
      %v2110 = vunpack.c.l.b16 %v2094
      %v2111 = vunpack.c.l.b16 %v2095
      %v2112 = vunpack.c.l.b16 %v2096
      %v2113 = vunpack.c.l.b16 %v2097
      %v2114 = vpack.c.b16 %v2107, %v2106
      %v2115 = vpack.c.b16 %v2109, %v2108
      %v2116 = vpack.c.b16 %v2111, %v2110
      %v2117 = vpack.c.b16 %v2113, %v2112
      %v2119 = vsel %vm268, %v2114, 0
      %v2122 = vsel %vm268, %v2115, 0
      %v2125 = vsel %vm268, %v2116, 0
      %v2128 = vsel %vm268, %v2117, 0
      %2130 = vmatprep.subr.bf16.mxu0 0
      %2131 = vmatpush1.bf16.msra.mxu0 %v283
      %2132 = vmatprep.subr.bf16.mxu0 0
      %2133 = vmatpush1.bf16.msra.mxu0 0
      %2134 = vmatprep.subr.bf16.mxu0 0
      %2135 = vmatpush1.bf16.msra.mxu0 0
      %2136 = vmatprep.subr.bf16.mxu0 0
      %2137 = vmatpush1.bf16.msra.mxu0 0
      %2138 = vmatprep.subr.bf16.mxu0 0
      %2139 = vmatpush1.bf16.msra.mxu0 0
      %2140 = vmatprep.subr.bf16.mxu0 0
      %2141 = vmatpush1.bf16.msra.mxu0 0
      %2142 = vmatprep.subr.bf16.mxu0 0
      %2143 = vmatpush1.bf16.msra.mxu0 0
      %2144 = vmatprep.subr.bf16.mxu0 0
      %2145 = vmatpush1.bf16.msra.mxu0 0
      %2146 = vmatprep.subr.bf16.mxu0 0
      %2147 = vmatpush1.bf16.msra.mxu0 0
      %2148 = vmatprep.subr.bf16.mxu0 0
      %2149 = vmatpush1.bf16.msra.mxu0 0
      %2150 = vmatprep.subr.bf16.mxu0 0
      %2151 = vmatpush1.bf16.msra.mxu0 0
      %2152 = vmatprep.subr.bf16.mxu0 0
      %2153 = vmatpush1.bf16.msra.mxu0 0
      %2154 = vmatprep.subr.bf16.mxu0 0
      %2155 = vmatpush1.bf16.msra.mxu0 0
      %2156 = vmatprep.subr.bf16.mxu0 0
      %2157 = vmatpush1.bf16.msra.mxu0 0
      %2158 = vmatprep.subr.bf16.mxu0 0
      %2159 = vmatpush1.bf16.msra.mxu0 0
      %2160 = vmatprep.subr.bf16.mxu0 0
      %2161 = vmatpush1.bf16.msra.mxu0 0
      %2162 = vmatprep.mubr.bf16.mxu0 0
      %2163 = vmatmul.mubr.bf16.gmra.mrb[0].mxu0 %v2119
      %v2164 = vpop.f32.mrb[0].mxu0
      %v2165 = vadd.f32 %v241, %v2164
      %v2166 = vpop.f32.mrb[0].mxu0
      %v2167 = vpop.f32.mrb[0].mxu0
      %v2168 = vadd.f32 %v241, %v2167
      %v2169 = vpop.f32.mrb[0].mxu0
      %2170 = vmatprep.mubr.bf16.mxu0 0
      %2171 = vmatmul.mubr.bf16.gmra.mrb[0].mxu0 %v2122
      %v2172 = vpop.f32.mrb[0].mxu0
      %v2173 = vadd.f32 %v241, %v2172
      %v2174 = vpop.f32.mrb[0].mxu0
      %v2175 = vpop.f32.mrb[0].mxu0
      %v2176 = vadd.f32 %v241, %v2175
      %v2177 = vpop.f32.mrb[0].mxu0
      %2178 = vmatprep.mubr.bf16.mxu0 0
      %2179 = vmatmul.mubr.bf16.gmra.mrb[0].mxu0 %v2125
      %v2180 = vpop.f32.mrb[0].mxu0
      %v2181 = vadd.f32 %v241, %v2180
      %v2182 = vpop.f32.mrb[0].mxu0
      %v2183 = vpop.f32.mrb[0].mxu0
      %v2184 = vadd.f32 %v241, %v2183
      %v2185 = vpop.f32.mrb[0].mxu0
      %2186 = vmatprep.mubr.bf16.mxu0 0
      %2187 = vmatmul.mubr.bf16.gmra.mrb[0].mxu0 %v2128
      %v2188 = vpop.f32.mrb[0].mxu0
      %v2189 = vadd.f32 %v241, %v2188
      %v2190 = vpop.f32.mrb[0].mxu0
      %v2191 = vpop.f32.mrb[0].mxu0
      %v2192 = vadd.f32 %v241, %v2191
      %v2193 = vpop.f32.mrb[0].mxu0
      %2194 = vdwg.mxu0
      %v2195 = vmax.f32 %v2165, 0.0
      %v2196 = vmax.f32 %v2168, 0.0
      %v2197 = vmax.f32 %v2173, 0.0
      %v2198 = vmax.f32 %v2176, 0.0
      %v2199 = vmax.f32 %v2181, 0.0
      %v2200 = vmax.f32 %v2184, 0.0
      %v2201 = vmax.f32 %v2189, 0.0
      %v2202 = vmax.f32 %v2192, 0.0
      %s2203 = scalar_lea.vmem [#allocation2], 960
      %2204 = vst.msk [vmem:[%s2203] sm:$0xff] %vm358, %v2195
      %2205 = vst.msk [vmem:[%s2203 + $0x8] sm:$0xff] %vm358, %v2196
      %2206 = vst.msk [vmem:[%s2203 + $0x10] sm:$0xff] %vm358, %v2197
      %2207 = vst.msk [vmem:[%s2203 + $0x18] sm:$0xff] %vm358, %v2198
      %2208 = vst.msk [vmem:[%s2203 + $0x20] sm:$0xff] %vm358, %v2199
      %2209 = vst.msk [vmem:[%s2203 + $0x28] sm:$0xff] %vm358, %v2200
      %2210 = vst.msk [vmem:[%s2203 + $0x30] sm:$0xff] %vm358, %v2201
      %2211 = vst.msk [vmem:[%s2203 + $0x38] sm:$0xff] %vm358, %v2202
      %v2212 = vld [vmem:[#allocation2] sm:$0xff]
      %v2213 = vld [vmem:[#allocation2 + $0x8] sm:$0xff]
      %v2214 = vld [vmem:[#allocation2 + $0x10] sm:$0xff]
      %v2215 = vld [vmem:[#allocation2 + $0x18] sm:$0xff]
      %v2216 = vld [vmem:[#allocation2 + $0x20] sm:$0xff]
      %v2217 = vld [vmem:[#allocation2 + $0x28] sm:$0xff]
      %v2218 = vld [vmem:[#allocation2 + $0x30] sm:$0xff]
      %v2219 = vld [vmem:[#allocation2 + $0x38] sm:$0xff]
      %v2220 = vld [vmem:[%s481] sm:$0xff]
      %v2221 = vld [vmem:[%s481 + $0x8] sm:$0xff]
      %v2222 = vld [vmem:[%s481 + $0x10] sm:$0xff]
      %v2223 = vld [vmem:[%s481 + $0x18] sm:$0xff]
      %v2224 = vld [vmem:[%s481 + $0x20] sm:$0xff]
      %v2225 = vld [vmem:[%s481 + $0x28] sm:$0xff]
      %v2226 = vld [vmem:[%s481 + $0x30] sm:$0xff]
      %v2227 = vld [vmem:[%s481 + $0x38] sm:$0xff]
      %v2228 = vmax.f32 %v2212, %v2220
      %v2229 = vmax.f32 %v2213, %v2221
      %v2230 = vmax.f32 %v2214, %v2222
      %v2231 = vmax.f32 %v2215, %v2223
      %v2232 = vmax.f32 %v2216, %v2224
      %v2233 = vmax.f32 %v2217, %v2225
      %v2234 = vmax.f32 %v2218, %v2226
      %v2235 = vmax.f32 %v2219, %v2227
      %v2236 = vld [vmem:[%s604] sm:$0xff]
      %v2237 = vld [vmem:[%s604 + $0x8] sm:$0xff]
      %v2238 = vld [vmem:[%s604 + $0x10] sm:$0xff]
      %v2239 = vld [vmem:[%s604 + $0x18] sm:$0xff]
      %v2240 = vld [vmem:[%s604 + $0x20] sm:$0xff]
      %v2241 = vld [vmem:[%s604 + $0x28] sm:$0xff]
      %v2242 = vld [vmem:[%s604 + $0x30] sm:$0xff]
      %v2243 = vld [vmem:[%s604 + $0x38] sm:$0xff]
      %v2244 = vmax.f32 %v2228, %v2236
      %v2245 = vmax.f32 %v2229, %v2237
      %v2246 = vmax.f32 %v2230, %v2238
      %v2247 = vmax.f32 %v2231, %v2239
      %v2248 = vmax.f32 %v2232, %v2240
      %v2249 = vmax.f32 %v2233, %v2241
      %v2250 = vmax.f32 %v2234, %v2242
      %v2251 = vmax.f32 %v2235, %v2243
      %v2252 = vld [vmem:[%s850] sm:$0xff]
      %v2253 = vld [vmem:[%s850 + $0x8] sm:$0xff]
      %v2254 = vld [vmem:[%s850 + $0x10] sm:$0xff]
      %v2255 = vld [vmem:[%s850 + $0x18] sm:$0xff]
      %v2256 = vld [vmem:[%s850 + $0x20] sm:$0xff]
      %v2257 = vld [vmem:[%s850 + $0x28] sm:$0xff]
      %v2258 = vld [vmem:[%s850 + $0x30] sm:$0xff]
      %v2259 = vld [vmem:[%s850 + $0x38] sm:$0xff]
      %v2260 = vmax.f32 %v2244, %v2252
      %v2261 = vmax.f32 %v2245, %v2253
      %v2262 = vmax.f32 %v2246, %v2254
      %v2263 = vmax.f32 %v2247, %v2255
      %v2264 = vmax.f32 %v2248, %v2256
      %v2265 = vmax.f32 %v2249, %v2257
      %v2266 = vmax.f32 %v2250, %v2258
      %v2267 = vmax.f32 %v2251, %v2259
      %v2268 = vld [vmem:[%s973] sm:$0xff]
      %v2269 = vld [vmem:[%s973 + $0x8] sm:$0xff]
      %v2270 = vld [vmem:[%s973 + $0x10] sm:$0xff]
      %v2271 = vld [vmem:[%s973 + $0x18] sm:$0xff]
      %v2272 = vld [vmem:[%s973 + $0x20] sm:$0xff]
      %v2273 = vld [vmem:[%s973 + $0x28] sm:$0xff]
      %v2274 = vld [vmem:[%s973 + $0x30] sm:$0xff]
      %v2275 = vld [vmem:[%s973 + $0x38] sm:$0xff]
      %v2276 = vmax.f32 %v2260, %v2268
      %v2277 = vmax.f32 %v2261, %v2269
      %v2278 = vmax.f32 %v2262, %v2270
      %v2279 = vmax.f32 %v2263, %v2271
      %v2280 = vmax.f32 %v2264, %v2272
      %v2281 = vmax.f32 %v2265, %v2273
      %v2282 = vmax.f32 %v2266, %v2274
      %v2283 = vmax.f32 %v2267, %v2275
      %v2284 = vld [vmem:[%s1096] sm:$0xff]
      %v2285 = vld [vmem:[%s1096 + $0x8] sm:$0xff]
      %v2286 = vld [vmem:[%s1096 + $0x10] sm:$0xff]
      %v2287 = vld [vmem:[%s1096 + $0x18] sm:$0xff]
      %v2288 = vld [vmem:[%s1096 + $0x20] sm:$0xff]
      %v2289 = vld [vmem:[%s1096 + $0x28] sm:$0xff]
      %v2290 = vld [vmem:[%s1096 + $0x30] sm:$0xff]
      %v2291 = vld [vmem:[%s1096 + $0x38] sm:$0xff]
      %v2292 = vmax.f32 %v2276, %v2284
      %v2293 = vmax.f32 %v2277, %v2285
      %v2294 = vmax.f32 %v2278, %v2286
      %v2295 = vmax.f32 %v2279, %v2287
      %v2296 = vmax.f32 %v2280, %v2288
      %v2297 = vmax.f32 %v2281, %v2289
      %v2298 = vmax.f32 %v2282, %v2290
      %v2299 = vmax.f32 %v2283, %v2291
      %v2300 = vld [vmem:[%s1342] sm:$0xff]
      %v2301 = vld [vmem:[%s1342 + $0x8] sm:$0xff]
      %v2302 = vld [vmem:[%s1342 + $0x10] sm:$0xff]
      %v2303 = vld [vmem:[%s1342 + $0x18] sm:$0xff]
      %v2304 = vld [vmem:[%s1342 + $0x20] sm:$0xff]
      %v2305 = vld [vmem:[%s1342 + $0x28] sm:$0xff]
      %v2306 = vld [vmem:[%s1342 + $0x30] sm:$0xff]
      %v2307 = vld [vmem:[%s1342 + $0x38] sm:$0xff]
      %v2308 = vmax.f32 %v2292, %v2300
      %v2309 = vmax.f32 %v2293, %v2301
      %v2310 = vmax.f32 %v2294, %v2302
      %v2311 = vmax.f32 %v2295, %v2303
      %v2312 = vmax.f32 %v2296, %v2304
      %v2313 = vmax.f32 %v2297, %v2305
      %v2314 = vmax.f32 %v2298, %v2306
      %v2315 = vmax.f32 %v2299, %v2307
      %v2316 = vld [vmem:[%s1465] sm:$0xff]
      %v2317 = vld [vmem:[%s1465 + $0x8] sm:$0xff]
      %v2318 = vld [vmem:[%s1465 + $0x10] sm:$0xff]
      %v2319 = vld [vmem:[%s1465 + $0x18] sm:$0xff]
      %v2320 = vld [vmem:[%s1465 + $0x20] sm:$0xff]
      %v2321 = vld [vmem:[%s1465 + $0x28] sm:$0xff]
      %v2322 = vld [vmem:[%s1465 + $0x30] sm:$0xff]
      %v2323 = vld [vmem:[%s1465 + $0x38] sm:$0xff]
      %v2324 = vmax.f32 %v2308, %v2316
      %v2325 = vmax.f32 %v2309, %v2317
      %v2326 = vmax.f32 %v2310, %v2318
      %v2327 = vmax.f32 %v2311, %v2319
      %v2328 = vmax.f32 %v2312, %v2320
      %v2329 = vmax.f32 %v2313, %v2321
      %v2330 = vmax.f32 %v2314, %v2322
      %v2331 = vmax.f32 %v2315, %v2323
      %v2332 = vld [vmem:[%s1588] sm:$0xff]
      %v2333 = vld [vmem:[%s1588 + $0x8] sm:$0xff]
      %v2334 = vld [vmem:[%s1588 + $0x10] sm:$0xff]
      %v2335 = vld [vmem:[%s1588 + $0x18] sm:$0xff]
      %v2336 = vld [vmem:[%s1588 + $0x20] sm:$0xff]
      %v2337 = vld [vmem:[%s1588 + $0x28] sm:$0xff]
      %v2338 = vld [vmem:[%s1588 + $0x30] sm:$0xff]
      %v2339 = vld [vmem:[%s1588 + $0x38] sm:$0xff]
      %v2340 = vmax.f32 %v2324, %v2332
      %v2341 = vmax.f32 %v2325, %v2333
      %v2342 = vmax.f32 %v2326, %v2334
      %v2343 = vmax.f32 %v2327, %v2335
      %v2344 = vmax.f32 %v2328, %v2336
      %v2345 = vmax.f32 %v2329, %v2337
      %v2346 = vmax.f32 %v2330, %v2338
      %v2347 = vmax.f32 %v2331, %v2339
      %2348 = vst.msk [vmem:[#allocation3] sm:$0xff] %vm358, %v2340
      %2349 = vst.msk [vmem:[#allocation3 + $0x8] sm:$0xff] %vm358, %v2341
      %2350 = vst.msk [vmem:[#allocation3 + $0x10] sm:$0xff] %vm358, %v2342
      %2351 = vst.msk [vmem:[#allocation3 + $0x18] sm:$0xff] %vm358, %v2343
      %2352 = vst.msk [vmem:[#allocation3 + $0x20] sm:$0xff] %vm358, %v2344
      %2353 = vst.msk [vmem:[#allocation3 + $0x28] sm:$0xff] %vm358, %v2345
      %2354 = vst.msk [vmem:[#allocation3 + $0x30] sm:$0xff] %vm358, %v2346
      %2355 = vst.msk [vmem:[#allocation3 + $0x38] sm:$0xff] %vm358, %v2347
      %v2356 = vld [vmem:[%s604] sm:$0x7f]
      %v2357 = vld [vmem:[%s604 + $0x8] sm:$0x7f]
      %v2358 = vld [vmem:[%s604 + $0x10] sm:$0x7f]
      %v2359 = vld [vmem:[%s604 + $0x18] sm:$0x7f]
      %v2360 = vld [vmem:[%s604 + $0x20] sm:$0x7f]
      %v2361 = vld [vmem:[%s604 + $0x28] sm:$0x7f]
      %v2362 = vld [vmem:[%s604 + $0x30] sm:$0x7f]
      %v2363 = vld [vmem:[%s604 + $0x38] sm:$0x7f]
      %v2364 = vld [vmem:[%s727] sm:$0x7f]
      %v2365 = vld [vmem:[%s727 + $0x8] sm:$0x7f]
      %v2366 = vld [vmem:[%s727 + $0x10] sm:$0x7f]
      %v2367 = vld [vmem:[%s727 + $0x18] sm:$0x7f]
      %v2368 = vld [vmem:[%s727 + $0x20] sm:$0x7f]
      %v2369 = vld [vmem:[%s727 + $0x28] sm:$0x7f]
      %v2370 = vld [vmem:[%s727 + $0x30] sm:$0x7f]
      %v2371 = vld [vmem:[%s727 + $0x38] sm:$0x7f]
      %v2372 = vmax.f32 %v2356, %v2364
      %v2373 = vmax.f32 %v2357, %v2365
      %v2374 = vmax.f32 %v2358, %v2366
      %v2375 = vmax.f32 %v2359, %v2367
      %v2376 = vmax.f32 %v2360, %v2368
      %v2377 = vmax.f32 %v2361, %v2369
      %v2378 = vmax.f32 %v2362, %v2370
      %v2379 = vmax.f32 %v2363, %v2371
      %v2380 = vld [vmem:[#allocation2 + $0x1] sm:$0x7f]
      %v2381 = vld [vmem:[#allocation2 + $0x9] sm:$0x7f]
      %v2382 = vld [vmem:[#allocation2 + $0x11] sm:$0x7f]
      %v2383 = vld [vmem:[#allocation2 + $0x19] sm:$0x7f]
      %v2384 = vld [vmem:[#allocation2 + $0x21] sm:$0x7f]
      %v2385 = vld [vmem:[#allocation2 + $0x29] sm:$0x7f]
      %v2386 = vld [vmem:[#allocation2 + $0x31] sm:$0x7f]
      %v2387 = vld [vmem:[#allocation2 + $0x39] sm:$0x7f]
      %v2388 = vmax.f32 %v2372, %v2380
      %v2389 = vmax.f32 %v2373, %v2381
      %v2390 = vmax.f32 %v2374, %v2382
      %v2391 = vmax.f32 %v2375, %v2383
      %v2392 = vmax.f32 %v2376, %v2384
      %v2393 = vmax.f32 %v2377, %v2385
      %v2394 = vmax.f32 %v2378, %v2386
      %v2395 = vmax.f32 %v2379, %v2387
      %v2396 = vld [vmem:[%s1096] sm:$0x7f]
      %v2397 = vld [vmem:[%s1096 + $0x8] sm:$0x7f]
      %v2398 = vld [vmem:[%s1096 + $0x10] sm:$0x7f]
      %v2399 = vld [vmem:[%s1096 + $0x18] sm:$0x7f]
      %v2400 = vld [vmem:[%s1096 + $0x20] sm:$0x7f]
      %v2401 = vld [vmem:[%s1096 + $0x28] sm:$0x7f]
      %v2402 = vld [vmem:[%s1096 + $0x30] sm:$0x7f]
      %v2403 = vld [vmem:[%s1096 + $0x38] sm:$0x7f]
      %v2404 = vmax.f32 %v2388, %v2396
      %v2405 = vmax.f32 %v2389, %v2397
      %v2406 = vmax.f32 %v2390, %v2398
      %v2407 = vmax.f32 %v2391, %v2399
      %v2408 = vmax.f32 %v2392, %v2400
      %v2409 = vmax.f32 %v2393, %v2401
      %v2410 = vmax.f32 %v2394, %v2402
      %v2411 = vmax.f32 %v2395, %v2403
      %v2412 = vld [vmem:[%s1219] sm:$0x7f]
      %v2413 = vld [vmem:[%s1219 + $0x8] sm:$0x7f]
      %v2414 = vld [vmem:[%s1219 + $0x10] sm:$0x7f]
      %v2415 = vld [vmem:[%s1219 + $0x18] sm:$0x7f]
      %v2416 = vld [vmem:[%s1219 + $0x20] sm:$0x7f]
      %v2417 = vld [vmem:[%s1219 + $0x28] sm:$0x7f]
      %v2418 = vld [vmem:[%s1219 + $0x30] sm:$0x7f]
      %v2419 = vld [vmem:[%s1219 + $0x38] sm:$0x7f]
      %v2420 = vmax.f32 %v2404, %v2412
      %v2421 = vmax.f32 %v2405, %v2413
      %v2422 = vmax.f32 %v2406, %v2414
      %v2423 = vmax.f32 %v2407, %v2415
      %v2424 = vmax.f32 %v2408, %v2416
      %v2425 = vmax.f32 %v2409, %v2417
      %v2426 = vmax.f32 %v2410, %v2418
      %v2427 = vmax.f32 %v2411, %v2419
      %v2428 = vld [vmem:[%s850 + $0x1] sm:$0x7f]
      %v2429 = vld [vmem:[%s850 + $0x9] sm:$0x7f]
      %v2430 = vld [vmem:[%s850 + $0x11] sm:$0x7f]
      %v2431 = vld [vmem:[%s850 + $0x19] sm:$0x7f]
      %v2432 = vld [vmem:[%s850 + $0x21] sm:$0x7f]
      %v2433 = vld [vmem:[%s850 + $0x29] sm:$0x7f]
      %v2434 = vld [vmem:[%s850 + $0x31] sm:$0x7f]
      %v2435 = vld [vmem:[%s850 + $0x39] sm:$0x7f]
      %v2436 = vmax.f32 %v2420, %v2428
      %v2437 = vmax.f32 %v2421, %v2429
      %v2438 = vmax.f32 %v2422, %v2430
      %v2439 = vmax.f32 %v2423, %v2431
      %v2440 = vmax.f32 %v2424, %v2432
      %v2441 = vmax.f32 %v2425, %v2433
      %v2442 = vmax.f32 %v2426, %v2434
      %v2443 = vmax.f32 %v2427, %v2435
      %v2444 = vld [vmem:[%s1588] sm:$0x7f]
      %v2445 = vld [vmem:[%s1588 + $0x8] sm:$0x7f]
      %v2446 = vld [vmem:[%s1588 + $0x10] sm:$0x7f]
      %v2447 = vld [vmem:[%s1588 + $0x18] sm:$0x7f]
      %v2448 = vld [vmem:[%s1588 + $0x20] sm:$0x7f]
      %v2449 = vld [vmem:[%s1588 + $0x28] sm:$0x7f]
      %v2450 = vld [vmem:[%s1588 + $0x30] sm:$0x7f]
      %v2451 = vld [vmem:[%s1588 + $0x38] sm:$0x7f]
      %v2452 = vmax.f32 %v2436, %v2444
      %v2453 = vmax.f32 %v2437, %v2445
      %v2454 = vmax.f32 %v2438, %v2446
      %v2455 = vmax.f32 %v2439, %v2447
      %v2456 = vmax.f32 %v2440, %v2448
      %v2457 = vmax.f32 %v2441, %v2449
      %v2458 = vmax.f32 %v2442, %v2450
      %v2459 = vmax.f32 %v2443, %v2451
      %v2460 = vld [vmem:[%s1711] sm:$0x7f]
      %v2461 = vld [vmem:[%s1711 + $0x8] sm:$0x7f]
      %v2462 = vld [vmem:[%s1711 + $0x10] sm:$0x7f]
      %v2463 = vld [vmem:[%s1711 + $0x18] sm:$0x7f]
      %v2464 = vld [vmem:[%s1711 + $0x20] sm:$0x7f]
      %v2465 = vld [vmem:[%s1711 + $0x28] sm:$0x7f]
      %v2466 = vld [vmem:[%s1711 + $0x30] sm:$0x7f]
      %v2467 = vld [vmem:[%s1711 + $0x38] sm:$0x7f]
      %v2468 = vmax.f32 %v2452, %v2460
      %v2469 = vmax.f32 %v2453, %v2461
      %v2470 = vmax.f32 %v2454, %v2462
      %v2471 = vmax.f32 %v2455, %v2463
      %v2472 = vmax.f32 %v2456, %v2464
      %v2473 = vmax.f32 %v2457, %v2465
      %v2474 = vmax.f32 %v2458, %v2466
      %v2475 = vmax.f32 %v2459, %v2467
      %v2476 = vld [vmem:[%s1342 + $0x1] sm:$0x7f]
      %v2477 = vld [vmem:[%s1342 + $0x9] sm:$0x7f]
      %v2478 = vld [vmem:[%s1342 + $0x11] sm:$0x7f]
      %v2479 = vld [vmem:[%s1342 + $0x19] sm:$0x7f]
      %v2480 = vld [vmem:[%s1342 + $0x21] sm:$0x7f]
      %v2481 = vld [vmem:[%s1342 + $0x29] sm:$0x7f]
      %v2482 = vld [vmem:[%s1342 + $0x31] sm:$0x7f]
      %v2483 = vld [vmem:[%s1342 + $0x39] sm:$0x7f]
      %v2484 = vmax.f32 %v2468, %v2476
      %v2485 = vmax.f32 %v2469, %v2477
      %v2486 = vmax.f32 %v2470, %v2478
      %v2487 = vmax.f32 %v2471, %v2479
      %v2488 = vmax.f32 %v2472, %v2480
      %v2489 = vmax.f32 %v2473, %v2481
      %v2490 = vmax.f32 %v2474, %v2482
      %v2491 = vmax.f32 %v2475, %v2483
      %s2492 = scalar_lea.vmem [#allocation3], 64
      %2493 = vst.msk [vmem:[%s2492] sm:$0xff] %vm358, 0.0
      %2494 = vst.msk [vmem:[%s2492 + $0x8] sm:$0xff] %vm358, 0.0
      %2495 = vst.msk [vmem:[%s2492 + $0x10] sm:$0xff] %vm358, 0.0
      %2496 = vst.msk [vmem:[%s2492 + $0x18] sm:$0xff] %vm358, 0.0
      %2497 = vst.msk [vmem:[%s2492 + $0x20] sm:$0xff] %vm358, 0.0
      %2498 = vst.msk [vmem:[%s2492 + $0x28] sm:$0xff] %vm358, 0.0
      %2499 = vst.msk [vmem:[%s2492 + $0x30] sm:$0xff] %vm358, 0.0
      %2500 = vst.msk [vmem:[%s2492 + $0x38] sm:$0xff] %vm358, 0.0
      %vm2501 = vcmask 161792
      %2502 = vst.msk [vmem:[%s2492] sm:$0x7f] %vm2501, %v2484
      %2503 = vst.msk [vmem:[%s2492 + $0x8] sm:$0x7f] %vm2501, %v2485
      %2504 = vst.msk [vmem:[%s2492 + $0x10] sm:$0x7f] %vm2501, %v2486
      %2505 = vst.msk [vmem:[%s2492 + $0x18] sm:$0x7f] %vm2501, %v2487
      %2506 = vst.msk [vmem:[%s2492 + $0x20] sm:$0x7f] %vm2501, %v2488
      %2507 = vst.msk [vmem:[%s2492 + $0x28] sm:$0x7f] %vm2501, %v2489
      %2508 = vst.msk [vmem:[%s2492 + $0x30] sm:$0x7f] %vm2501, %v2490
      %2509 = vst.msk [vmem:[%s2492 + $0x38] sm:$0x7f] %vm2501, %v2491
      %v2510 = vld [vmem:[%s1342] sm:$0xff]
      %v2511 = vld [vmem:[%s1342 + $0x8] sm:$0xff]
      %v2512 = vld [vmem:[%s1342 + $0x10] sm:$0xff]
      %v2513 = vld [vmem:[%s1342 + $0x18] sm:$0xff]
      %v2514 = vld [vmem:[%s1342 + $0x20] sm:$0xff]
      %v2515 = vld [vmem:[%s1342 + $0x28] sm:$0xff]
      %v2516 = vld [vmem:[%s1342 + $0x30] sm:$0xff]
      %v2517 = vld [vmem:[%s1465] sm:$0xff]
      %v2518 = vld [vmem:[%s1465 + $0x8] sm:$0xff]
      %v2519 = vld [vmem:[%s1465 + $0x10] sm:$0xff]
      %v2520 = vld [vmem:[%s1465 + $0x18] sm:$0xff]
      %v2521 = vld [vmem:[%s1465 + $0x20] sm:$0xff]
      %v2522 = vld [vmem:[%s1465 + $0x28] sm:$0xff]
      %v2523 = vld [vmem:[%s1465 + $0x30] sm:$0xff]
      %v2524 = vmax.f32 %v2510, %v2517
      %v2525 = vmax.f32 %v2511, %v2518
      %v2526 = vmax.f32 %v2512, %v2519
      %v2527 = vmax.f32 %v2513, %v2520
      %v2528 = vmax.f32 %v2514, %v2521
      %v2529 = vmax.f32 %v2515, %v2522
      %v2530 = vmax.f32 %v2516, %v2523
      %v2531 = vld [vmem:[%s1588] sm:$0xff]
      %v2532 = vld [vmem:[%s1588 + $0x8] sm:$0xff]
      %v2533 = vld [vmem:[%s1588 + $0x10] sm:$0xff]
      %v2534 = vld [vmem:[%s1588 + $0x18] sm:$0xff]
      %v2535 = vld [vmem:[%s1588 + $0x20] sm:$0xff]
      %v2536 = vld [vmem:[%s1588 + $0x28] sm:$0xff]
      %v2537 = vld [vmem:[%s1588 + $0x30] sm:$0xff]
      %v2538 = vmax.f32 %v2524, %v2531
      %v2539 = vmax.f32 %v2525, %v2532
      %v2540 = vmax.f32 %v2526, %v2533
      %v2541 = vmax.f32 %v2527, %v2534
      %v2542 = vmax.f32 %v2528, %v2535
      %v2543 = vmax.f32 %v2529, %v2536
      %v2544 = vmax.f32 %v2530, %v2537
      %v2545 = vld [vmem:[%s1834] sm:$0xff]
      %v2546 = vld [vmem:[%s1834 + $0x8] sm:$0xff]
      %v2547 = vld [vmem:[%s1834 + $0x10] sm:$0xff]
      %v2548 = vld [vmem:[%s1834 + $0x18] sm:$0xff]
      %v2549 = vld [vmem:[%s1834 + $0x20] sm:$0xff]
      %v2550 = vld [vmem:[%s1834 + $0x28] sm:$0xff]
      %v2551 = vld [vmem:[%s1834 + $0x30] sm:$0xff]
      %v2552 = vmax.f32 %v2538, %v2545
      %v2553 = vmax.f32 %v2539, %v2546
      %v2554 = vmax.f32 %v2540, %v2547
      %v2555 = vmax.f32 %v2541, %v2548
      %v2556 = vmax.f32 %v2542, %v2549
      %v2557 = vmax.f32 %v2543, %v2550
      %v2558 = vmax.f32 %v2544, %v2551
      %v2559 = vld [vmem:[%s1957] sm:$0xff]
      %v2560 = vld [vmem:[%s1957 + $0x8] sm:$0xff]
      %v2561 = vld [vmem:[%s1957 + $0x10] sm:$0xff]
      %v2562 = vld [vmem:[%s1957 + $0x18] sm:$0xff]
      %v2563 = vld [vmem:[%s1957 + $0x20] sm:$0xff]
      %v2564 = vld [vmem:[%s1957 + $0x28] sm:$0xff]
      %v2565 = vld [vmem:[%s1957 + $0x30] sm:$0xff]
      %v2566 = vmax.f32 %v2552, %v2559
      %v2567 = vmax.f32 %v2553, %v2560
      %v2568 = vmax.f32 %v2554, %v2561
      %v2569 = vmax.f32 %v2555, %v2562
      %v2570 = vmax.f32 %v2556, %v2563
      %v2571 = vmax.f32 %v2557, %v2564
      %v2572 = vmax.f32 %v2558, %v2565
      %v2573 = vld [vmem:[%s2080] sm:$0xff]
      %v2574 = vld [vmem:[%s2080 + $0x8] sm:$0xff]
      %v2575 = vld [vmem:[%s2080 + $0x10] sm:$0xff]
      %v2576 = vld [vmem:[%s2080 + $0x18] sm:$0xff]
      %v2577 = vld [vmem:[%s2080 + $0x20] sm:$0xff]
      %v2578 = vld [vmem:[%s2080 + $0x28] sm:$0xff]
      %v2579 = vld [vmem:[%s2080 + $0x30] sm:$0xff]
      %v2580 = vmax.f32 %v2566, %v2573
      %v2581 = vmax.f32 %v2567, %v2574
      %v2582 = vmax.f32 %v2568, %v2575
      %v2583 = vmax.f32 %v2569, %v2576
      %v2584 = vmax.f32 %v2570, %v2577
      %v2585 = vmax.f32 %v2571, %v2578
      %v2586 = vmax.f32 %v2572, %v2579
      %s2587 = scalar_lea.vmem [#allocation2], 8
      %v2588 = vld [vmem:[%s2587] sm:$0xff]
      %v2589 = vld [vmem:[%s2587 + $0x8] sm:$0xff]
      %v2590 = vld [vmem:[%s2587 + $0x10] sm:$0xff]
      %v2591 = vld [vmem:[%s2587 + $0x18] sm:$0xff]
      %v2592 = vld [vmem:[%s2587 + $0x20] sm:$0xff]
      %v2593 = vld [vmem:[%s2587 + $0x28] sm:$0xff]
      %v2594 = vld [vmem:[%s2587 + $0x30] sm:$0xff]
      %v2595 = vmax.f32 %v2580, %v2588
      %v2596 = vmax.f32 %v2581, %v2589
      %v2597 = vmax.f32 %v2582, %v2590
      %v2598 = vmax.f32 %v2583, %v2591
      %v2599 = vmax.f32 %v2584, %v2592
      %v2600 = vmax.f32 %v2585, %v2593
      %v2601 = vmax.f32 %v2586, %v2594
      %s2602 = scalar_lea.vmem [#allocation2], 72
      %v2603 = vld [vmem:[%s2602] sm:$0xff]
      %v2604 = vld [vmem:[%s2602 + $0x8] sm:$0xff]
      %v2605 = vld [vmem:[%s2602 + $0x10] sm:$0xff]
      %v2606 = vld [vmem:[%s2602 + $0x18] sm:$0xff]
      %v2607 = vld [vmem:[%s2602 + $0x20] sm:$0xff]
      %v2608 = vld [vmem:[%s2602 + $0x28] sm:$0xff]
      %v2609 = vld [vmem:[%s2602 + $0x30] sm:$0xff]
      %v2610 = vmax.f32 %v2595, %v2603
      %v2611 = vmax.f32 %v2596, %v2604
      %v2612 = vmax.f32 %v2597, %v2605
      %v2613 = vmax.f32 %v2598, %v2606
      %v2614 = vmax.f32 %v2599, %v2607
      %v2615 = vmax.f32 %v2600, %v2608
      %v2616 = vmax.f32 %v2601, %v2609
      %s2617 = scalar_lea.vmem [#allocation2], 136
      %v2618 = vld [vmem:[%s2617] sm:$0xff]
      %v2619 = vld [vmem:[%s2617 + $0x8] sm:$0xff]
      %v2620 = vld [vmem:[%s2617 + $0x10] sm:$0xff]
      %v2621 = vld [vmem:[%s2617 + $0x18] sm:$0xff]
      %v2622 = vld [vmem:[%s2617 + $0x20] sm:$0xff]
      %v2623 = vld [vmem:[%s2617 + $0x28] sm:$0xff]
      %v2624 = vld [vmem:[%s2617 + $0x30] sm:$0xff]
      %v2625 = vmax.f32 %v2610, %v2618
      %v2626 = vmax.f32 %v2611, %v2619
      %v2627 = vmax.f32 %v2612, %v2620
      %v2628 = vmax.f32 %v2613, %v2621
      %v2629 = vmax.f32 %v2614, %v2622
      %v2630 = vmax.f32 %v2615, %v2623
      %v2631 = vmax.f32 %v2616, %v2624
      %s2632 = scalar_lea.vmem [#allocation3], 128
      %2633 = vst.msk [vmem:[%s2632] sm:$0xff] %vm358, 0.0
      %2634 = vst.msk [vmem:[%s2632 + $0x8] sm:$0xff] %vm358, 0.0
      %2635 = vst.msk [vmem:[%s2632 + $0x10] sm:$0xff] %vm358, 0.0
      %2636 = vst.msk [vmem:[%s2632 + $0x18] sm:$0xff] %vm358, 0.0
      %2637 = vst.msk [vmem:[%s2632 + $0x20] sm:$0xff] %vm358, 0.0
      %2638 = vst.msk [vmem:[%s2632 + $0x28] sm:$0xff] %vm358, 0.0
      %2639 = vst.msk [vmem:[%s2632 + $0x30] sm:$0xff] %vm358, 0.0
      %2640 = vst.msk [vmem:[%s2632 + $0x38] sm:$0xff] %vm358, 0.0
      %2641 = vst.msk [vmem:[%s2632] sm:$0xff] %vm358, %v2625
      %2642 = vst.msk [vmem:[%s2632 + $0x8] sm:$0xff] %vm358, %v2626
      %2643 = vst.msk [vmem:[%s2632 + $0x10] sm:$0xff] %vm358, %v2627
      %2644 = vst.msk [vmem:[%s2632 + $0x18] sm:$0xff] %vm358, %v2628
      %2645 = vst.msk [vmem:[%s2632 + $0x20] sm:$0xff] %vm358, %v2629
      %2646 = vst.msk [vmem:[%s2632 + $0x28] sm:$0xff] %vm358, %v2630
      %2647 = vst.msk [vmem:[%s2632 + $0x30] sm:$0xff] %vm358, %v2631
      %v2648 = vld [vmem:[%s1588] sm:$0x7f]
      %v2649 = vld [vmem:[%s1588 + $0x8] sm:$0x7f]
      %v2650 = vld [vmem:[%s1588 + $0x10] sm:$0x7f]
      %v2651 = vld [vmem:[%s1588 + $0x18] sm:$0x7f]
      %v2652 = vld [vmem:[%s1588 + $0x20] sm:$0x7f]
      %v2653 = vld [vmem:[%s1588 + $0x28] sm:$0x7f]
      %v2654 = vld [vmem:[%s1588 + $0x30] sm:$0x7f]
      %v2655 = vld [vmem:[%s1711] sm:$0x7f]
      %v2656 = vld [vmem:[%s1711 + $0x8] sm:$0x7f]
      %v2657 = vld [vmem:[%s1711 + $0x10] sm:$0x7f]
      %v2658 = vld [vmem:[%s1711 + $0x18] sm:$0x7f]
      %v2659 = vld [vmem:[%s1711 + $0x20] sm:$0x7f]
      %v2660 = vld [vmem:[%s1711 + $0x28] sm:$0x7f]
      %v2661 = vld [vmem:[%s1711 + $0x30] sm:$0x7f]
      %v2662 = vmax.f32 %v2648, %v2655
      %v2663 = vmax.f32 %v2649, %v2656
      %v2664 = vmax.f32 %v2650, %v2657
      %v2665 = vmax.f32 %v2651, %v2658
      %v2666 = vmax.f32 %v2652, %v2659
      %v2667 = vmax.f32 %v2653, %v2660
      %v2668 = vmax.f32 %v2654, %v2661
      %v2669 = vld [vmem:[%s1342 + $0x1] sm:$0x7f]
      %v2670 = vld [vmem:[%s1342 + $0x9] sm:$0x7f]
      %v2671 = vld [vmem:[%s1342 + $0x11] sm:$0x7f]
      %v2672 = vld [vmem:[%s1342 + $0x19] sm:$0x7f]
      %v2673 = vld [vmem:[%s1342 + $0x21] sm:$0x7f]
      %v2674 = vld [vmem:[%s1342 + $0x29] sm:$0x7f]
      %v2675 = vld [vmem:[%s1342 + $0x31] sm:$0x7f]
      %v2676 = vmax.f32 %v2662, %v2669
      %v2677 = vmax.f32 %v2663, %v2670
      %v2678 = vmax.f32 %v2664, %v2671
      %v2679 = vmax.f32 %v2665, %v2672
      %v2680 = vmax.f32 %v2666, %v2673
      %v2681 = vmax.f32 %v2667, %v2674
      %v2682 = vmax.f32 %v2668, %v2675
      %v2683 = vld [vmem:[%s2080] sm:$0x7f]
      %v2684 = vld [vmem:[%s2080 + $0x8] sm:$0x7f]
      %v2685 = vld [vmem:[%s2080 + $0x10] sm:$0x7f]
      %v2686 = vld [vmem:[%s2080 + $0x18] sm:$0x7f]
      %v2687 = vld [vmem:[%s2080 + $0x20] sm:$0x7f]
      %v2688 = vld [vmem:[%s2080 + $0x28] sm:$0x7f]
      %v2689 = vld [vmem:[%s2080 + $0x30] sm:$0x7f]
      %v2690 = vmax.f32 %v2676, %v2683
      %v2691 = vmax.f32 %v2677, %v2684
      %v2692 = vmax.f32 %v2678, %v2685
      %v2693 = vmax.f32 %v2679, %v2686
      %v2694 = vmax.f32 %v2680, %v2687
      %v2695 = vmax.f32 %v2681, %v2688
      %v2696 = vmax.f32 %v2682, %v2689
      %v2697 = vld [vmem:[%s2203] sm:$0x7f]
      %v2698 = vld [vmem:[%s2203 + $0x8] sm:$0x7f]
      %v2699 = vld [vmem:[%s2203 + $0x10] sm:$0x7f]
      %v2700 = vld [vmem:[%s2203 + $0x18] sm:$0x7f]
      %v2701 = vld [vmem:[%s2203 + $0x20] sm:$0x7f]
      %v2702 = vld [vmem:[%s2203 + $0x28] sm:$0x7f]
      %v2703 = vld [vmem:[%s2203 + $0x30] sm:$0x7f]
      %v2704 = vmax.f32 %v2690, %v2697
      %v2705 = vmax.f32 %v2691, %v2698
      %v2706 = vmax.f32 %v2692, %v2699
      %v2707 = vmax.f32 %v2693, %v2700
      %v2708 = vmax.f32 %v2694, %v2701
      %v2709 = vmax.f32 %v2695, %v2702
      %v2710 = vmax.f32 %v2696, %v2703
      %v2711 = vld [vmem:[%s1834 + $0x1] sm:$0x7f]
      %v2712 = vld [vmem:[%s1834 + $0x9] sm:$0x7f]
      %v2713 = vld [vmem:[%s1834 + $0x11] sm:$0x7f]
      %v2714 = vld [vmem:[%s1834 + $0x19] sm:$0x7f]
      %v2715 = vld [vmem:[%s1834 + $0x21] sm:$0x7f]
      %v2716 = vld [vmem:[%s1834 + $0x29] sm:$0x7f]
      %v2717 = vld [vmem:[%s1834 + $0x31] sm:$0x7f]
      %v2718 = vmax.f32 %v2704, %v2711
      %v2719 = vmax.f32 %v2705, %v2712
      %v2720 = vmax.f32 %v2706, %v2713
      %v2721 = vmax.f32 %v2707, %v2714
      %v2722 = vmax.f32 %v2708, %v2715
      %v2723 = vmax.f32 %v2709, %v2716
      %v2724 = vmax.f32 %v2710, %v2717
      %v2725 = vld [vmem:[%s2617] sm:$0x7f]
      %v2726 = vld [vmem:[%s2617 + $0x8] sm:$0x7f]
      %v2727 = vld [vmem:[%s2617 + $0x10] sm:$0x7f]
      %v2728 = vld [vmem:[%s2617 + $0x18] sm:$0x7f]
      %v2729 = vld [vmem:[%s2617 + $0x20] sm:$0x7f]
      %v2730 = vld [vmem:[%s2617 + $0x28] sm:$0x7f]
      %v2731 = vld [vmem:[%s2617 + $0x30] sm:$0x7f]
      %v2732 = vmax.f32 %v2718, %v2725
      %v2733 = vmax.f32 %v2719, %v2726
      %v2734 = vmax.f32 %v2720, %v2727
      %v2735 = vmax.f32 %v2721, %v2728
      %v2736 = vmax.f32 %v2722, %v2729
      %v2737 = vmax.f32 %v2723, %v2730
      %v2738 = vmax.f32 %v2724, %v2731
      %s2739 = scalar_lea.vmem [#allocation2], 200
      %v2740 = vld [vmem:[%s2739] sm:$0x7f]
      %v2741 = vld [vmem:[%s2739 + $0x8] sm:$0x7f]
      %v2742 = vld [vmem:[%s2739 + $0x10] sm:$0x7f]
      %v2743 = vld [vmem:[%s2739 + $0x18] sm:$0x7f]
      %v2744 = vld [vmem:[%s2739 + $0x20] sm:$0x7f]
      %v2745 = vld [vmem:[%s2739 + $0x28] sm:$0x7f]
      %v2746 = vld [vmem:[%s2739 + $0x30] sm:$0x7f]
      %v2747 = vmax.f32 %v2732, %v2740
      %v2748 = vmax.f32 %v2733, %v2741
      %v2749 = vmax.f32 %v2734, %v2742
      %v2750 = vmax.f32 %v2735, %v2743
      %v2751 = vmax.f32 %v2736, %v2744
      %v2752 = vmax.f32 %v2737, %v2745
      %v2753 = vmax.f32 %v2738, %v2746
      %v2754 = vld [vmem:[%s2587 + $0x1] sm:$0x7f]
      %v2755 = vld [vmem:[%s2587 + $0x9] sm:$0x7f]
      %v2756 = vld [vmem:[%s2587 + $0x11] sm:$0x7f]
      %v2757 = vld [vmem:[%s2587 + $0x19] sm:$0x7f]
      %v2758 = vld [vmem:[%s2587 + $0x21] sm:$0x7f]
      %v2759 = vld [vmem:[%s2587 + $0x29] sm:$0x7f]
      %v2760 = vld [vmem:[%s2587 + $0x31] sm:$0x7f]
      %v2761 = vmax.f32 %v2747, %v2754
      %v2762 = vmax.f32 %v2748, %v2755
      %v2763 = vmax.f32 %v2749, %v2756
      %v2764 = vmax.f32 %v2750, %v2757
      %v2765 = vmax.f32 %v2751, %v2758
      %v2766 = vmax.f32 %v2752, %v2759
      %v2767 = vmax.f32 %v2753, %v2760
      %s2768 = scalar_lea.vmem [#allocation3], 192
      %2769 = vst.msk [vmem:[%s2768] sm:$0xff] %vm358, 0.0
      %2770 = vst.msk [vmem:[%s2768 + $0x8] sm:$0xff] %vm358, 0.0
      %2771 = vst.msk [vmem:[%s2768 + $0x10] sm:$0xff] %vm358, 0.0
      %2772 = vst.msk [vmem:[%s2768 + $0x18] sm:$0xff] %vm358, 0.0
      %2773 = vst.msk [vmem:[%s2768 + $0x20] sm:$0xff] %vm358, 0.0
      %2774 = vst.msk [vmem:[%s2768 + $0x28] sm:$0xff] %vm358, 0.0
      %2775 = vst.msk [vmem:[%s2768 + $0x30] sm:$0xff] %vm358, 0.0
      %2776 = vst.msk [vmem:[%s2768 + $0x38] sm:$0xff] %vm358, 0.0
      %2777 = vst.msk [vmem:[%s2768] sm:$0x7f] %vm2501, %v2761
      %2778 = vst.msk [vmem:[%s2768 + $0x8] sm:$0x7f] %vm2501, %v2762
      %2779 = vst.msk [vmem:[%s2768 + $0x10] sm:$0x7f] %vm2501, %v2763
      %2780 = vst.msk [vmem:[%s2768 + $0x18] sm:$0x7f] %vm2501, %v2764
      %2781 = vst.msk [vmem:[%s2768 + $0x20] sm:$0x7f] %vm2501, %v2765
      %2782 = vst.msk [vmem:[%s2768 + $0x28] sm:$0x7f] %vm2501, %v2766
      %2783 = vst.msk [vmem:[%s2768 + $0x30] sm:$0x7f] %vm2501, %v2767
      %v2784 = vld [vmem:[#allocation3] sm:$0xff]
      %v2785 = vld [vmem:[#allocation3 + $0x8] sm:$0xff]
      %v2786 = vld [vmem:[#allocation3 + $0x10] sm:$0xff]
      %v2787 = vld [vmem:[#allocation3 + $0x18] sm:$0xff]
      %v2788 = vld [vmem:[#allocation3 + $0x20] sm:$0xff]
      %v2789 = vld [vmem:[#allocation3 + $0x28] sm:$0xff]
      %v2790 = vld [vmem:[#allocation3 + $0x30] sm:$0xff]
      %v2791 = vld [vmem:[#allocation3 + $0x38] sm:$0xff]
      %v2792 = vpack.c.bf16 %v2785, %v2784
      %v2793 = vpack.c.bf16 %v2787, %v2786
      %v2794 = vpack.c.bf16 %v2789, %v2788
      %v2795 = vpack.c.bf16 %v2791, %v2790
      %v2796 = vld [vmem:[%s3] sm:$0xf]
      %v2797 = vld [vmem:[%s3 + $0x4] sm:$0xf]
      %v2798 = vld [vmem:[%s3 + $0x8] sm:$0x3]
      %v2802 = vunpack.c.l.b16 %v2796
      %v2803 = vunpack.c.l.b16 %v2797
      %v2804 = vunpack.c.l.b16 %v2798
      %v2805 = vpack.c.b16 %v2803, %v2802
      %v2806 = vpack.c.b16 %v2804, %v2804
      %v2809 = vsel %vm358, %v2792, 0
      %v2812 = vsel %vm358, %v2793, 0
      %v2815 = vsel %vm358, %v2794, 0
      %v2818 = vsel %vm358, %v2795, 0
      %vm2820 = vcmask 1041408
      %v2822 = vsel %vm2820, %v2806, 0
      %2824 = vmatprep.subr.bf16.mxu0 0
      %2825 = vmatpush1.bf16.msra.mxu0 %v2805
      %2826 = vmatprep.subr.bf16.mxu0 0
      %2827 = vmatpush1.bf16.msra.mxu0 %v2822
      %2828 = vmatprep.subr.bf16.mxu0 0
      %2829 = vmatpush1.bf16.msra.mxu0 0
      %2830 = vmatprep.subr.bf16.mxu0 0
      %2831 = vmatpush1.bf16.msra.mxu0 0
      %2832 = vmatprep.subr.bf16.mxu0 0
      %2833 = vmatpush1.bf16.msra.mxu0 0
      %2834 = vmatprep.subr.bf16.mxu0 0
      %2835 = vmatpush1.bf16.msra.mxu0 0
      %2836 = vmatprep.subr.bf16.mxu0 0
      %2837 = vmatpush1.bf16.msra.mxu0 0
      %2838 = vmatprep.subr.bf16.mxu0 0
      %2839 = vmatpush1.bf16.msra.mxu0 0
      %2840 = vmatprep.subr.bf16.mxu0 0
      %2841 = vmatpush1.bf16.msra.mxu0 0
      %2842 = vmatprep.subr.bf16.mxu0 0
      %2843 = vmatpush1.bf16.msra.mxu0 0
      %2844 = vmatprep.subr.bf16.mxu0 0
      %2845 = vmatpush1.bf16.msra.mxu0 0
      %2846 = vmatprep.subr.bf16.mxu0 0
      %2847 = vmatpush1.bf16.msra.mxu0 0
      %2848 = vmatprep.subr.bf16.mxu0 0
      %2849 = vmatpush1.bf16.msra.mxu0 0
      %2850 = vmatprep.subr.bf16.mxu0 0
      %2851 = vmatpush1.bf16.msra.mxu0 0
      %2852 = vmatprep.subr.bf16.mxu0 0
      %2853 = vmatpush1.bf16.msra.mxu0 0
      %2854 = vmatprep.subr.bf16.mxu0 0
      %2855 = vmatpush1.bf16.msra.mxu0 0
      %2856 = vmatprep.mubr.bf16.mxu0 0
      %2857 = vmatmul.mubr.bf16.gmra.mrb[0].mxu0 %v2809
      %v2858 = vpop.f32.mrb[0].mxu0
      %v2859 = vadd.f32 0.0, %v2858
      %v2860 = vpop.f32.mrb[0].mxu0
      %v2861 = vpop.f32.mrb[0].mxu0
      %v2862 = vadd.f32 0.0, %v2861
      %v2863 = vpop.f32.mrb[0].mxu0
      %2864 = vmatprep.mubr.bf16.mxu0 0
      %2865 = vmatmul.mubr.bf16.gmra.mrb[0].mxu0 %v2812
      %v2866 = vpop.f32.mrb[0].mxu0
      %v2867 = vadd.f32 0.0, %v2866
      %v2868 = vpop.f32.mrb[0].mxu0
      %v2869 = vpop.f32.mrb[0].mxu0
      %v2870 = vadd.f32 0.0, %v2869
      %v2871 = vpop.f32.mrb[0].mxu0
      %2872 = vmatprep.mubr.bf16.mxu0 0
      %2873 = vmatmul.mubr.bf16.gmra.mrb[0].mxu0 %v2815
      %v2874 = vpop.f32.mrb[0].mxu0
      %v2875 = vadd.f32 0.0, %v2874
      %v2876 = vpop.f32.mrb[0].mxu0
      %v2877 = vpop.f32.mrb[0].mxu0
      %v2878 = vadd.f32 0.0, %v2877
      %v2879 = vpop.f32.mrb[0].mxu0
      %2880 = vmatprep.mubr.bf16.mxu0 0
      %2881 = vmatmul.mubr.bf16.gmra.mrb[0].mxu0 %v2818
      %v2882 = vpop.f32.mrb[0].mxu0
      %v2883 = vpop.f32.mrb[0].mxu0
      %v2884 = vpop.f32.mrb[0].mxu0
      %v2885 = vpop.f32.mrb[0].mxu0
      %2886 = vdwg.mxu0
      %v2887 = vadd.f32 %v2859, 0.0
      %v2888 = vadd.f32 %v2862, 0.0
      %v2889 = vadd.f32 %v2867, 0.0
      %v2890 = vadd.f32 %v2870, 0.0
      %v2891 = vadd.f32 %v2875, 0.0
      %v2892 = vadd.f32 %v2878, 0.0
      %v2893 = vld [vmem:[%s2492] sm:$0xff]
      %v2894 = vld [vmem:[%s2492 + $0x8] sm:$0xff]
      %v2895 = vld [vmem:[%s2492 + $0x10] sm:$0xff]
      %v2896 = vld [vmem:[%s2492 + $0x18] sm:$0xff]
      %v2897 = vld [vmem:[%s2492 + $0x20] sm:$0xff]
      %v2898 = vld [vmem:[%s2492 + $0x28] sm:$0xff]
      %v2899 = vld [vmem:[%s2492 + $0x30] sm:$0xff]
      %v2900 = vld [vmem:[%s2492 + $0x38] sm:$0xff]
      %v2901 = vpack.c.bf16 %v2894, %v2893
      %v2902 = vpack.c.bf16 %v2896, %v2895
      %v2903 = vpack.c.bf16 %v2898, %v2897
      %v2904 = vpack.c.bf16 %v2900, %v2899
      %s2905 = scalar_lea.vmem %s3, 12
      %v2906 = vld [vmem:[%s2905] sm:$0xf]
      %v2907 = vld [vmem:[%s2905 + $0x4] sm:$0xf]
      %v2908 = vld [vmem:[%s2905 + $0x8] sm:$0x3]
      %v2912 = vunpack.c.l.b16 %v2906
      %v2913 = vunpack.c.l.b16 %v2907
      %v2914 = vunpack.c.l.b16 %v2908
      %v2915 = vpack.c.b16 %v2913, %v2912
      %v2916 = vpack.c.b16 %v2914, %v2914
      %v2919 = vsel %vm358, %v2901, 0
      %v2922 = vsel %vm358, %v2902, 0
      %v2925 = vsel %vm358, %v2903, 0
      %v2928 = vsel %vm358, %v2904, 0
      %v2931 = vsel %vm2820, %v2916, 0
      %2933 = vmatprep.subr.bf16.mxu0 0
      %2934 = vmatpush1.bf16.msra.mxu0 %v2915
      %2935 = vmatprep.subr.bf16.mxu0 0
      %2936 = vmatpush1.bf16.msra.mxu0 %v2931
      %2937 = vmatprep.subr.bf16.mxu0 0
      %2938 = vmatpush1.bf16.msra.mxu0 0
      %2939 = vmatprep.subr.bf16.mxu0 0
      %2940 = vmatpush1.bf16.msra.mxu0 0
      %2941 = vmatprep.subr.bf16.mxu0 0
      %2942 = vmatpush1.bf16.msra.mxu0 0
      %2943 = vmatprep.subr.bf16.mxu0 0
      %2944 = vmatpush1.bf16.msra.mxu0 0
      %2945 = vmatprep.subr.bf16.mxu0 0
      %2946 = vmatpush1.bf16.msra.mxu0 0
      %2947 = vmatprep.subr.bf16.mxu0 0
      %2948 = vmatpush1.bf16.msra.mxu0 0
      %2949 = vmatprep.subr.bf16.mxu0 0
      %2950 = vmatpush1.bf16.msra.mxu0 0
      %2951 = vmatprep.subr.bf16.mxu0 0
      %2952 = vmatpush1.bf16.msra.mxu0 0
      %2953 = vmatprep.subr.bf16.mxu0 0
      %2954 = vmatpush1.bf16.msra.mxu0 0
      %2955 = vmatprep.subr.bf16.mxu0 0
      %2956 = vmatpush1.bf16.msra.mxu0 0
      %2957 = vmatprep.subr.bf16.mxu0 0
      %2958 = vmatpush1.bf16.msra.mxu0 0
      %2959 = vmatprep.subr.bf16.mxu0 0
      %2960 = vmatpush1.bf16.msra.mxu0 0
      %2961 = vmatprep.subr.bf16.mxu0 0
      %2962 = vmatpush1.bf16.msra.mxu0 0
      %2963 = vmatprep.subr.bf16.mxu0 0
      %2964 = vmatpush1.bf16.msra.mxu0 0
      %2965 = vmatprep.mubr.bf16.mxu0 0
      %2966 = vmatmul.mubr.bf16.gmra.mrb[0].mxu0 %v2919
      %v2967 = vpop.f32.mrb[0].mxu0
      %v2968 = vadd.f32 0.0, %v2967
      %v2969 = vpop.f32.mrb[0].mxu0
      %v2970 = vpop.f32.mrb[0].mxu0
      %v2971 = vadd.f32 0.0, %v2970
      %v2972 = vpop.f32.mrb[0].mxu0
      %2973 = vmatprep.mubr.bf16.mxu0 0
      %2974 = vmatmul.mubr.bf16.gmra.mrb[0].mxu0 %v2922
      %v2975 = vpop.f32.mrb[0].mxu0
      %v2976 = vadd.f32 0.0, %v2975
      %v2977 = vpop.f32.mrb[0].mxu0
      %v2978 = vpop.f32.mrb[0].mxu0
      %v2979 = vadd.f32 0.0, %v2978
      %v2980 = vpop.f32.mrb[0].mxu0
      %2981 = vmatprep.mubr.bf16.mxu0 0
      %2982 = vmatmul.mubr.bf16.gmra.mrb[0].mxu0 %v2925
      %v2983 = vpop.f32.mrb[0].mxu0
      %v2984 = vadd.f32 0.0, %v2983
      %v2985 = vpop.f32.mrb[0].mxu0
      %v2986 = vpop.f32.mrb[0].mxu0
      %v2987 = vadd.f32 0.0, %v2986
      %v2988 = vpop.f32.mrb[0].mxu0
      %2989 = vmatprep.mubr.bf16.mxu0 0
      %2990 = vmatmul.mubr.bf16.gmra.mrb[0].mxu0 %v2928
      %v2991 = vpop.f32.mrb[0].mxu0
      %v2992 = vpop.f32.mrb[0].mxu0
      %v2993 = vpop.f32.mrb[0].mxu0
      %v2994 = vpop.f32.mrb[0].mxu0
      %2995 = vdwg.mxu0
      %v2996 = vadd.f32 %v2887, %v2968
      %v2997 = vadd.f32 %v2888, %v2971
      %v2998 = vadd.f32 %v2889, %v2976
      %v2999 = vadd.f32 %v2890, %v2979
      %v3000 = vadd.f32 %v2891, %v2984
      %v3001 = vadd.f32 %v2892, %v2987
      %s3002 = scalar_lea.vmem %s3, 24
      %v3003 = vld [vmem:[%s3002] sm:$0xf]
      %v3004 = vld [vmem:[%s3002 + $0x4] sm:$0xf]
      %v3005 = vld [vmem:[%s3002 + $0x8] sm:$0x3]
      %v3009 = vunpack.c.l.b16 %v3003
      %v3010 = vunpack.c.l.b16 %v3004
      %v3011 = vunpack.c.l.b16 %v3005
      %v3012 = vpack.c.b16 %v3010, %v3009
      %v3013 = vpack.c.b16 %v3011, %v3011
      %v3016 = vsel %vm2820, %v3013, 0
      %3018 = vmatprep.subr.bf16.mxu0 0
      %3019 = vmatpush1.bf16.msra.mxu0 %v3012
      %3020 = vmatprep.subr.bf16.mxu0 0
      %3021 = vmatpush1.bf16.msra.mxu0 %v3016
      %3022 = vmatprep.subr.bf16.mxu0 0
      %3023 = vmatpush1.bf16.msra.mxu0 0
      %3024 = vmatprep.subr.bf16.mxu0 0
      %3025 = vmatpush1.bf16.msra.mxu0 0
      %3026 = vmatprep.subr.bf16.mxu0 0
      %3027 = vmatpush1.bf16.msra.mxu0 0
      %3028 = vmatprep.subr.bf16.mxu0 0
      %3029 = vmatpush1.bf16.msra.mxu0 0
      %3030 = vmatprep.subr.bf16.mxu0 0
      %3031 = vmatpush1.bf16.msra.mxu0 0
      %3032 = vmatprep.subr.bf16.mxu0 0
      %3033 = vmatpush1.bf16.msra.mxu0 0
      %3034 = vmatprep.subr.bf16.mxu0 0
      %3035 = vmatpush1.bf16.msra.mxu0 0
      %3036 = vmatprep.subr.bf16.mxu0 0
      %3037 = vmatpush1.bf16.msra.mxu0 0
      %3038 = vmatprep.subr.bf16.mxu0 0
      %3039 = vmatpush1.bf16.msra.mxu0 0
      %3040 = vmatprep.subr.bf16.mxu0 0
      %3041 = vmatpush1.bf16.msra.mxu0 0
      %3042 = vmatprep.subr.bf16.mxu0 0
      %3043 = vmatpush1.bf16.msra.mxu0 0
      %3044 = vmatprep.subr.bf16.mxu0 0
      %3045 = vmatpush1.bf16.msra.mxu0 0
      %3046 = vmatprep.subr.bf16.mxu0 0
      %3047 = vmatpush1.bf16.msra.mxu0 0
      %3048 = vmatprep.subr.bf16.mxu0 0
      %3049 = vmatpush1.bf16.msra.mxu0 0
      %3050 = vmatprep.mubr.bf16.mxu0 0
      %3051 = vmatmul.mubr.bf16.gmra.mrb[0].mxu0 %v2809
      %v3052 = vpop.f32.mrb[0].mxu0
      %v3053 = vadd.f32 0.0, %v3052
      %v3054 = vpop.f32.mrb[0].mxu0
      %v3055 = vpop.f32.mrb[0].mxu0
      %v3056 = vadd.f32 0.0, %v3055
      %v3057 = vpop.f32.mrb[0].mxu0
      %3058 = vmatprep.mubr.bf16.mxu0 0
      %3059 = vmatmul.mubr.bf16.gmra.mrb[0].mxu0 %v2812
      %v3060 = vpop.f32.mrb[0].mxu0
      %v3061 = vadd.f32 0.0, %v3060
      %v3062 = vpop.f32.mrb[0].mxu0
      %v3063 = vpop.f32.mrb[0].mxu0
      %v3064 = vadd.f32 0.0, %v3063
      %v3065 = vpop.f32.mrb[0].mxu0
      %3066 = vmatprep.mubr.bf16.mxu0 0
      %3067 = vmatmul.mubr.bf16.gmra.mrb[0].mxu0 %v2815
      %v3068 = vpop.f32.mrb[0].mxu0
      %v3069 = vadd.f32 0.0, %v3068
      %v3070 = vpop.f32.mrb[0].mxu0
      %v3071 = vpop.f32.mrb[0].mxu0
      %v3072 = vadd.f32 0.0, %v3071
      %v3073 = vpop.f32.mrb[0].mxu0
      %3074 = vmatprep.mubr.bf16.mxu0 0
      %3075 = vmatmul.mubr.bf16.gmra.mrb[0].mxu0 %v2818
      %v3076 = vpop.f32.mrb[0].mxu0
      %v3077 = vpop.f32.mrb[0].mxu0
      %v3078 = vpop.f32.mrb[0].mxu0
      %v3079 = vpop.f32.mrb[0].mxu0
      %3080 = vdwg.mxu0
      %v3087 = vrot.slane %v3053, 1
      %v3088 = vrot.slane %v3056, 1
      %v3089 = vrot.slane %v3061, 1
      %v3090 = vrot.slane %v3064, 1
      %v3091 = vrot.slane %v3069, 1
      %v3092 = vrot.slane %v3072, 1
      %v3099 = vadd.f32 %v2996, %v3087
      %v3100 = vadd.f32 %v2997, %v3088
      %v3101 = vadd.f32 %v2998, %v3089
      %v3102 = vadd.f32 %v2999, %v3090
      %v3103 = vadd.f32 %v3000, %v3091
      %v3104 = vadd.f32 %v3001, %v3092
      %s3105 = scalar_lea.vmem %s3, 36
      %v3106 = vld [vmem:[%s3105] sm:$0xf]
      %v3107 = vld [vmem:[%s3105 + $0x4] sm:$0xf]
      %v3108 = vld [vmem:[%s3105 + $0x8] sm:$0x3]
      %v3112 = vunpack.c.l.b16 %v3106
      %v3113 = vunpack.c.l.b16 %v3107
      %v3114 = vunpack.c.l.b16 %v3108
      %v3115 = vpack.c.b16 %v3113, %v3112
      %v3116 = vpack.c.b16 %v3114, %v3114
      %v3119 = vsel %vm2820, %v3116, 0
      %3121 = vmatprep.subr.bf16.mxu0 0
      %3122 = vmatpush1.bf16.msra.mxu0 %v3115
      %3123 = vmatprep.subr.bf16.mxu0 0
      %3124 = vmatpush1.bf16.msra.mxu0 %v3119
      %3125 = vmatprep.subr.bf16.mxu0 0
      %3126 = vmatpush1.bf16.msra.mxu0 0
      %3127 = vmatprep.subr.bf16.mxu0 0
      %3128 = vmatpush1.bf16.msra.mxu0 0
      %3129 = vmatprep.subr.bf16.mxu0 0
      %3130 = vmatpush1.bf16.msra.mxu0 0
      %3131 = vmatprep.subr.bf16.mxu0 0
      %3132 = vmatpush1.bf16.msra.mxu0 0
      %3133 = vmatprep.subr.bf16.mxu0 0
      %3134 = vmatpush1.bf16.msra.mxu0 0
      %3135 = vmatprep.subr.bf16.mxu0 0
      %3136 = vmatpush1.bf16.msra.mxu0 0
      %3137 = vmatprep.subr.bf16.mxu0 0
      %3138 = vmatpush1.bf16.msra.mxu0 0
      %3139 = vmatprep.subr.bf16.mxu0 0
      %3140 = vmatpush1.bf16.msra.mxu0 0
      %3141 = vmatprep.subr.bf16.mxu0 0
      %3142 = vmatpush1.bf16.msra.mxu0 0
      %3143 = vmatprep.subr.bf16.mxu0 0
      %3144 = vmatpush1.bf16.msra.mxu0 0
      %3145 = vmatprep.subr.bf16.mxu0 0
      %3146 = vmatpush1.bf16.msra.mxu0 0
      %3147 = vmatprep.subr.bf16.mxu0 0
      %3148 = vmatpush1.bf16.msra.mxu0 0
      %3149 = vmatprep.subr.bf16.mxu0 0
      %3150 = vmatpush1.bf16.msra.mxu0 0
      %3151 = vmatprep.subr.bf16.mxu0 0
      %3152 = vmatpush1.bf16.msra.mxu0 0
      %3153 = vmatprep.mubr.bf16.mxu0 0
      %3154 = vmatmul.mubr.bf16.gmra.mrb[0].mxu0 %v2919
      %v3155 = vpop.f32.mrb[0].mxu0
      %v3156 = vadd.f32 0.0, %v3155
      %v3157 = vpop.f32.mrb[0].mxu0
      %v3158 = vpop.f32.mrb[0].mxu0
      %v3159 = vadd.f32 0.0, %v3158
      %v3160 = vpop.f32.mrb[0].mxu0
      %3161 = vmatprep.mubr.bf16.mxu0 0
      %3162 = vmatmul.mubr.bf16.gmra.mrb[0].mxu0 %v2922
      %v3163 = vpop.f32.mrb[0].mxu0
      %v3164 = vadd.f32 0.0, %v3163
      %v3165 = vpop.f32.mrb[0].mxu0
      %v3166 = vpop.f32.mrb[0].mxu0
      %v3167 = vadd.f32 0.0, %v3166
      %v3168 = vpop.f32.mrb[0].mxu0
      %3169 = vmatprep.mubr.bf16.mxu0 0
      %3170 = vmatmul.mubr.bf16.gmra.mrb[0].mxu0 %v2925
      %v3171 = vpop.f32.mrb[0].mxu0
      %v3172 = vadd.f32 0.0, %v3171
      %v3173 = vpop.f32.mrb[0].mxu0
      %v3174 = vpop.f32.mrb[0].mxu0
      %v3175 = vadd.f32 0.0, %v3174
      %v3176 = vpop.f32.mrb[0].mxu0
      %3177 = vmatprep.mubr.bf16.mxu0 0
      %3178 = vmatmul.mubr.bf16.gmra.mrb[0].mxu0 %v2928
      %v3179 = vpop.f32.mrb[0].mxu0
      %v3180 = vpop.f32.mrb[0].mxu0
      %v3181 = vpop.f32.mrb[0].mxu0
      %v3182 = vpop.f32.mrb[0].mxu0
      %3183 = vdwg.mxu0
      %v3190 = vrot.slane %v3156, 1
      %v3191 = vrot.slane %v3159, 1
      %v3192 = vrot.slane %v3164, 1
      %v3193 = vrot.slane %v3167, 1
      %v3194 = vrot.slane %v3172, 1
      %v3195 = vrot.slane %v3175, 1
      %v3202 = vadd.f32 %v3099, %v3190
      %v3203 = vadd.f32 %v3100, %v3191
      %v3204 = vadd.f32 %v3101, %v3192
      %v3205 = vadd.f32 %v3102, %v3193
      %v3206 = vadd.f32 %v3103, %v3194
      %v3207 = vadd.f32 %v3104, %v3195
      %v3208 = vld [vmem:[%s2632] sm:$0xff]
      %v3209 = vld [vmem:[%s2632 + $0x8] sm:$0xff]
      %v3210 = vld [vmem:[%s2632 + $0x10] sm:$0xff]
      %v3211 = vld [vmem:[%s2632 + $0x18] sm:$0xff]
      %v3212 = vld [vmem:[%s2632 + $0x20] sm:$0xff]
      %v3213 = vld [vmem:[%s2632 + $0x28] sm:$0xff]
      %v3214 = vld [vmem:[%s2632 + $0x30] sm:$0xff]
      %v3215 = vld [vmem:[%s2632 + $0x38] sm:$0xff]
      %v3216 = vpack.c.bf16 %v3209, %v3208
      %v3217 = vpack.c.bf16 %v3211, %v3210
      %v3218 = vpack.c.bf16 %v3213, %v3212
      %v3219 = vpack.c.bf16 %v3215, %v3214
      %s3220 = scalar_lea.vmem %s3, 48
      %v3221 = vld [vmem:[%s3220] sm:$0xf]
      %v3222 = vld [vmem:[%s3220 + $0x4] sm:$0xf]
      %v3223 = vld [vmem:[%s3220 + $0x8] sm:$0x3]
      %v3227 = vunpack.c.l.b16 %v3221
      %v3228 = vunpack.c.l.b16 %v3222
      %v3229 = vunpack.c.l.b16 %v3223
      %v3230 = vpack.c.b16 %v3228, %v3227
      %v3231 = vpack.c.b16 %v3229, %v3229
      %v3234 = vsel %vm358, %v3216, 0
      %v3237 = vsel %vm358, %v3217, 0
      %v3240 = vsel %vm358, %v3218, 0
      %v3243 = vsel %vm358, %v3219, 0
      %v3246 = vsel %vm2820, %v3231, 0
      %3248 = vmatprep.subr.bf16.mxu0 0
      %3249 = vmatpush1.bf16.msra.mxu0 %v3230
      %3250 = vmatprep.subr.bf16.mxu0 0
      %3251 = vmatpush1.bf16.msra.mxu0 %v3246
      %3252 = vmatprep.subr.bf16.mxu0 0
      %3253 = vmatpush1.bf16.msra.mxu0 0
      %3254 = vmatprep.subr.bf16.mxu0 0
      %3255 = vmatpush1.bf16.msra.mxu0 0
      %3256 = vmatprep.subr.bf16.mxu0 0
      %3257 = vmatpush1.bf16.msra.mxu0 0
      %3258 = vmatprep.subr.bf16.mxu0 0
      %3259 = vmatpush1.bf16.msra.mxu0 0
      %3260 = vmatprep.subr.bf16.mxu0 0
      %3261 = vmatpush1.bf16.msra.mxu0 0
      %3262 = vmatprep.subr.bf16.mxu0 0
      %3263 = vmatpush1.bf16.msra.mxu0 0
      %3264 = vmatprep.subr.bf16.mxu0 0
      %3265 = vmatpush1.bf16.msra.mxu0 0
      %3266 = vmatprep.subr.bf16.mxu0 0
      %3267 = vmatpush1.bf16.msra.mxu0 0
      %3268 = vmatprep.subr.bf16.mxu0 0
      %3269 = vmatpush1.bf16.msra.mxu0 0
      %3270 = vmatprep.subr.bf16.mxu0 0
      %3271 = vmatpush1.bf16.msra.mxu0 0
      %3272 = vmatprep.subr.bf16.mxu0 0
      %3273 = vmatpush1.bf16.msra.mxu0 0
      %3274 = vmatprep.subr.bf16.mxu0 0
      %3275 = vmatpush1.bf16.msra.mxu0 0
      %3276 = vmatprep.subr.bf16.mxu0 0
      %3277 = vmatpush1.bf16.msra.mxu0 0
      %3278 = vmatprep.subr.bf16.mxu0 0
      %3279 = vmatpush1.bf16.msra.mxu0 0
      %3280 = vmatprep.mubr.bf16.mxu0 0
      %3281 = vmatmul.mubr.bf16.gmra.mrb[0].mxu0 %v3234
      %v3282 = vpop.f32.mrb[0].mxu0
      %v3283 = vadd.f32 0.0, %v3282
      %v3284 = vpop.f32.mrb[0].mxu0
      %v3285 = vpop.f32.mrb[0].mxu0
      %v3286 = vadd.f32 0.0, %v3285
      %v3287 = vpop.f32.mrb[0].mxu0
      %3288 = vmatprep.mubr.bf16.mxu0 0
      %3289 = vmatmul.mubr.bf16.gmra.mrb[0].mxu0 %v3237
      %v3290 = vpop.f32.mrb[0].mxu0
      %v3291 = vadd.f32 0.0, %v3290
      %v3292 = vpop.f32.mrb[0].mxu0
      %v3293 = vpop.f32.mrb[0].mxu0
      %v3294 = vadd.f32 0.0, %v3293
      %v3295 = vpop.f32.mrb[0].mxu0
      %3296 = vmatprep.mubr.bf16.mxu0 0
      %3297 = vmatmul.mubr.bf16.gmra.mrb[0].mxu0 %v3240
      %v3298 = vpop.f32.mrb[0].mxu0
      %v3299 = vadd.f32 0.0, %v3298
      %v3300 = vpop.f32.mrb[0].mxu0
      %v3301 = vpop.f32.mrb[0].mxu0
      %v3302 = vadd.f32 0.0, %v3301
      %v3303 = vpop.f32.mrb[0].mxu0
      %3304 = vmatprep.mubr.bf16.mxu0 0
      %3305 = vmatmul.mubr.bf16.gmra.mrb[0].mxu0 %v3243
      %v3306 = vpop.f32.mrb[0].mxu0
      %v3307 = vpop.f32.mrb[0].mxu0
      %v3308 = vpop.f32.mrb[0].mxu0
      %v3309 = vpop.f32.mrb[0].mxu0
      %3310 = vdwg.mxu0
      %v3311 = vadd.f32 %v3202, %v3283
      %v3312 = vadd.f32 %v3203, %v3286
      %v3313 = vadd.f32 %v3204, %v3291
      %v3314 = vadd.f32 %v3205, %v3294
      %v3315 = vadd.f32 %v3206, %v3299
      %v3316 = vadd.f32 %v3207, %v3302
      %v3317 = vld [vmem:[%s2768] sm:$0xff]
      %v3318 = vld [vmem:[%s2768 + $0x8] sm:$0xff]
      %v3319 = vld [vmem:[%s2768 + $0x10] sm:$0xff]
      %v3320 = vld [vmem:[%s2768 + $0x18] sm:$0xff]
      %v3321 = vld [vmem:[%s2768 + $0x20] sm:$0xff]
      %v3322 = vld [vmem:[%s2768 + $0x28] sm:$0xff]
      %v3323 = vld [vmem:[%s2768 + $0x30] sm:$0xff]
      %v3324 = vld [vmem:[%s2768 + $0x38] sm:$0xff]
      %v3325 = vpack.c.bf16 %v3318, %v3317
      %v3326 = vpack.c.bf16 %v3320, %v3319
      %v3327 = vpack.c.bf16 %v3322, %v3321
      %v3328 = vpack.c.bf16 %v3324, %v3323
      %s3329 = scalar_lea.vmem %s3, 60
      %v3330 = vld [vmem:[%s3329] sm:$0xf]
      %v3331 = vld [vmem:[%s3329 + $0x4] sm:$0xf]
      %v3332 = vld [vmem:[%s3329 + $0x8] sm:$0x3]
      %v3336 = vunpack.c.l.b16 %v3330
      %v3337 = vunpack.c.l.b16 %v3331
      %v3338 = vunpack.c.l.b16 %v3332
      %v3339 = vpack.c.b16 %v3337, %v3336
      %v3340 = vpack.c.b16 %v3338, %v3338
      %v3343 = vsel %vm358, %v3325, 0
      %v3346 = vsel %vm358, %v3326, 0
      %v3349 = vsel %vm358, %v3327, 0
      %v3352 = vsel %vm358, %v3328, 0
      %v3355 = vsel %vm2820, %v3340, 0
      %3357 = vmatprep.subr.bf16.mxu0 0
      %3358 = vmatpush1.bf16.msra.mxu0 %v3339
      %3359 = vmatprep.subr.bf16.mxu0 0
      %3360 = vmatpush1.bf16.msra.mxu0 %v3355
      %3361 = vmatprep.subr.bf16.mxu0 0
      %3362 = vmatpush1.bf16.msra.mxu0 0
      %3363 = vmatprep.subr.bf16.mxu0 0
      %3364 = vmatpush1.bf16.msra.mxu0 0
      %3365 = vmatprep.subr.bf16.mxu0 0
      %3366 = vmatpush1.bf16.msra.mxu0 0
      %3367 = vmatprep.subr.bf16.mxu0 0
      %3368 = vmatpush1.bf16.msra.mxu0 0
      %3369 = vmatprep.subr.bf16.mxu0 0
      %3370 = vmatpush1.bf16.msra.mxu0 0
      %3371 = vmatprep.subr.bf16.mxu0 0
      %3372 = vmatpush1.bf16.msra.mxu0 0
      %3373 = vmatprep.subr.bf16.mxu0 0
      %3374 = vmatpush1.bf16.msra.mxu0 0
      %3375 = vmatprep.subr.bf16.mxu0 0
      %3376 = vmatpush1.bf16.msra.mxu0 0
      %3377 = vmatprep.subr.bf16.mxu0 0
      %3378 = vmatpush1.bf16.msra.mxu0 0
      %3379 = vmatprep.subr.bf16.mxu0 0
      %3380 = vmatpush1.bf16.msra.mxu0 0
      %3381 = vmatprep.subr.bf16.mxu0 0
      %3382 = vmatpush1.bf16.msra.mxu0 0
      %3383 = vmatprep.subr.bf16.mxu0 0
      %3384 = vmatpush1.bf16.msra.mxu0 0
      %3385 = vmatprep.subr.bf16.mxu0 0
      %3386 = vmatpush1.bf16.msra.mxu0 0
      %3387 = vmatprep.subr.bf16.mxu0 0
      %3388 = vmatpush1.bf16.msra.mxu0 0
      %3389 = vmatprep.mubr.bf16.mxu0 0
      %3390 = vmatmul.mubr.bf16.gmra.mrb[0].mxu0 %v3343
      %v3391 = vpop.f32.mrb[0].mxu0
      %v3392 = vadd.f32 0.0, %v3391
      %v3393 = vpop.f32.mrb[0].mxu0
      %v3394 = vpop.f32.mrb[0].mxu0
      %v3395 = vadd.f32 0.0, %v3394
      %v3396 = vpop.f32.mrb[0].mxu0
      %3397 = vmatprep.mubr.bf16.mxu0 0
      %3398 = vmatmul.mubr.bf16.gmra.mrb[0].mxu0 %v3346
      %v3399 = vpop.f32.mrb[0].mxu0
      %v3400 = vadd.f32 0.0, %v3399
      %v3401 = vpop.f32.mrb[0].mxu0
      %v3402 = vpop.f32.mrb[0].mxu0
      %v3403 = vadd.f32 0.0, %v3402
      %v3404 = vpop.f32.mrb[0].mxu0
      %3405 = vmatprep.mubr.bf16.mxu0 0
      %3406 = vmatmul.mubr.bf16.gmra.mrb[0].mxu0 %v3349
      %v3407 = vpop.f32.mrb[0].mxu0
      %v3408 = vadd.f32 0.0, %v3407
      %v3409 = vpop.f32.mrb[0].mxu0
      %v3410 = vpop.f32.mrb[0].mxu0
      %v3411 = vadd.f32 0.0, %v3410
      %v3412 = vpop.f32.mrb[0].mxu0
      %3413 = vmatprep.mubr.bf16.mxu0 0
      %3414 = vmatmul.mubr.bf16.gmra.mrb[0].mxu0 %v3352
      %v3415 = vpop.f32.mrb[0].mxu0
      %v3416 = vpop.f32.mrb[0].mxu0
      %v3417 = vpop.f32.mrb[0].mxu0
      %v3418 = vpop.f32.mrb[0].mxu0
      %3419 = vdwg.mxu0
      %v3420 = vadd.f32 %v3311, %v3392
      %v3421 = vadd.f32 %v3312, %v3395
      %v3422 = vadd.f32 %v3313, %v3400
      %v3423 = vadd.f32 %v3314, %v3403
      %v3424 = vadd.f32 %v3315, %v3408
      %v3425 = vadd.f32 %v3316, %v3411
      %s3426 = scalar_lea.vmem %s3, 72
      %v3427 = vld [vmem:[%s3426] sm:$0xf]
      %v3428 = vld [vmem:[%s3426 + $0x4] sm:$0xf]
      %v3429 = vld [vmem:[%s3426 + $0x8] sm:$0x3]
      %v3433 = vunpack.c.l.b16 %v3427
      %v3434 = vunpack.c.l.b16 %v3428
      %v3435 = vunpack.c.l.b16 %v3429
      %v3436 = vpack.c.b16 %v3434, %v3433
      %v3437 = vpack.c.b16 %v3435, %v3435
      %v3440 = vsel %vm2820, %v3437, 0
      %3442 = vmatprep.subr.bf16.mxu0 0
      %3443 = vmatpush1.bf16.msra.mxu0 %v3436
      %3444 = vmatprep.subr.bf16.mxu0 0
      %3445 = vmatpush1.bf16.msra.mxu0 %v3440
      %3446 = vmatprep.subr.bf16.mxu0 0
      %3447 = vmatpush1.bf16.msra.mxu0 0
      %3448 = vmatprep.subr.bf16.mxu0 0
      %3449 = vmatpush1.bf16.msra.mxu0 0
      %3450 = vmatprep.subr.bf16.mxu0 0
      %3451 = vmatpush1.bf16.msra.mxu0 0
      %3452 = vmatprep.subr.bf16.mxu0 0
      %3453 = vmatpush1.bf16.msra.mxu0 0
      %3454 = vmatprep.subr.bf16.mxu0 0
      %3455 = vmatpush1.bf16.msra.mxu0 0
      %3456 = vmatprep.subr.bf16.mxu0 0
      %3457 = vmatpush1.bf16.msra.mxu0 0
      %3458 = vmatprep.subr.bf16.mxu0 0
      %3459 = vmatpush1.bf16.msra.mxu0 0
      %3460 = vmatprep.subr.bf16.mxu0 0
      %3461 = vmatpush1.bf16.msra.mxu0 0
      %3462 = vmatprep.subr.bf16.mxu0 0
      %3463 = vmatpush1.bf16.msra.mxu0 0
      %3464 = vmatprep.subr.bf16.mxu0 0
      %3465 = vmatpush1.bf16.msra.mxu0 0
      %3466 = vmatprep.subr.bf16.mxu0 0
      %3467 = vmatpush1.bf16.msra.mxu0 0
      %3468 = vmatprep.subr.bf16.mxu0 0
      %3469 = vmatpush1.bf16.msra.mxu0 0
      %3470 = vmatprep.subr.bf16.mxu0 0
      %3471 = vmatpush1.bf16.msra.mxu0 0
      %3472 = vmatprep.subr.bf16.mxu0 0
      %3473 = vmatpush1.bf16.msra.mxu0 0
      %3474 = vmatprep.mubr.bf16.mxu0 0
      %3475 = vmatmul.mubr.bf16.gmra.mrb[0].mxu0 %v3234
      %v3476 = vpop.f32.mrb[0].mxu0
      %v3477 = vadd.f32 0.0, %v3476
      %v3478 = vpop.f32.mrb[0].mxu0
      %v3479 = vpop.f32.mrb[0].mxu0
      %v3480 = vadd.f32 0.0, %v3479
      %v3481 = vpop.f32.mrb[0].mxu0
      %3482 = vmatprep.mubr.bf16.mxu0 0
      %3483 = vmatmul.mubr.bf16.gmra.mrb[0].mxu0 %v3237
      %v3484 = vpop.f32.mrb[0].mxu0
      %v3485 = vadd.f32 0.0, %v3484
      %v3486 = vpop.f32.mrb[0].mxu0
      %v3487 = vpop.f32.mrb[0].mxu0
      %v3488 = vadd.f32 0.0, %v3487
      %v3489 = vpop.f32.mrb[0].mxu0
      %3490 = vmatprep.mubr.bf16.mxu0 0
      %3491 = vmatmul.mubr.bf16.gmra.mrb[0].mxu0 %v3240
      %v3492 = vpop.f32.mrb[0].mxu0
      %v3493 = vadd.f32 0.0, %v3492
      %v3494 = vpop.f32.mrb[0].mxu0
      %v3495 = vpop.f32.mrb[0].mxu0
      %v3496 = vadd.f32 0.0, %v3495
      %v3497 = vpop.f32.mrb[0].mxu0
      %3498 = vmatprep.mubr.bf16.mxu0 0
      %3499 = vmatmul.mubr.bf16.gmra.mrb[0].mxu0 %v3243
      %v3500 = vpop.f32.mrb[0].mxu0
      %v3501 = vpop.f32.mrb[0].mxu0
      %v3502 = vpop.f32.mrb[0].mxu0
      %v3503 = vpop.f32.mrb[0].mxu0
      %3504 = vdwg.mxu0
      %v3511 = vrot.slane %v3477, 1
      %v3512 = vrot.slane %v3480, 1
      %v3513 = vrot.slane %v3485, 1
      %v3514 = vrot.slane %v3488, 1
      %v3515 = vrot.slane %v3493, 1
      %v3516 = vrot.slane %v3496, 1
      %v3523 = vadd.f32 %v3420, %v3511
      %v3524 = vadd.f32 %v3421, %v3512
      %v3525 = vadd.f32 %v3422, %v3513
      %v3526 = vadd.f32 %v3423, %v3514
      %v3527 = vadd.f32 %v3424, %v3515
      %v3528 = vadd.f32 %v3425, %v3516
      %s3529 = scalar_lea.vmem %s3, 84
      %v3530 = vld [vmem:[%s3529] sm:$0xf]
      %v3531 = vld [vmem:[%s3529 + $0x4] sm:$0xf]
      %v3532 = vld [vmem:[%s3529 + $0x8] sm:$0x3]
      %v3536 = vunpack.c.l.b16 %v3530
      %v3537 = vunpack.c.l.b16 %v3531
      %v3538 = vunpack.c.l.b16 %v3532
      %v3539 = vpack.c.b16 %v3537, %v3536
      %v3540 = vpack.c.b16 %v3538, %v3538
      %v3543 = vsel %vm2820, %v3540, 0
      %3545 = vmatprep.subr.bf16.mxu0 0
      %3546 = vmatpush1.bf16.msra.mxu0 %v3539
      %3547 = vmatprep.subr.bf16.mxu0 0
      %3548 = vmatpush1.bf16.msra.mxu0 %v3543
      %3549 = vmatprep.subr.bf16.mxu0 0
      %3550 = vmatpush1.bf16.msra.mxu0 0
      %3551 = vmatprep.subr.bf16.mxu0 0
      %3552 = vmatpush1.bf16.msra.mxu0 0
      %3553 = vmatprep.subr.bf16.mxu0 0
      %3554 = vmatpush1.bf16.msra.mxu0 0
      %3555 = vmatprep.subr.bf16.mxu0 0
      %3556 = vmatpush1.bf16.msra.mxu0 0
      %3557 = vmatprep.subr.bf16.mxu0 0
      %3558 = vmatpush1.bf16.msra.mxu0 0
      %3559 = vmatprep.subr.bf16.mxu0 0
      %3560 = vmatpush1.bf16.msra.mxu0 0
      %3561 = vmatprep.subr.bf16.mxu0 0
      %3562 = vmatpush1.bf16.msra.mxu0 0
      %3563 = vmatprep.subr.bf16.mxu0 0
      %3564 = vmatpush1.bf16.msra.mxu0 0
      %3565 = vmatprep.subr.bf16.mxu0 0
      %3566 = vmatpush1.bf16.msra.mxu0 0
      %3567 = vmatprep.subr.bf16.mxu0 0
      %3568 = vmatpush1.bf16.msra.mxu0 0
      %3569 = vmatprep.subr.bf16.mxu0 0
      %3570 = vmatpush1.bf16.msra.mxu0 0
      %3571 = vmatprep.subr.bf16.mxu0 0
      %3572 = vmatpush1.bf16.msra.mxu0 0
      %3573 = vmatprep.subr.bf16.mxu0 0
      %3574 = vmatpush1.bf16.msra.mxu0 0
      %3575 = vmatprep.subr.bf16.mxu0 0
      %3576 = vmatpush1.bf16.msra.mxu0 0
      %3577 = vmatprep.mubr.bf16.mxu0 0
      %3578 = vmatmul.mubr.bf16.gmra.mrb[0].mxu0 %v3343
      %v3579 = vpop.f32.mrb[0].mxu0
      %v3580 = vadd.f32 0.0, %v3579
      %v3581 = vpop.f32.mrb[0].mxu0
      %v3582 = vpop.f32.mrb[0].mxu0
      %v3583 = vadd.f32 0.0, %v3582
      %v3584 = vpop.f32.mrb[0].mxu0
      %3585 = vmatprep.mubr.bf16.mxu0 0
      %3586 = vmatmul.mubr.bf16.gmra.mrb[0].mxu0 %v3346
      %v3587 = vpop.f32.mrb[0].mxu0
      %v3588 = vadd.f32 0.0, %v3587
      %v3589 = vpop.f32.mrb[0].mxu0
      %v3590 = vpop.f32.mrb[0].mxu0
      %v3591 = vadd.f32 0.0, %v3590
      %v3592 = vpop.f32.mrb[0].mxu0
      %3593 = vmatprep.mubr.bf16.mxu0 0
      %3594 = vmatmul.mubr.bf16.gmra.mrb[0].mxu0 %v3349
      %v3595 = vpop.f32.mrb[0].mxu0
      %v3596 = vadd.f32 0.0, %v3595
      %v3597 = vpop.f32.mrb[0].mxu0
      %v3598 = vpop.f32.mrb[0].mxu0
      %v3599 = vadd.f32 0.0, %v3598
      %v3600 = vpop.f32.mrb[0].mxu0
      %3601 = vmatprep.mubr.bf16.mxu0 0
      %3602 = vmatmul.mubr.bf16.gmra.mrb[0].mxu0 %v3352
      %v3603 = vpop.f32.mrb[0].mxu0
      %v3604 = vpop.f32.mrb[0].mxu0
      %v3605 = vpop.f32.mrb[0].mxu0
      %v3606 = vpop.f32.mrb[0].mxu0
      %3607 = vdwg.mxu0
      %v3614 = vrot.slane %v3580, 1
      %v3615 = vrot.slane %v3583, 1
      %v3616 = vrot.slane %v3588, 1
      %v3617 = vrot.slane %v3591, 1
      %v3618 = vrot.slane %v3596, 1
      %v3619 = vrot.slane %v3599, 1
      %v3626 = vadd.f32 %v3523, %v3614
      %v3627 = vadd.f32 %v3524, %v3615
      %v3628 = vadd.f32 %v3525, %v3616
      %v3629 = vadd.f32 %v3526, %v3617
      %v3630 = vadd.f32 %v3527, %v3618
      %v3631 = vadd.f32 %v3528, %v3619
      %s3632 = scalar_lea.vmem %s3, 96
      %v3633 = vld [vmem:[%s3632] sm:$0xf]
      %v3634 = vld [vmem:[%s3632 + $0x4] sm:$0xf]
      %v3635 = vld [vmem:[%s3632 + $0x8] sm:$0x3]
      %v3639 = vunpack.c.l.b16 %v3633
      %v3640 = vunpack.c.l.b16 %v3634
      %v3641 = vunpack.c.l.b16 %v3635
      %v3642 = vpack.c.b16 %v3640, %v3639
      %v3643 = vpack.c.b16 %v3641, %v3641
      %v3646 = vsel %vm2820, %v3643, 0
      %3648 = vmatprep.subr.bf16.mxu0 0
      %3649 = vmatpush1.bf16.msra.mxu0 %v3642
      %3650 = vmatprep.subr.bf16.mxu0 0
      %3651 = vmatpush1.bf16.msra.mxu0 %v3646
      %3652 = vmatprep.subr.bf16.mxu0 0
      %3653 = vmatpush1.bf16.msra.mxu0 0
      %3654 = vmatprep.subr.bf16.mxu0 0
      %3655 = vmatpush1.bf16.msra.mxu0 0
      %3656 = vmatprep.subr.bf16.mxu0 0
      %3657 = vmatpush1.bf16.msra.mxu0 0
      %3658 = vmatprep.subr.bf16.mxu0 0
      %3659 = vmatpush1.bf16.msra.mxu0 0
      %3660 = vmatprep.subr.bf16.mxu0 0
      %3661 = vmatpush1.bf16.msra.mxu0 0
      %3662 = vmatprep.subr.bf16.mxu0 0
      %3663 = vmatpush1.bf16.msra.mxu0 0
      %3664 = vmatprep.subr.bf16.mxu0 0
      %3665 = vmatpush1.bf16.msra.mxu0 0
      %3666 = vmatprep.subr.bf16.mxu0 0
      %3667 = vmatpush1.bf16.msra.mxu0 0
      %3668 = vmatprep.subr.bf16.mxu0 0
      %3669 = vmatpush1.bf16.msra.mxu0 0
      %3670 = vmatprep.subr.bf16.mxu0 0
      %3671 = vmatpush1.bf16.msra.mxu0 0
      %3672 = vmatprep.subr.bf16.mxu0 0
      %3673 = vmatpush1.bf16.msra.mxu0 0
      %3674 = vmatprep.subr.bf16.mxu0 0
      %3675 = vmatpush1.bf16.msra.mxu0 0
      %3676 = vmatprep.subr.bf16.mxu0 0
      %3677 = vmatpush1.bf16.msra.mxu0 0
      %3678 = vmatprep.subr.bf16.mxu0 0
      %3679 = vmatpush1.bf16.msra.mxu0 0
      %3680 = vmatprep.mubr.bf16.mxu0 0
      %3681 = vmatmul.mubr.bf16.gmra.mrb[0].mxu0 %v2809
      %v3682 = vpop.f32.mrb[0].mxu0
      %v3683 = vpop.f32.mrb[0].mxu0
      %v3684 = vpop.f32.mrb[0].mxu0
      %v3685 = vadd.f32 0.0, %v3684
      %v3686 = vpop.f32.mrb[0].mxu0
      %3687 = vmatprep.mubr.bf16.mxu0 0
      %3688 = vmatmul.mubr.bf16.gmra.mrb[0].mxu0 %v2812
      %v3689 = vpop.f32.mrb[0].mxu0
      %v3690 = vadd.f32 0.0, %v3689
      %v3691 = vpop.f32.mrb[0].mxu0
      %v3692 = vpop.f32.mrb[0].mxu0
      %v3693 = vadd.f32 0.0, %v3692
      %v3694 = vpop.f32.mrb[0].mxu0
      %3695 = vmatprep.mubr.bf16.mxu0 0
      %3696 = vmatmul.mubr.bf16.gmra.mrb[0].mxu0 %v2815
      %v3697 = vpop.f32.mrb[0].mxu0
      %v3698 = vadd.f32 0.0, %v3697
      %v3699 = vpop.f32.mrb[0].mxu0
      %v3700 = vpop.f32.mrb[0].mxu0
      %v3701 = vadd.f32 0.0, %v3700
      %v3702 = vpop.f32.mrb[0].mxu0
      %3703 = vmatprep.mubr.bf16.mxu0 0
      %3704 = vmatmul.mubr.bf16.gmra.mrb[0].mxu0 %v2818
      %v3705 = vpop.f32.mrb[0].mxu0
      %v3706 = vadd.f32 0.0, %v3705
      %v3707 = vpop.f32.mrb[0].mxu0
      %v3708 = vpop.f32.mrb[0].mxu0
      %v3709 = vpop.f32.mrb[0].mxu0
      %3710 = vdwg.mxu0
      %v3711 = vadd.f32 %v3626, %v3685
      %v3712 = vadd.f32 %v3627, %v3690
      %v3713 = vadd.f32 %v3628, %v3693
      %v3714 = vadd.f32 %v3629, %v3698
      %v3715 = vadd.f32 %v3630, %v3701
      %v3716 = vadd.f32 %v3631, %v3706
      %s3717 = scalar_lea.vmem %s3, 108
      %v3718 = vld [vmem:[%s3717] sm:$0xf]
      %v3719 = vld [vmem:[%s3717 + $0x4] sm:$0xf]
      %v3720 = vld [vmem:[%s3717 + $0x8] sm:$0x3]
      %v3724 = vunpack.c.l.b16 %v3718
      %v3725 = vunpack.c.l.b16 %v3719
      %v3726 = vunpack.c.l.b16 %v3720
      %v3727 = vpack.c.b16 %v3725, %v3724
      %v3728 = vpack.c.b16 %v3726, %v3726
      %v3731 = vsel %vm2820, %v3728, 0
      %3733 = vmatprep.subr.bf16.mxu0 0
      %3734 = vmatpush1.bf16.msra.mxu0 %v3727
      %3735 = vmatprep.subr.bf16.mxu0 0
      %3736 = vmatpush1.bf16.msra.mxu0 %v3731
      %3737 = vmatprep.subr.bf16.mxu0 0
      %3738 = vmatpush1.bf16.msra.mxu0 0
      %3739 = vmatprep.subr.bf16.mxu0 0
      %3740 = vmatpush1.bf16.msra.mxu0 0
      %3741 = vmatprep.subr.bf16.mxu0 0
      %3742 = vmatpush1.bf16.msra.mxu0 0
      %3743 = vmatprep.subr.bf16.mxu0 0
      %3744 = vmatpush1.bf16.msra.mxu0 0
      %3745 = vmatprep.subr.bf16.mxu0 0
      %3746 = vmatpush1.bf16.msra.mxu0 0
      %3747 = vmatprep.subr.bf16.mxu0 0
      %3748 = vmatpush1.bf16.msra.mxu0 0
      %3749 = vmatprep.subr.bf16.mxu0 0
      %3750 = vmatpush1.bf16.msra.mxu0 0
      %3751 = vmatprep.subr.bf16.mxu0 0
      %3752 = vmatpush1.bf16.msra.mxu0 0
      %3753 = vmatprep.subr.bf16.mxu0 0
      %3754 = vmatpush1.bf16.msra.mxu0 0
      %3755 = vmatprep.subr.bf16.mxu0 0
      %3756 = vmatpush1.bf16.msra.mxu0 0
      %3757 = vmatprep.subr.bf16.mxu0 0
      %3758 = vmatpush1.bf16.msra.mxu0 0
      %3759 = vmatprep.subr.bf16.mxu0 0
      %3760 = vmatpush1.bf16.msra.mxu0 0
      %3761 = vmatprep.subr.bf16.mxu0 0
      %3762 = vmatpush1.bf16.msra.mxu0 0
      %3763 = vmatprep.subr.bf16.mxu0 0
      %3764 = vmatpush1.bf16.msra.mxu0 0
      %3765 = vmatprep.mubr.bf16.mxu0 0
      %3766 = vmatmul.mubr.bf16.gmra.mrb[0].mxu0 %v2919
      %v3767 = vpop.f32.mrb[0].mxu0
      %v3768 = vpop.f32.mrb[0].mxu0
      %v3769 = vpop.f32.mrb[0].mxu0
      %v3770 = vadd.f32 0.0, %v3769
      %v3771 = vpop.f32.mrb[0].mxu0
      %3772 = vmatprep.mubr.bf16.mxu0 0
      %3773 = vmatmul.mubr.bf16.gmra.mrb[0].mxu0 %v2922
      %v3774 = vpop.f32.mrb[0].mxu0
      %v3775 = vadd.f32 0.0, %v3774
      %v3776 = vpop.f32.mrb[0].mxu0
      %v3777 = vpop.f32.mrb[0].mxu0
      %v3778 = vadd.f32 0.0, %v3777
      %v3779 = vpop.f32.mrb[0].mxu0
      %3780 = vmatprep.mubr.bf16.mxu0 0
      %3781 = vmatmul.mubr.bf16.gmra.mrb[0].mxu0 %v2925
      %v3782 = vpop.f32.mrb[0].mxu0
      %v3783 = vadd.f32 0.0, %v3782
      %v3784 = vpop.f32.mrb[0].mxu0
      %v3785 = vpop.f32.mrb[0].mxu0
      %v3786 = vadd.f32 0.0, %v3785
      %v3787 = vpop.f32.mrb[0].mxu0
      %3788 = vmatprep.mubr.bf16.mxu0 0
      %3789 = vmatmul.mubr.bf16.gmra.mrb[0].mxu0 %v2928
      %v3790 = vpop.f32.mrb[0].mxu0
      %v3791 = vadd.f32 0.0, %v3790
      %v3792 = vpop.f32.mrb[0].mxu0
      %v3793 = vpop.f32.mrb[0].mxu0
      %v3794 = vpop.f32.mrb[0].mxu0
      %3795 = vdwg.mxu0
      %v3796 = vadd.f32 %v3711, %v3770
      %v3797 = vadd.f32 %v3712, %v3775
      %v3798 = vadd.f32 %v3713, %v3778
      %v3799 = vadd.f32 %v3714, %v3783
      %v3800 = vadd.f32 %v3715, %v3786
      %v3801 = vadd.f32 %v3716, %v3791
      %s3802 = scalar_lea.vmem %s3, 120
      %v3803 = vld [vmem:[%s3802] sm:$0xf]
      %v3804 = vld [vmem:[%s3802 + $0x4] sm:$0xf]
      %v3805 = vld [vmem:[%s3802 + $0x8] sm:$0x3]
      %v3809 = vunpack.c.l.b16 %v3803
      %v3810 = vunpack.c.l.b16 %v3804
      %v3811 = vunpack.c.l.b16 %v3805
      %v3812 = vpack.c.b16 %v3810, %v3809
      %v3813 = vpack.c.b16 %v3811, %v3811
      %v3816 = vsel %vm2820, %v3813, 0
      %3818 = vmatprep.subr.bf16.mxu0 0
      %3819 = vmatpush1.bf16.msra.mxu0 %v3812
      %3820 = vmatprep.subr.bf16.mxu0 0
      %3821 = vmatpush1.bf16.msra.mxu0 %v3816
      %3822 = vmatprep.subr.bf16.mxu0 0
      %3823 = vmatpush1.bf16.msra.mxu0 0
      %3824 = vmatprep.subr.bf16.mxu0 0
      %3825 = vmatpush1.bf16.msra.mxu0 0
      %3826 = vmatprep.subr.bf16.mxu0 0
      %3827 = vmatpush1.bf16.msra.mxu0 0
      %3828 = vmatprep.subr.bf16.mxu0 0
      %3829 = vmatpush1.bf16.msra.mxu0 0
      %3830 = vmatprep.subr.bf16.mxu0 0
      %3831 = vmatpush1.bf16.msra.mxu0 0
      %3832 = vmatprep.subr.bf16.mxu0 0
      %3833 = vmatpush1.bf16.msra.mxu0 0
      %3834 = vmatprep.subr.bf16.mxu0 0
      %3835 = vmatpush1.bf16.msra.mxu0 0
      %3836 = vmatprep.subr.bf16.mxu0 0
      %3837 = vmatpush1.bf16.msra.mxu0 0
      %3838 = vmatprep.subr.bf16.mxu0 0
      %3839 = vmatpush1.bf16.msra.mxu0 0
      %3840 = vmatprep.subr.bf16.mxu0 0
      %3841 = vmatpush1.bf16.msra.mxu0 0
      %3842 = vmatprep.subr.bf16.mxu0 0
      %3843 = vmatpush1.bf16.msra.mxu0 0
      %3844 = vmatprep.subr.bf16.mxu0 0
      %3845 = vmatpush1.bf16.msra.mxu0 0
      %3846 = vmatprep.subr.bf16.mxu0 0
      %3847 = vmatpush1.bf16.msra.mxu0 0
      %3848 = vmatprep.subr.bf16.mxu0 0
      %3849 = vmatpush1.bf16.msra.mxu0 0
      %3850 = vmatprep.mubr.bf16.mxu0 0
      %3851 = vmatmul.mubr.bf16.gmra.mrb[0].mxu0 %v2809
      %v3852 = vpop.f32.mrb[0].mxu0
      %v3853 = vpop.f32.mrb[0].mxu0
      %v3854 = vpop.f32.mrb[0].mxu0
      %v3855 = vadd.f32 0.0, %v3854
      %v3856 = vpop.f32.mrb[0].mxu0
      %3857 = vmatprep.mubr.bf16.mxu0 0
      %3858 = vmatmul.mubr.bf16.gmra.mrb[0].mxu0 %v2812
      %v3859 = vpop.f32.mrb[0].mxu0
      %v3860 = vadd.f32 0.0, %v3859
      %v3861 = vpop.f32.mrb[0].mxu0
      %v3862 = vpop.f32.mrb[0].mxu0
      %v3863 = vadd.f32 0.0, %v3862
      %v3864 = vpop.f32.mrb[0].mxu0
      %3865 = vmatprep.mubr.bf16.mxu0 0
      %3866 = vmatmul.mubr.bf16.gmra.mrb[0].mxu0 %v2815
      %v3867 = vpop.f32.mrb[0].mxu0
      %v3868 = vadd.f32 0.0, %v3867
      %v3869 = vpop.f32.mrb[0].mxu0
      %v3870 = vpop.f32.mrb[0].mxu0
      %v3871 = vadd.f32 0.0, %v3870
      %v3872 = vpop.f32.mrb[0].mxu0
      %3873 = vmatprep.mubr.bf16.mxu0 0
      %3874 = vmatmul.mubr.bf16.gmra.mrb[0].mxu0 %v2818
      %v3875 = vpop.f32.mrb[0].mxu0
      %v3876 = vadd.f32 0.0, %v3875
      %v3877 = vpop.f32.mrb[0].mxu0
      %v3878 = vpop.f32.mrb[0].mxu0
      %v3879 = vpop.f32.mrb[0].mxu0
      %3880 = vdwg.mxu0
      %v3887 = vrot.slane %v3855, 1
      %v3888 = vrot.slane %v3860, 1
      %v3889 = vrot.slane %v3863, 1
      %v3890 = vrot.slane %v3868, 1
      %v3891 = vrot.slane %v3871, 1
      %v3892 = vrot.slane %v3876, 1
      %v3899 = vadd.f32 %v3796, %v3887
      %v3900 = vadd.f32 %v3797, %v3888
      %v3901 = vadd.f32 %v3798, %v3889
      %v3902 = vadd.f32 %v3799, %v3890
      %v3903 = vadd.f32 %v3800, %v3891
      %v3904 = vadd.f32 %v3801, %v3892
      %s3905 = scalar_lea.vmem %s3, 132
      %v3906 = vld [vmem:[%s3905] sm:$0xf]
      %v3907 = vld [vmem:[%s3905 + $0x4] sm:$0xf]
      %v3908 = vld [vmem:[%s3905 + $0x8] sm:$0x3]
      %v3912 = vunpack.c.l.b16 %v3906
      %v3913 = vunpack.c.l.b16 %v3907
      %v3914 = vunpack.c.l.b16 %v3908
      %v3915 = vpack.c.b16 %v3913, %v3912
      %v3916 = vpack.c.b16 %v3914, %v3914
      %v3919 = vsel %vm2820, %v3916, 0
      %3921 = vmatprep.subr.bf16.mxu0 0
      %3922 = vmatpush1.bf16.msra.mxu0 %v3915
      %3923 = vmatprep.subr.bf16.mxu0 0
      %3924 = vmatpush1.bf16.msra.mxu0 %v3919
      %3925 = vmatprep.subr.bf16.mxu0 0
      %3926 = vmatpush1.bf16.msra.mxu0 0
      %3927 = vmatprep.subr.bf16.mxu0 0
      %3928 = vmatpush1.bf16.msra.mxu0 0
      %3929 = vmatprep.subr.bf16.mxu0 0
      %3930 = vmatpush1.bf16.msra.mxu0 0
      %3931 = vmatprep.subr.bf16.mxu0 0
      %3932 = vmatpush1.bf16.msra.mxu0 0
      %3933 = vmatprep.subr.bf16.mxu0 0
      %3934 = vmatpush1.bf16.msra.mxu0 0
      %3935 = vmatprep.subr.bf16.mxu0 0
      %3936 = vmatpush1.bf16.msra.mxu0 0
      %3937 = vmatprep.subr.bf16.mxu0 0
      %3938 = vmatpush1.bf16.msra.mxu0 0
      %3939 = vmatprep.subr.bf16.mxu0 0
      %3940 = vmatpush1.bf16.msra.mxu0 0
      %3941 = vmatprep.subr.bf16.mxu0 0
      %3942 = vmatpush1.bf16.msra.mxu0 0
      %3943 = vmatprep.subr.bf16.mxu0 0
      %3944 = vmatpush1.bf16.msra.mxu0 0
      %3945 = vmatprep.subr.bf16.mxu0 0
      %3946 = vmatpush1.bf16.msra.mxu0 0
      %3947 = vmatprep.subr.bf16.mxu0 0
      %3948 = vmatpush1.bf16.msra.mxu0 0
      %3949 = vmatprep.subr.bf16.mxu0 0
      %3950 = vmatpush1.bf16.msra.mxu0 0
      %3951 = vmatprep.subr.bf16.mxu0 0
      %3952 = vmatpush1.bf16.msra.mxu0 0
      %3953 = vmatprep.mubr.bf16.mxu0 0
      %3954 = vmatmul.mubr.bf16.gmra.mrb[0].mxu0 %v2919
      %v3955 = vpop.f32.mrb[0].mxu0
      %v3956 = vpop.f32.mrb[0].mxu0
      %v3957 = vpop.f32.mrb[0].mxu0
      %v3958 = vadd.f32 0.0, %v3957
      %v3959 = vpop.f32.mrb[0].mxu0
      %3960 = vmatprep.mubr.bf16.mxu0 0
      %3961 = vmatmul.mubr.bf16.gmra.mrb[0].mxu0 %v2922
      %v3962 = vpop.f32.mrb[0].mxu0
      %v3963 = vadd.f32 0.0, %v3962
      %v3964 = vpop.f32.mrb[0].mxu0
      %v3965 = vpop.f32.mrb[0].mxu0
      %v3966 = vadd.f32 0.0, %v3965
      %v3967 = vpop.f32.mrb[0].mxu0
      %3968 = vmatprep.mubr.bf16.mxu0 0
      %3969 = vmatmul.mubr.bf16.gmra.mrb[0].mxu0 %v2925
      %v3970 = vpop.f32.mrb[0].mxu0
      %v3971 = vadd.f32 0.0, %v3970
      %v3972 = vpop.f32.mrb[0].mxu0
      %v3973 = vpop.f32.mrb[0].mxu0
      %v3974 = vadd.f32 0.0, %v3973
      %v3975 = vpop.f32.mrb[0].mxu0
      %3976 = vmatprep.mubr.bf16.mxu0 0
      %3977 = vmatmul.mubr.bf16.gmra.mrb[0].mxu0 %v2928
      %v3978 = vpop.f32.mrb[0].mxu0
      %v3979 = vadd.f32 0.0, %v3978
      %v3980 = vpop.f32.mrb[0].mxu0
      %v3981 = vpop.f32.mrb[0].mxu0
      %v3982 = vpop.f32.mrb[0].mxu0
      %3983 = vdwg.mxu0
      %v3990 = vrot.slane %v3958, 1
      %v3991 = vrot.slane %v3963, 1
      %v3992 = vrot.slane %v3966, 1
      %v3993 = vrot.slane %v3971, 1
      %v3994 = vrot.slane %v3974, 1
      %v3995 = vrot.slane %v3979, 1
      %v4002 = vadd.f32 %v3899, %v3990
      %v4003 = vadd.f32 %v3900, %v3991
      %v4004 = vadd.f32 %v3901, %v3992
      %v4005 = vadd.f32 %v3902, %v3993
      %v4006 = vadd.f32 %v3903, %v3994
      %v4007 = vadd.f32 %v3904, %v3995
      %s4008 = scalar_lea.vmem %s3, 144
      %v4009 = vld [vmem:[%s4008] sm:$0xf]
      %v4010 = vld [vmem:[%s4008 + $0x4] sm:$0xf]
      %v4011 = vld [vmem:[%s4008 + $0x8] sm:$0x3]
      %v4015 = vunpack.c.l.b16 %v4009
      %v4016 = vunpack.c.l.b16 %v4010
      %v4017 = vunpack.c.l.b16 %v4011
      %v4018 = vpack.c.b16 %v4016, %v4015
      %v4019 = vpack.c.b16 %v4017, %v4017
      %v4022 = vsel %vm2820, %v4019, 0
      %4024 = vmatprep.subr.bf16.mxu0 0
      %4025 = vmatpush1.bf16.msra.mxu0 %v4018
      %4026 = vmatprep.subr.bf16.mxu0 0
      %4027 = vmatpush1.bf16.msra.mxu0 %v4022
      %4028 = vmatprep.subr.bf16.mxu0 0
      %4029 = vmatpush1.bf16.msra.mxu0 0
      %4030 = vmatprep.subr.bf16.mxu0 0
      %4031 = vmatpush1.bf16.msra.mxu0 0
      %4032 = vmatprep.subr.bf16.mxu0 0
      %4033 = vmatpush1.bf16.msra.mxu0 0
      %4034 = vmatprep.subr.bf16.mxu0 0
      %4035 = vmatpush1.bf16.msra.mxu0 0
      %4036 = vmatprep.subr.bf16.mxu0 0
      %4037 = vmatpush1.bf16.msra.mxu0 0
      %4038 = vmatprep.subr.bf16.mxu0 0
      %4039 = vmatpush1.bf16.msra.mxu0 0
      %4040 = vmatprep.subr.bf16.mxu0 0
      %4041 = vmatpush1.bf16.msra.mxu0 0
      %4042 = vmatprep.subr.bf16.mxu0 0
      %4043 = vmatpush1.bf16.msra.mxu0 0
      %4044 = vmatprep.subr.bf16.mxu0 0
      %4045 = vmatpush1.bf16.msra.mxu0 0
      %4046 = vmatprep.subr.bf16.mxu0 0
      %4047 = vmatpush1.bf16.msra.mxu0 0
      %4048 = vmatprep.subr.bf16.mxu0 0
      %4049 = vmatpush1.bf16.msra.mxu0 0
      %4050 = vmatprep.subr.bf16.mxu0 0
      %4051 = vmatpush1.bf16.msra.mxu0 0
      %4052 = vmatprep.subr.bf16.mxu0 0
      %4053 = vmatpush1.bf16.msra.mxu0 0
      %4054 = vmatprep.subr.bf16.mxu0 0
      %4055 = vmatpush1.bf16.msra.mxu0 0
      %4056 = vmatprep.mubr.bf16.mxu0 0
      %4057 = vmatmul.mubr.bf16.gmra.mrb[0].mxu0 %v3234
      %v4058 = vpop.f32.mrb[0].mxu0
      %v4059 = vpop.f32.mrb[0].mxu0
      %v4060 = vpop.f32.mrb[0].mxu0
      %v4061 = vadd.f32 0.0, %v4060
      %v4062 = vpop.f32.mrb[0].mxu0
      %4063 = vmatprep.mubr.bf16.mxu0 0
      %4064 = vmatmul.mubr.bf16.gmra.mrb[0].mxu0 %v3237
      %v4065 = vpop.f32.mrb[0].mxu0
      %v4066 = vadd.f32 0.0, %v4065
      %v4067 = vpop.f32.mrb[0].mxu0
      %v4068 = vpop.f32.mrb[0].mxu0
      %v4069 = vadd.f32 0.0, %v4068
      %v4070 = vpop.f32.mrb[0].mxu0
      %4071 = vmatprep.mubr.bf16.mxu0 0
      %4072 = vmatmul.mubr.bf16.gmra.mrb[0].mxu0 %v3240
      %v4073 = vpop.f32.mrb[0].mxu0
      %v4074 = vadd.f32 0.0, %v4073
      %v4075 = vpop.f32.mrb[0].mxu0
      %v4076 = vpop.f32.mrb[0].mxu0
      %v4077 = vadd.f32 0.0, %v4076
      %v4078 = vpop.f32.mrb[0].mxu0
      %4079 = vmatprep.mubr.bf16.mxu0 0
      %4080 = vmatmul.mubr.bf16.gmra.mrb[0].mxu0 %v3243
      %v4081 = vpop.f32.mrb[0].mxu0
      %v4082 = vadd.f32 0.0, %v4081
      %v4083 = vpop.f32.mrb[0].mxu0
      %v4084 = vpop.f32.mrb[0].mxu0
      %v4085 = vpop.f32.mrb[0].mxu0
      %4086 = vdwg.mxu0
      %v4087 = vadd.f32 %v4002, %v4061
      %v4088 = vadd.f32 %v4003, %v4066
      %v4089 = vadd.f32 %v4004, %v4069
      %v4090 = vadd.f32 %v4005, %v4074
      %v4091 = vadd.f32 %v4006, %v4077
      %v4092 = vadd.f32 %v4007, %v4082
      %s4093 = scalar_lea.vmem %s3, 156
      %v4094 = vld [vmem:[%s4093] sm:$0xf]
      %v4095 = vld [vmem:[%s4093 + $0x4] sm:$0xf]
      %v4096 = vld [vmem:[%s4093 + $0x8] sm:$0x3]
      %v4100 = vunpack.c.l.b16 %v4094
      %v4101 = vunpack.c.l.b16 %v4095
      %v4102 = vunpack.c.l.b16 %v4096
      %v4103 = vpack.c.b16 %v4101, %v4100
      %v4104 = vpack.c.b16 %v4102, %v4102
      %v4107 = vsel %vm2820, %v4104, 0
      %4109 = vmatprep.subr.bf16.mxu0 0
      %4110 = vmatpush1.bf16.msra.mxu0 %v4103
      %4111 = vmatprep.subr.bf16.mxu0 0
      %4112 = vmatpush1.bf16.msra.mxu0 %v4107
      %4113 = vmatprep.subr.bf16.mxu0 0
      %4114 = vmatpush1.bf16.msra.mxu0 0
      %4115 = vmatprep.subr.bf16.mxu0 0
      %4116 = vmatpush1.bf16.msra.mxu0 0
      %4117 = vmatprep.subr.bf16.mxu0 0
      %4118 = vmatpush1.bf16.msra.mxu0 0
      %4119 = vmatprep.subr.bf16.mxu0 0
      %4120 = vmatpush1.bf16.msra.mxu0 0
      %4121 = vmatprep.subr.bf16.mxu0 0
      %4122 = vmatpush1.bf16.msra.mxu0 0
      %4123 = vmatprep.subr.bf16.mxu0 0
      %4124 = vmatpush1.bf16.msra.mxu0 0
      %4125 = vmatprep.subr.bf16.mxu0 0
      %4126 = vmatpush1.bf16.msra.mxu0 0
      %4127 = vmatprep.subr.bf16.mxu0 0
      %4128 = vmatpush1.bf16.msra.mxu0 0
      %4129 = vmatprep.subr.bf16.mxu0 0
      %4130 = vmatpush1.bf16.msra.mxu0 0
      %4131 = vmatprep.subr.bf16.mxu0 0
      %4132 = vmatpush1.bf16.msra.mxu0 0
      %4133 = vmatprep.subr.bf16.mxu0 0
      %4134 = vmatpush1.bf16.msra.mxu0 0
      %4135 = vmatprep.subr.bf16.mxu0 0
      %4136 = vmatpush1.bf16.msra.mxu0 0
      %4137 = vmatprep.subr.bf16.mxu0 0
      %4138 = vmatpush1.bf16.msra.mxu0 0
      %4139 = vmatprep.subr.bf16.mxu0 0
      %4140 = vmatpush1.bf16.msra.mxu0 0
      %4141 = vmatprep.mubr.bf16.mxu0 0
      %4142 = vmatmul.mubr.bf16.gmra.mrb[0].mxu0 %v3343
      %v4143 = vpop.f32.mrb[0].mxu0
      %v4144 = vpop.f32.mrb[0].mxu0
      %v4145 = vpop.f32.mrb[0].mxu0
      %v4146 = vadd.f32 0.0, %v4145
      %v4147 = vpop.f32.mrb[0].mxu0
      %4148 = vmatprep.mubr.bf16.mxu0 0
      %4149 = vmatmul.mubr.bf16.gmra.mrb[0].mxu0 %v3346
      %v4150 = vpop.f32.mrb[0].mxu0
      %v4151 = vadd.f32 0.0, %v4150
      %v4152 = vpop.f32.mrb[0].mxu0
      %v4153 = vpop.f32.mrb[0].mxu0
      %v4154 = vadd.f32 0.0, %v4153
      %v4155 = vpop.f32.mrb[0].mxu0
      %4156 = vmatprep.mubr.bf16.mxu0 0
      %4157 = vmatmul.mubr.bf16.gmra.mrb[0].mxu0 %v3349
      %v4158 = vpop.f32.mrb[0].mxu0
      %v4159 = vadd.f32 0.0, %v4158
      %v4160 = vpop.f32.mrb[0].mxu0
      %v4161 = vpop.f32.mrb[0].mxu0
      %v4162 = vadd.f32 0.0, %v4161
      %v4163 = vpop.f32.mrb[0].mxu0
      %4164 = vmatprep.mubr.bf16.mxu0 0
      %4165 = vmatmul.mubr.bf16.gmra.mrb[0].mxu0 %v3352
      %v4166 = vpop.f32.mrb[0].mxu0
      %v4167 = vadd.f32 0.0, %v4166
      %v4168 = vpop.f32.mrb[0].mxu0
      %v4169 = vpop.f32.mrb[0].mxu0
      %v4170 = vpop.f32.mrb[0].mxu0
      %4171 = vdwg.mxu0
      %v4172 = vadd.f32 %v4087, %v4146
      %v4173 = vadd.f32 %v4088, %v4151
      %v4174 = vadd.f32 %v4089, %v4154
      %v4175 = vadd.f32 %v4090, %v4159
      %v4176 = vadd.f32 %v4091, %v4162
      %v4177 = vadd.f32 %v4092, %v4167
      %s4178 = scalar_lea.vmem %s3, 168
      %v4179 = vld [vmem:[%s4178] sm:$0xf]
      %v4180 = vld [vmem:[%s4178 + $0x4] sm:$0xf]
      %v4181 = vld [vmem:[%s4178 + $0x8] sm:$0x3]
      %v4185 = vunpack.c.l.b16 %v4179
      %v4186 = vunpack.c.l.b16 %v4180
      %v4187 = vunpack.c.l.b16 %v4181
      %v4188 = vpack.c.b16 %v4186, %v4185
      %v4189 = vpack.c.b16 %v4187, %v4187
      %v4192 = vsel %vm2820, %v4189, 0
      %4194 = vmatprep.subr.bf16.mxu0 0
      %4195 = vmatpush1.bf16.msra.mxu0 %v4188
      %4196 = vmatprep.subr.bf16.mxu0 0
      %4197 = vmatpush1.bf16.msra.mxu0 %v4192
      %4198 = vmatprep.subr.bf16.mxu0 0
      %4199 = vmatpush1.bf16.msra.mxu0 0
      %4200 = vmatprep.subr.bf16.mxu0 0
      %4201 = vmatpush1.bf16.msra.mxu0 0
      %4202 = vmatprep.subr.bf16.mxu0 0
      %4203 = vmatpush1.bf16.msra.mxu0 0
      %4204 = vmatprep.subr.bf16.mxu0 0
      %4205 = vmatpush1.bf16.msra.mxu0 0
      %4206 = vmatprep.subr.bf16.mxu0 0
      %4207 = vmatpush1.bf16.msra.mxu0 0
      %4208 = vmatprep.subr.bf16.mxu0 0
      %4209 = vmatpush1.bf16.msra.mxu0 0
      %4210 = vmatprep.subr.bf16.mxu0 0
      %4211 = vmatpush1.bf16.msra.mxu0 0
      %4212 = vmatprep.subr.bf16.mxu0 0
      %4213 = vmatpush1.bf16.msra.mxu0 0
      %4214 = vmatprep.subr.bf16.mxu0 0
      %4215 = vmatpush1.bf16.msra.mxu0 0
      %4216 = vmatprep.subr.bf16.mxu0 0
      %4217 = vmatpush1.bf16.msra.mxu0 0
      %4218 = vmatprep.subr.bf16.mxu0 0
      %4219 = vmatpush1.bf16.msra.mxu0 0
      %4220 = vmatprep.subr.bf16.mxu0 0
      %4221 = vmatpush1.bf16.msra.mxu0 0
      %4222 = vmatprep.subr.bf16.mxu0 0
      %4223 = vmatpush1.bf16.msra.mxu0 0
      %4224 = vmatprep.subr.bf16.mxu0 0
      %4225 = vmatpush1.bf16.msra.mxu0 0
      %4226 = vmatprep.mubr.bf16.mxu0 0
      %4227 = vmatmul.mubr.bf16.gmra.mrb[0].mxu0 %v3234
      %v4228 = vpop.f32.mrb[0].mxu0
      %v4229 = vpop.f32.mrb[0].mxu0
      %v4230 = vpop.f32.mrb[0].mxu0
      %v4231 = vadd.f32 0.0, %v4230
      %v4232 = vpop.f32.mrb[0].mxu0
      %4233 = vmatprep.mubr.bf16.mxu0 0
      %4234 = vmatmul.mubr.bf16.gmra.mrb[0].mxu0 %v3237
      %v4235 = vpop.f32.mrb[0].mxu0
      %v4236 = vadd.f32 0.0, %v4235
      %v4237 = vpop.f32.mrb[0].mxu0
      %v4238 = vpop.f32.mrb[0].mxu0
      %v4239 = vadd.f32 0.0, %v4238
      %v4240 = vpop.f32.mrb[0].mxu0
      %4241 = vmatprep.mubr.bf16.mxu0 0
      %4242 = vmatmul.mubr.bf16.gmra.mrb[0].mxu0 %v3240
      %v4243 = vpop.f32.mrb[0].mxu0
      %v4244 = vadd.f32 0.0, %v4243
      %v4245 = vpop.f32.mrb[0].mxu0
      %v4246 = vpop.f32.mrb[0].mxu0
      %v4247 = vadd.f32 0.0, %v4246
      %v4248 = vpop.f32.mrb[0].mxu0
      %4249 = vmatprep.mubr.bf16.mxu0 0
      %4250 = vmatmul.mubr.bf16.gmra.mrb[0].mxu0 %v3243
      %v4251 = vpop.f32.mrb[0].mxu0
      %v4252 = vadd.f32 0.0, %v4251
      %v4253 = vpop.f32.mrb[0].mxu0
      %v4254 = vpop.f32.mrb[0].mxu0
      %v4255 = vpop.f32.mrb[0].mxu0
      %4256 = vdwg.mxu0
      %v4263 = vrot.slane %v4231, 1
      %v4264 = vrot.slane %v4236, 1
      %v4265 = vrot.slane %v4239, 1
      %v4266 = vrot.slane %v4244, 1
      %v4267 = vrot.slane %v4247, 1
      %v4268 = vrot.slane %v4252, 1
      %v4275 = vadd.f32 %v4172, %v4263
      %v4276 = vadd.f32 %v4173, %v4264
      %v4277 = vadd.f32 %v4174, %v4265
      %v4278 = vadd.f32 %v4175, %v4266
      %v4279 = vadd.f32 %v4176, %v4267
      %v4280 = vadd.f32 %v4177, %v4268
      %s4281 = scalar_lea.vmem %s3, 180
      %v4282 = vld [vmem:[%s4281] sm:$0xf]
      %v4283 = vld [vmem:[%s4281 + $0x4] sm:$0xf]
      %v4284 = vld [vmem:[%s4281 + $0x8] sm:$0x3]
      %v4288 = vunpack.c.l.b16 %v4282
      %v4289 = vunpack.c.l.b16 %v4283
      %v4290 = vunpack.c.l.b16 %v4284
      %v4291 = vpack.c.b16 %v4289, %v4288
      %v4292 = vpack.c.b16 %v4290, %v4290
      %v4295 = vsel %vm2820, %v4292, 0
      %4297 = vmatprep.subr.bf16.mxu0 0
      %4298 = vmatpush1.bf16.msra.mxu0 %v4291
      %4299 = vmatprep.subr.bf16.mxu0 0
      %4300 = vmatpush1.bf16.msra.mxu0 %v4295
      %4301 = vmatprep.subr.bf16.mxu0 0
      %4302 = vmatpush1.bf16.msra.mxu0 0
      %4303 = vmatprep.subr.bf16.mxu0 0
      %4304 = vmatpush1.bf16.msra.mxu0 0
      %4305 = vmatprep.subr.bf16.mxu0 0
      %4306 = vmatpush1.bf16.msra.mxu0 0
      %4307 = vmatprep.subr.bf16.mxu0 0
      %4308 = vmatpush1.bf16.msra.mxu0 0
      %4309 = vmatprep.subr.bf16.mxu0 0
      %4310 = vmatpush1.bf16.msra.mxu0 0
      %4311 = vmatprep.subr.bf16.mxu0 0
      %4312 = vmatpush1.bf16.msra.mxu0 0
      %4313 = vmatprep.subr.bf16.mxu0 0
      %4314 = vmatpush1.bf16.msra.mxu0 0
      %4315 = vmatprep.subr.bf16.mxu0 0
      %4316 = vmatpush1.bf16.msra.mxu0 0
      %4317 = vmatprep.subr.bf16.mxu0 0
      %4318 = vmatpush1.bf16.msra.mxu0 0
      %4319 = vmatprep.subr.bf16.mxu0 0
      %4320 = vmatpush1.bf16.msra.mxu0 0
      %4321 = vmatprep.subr.bf16.mxu0 0
      %4322 = vmatpush1.bf16.msra.mxu0 0
      %4323 = vmatprep.subr.bf16.mxu0 0
      %4324 = vmatpush1.bf16.msra.mxu0 0
      %4325 = vmatprep.subr.bf16.mxu0 0
      %4326 = vmatpush1.bf16.msra.mxu0 0
      %4327 = vmatprep.subr.bf16.mxu0 0
      %4328 = vmatpush1.bf16.msra.mxu0 0
      %4329 = vmatprep.mubr.bf16.mxu0 0
      %4330 = vmatmul.mubr.bf16.gmra.mrb[0].mxu0 %v3343
      %v4331 = vpop.f32.mrb[0].mxu0
      %v4332 = vpop.f32.mrb[0].mxu0
      %v4333 = vpop.f32.mrb[0].mxu0
      %v4334 = vadd.f32 0.0, %v4333
      %v4335 = vpop.f32.mrb[0].mxu0
      %4336 = vmatprep.mubr.bf16.mxu0 0
      %4337 = vmatmul.mubr.bf16.gmra.mrb[0].mxu0 %v3346
      %v4338 = vpop.f32.mrb[0].mxu0
      %v4339 = vadd.f32 0.0, %v4338
      %v4340 = vpop.f32.mrb[0].mxu0
      %v4341 = vpop.f32.mrb[0].mxu0
      %v4342 = vadd.f32 0.0, %v4341
      %v4343 = vpop.f32.mrb[0].mxu0
      %4344 = vmatprep.mubr.bf16.mxu0 0
      %4345 = vmatmul.mubr.bf16.gmra.mrb[0].mxu0 %v3349
      %v4346 = vpop.f32.mrb[0].mxu0
      %v4347 = vadd.f32 0.0, %v4346
      %v4348 = vpop.f32.mrb[0].mxu0
      %v4349 = vpop.f32.mrb[0].mxu0
      %v4350 = vadd.f32 0.0, %v4349
      %v4351 = vpop.f32.mrb[0].mxu0
      %4352 = vmatprep.mubr.bf16.mxu0 0
      %4353 = vmatmul.mubr.bf16.gmra.mrb[0].mxu0 %v3352
      %v4354 = vpop.f32.mrb[0].mxu0
      %v4355 = vadd.f32 0.0, %v4354
      %v4356 = vpop.f32.mrb[0].mxu0
      %v4357 = vpop.f32.mrb[0].mxu0
      %v4358 = vpop.f32.mrb[0].mxu0
      %4359 = vdwg.mxu0
      %v4366 = vrot.slane %v4334, 1
      %v4367 = vrot.slane %v4339, 1
      %v4368 = vrot.slane %v4342, 1
      %v4369 = vrot.slane %v4347, 1
      %v4370 = vrot.slane %v4350, 1
      %v4371 = vrot.slane %v4355, 1
      %v4378 = vadd.f32 %v4275, %v4366
      %v4379 = vadd.f32 %v4276, %v4367
      %v4380 = vadd.f32 %v4277, %v4368
      %v4381 = vadd.f32 %v4278, %v4369
      %v4382 = vadd.f32 %v4279, %v4370
      %v4383 = vadd.f32 %v4280, %v4371
      %v4384 = vld [vmem:[%s4] sm:$0x1]
      %v4386 = vlaneseq
      %v4387 = vshrl.u32 %v4386, 7
      %v4388 = vsub.s32 0, %v4387
      %v4389 = vrot.slane %v4384, %v4388
      %v4391 = vadd.f32 %v4378, %v4389
      %v4392 = vadd.f32 %v4379, %v4389
      %v4393 = vadd.f32 %v4380, %v4389
      %v4394 = vadd.f32 %v4381, %v4389
      %v4395 = vadd.f32 %v4382, %v4389
      %v4396 = vadd.f32 %v4383, %v4389
      %v4397 = vmax.f32 %v4391, 0.0
      %v4398 = vmax.f32 %v4392, 0.0
      %v4399 = vmax.f32 %v4393, 0.0
      %v4400 = vmax.f32 %v4394, 0.0
      %v4401 = vmax.f32 %v4395, 0.0
      %v4402 = vmax.f32 %v4396, 0.0
      %vm4403 = vcmask 324608
      %4404 = vst.msk [vmem:[%s224] sm:$0x3f] %vm4403, %v4397
      %4405 = vst.msk [vmem:[%s224 + $0x8] sm:$0x3f] %vm4403, %v4398
      %4406 = vst.msk [vmem:[%s224 + $0x10] sm:$0x3f] %vm4403, %v4399
      %4407 = vst.msk [vmem:[%s224 + $0x18] sm:$0x3f] %vm4403, %v4400
      %4408 = vst.msk [vmem:[%s224 + $0x20] sm:$0x3f] %vm4403, %v4401
      %4409 = vst.msk [vmem:[%s224 + $0x28] sm:$0x3f] %vm4403, %v4402
      %p4410 = scmp.lt.s32.totalorder %s16, 1
      %s4411 = scalar_select %p4410, %s16, 1
      %s4412 = smul.addr %s4411, 6
      %s4413 = smul.addr %s4412, 8
      %s4414 = scalar_lea.vmem %s5, %s4413
      // Predicated region
      $region41: #{multiclass_cnn_forward.2} parent=39 // pred_check
        %p4415 = pneg %p144
      $region42: #{multiclass_cnn_forward.2} parent=39 // pred_check_branch
        %4417 = sbr.rel (%p4415) target = $region44
      $region43: #{multiclass_cnn_forward.2} parent=39 // pred_region
        _
      $region44: #{multiclass_cnn_forward.2} parent=39 // pred_fallthru
        _
    $region40: #{multiclass_cnn_forward.2} parent=5 // pred_fallthru
      _
    %p4418 = scmp.le.s32.totalorder 2, %s11
    // Predicated region
    $region45: #{multiclass_cnn_forward.2} parent=5 // pred_check
      %p4419 = pneg %p4418
    $region46: #{multiclass_cnn_forward.2} parent=5 // pred_check_branch
      %4421 = sbr.rel (%p4419) target = $region48
    $region47: #{multiclass_cnn_forward.2} parent=5 // pred_region
      %s4422 = ssub.s32 %s11, 2
      // Predicated region
      $region49: #{multiclass_cnn_forward.2} parent=47 // pred_check
        %p4423 = pneg %p150
      $region50: #{multiclass_cnn_forward.2} parent=47 // pred_check_branch
        %4425 = sbr.rel (%p4423) target = $region52
      $region51: #{multiclass_cnn_forward.2} parent=47 // pred_region
        %p4426 = scmp.lt.s32.totalorder %s17, 1
        %s4427 = scalar_select %p4426, %s17, 1
        %s4428 = smul.addr %s4427, 6
        %s4429 = smul.addr %s4428, 8
        %s4430 = scalar_lea.vmem %s5, %s4429
      $region52: #{multiclass_cnn_forward.2} parent=47 // pred_fallthru
        _
    $region48: #{multiclass_cnn_forward.2} parent=5 // pred_fallthru
      _
  $region6: #{multiclass_cnn_forward.2} parent=0 // loop_footer
    %s15 = sadd.s32 1, %s11
  $region7: #{multiclass_cnn_forward.2} parent=0 // loop_footer_branch
    %10 = sbr.rel target = $region3
  $region8: #{multiclass_cnn_forward.2} parent=0 // loop_exit
    _

// kernel: multiclass_cnn_forward.3
$region0: #{multiclass_cnn_forward.3}
  #allocation0 [shape = 'u32[]', space=smem, size = 0x4, offset = 0x4, fixed_abs, tag = 'smem constant byte address 0x4 - core index']
  #allocation1 [shape = 'u32[144,128]{1,0:T(1,128)}', space=vmem, size = 0x12000, scoped, tag = 'internal scratch']
  %s0 = inlined_call_operand.vmem [shape: bf16[2,1440], index: 0, kind: input, shape index: {}]
  %s1 = inlined_call_operand.vmem [shape: bf16[1440,720], index: 1, kind: input, shape index: {}]
  %s2 = inlined_call_operand.vmem [shape: f32[1,720], index: 2, kind: input, shape index: {}]
  %s3 = inlined_call_operand.vmem [shape: bf16[720,360], index: 3, kind: input, shape index: {}]
  %s4 = inlined_call_operand.vmem [shape: f32[1,360], index: 4, kind: input, shape index: {}]
  %s5 = inlined_call_operand.vmem [shape: bf16[360,18], index: 5, kind: input, shape index: {}]
  %s6 = inlined_call_operand.vmem [shape: f32[1,18], index: 6, kind: input, shape index: {}]
  %s7 = inlined_call_operand.hbm [shape: f32[2,18], index: 7, kind: output, shape index: {}]
  %s8 = sld [smem:[#allocation0]]
  $region38: #{multiclass_cnn_forward.3} parent=0
    _
  %s10 = ssub.s32 1, %s8
  %s11 = scalar_select 0, %s10, %s8
  $region1: #{multiclass_cnn_forward.3} parent=0
    #allocation2 [shape = 'u8[1024]{0}', space=vmem, size = 0x400, scoped, tag = 'output window, operand 0, single buffered']
    #allocation3 [shape = 's32[1]{0}', space=sflag, size = 0x4, scoped, tag = 'scoped memory for multiclass_cnn_forward.3']
    %12 = vsyncpa [#allocation3], 0
    // Predicated region
    $region2: #{multiclass_cnn_forward.3} parent=1 // pred_check
      _
    $region3: #{multiclass_cnn_forward.3} parent=1 // pred_check_branch
      %14 = sbr.rel (0) target = $region5
    $region4: #{multiclass_cnn_forward.3} parent=1 // pred_region
      _
    $region5: #{multiclass_cnn_forward.3} parent=1 // pred_fallthru
      _
    // Predicated region
    $region6: #{multiclass_cnn_forward.3} parent=1 // pred_check
      _
    $region7: #{multiclass_cnn_forward.3} parent=1 // pred_check_branch
      %16 = sbr.rel (0) target = $region9
    $region8: #{multiclass_cnn_forward.3} parent=1 // pred_region
      _
    $region9: #{multiclass_cnn_forward.3} parent=1 // pred_fallthru
      _
    // Predicated region
    $region10: #{multiclass_cnn_forward.3} parent=1 // pred_check
      _
    $region11: #{multiclass_cnn_forward.3} parent=1 // pred_check_branch
      %18 = sbr.rel (0) target = $region13
    $region12: #{multiclass_cnn_forward.3} parent=1 // pred_region
      _
    $region13: #{multiclass_cnn_forward.3} parent=1 // pred_fallthru
      _
    // Predicated region
    $region14: #{multiclass_cnn_forward.3} parent=1 // pred_check
      _
    $region15: #{multiclass_cnn_forward.3} parent=1 // pred_check_branch
      %20 = sbr.rel (0) target = $region17
    $region16: #{multiclass_cnn_forward.3} parent=1 // pred_region
      _
    $region17: #{multiclass_cnn_forward.3} parent=1 // pred_fallthru
      _
    // Predicated region
    $region18: #{multiclass_cnn_forward.3} parent=1 // pred_check
      _
    $region19: #{multiclass_cnn_forward.3} parent=1 // pred_check_branch
      %22 = sbr.rel (0) target = $region21
    $region20: #{multiclass_cnn_forward.3} parent=1 // pred_region
      _
    $region21: #{multiclass_cnn_forward.3} parent=1 // pred_fallthru
      _
    // Predicated region
    $region22: #{multiclass_cnn_forward.3} parent=1 // pred_check
      _
    $region23: #{multiclass_cnn_forward.3} parent=1 // pred_check_branch
      %24 = sbr.rel (0) target = $region25
    $region24: #{multiclass_cnn_forward.3} parent=1 // pred_region
      _
    $region25: #{multiclass_cnn_forward.3} parent=1 // pred_fallthru
      _
    // Predicated region
    $region26: #{multiclass_cnn_forward.3} parent=1 // pred_check
      _
    $region27: #{multiclass_cnn_forward.3} parent=1 // pred_check_branch
      %26 = sbr.rel (0) target = $region29
    $region28: #{multiclass_cnn_forward.3} parent=1 // pred_region
      _
    $region29: #{multiclass_cnn_forward.3} parent=1 // pred_fallthru
      _
    %v28 = vld [vmem:[%s0] sm:$0xff]
    %v29 = vld [vmem:[%s0 + $0x8] sm:$0xf]
    %v30 = vld [vmem:[%s1] sm:$0xff]
    %v31 = vld [vmem:[%s1 + $0x8] sm:$0xff]
    %v32 = vld [vmem:[%s1 + $0x10] sm:$0xff]
    %v33 = vld [vmem:[%s1 + $0x18] sm:$0xff]
    %v34 = vld [vmem:[%s1 + $0x20] sm:$0xff]
    %v35 = vld [vmem:[%s1 + $0x28] sm:$0xff]
    %v36 = vld [vmem:[%s1 + $0x30] sm:$0xff]
    %v37 = vld [vmem:[%s1 + $0x38] sm:$0xff]
    %v38 = vld [vmem:[%s1 + $0x40] sm:$0xff]
    %v39 = vld [vmem:[%s1 + $0x48] sm:$0xff]
    %v40 = vld [vmem:[%s1 + $0x50] sm:$0xff]
    %v41 = vld [vmem:[%s1 + $0x58] sm:$0xff]
    %v42 = vld [vmem:[%s1 + $0x60] sm:$0xff]
    %v43 = vld [vmem:[%s1 + $0x68] sm:$0xff]
    %v44 = vld [vmem:[%s1 + $0x70] sm:$0xff]
    %v45 = vld [vmem:[%s1 + $0x78] sm:$0xff]
    %v46 = vld [vmem:[%s1 + $0x80] sm:$0xff]
    %v47 = vld [vmem:[%s1 + $0x88] sm:$0xff]
    %v48 = vld [vmem:[%s1 + $0x90] sm:$0xff]
    %v49 = vld [vmem:[%s1 + $0x98] sm:$0xff]
    %v50 = vld [vmem:[%s1 + $0xa0] sm:$0xff]
    %v51 = vld [vmem:[%s1 + $0xa8] sm:$0xff]
    %v52 = vld [vmem:[%s1 + $0xb0] sm:$0xff]
    %v53 = vld [vmem:[%s1 + $0xb8] sm:$0xff]
    %v54 = vld [vmem:[%s1 + $0xc0] sm:$0xff]
    %v55 = vld [vmem:[%s1 + $0xc8] sm:$0xff]
    %v56 = vld [vmem:[%s1 + $0xd0] sm:$0xff]
    %v57 = vld [vmem:[%s1 + $0xd8] sm:$0xff]
    %v58 = vld [vmem:[%s1 + $0xe0] sm:$0xff]
    %v59 = vld [vmem:[%s1 + $0xe8] sm:$0xff]
    %v60 = vld [vmem:[%s1 + $0xf0] sm:$0xff]
    %v61 = vld [vmem:[%s1 + $0xf8] sm:$0xff]
    %v62 = vld [vmem:[%s1 + $0x100] sm:$0xff]
    %v63 = vld [vmem:[%s1 + $0x108] sm:$0xff]
    %v64 = vld [vmem:[%s1 + $0x110] sm:$0xff]
    %v65 = vld [vmem:[%s1 + $0x118] sm:$0xff]
    %v66 = vld [vmem:[%s1 + $0x120] sm:$0xff]
    %v67 = vld [vmem:[%s1 + $0x128] sm:$0xff]
    %v68 = vld [vmem:[%s1 + $0x130] sm:$0xff]
    %v69 = vld [vmem:[%s1 + $0x138] sm:$0xff]
    %v70 = vld [vmem:[%s1 + $0x140] sm:$0xff]
    %v71 = vld [vmem:[%s1 + $0x148] sm:$0xff]
    %v72 = vld [vmem:[%s1 + $0x150] sm:$0xff]
    %v73 = vld [vmem:[%s1 + $0x158] sm:$0xff]
    %v74 = vld [vmem:[%s1 + $0x160] sm:$0xff]
    %v75 = vld [vmem:[%s1 + $0x168] sm:$0xff]
    %v76 = vld [vmem:[%s1 + $0x170] sm:$0xff]
    %v77 = vld [vmem:[%s1 + $0x178] sm:$0xff]
    %v78 = vld [vmem:[%s1 + $0x180] sm:$0xff]
    %v79 = vld [vmem:[%s1 + $0x188] sm:$0xff]
    %v80 = vld [vmem:[%s1 + $0x190] sm:$0xff]
    %v81 = vld [vmem:[%s1 + $0x198] sm:$0xff]
    %v82 = vld [vmem:[%s1 + $0x1a0] sm:$0xff]
    %v83 = vld [vmem:[%s1 + $0x1a8] sm:$0xff]
    %v84 = vld [vmem:[%s1 + $0x1b0] sm:$0xff]
    %v85 = vld [vmem:[%s1 + $0x1b8] sm:$0xff]
    %v86 = vld [vmem:[%s1 + $0x1c0] sm:$0xff]
    %v87 = vld [vmem:[%s1 + $0x1c8] sm:$0xff]
    %v88 = vld [vmem:[%s1 + $0x1d0] sm:$0xff]
    %v89 = vld [vmem:[%s1 + $0x1d8] sm:$0xff]
    %v90 = vld [vmem:[%s1 + $0x1e0] sm:$0xff]
    %v91 = vld [vmem:[%s1 + $0x1e8] sm:$0xff]
    %v92 = vld [vmem:[%s1 + $0x1f0] sm:$0xff]
    %v93 = vld [vmem:[%s1 + $0x1f8] sm:$0xff]
    %v94 = vld [vmem:[%s1 + $0x200] sm:$0xff]
    %v95 = vld [vmem:[%s1 + $0x208] sm:$0xff]
    %v96 = vld [vmem:[%s1 + $0x210] sm:$0xff]
    %v97 = vld [vmem:[%s1 + $0x218] sm:$0xff]
    %v98 = vld [vmem:[%s1 + $0x220] sm:$0xff]
    %v99 = vld [vmem:[%s1 + $0x228] sm:$0xff]
    %v100 = vld [vmem:[%s1 + $0x230] sm:$0xff]
    %v101 = vld [vmem:[%s1 + $0x238] sm:$0xff]
    %v102 = vld [vmem:[%s1 + $0x240] sm:$0xff]
    %v103 = vld [vmem:[%s1 + $0x248] sm:$0xff]
    %v104 = vld [vmem:[%s1 + $0x250] sm:$0xff]
    %v105 = vld [vmem:[%s1 + $0x258] sm:$0xff]
    %v106 = vld [vmem:[%s1 + $0x260] sm:$0xff]
    %v107 = vld [vmem:[%s1 + $0x268] sm:$0xff]
    %v108 = vld [vmem:[%s1 + $0x270] sm:$0xff]
    %v109 = vld [vmem:[%s1 + $0x278] sm:$0xff]
    %v110 = vld [vmem:[%s1 + $0x280] sm:$0xff]
    %v111 = vld [vmem:[%s1 + $0x288] sm:$0xff]
    %v112 = vld [vmem:[%s1 + $0x290] sm:$0xff]
    %v113 = vld [vmem:[%s1 + $0x298] sm:$0xff]
    %v114 = vld [vmem:[%s1 + $0x2a0] sm:$0xff]
    %v115 = vld [vmem:[%s1 + $0x2a8] sm:$0xff]
    %v116 = vld [vmem:[%s1 + $0x2b0] sm:$0xff]
    %v117 = vld [vmem:[%s1 + $0x2b8] sm:$0xff]
    %v118 = vld [vmem:[%s1 + $0x2c0] sm:$0xff]
    %v119 = vld [vmem:[%s1 + $0x2c8] sm:$0xff]
    %v120 = vld [vmem:[%s1 + $0x2d0] sm:$0xff]
    %v121 = vld [vmem:[%s1 + $0x2d8] sm:$0xff]
    %v122 = vld [vmem:[%s1 + $0x2e0] sm:$0xff]
    %v123 = vld [vmem:[%s1 + $0x2e8] sm:$0xff]
    %v124 = vld [vmem:[%s1 + $0x2f0] sm:$0xff]
    %v125 = vld [vmem:[%s1 + $0x2f8] sm:$0xff]
    %v126 = vld [vmem:[%s1 + $0x300] sm:$0xff]
    %v127 = vld [vmem:[%s1 + $0x308] sm:$0xff]
    %v128 = vld [vmem:[%s1 + $0x310] sm:$0xff]
    %v129 = vld [vmem:[%s1 + $0x318] sm:$0xff]
    %v130 = vld [vmem:[%s1 + $0x320] sm:$0xff]
    %v131 = vld [vmem:[%s1 + $0x328] sm:$0xff]
    %v132 = vld [vmem:[%s1 + $0x330] sm:$0xff]
    %v133 = vld [vmem:[%s1 + $0x338] sm:$0xff]
    %v134 = vld [vmem:[%s1 + $0x340] sm:$0xff]
    %v135 = vld [vmem:[%s1 + $0x348] sm:$0xff]
    %v136 = vld [vmem:[%s1 + $0x350] sm:$0xff]
    %v137 = vld [vmem:[%s1 + $0x358] sm:$0xff]
    %v138 = vld [vmem:[%s1 + $0x360] sm:$0xff]
    %v139 = vld [vmem:[%s1 + $0x368] sm:$0xff]
    %v140 = vld [vmem:[%s1 + $0x370] sm:$0xff]
    %v141 = vld [vmem:[%s1 + $0x378] sm:$0xff]
    %v142 = vld [vmem:[%s1 + $0x380] sm:$0xff]
    %v143 = vld [vmem:[%s1 + $0x388] sm:$0xff]
    %v144 = vld [vmem:[%s1 + $0x390] sm:$0xff]
    %v145 = vld [vmem:[%s1 + $0x398] sm:$0xff]
    %v146 = vld [vmem:[%s1 + $0x3a0] sm:$0xff]
    %v147 = vld [vmem:[%s1 + $0x3a8] sm:$0xff]
    %v148 = vld [vmem:[%s1 + $0x3b0] sm:$0xff]
    %v149 = vld [vmem:[%s1 + $0x3b8] sm:$0xff]
    %v150 = vld [vmem:[%s1 + $0x3c0] sm:$0xff]
    %v151 = vld [vmem:[%s1 + $0x3c8] sm:$0xff]
    %v152 = vld [vmem:[%s1 + $0x3d0] sm:$0xff]
    %v153 = vld [vmem:[%s1 + $0x3d8] sm:$0xff]
    %v154 = vld [vmem:[%s1 + $0x3e0] sm:$0xff]
    %v155 = vld [vmem:[%s1 + $0x3e8] sm:$0xff]
    %v156 = vld [vmem:[%s1 + $0x3f0] sm:$0xff]
    %v157 = vld [vmem:[%s1 + $0x3f8] sm:$0xff]
    %v158 = vld [vmem:[%s1 + $0x400] sm:$0xff]
    %v159 = vld [vmem:[%s1 + $0x408] sm:$0xff]
    %v160 = vld [vmem:[%s1 + $0x410] sm:$0xff]
    %v161 = vld [vmem:[%s1 + $0x418] sm:$0xff]
    %v162 = vld [vmem:[%s1 + $0x420] sm:$0xff]
    %v163 = vld [vmem:[%s1 + $0x428] sm:$0xff]
    %v164 = vld [vmem:[%s1 + $0x430] sm:$0xff]
    %v165 = vld [vmem:[%s1 + $0x438] sm:$0xff]
    %v166 = vld [vmem:[%s1 + $0x440] sm:$0xff]
    %v167 = vld [vmem:[%s1 + $0x448] sm:$0xff]
    %v168 = vld [vmem:[%s1 + $0x450] sm:$0xff]
    %v169 = vld [vmem:[%s1 + $0x458] sm:$0xff]
    %v170 = vld [vmem:[%s1 + $0x460] sm:$0xff]
    %v171 = vld [vmem:[%s1 + $0x468] sm:$0xff]
    %v172 = vld [vmem:[%s1 + $0x470] sm:$0xff]
    %v173 = vld [vmem:[%s1 + $0x478] sm:$0xff]
    %v174 = vld [vmem:[%s1 + $0x480] sm:$0xff]
    %v175 = vld [vmem:[%s1 + $0x488] sm:$0xff]
    %v176 = vld [vmem:[%s1 + $0x490] sm:$0xff]
    %v177 = vld [vmem:[%s1 + $0x498] sm:$0xff]
    %v178 = vld [vmem:[%s1 + $0x4a0] sm:$0xff]
    %v179 = vld [vmem:[%s1 + $0x4a8] sm:$0xff]
    %v180 = vld [vmem:[%s1 + $0x4b0] sm:$0xff]
    %v181 = vld [vmem:[%s1 + $0x4b8] sm:$0xff]
    %v182 = vld [vmem:[%s1 + $0x4c0] sm:$0xff]
    %v183 = vld [vmem:[%s1 + $0x4c8] sm:$0xff]
    %v184 = vld [vmem:[%s1 + $0x4d0] sm:$0xff]
    %v185 = vld [vmem:[%s1 + $0x4d8] sm:$0xff]
    %v186 = vld [vmem:[%s1 + $0x4e0] sm:$0xff]
    %v187 = vld [vmem:[%s1 + $0x4e8] sm:$0xff]
    %v188 = vld [vmem:[%s1 + $0x4f0] sm:$0xff]
    %v189 = vld [vmem:[%s1 + $0x4f8] sm:$0xff]
    %v190 = vld [vmem:[%s1 + $0x500] sm:$0xff]
    %v191 = vld [vmem:[%s1 + $0x508] sm:$0xff]
    %v192 = vld [vmem:[%s1 + $0x510] sm:$0xff]
    %v193 = vld [vmem:[%s1 + $0x518] sm:$0xff]
    %v194 = vld [vmem:[%s1 + $0x520] sm:$0xff]
    %v195 = vld [vmem:[%s1 + $0x528] sm:$0xff]
    %v196 = vld [vmem:[%s1 + $0x530] sm:$0xff]
    %v197 = vld [vmem:[%s1 + $0x538] sm:$0xff]
    %v198 = vld [vmem:[%s1 + $0x540] sm:$0xff]
    %v199 = vld [vmem:[%s1 + $0x548] sm:$0xff]
    %v200 = vld [vmem:[%s1 + $0x550] sm:$0xff]
    %v201 = vld [vmem:[%s1 + $0x558] sm:$0xff]
    %v202 = vld [vmem:[%s1 + $0x560] sm:$0xff]
    %v203 = vld [vmem:[%s1 + $0x568] sm:$0xff]
    %v204 = vld [vmem:[%s1 + $0x570] sm:$0xff]
    %v205 = vld [vmem:[%s1 + $0x578] sm:$0xff]
    %v206 = vld [vmem:[%s1 + $0x580] sm:$0xff]
    %v207 = vld [vmem:[%s1 + $0x588] sm:$0xff]
    %v208 = vld [vmem:[%s1 + $0x590] sm:$0xff]
    %v209 = vld [vmem:[%s1 + $0x598] sm:$0xff]
    %v210 = vld [vmem:[%s1 + $0x5a0] sm:$0xff]
    %v211 = vld [vmem:[%s1 + $0x5a8] sm:$0xff]
    %v212 = vld [vmem:[%s1 + $0x5b0] sm:$0xff]
    %v213 = vld [vmem:[%s1 + $0x5b8] sm:$0xff]
    %v214 = vld [vmem:[%s1 + $0x5c0] sm:$0xff]
    %v215 = vld [vmem:[%s1 + $0x5c8] sm:$0xff]
    %v216 = vld [vmem:[%s1 + $0x5d0] sm:$0xff]
    %v217 = vld [vmem:[%s1 + $0x5d8] sm:$0xff]
    %v218 = vld [vmem:[%s1 + $0x5e0] sm:$0xff]
    %v219 = vld [vmem:[%s1 + $0x5e8] sm:$0xff]
    %v220 = vld [vmem:[%s1 + $0x5f0] sm:$0xff]
    %v221 = vld [vmem:[%s1 + $0x5f8] sm:$0xff]
    %v222 = vld [vmem:[%s1 + $0x600] sm:$0xff]
    %v223 = vld [vmem:[%s1 + $0x608] sm:$0xff]
    %v224 = vld [vmem:[%s1 + $0x610] sm:$0xff]
    %v225 = vld [vmem:[%s1 + $0x618] sm:$0xff]
    %v226 = vld [vmem:[%s1 + $0x620] sm:$0xff]
    %v227 = vld [vmem:[%s1 + $0x628] sm:$0xff]
    %v228 = vld [vmem:[%s1 + $0x630] sm:$0xff]
    %v229 = vld [vmem:[%s1 + $0x638] sm:$0xff]
    %v230 = vld [vmem:[%s1 + $0x640] sm:$0xff]
    %v231 = vld [vmem:[%s1 + $0x648] sm:$0xff]
    %v232 = vld [vmem:[%s1 + $0x650] sm:$0xff]
    %v233 = vld [vmem:[%s1 + $0x658] sm:$0xff]
    %v234 = vld [vmem:[%s1 + $0x660] sm:$0xff]
    %v235 = vld [vmem:[%s1 + $0x668] sm:$0xff]
    %v236 = vld [vmem:[%s1 + $0x670] sm:$0xff]
    %v237 = vld [vmem:[%s1 + $0x678] sm:$0xff]
    %v238 = vld [vmem:[%s1 + $0x680] sm:$0xff]
    %v239 = vld [vmem:[%s1 + $0x688] sm:$0xff]
    %v240 = vld [vmem:[%s1 + $0x690] sm:$0xff]
    %v241 = vld [vmem:[%s1 + $0x698] sm:$0xff]
    %v242 = vld [vmem:[%s1 + $0x6a0] sm:$0xff]
    %v243 = vld [vmem:[%s1 + $0x6a8] sm:$0xff]
    %v244 = vld [vmem:[%s1 + $0x6b0] sm:$0xff]
    %v245 = vld [vmem:[%s1 + $0x6b8] sm:$0xff]
    %v246 = vld [vmem:[%s1 + $0x6c0] sm:$0xff]
    %v247 = vld [vmem:[%s1 + $0x6c8] sm:$0xff]
    %v248 = vld [vmem:[%s1 + $0x6d0] sm:$0xff]
    %v249 = vld [vmem:[%s1 + $0x6d8] sm:$0xff]
    %v250 = vld [vmem:[%s1 + $0x6e0] sm:$0xff]
    %v251 = vld [vmem:[%s1 + $0x6e8] sm:$0xff]
    %v252 = vld [vmem:[%s1 + $0x6f0] sm:$0xff]
    %v253 = vld [vmem:[%s1 + $0x6f8] sm:$0xff]
    %v254 = vld [vmem:[%s1 + $0x700] sm:$0xff]
    %v255 = vld [vmem:[%s1 + $0x708] sm:$0xff]
    %v256 = vld [vmem:[%s1 + $0x710] sm:$0xff]
    %v257 = vld [vmem:[%s1 + $0x718] sm:$0xff]
    %v258 = vld [vmem:[%s1 + $0x720] sm:$0xff]
    %v259 = vld [vmem:[%s1 + $0x728] sm:$0xff]
    %v260 = vld [vmem:[%s1 + $0x730] sm:$0xff]
    %v261 = vld [vmem:[%s1 + $0x738] sm:$0xff]
    %v262 = vld [vmem:[%s1 + $0x740] sm:$0xff]
    %v263 = vld [vmem:[%s1 + $0x748] sm:$0xff]
    %v264 = vld [vmem:[%s1 + $0x750] sm:$0xff]
    %v265 = vld [vmem:[%s1 + $0x758] sm:$0xff]
    %v266 = vld [vmem:[%s1 + $0x760] sm:$0xff]
    %v267 = vld [vmem:[%s1 + $0x768] sm:$0xff]
    %v268 = vld [vmem:[%s1 + $0x770] sm:$0xff]
    %v269 = vld [vmem:[%s1 + $0x778] sm:$0xff]
    %v270 = vld [vmem:[%s1 + $0x780] sm:$0xff]
    %v271 = vld [vmem:[%s1 + $0x788] sm:$0xff]
    %v272 = vld [vmem:[%s1 + $0x790] sm:$0xff]
    %v273 = vld [vmem:[%s1 + $0x798] sm:$0xff]
    %v274 = vld [vmem:[%s1 + $0x7a0] sm:$0xff]
    %v275 = vld [vmem:[%s1 + $0x7a8] sm:$0xff]
    %v276 = vld [vmem:[%s1 + $0x7b0] sm:$0xff]
    %v277 = vld [vmem:[%s1 + $0x7b8] sm:$0xff]
    %v278 = vld [vmem:[%s1 + $0x7c0] sm:$0xff]
    %v279 = vld [vmem:[%s1 + $0x7c8] sm:$0xff]
    %v280 = vld [vmem:[%s1 + $0x7d0] sm:$0xff]
    %v281 = vld [vmem:[%s1 + $0x7d8] sm:$0xff]
    %v282 = vld [vmem:[%s1 + $0x7e0] sm:$0xff]
    %v283 = vld [vmem:[%s1 + $0x7e8] sm:$0xff]
    %v284 = vld [vmem:[%s1 + $0x7f0] sm:$0xff]
    %v285 = vld [vmem:[%s1 + $0x7f8] sm:$0xff]
    %v286 = vld [vmem:[%s1 + $0x800] sm:$0xff]
    %v287 = vld [vmem:[%s1 + $0x808] sm:$0xff]
    %v288 = vld [vmem:[%s1 + $0x810] sm:$0xff]
    %v289 = vld [vmem:[%s1 + $0x818] sm:$0xff]
    %v290 = vld [vmem:[%s1 + $0x820] sm:$0xff]
    %v291 = vld [vmem:[%s1 + $0x828] sm:$0xff]
    %v292 = vld [vmem:[%s1 + $0x830] sm:$0xff]
    %v293 = vld [vmem:[%s1 + $0x838] sm:$0xff]
    %v294 = vld [vmem:[%s1 + $0x840] sm:$0xff]
    %v295 = vld [vmem:[%s1 + $0x848] sm:$0xff]
    %v296 = vld [vmem:[%s1 + $0x850] sm:$0xff]
    %v297 = vld [vmem:[%s1 + $0x858] sm:$0xff]
    %v298 = vld [vmem:[%s1 + $0x860] sm:$0xff]
    %v299 = vld [vmem:[%s1 + $0x868] sm:$0xff]
    %v300 = vld [vmem:[%s1 + $0x870] sm:$0xff]
    %v301 = vld [vmem:[%s1 + $0x878] sm:$0xff]
    %v302 = vld [vmem:[%s1 + $0x880] sm:$0xff]
    %v303 = vld [vmem:[%s1 + $0x888] sm:$0xff]
    %v304 = vld [vmem:[%s1 + $0x890] sm:$0xff]
    %v305 = vld [vmem:[%s1 + $0x898] sm:$0xff]
    %v306 = vld [vmem:[%s1 + $0x8a0] sm:$0xff]
    %v307 = vld [vmem:[%s1 + $0x8a8] sm:$0xff]
    %v308 = vld [vmem:[%s1 + $0x8b0] sm:$0xff]
    %v309 = vld [vmem:[%s1 + $0x8b8] sm:$0xff]
    %v310 = vld [vmem:[%s1 + $0x8c0] sm:$0xff]
    %v311 = vld [vmem:[%s1 + $0x8c8] sm:$0xff]
    %v312 = vld [vmem:[%s1 + $0x8d0] sm:$0xff]
    %v313 = vld [vmem:[%s1 + $0x8d8] sm:$0xff]
    %v314 = vld [vmem:[%s1 + $0x8e0] sm:$0xff]
    %v315 = vld [vmem:[%s1 + $0x8e8] sm:$0xff]
    %v316 = vld [vmem:[%s1 + $0x8f0] sm:$0xff]
    %v317 = vld [vmem:[%s1 + $0x8f8] sm:$0xff]
    %v318 = vld [vmem:[%s1 + $0x900] sm:$0xff]
    %v319 = vld [vmem:[%s1 + $0x908] sm:$0xff]
    %v320 = vld [vmem:[%s1 + $0x910] sm:$0xff]
    %v321 = vld [vmem:[%s1 + $0x918] sm:$0xff]
    %v322 = vld [vmem:[%s1 + $0x920] sm:$0xff]
    %v323 = vld [vmem:[%s1 + $0x928] sm:$0xff]
    %v324 = vld [vmem:[%s1 + $0x930] sm:$0xff]
    %v325 = vld [vmem:[%s1 + $0x938] sm:$0xff]
    %v326 = vld [vmem:[%s1 + $0x940] sm:$0xff]
    %v327 = vld [vmem:[%s1 + $0x948] sm:$0xff]
    %v328 = vld [vmem:[%s1 + $0x950] sm:$0xff]
    %v329 = vld [vmem:[%s1 + $0x958] sm:$0xff]
    %v330 = vld [vmem:[%s1 + $0x960] sm:$0xff]
    %v331 = vld [vmem:[%s1 + $0x968] sm:$0xff]
    %v332 = vld [vmem:[%s1 + $0x970] sm:$0xff]
    %v333 = vld [vmem:[%s1 + $0x978] sm:$0xff]
    %v334 = vld [vmem:[%s1 + $0x980] sm:$0xff]
    %v335 = vld [vmem:[%s1 + $0x988] sm:$0xff]
    %v336 = vld [vmem:[%s1 + $0x990] sm:$0xff]
    %v337 = vld [vmem:[%s1 + $0x998] sm:$0xff]
    %v338 = vld [vmem:[%s1 + $0x9a0] sm:$0xff]
    %v339 = vld [vmem:[%s1 + $0x9a8] sm:$0xff]
    %v340 = vld [vmem:[%s1 + $0x9b0] sm:$0xff]
    %v341 = vld [vmem:[%s1 + $0x9b8] sm:$0xff]
    %v342 = vld [vmem:[%s1 + $0x9c0] sm:$0xff]
    %v343 = vld [vmem:[%s1 + $0x9c8] sm:$0xff]
    %v344 = vld [vmem:[%s1 + $0x9d0] sm:$0xff]
    %v345 = vld [vmem:[%s1 + $0x9d8] sm:$0xff]
    %v346 = vld [vmem:[%s1 + $0x9e0] sm:$0xff]
    %v347 = vld [vmem:[%s1 + $0x9e8] sm:$0xff]
    %v348 = vld [vmem:[%s1 + $0x9f0] sm:$0xff]
    %v349 = vld [vmem:[%s1 + $0x9f8] sm:$0xff]
    %v350 = vld [vmem:[%s1 + $0xa00] sm:$0xff]
    %v351 = vld [vmem:[%s1 + $0xa08] sm:$0xff]
    %v352 = vld [vmem:[%s1 + $0xa10] sm:$0xff]
    %v353 = vld [vmem:[%s1 + $0xa18] sm:$0xff]
    %v354 = vld [vmem:[%s1 + $0xa20] sm:$0xff]
    %v355 = vld [vmem:[%s1 + $0xa28] sm:$0xff]
    %v356 = vld [vmem:[%s1 + $0xa30] sm:$0xff]
    %v357 = vld [vmem:[%s1 + $0xa38] sm:$0xff]
    %v358 = vld [vmem:[%s1 + $0xa40] sm:$0xff]
    %v359 = vld [vmem:[%s1 + $0xa48] sm:$0xff]
    %v360 = vld [vmem:[%s1 + $0xa50] sm:$0xff]
    %v361 = vld [vmem:[%s1 + $0xa58] sm:$0xff]
    %v362 = vld [vmem:[%s1 + $0xa60] sm:$0xff]
    %v363 = vld [vmem:[%s1 + $0xa68] sm:$0xff]
    %v364 = vld [vmem:[%s1 + $0xa70] sm:$0xff]
    %v365 = vld [vmem:[%s1 + $0xa78] sm:$0xff]
    %v366 = vld [vmem:[%s1 + $0xa80] sm:$0xff]
    %v367 = vld [vmem:[%s1 + $0xa88] sm:$0xff]
    %v368 = vld [vmem:[%s1 + $0xa90] sm:$0xff]
    %v369 = vld [vmem:[%s1 + $0xa98] sm:$0xff]
    %v370 = vld [vmem:[%s1 + $0xaa0] sm:$0xff]
    %v371 = vld [vmem:[%s1 + $0xaa8] sm:$0xff]
    %v372 = vld [vmem:[%s1 + $0xab0] sm:$0xff]
    %v373 = vld [vmem:[%s1 + $0xab8] sm:$0xff]
    %v374 = vld [vmem:[%s1 + $0xac0] sm:$0xff]
    %v375 = vld [vmem:[%s1 + $0xac8] sm:$0xff]
    %v376 = vld [vmem:[%s1 + $0xad0] sm:$0xff]
    %v377 = vld [vmem:[%s1 + $0xad8] sm:$0xff]
    %v378 = vld [vmem:[%s1 + $0xae0] sm:$0xff]
    %v379 = vld [vmem:[%s1 + $0xae8] sm:$0xff]
    %v380 = vld [vmem:[%s1 + $0xaf0] sm:$0xff]
    %v381 = vld [vmem:[%s1 + $0xaf8] sm:$0xff]
    %v382 = vld [vmem:[%s1 + $0xb00] sm:$0xff]
    %v383 = vld [vmem:[%s1 + $0xb08] sm:$0xff]
    %v384 = vld [vmem:[%s1 + $0xb10] sm:$0xff]
    %v385 = vld [vmem:[%s1 + $0xb18] sm:$0xff]
    %v386 = vld [vmem:[%s1 + $0xb20] sm:$0xff]
    %v387 = vld [vmem:[%s1 + $0xb28] sm:$0xff]
    %v388 = vld [vmem:[%s1 + $0xb30] sm:$0xff]
    %v389 = vld [vmem:[%s1 + $0xb38] sm:$0xff]
    %v390 = vld [vmem:[%s1 + $0xb40] sm:$0xff]
    %v391 = vld [vmem:[%s1 + $0xb48] sm:$0xff]
    %v392 = vld [vmem:[%s1 + $0xb50] sm:$0xff]
    %v393 = vld [vmem:[%s1 + $0xb58] sm:$0xff]
    %v394 = vld [vmem:[%s1 + $0xb60] sm:$0xff]
    %v395 = vld [vmem:[%s1 + $0xb68] sm:$0xff]
    %v396 = vld [vmem:[%s1 + $0xb70] sm:$0xff]
    %v397 = vld [vmem:[%s1 + $0xb78] sm:$0xff]
    %v398 = vld [vmem:[%s1 + $0xb80] sm:$0xff]
    %v399 = vld [vmem:[%s1 + $0xb88] sm:$0xff]
    %v400 = vld [vmem:[%s1 + $0xb90] sm:$0xff]
    %v401 = vld [vmem:[%s1 + $0xb98] sm:$0xff]
    %v402 = vld [vmem:[%s1 + $0xba0] sm:$0xff]
    %v403 = vld [vmem:[%s1 + $0xba8] sm:$0xff]
    %v404 = vld [vmem:[%s1 + $0xbb0] sm:$0xff]
    %v405 = vld [vmem:[%s1 + $0xbb8] sm:$0xff]
    %v406 = vld [vmem:[%s1 + $0xbc0] sm:$0xff]
    %v407 = vld [vmem:[%s1 + $0xbc8] sm:$0xff]
    %v408 = vld [vmem:[%s1 + $0xbd0] sm:$0xff]
    %v409 = vld [vmem:[%s1 + $0xbd8] sm:$0xff]
    %v410 = vld [vmem:[%s1 + $0xbe0] sm:$0xff]
    %v411 = vld [vmem:[%s1 + $0xbe8] sm:$0xff]
    %v412 = vld [vmem:[%s1 + $0xbf0] sm:$0xff]
    %v413 = vld [vmem:[%s1 + $0xbf8] sm:$0xff]
    %v414 = vld [vmem:[%s1 + $0xc00] sm:$0xff]
    %v415 = vld [vmem:[%s1 + $0xc08] sm:$0xff]
    %v416 = vld [vmem:[%s1 + $0xc10] sm:$0xff]
    %v417 = vld [vmem:[%s1 + $0xc18] sm:$0xff]
    %v418 = vld [vmem:[%s1 + $0xc20] sm:$0xff]
    %v419 = vld [vmem:[%s1 + $0xc28] sm:$0xff]
    %v420 = vld [vmem:[%s1 + $0xc30] sm:$0xff]
    %v421 = vld [vmem:[%s1 + $0xc38] sm:$0xff]
    %v422 = vld [vmem:[%s1 + $0xc40] sm:$0xff]
    %v423 = vld [vmem:[%s1 + $0xc48] sm:$0xff]
    %v424 = vld [vmem:[%s1 + $0xc50] sm:$0xff]
    %v425 = vld [vmem:[%s1 + $0xc58] sm:$0xff]
    %v426 = vld [vmem:[%s1 + $0xc60] sm:$0xff]
    %v427 = vld [vmem:[%s1 + $0xc68] sm:$0xff]
    %v428 = vld [vmem:[%s1 + $0xc70] sm:$0xff]
    %v429 = vld [vmem:[%s1 + $0xc78] sm:$0xff]
    %v430 = vld [vmem:[%s1 + $0xc80] sm:$0xff]
    %v431 = vld [vmem:[%s1 + $0xc88] sm:$0xff]
    %v432 = vld [vmem:[%s1 + $0xc90] sm:$0xff]
    %v433 = vld [vmem:[%s1 + $0xc98] sm:$0xff]
    %v434 = vld [vmem:[%s1 + $0xca0] sm:$0xff]
    %v435 = vld [vmem:[%s1 + $0xca8] sm:$0xff]
    %v436 = vld [vmem:[%s1 + $0xcb0] sm:$0xff]
    %v437 = vld [vmem:[%s1 + $0xcb8] sm:$0xff]
    %v438 = vld [vmem:[%s1 + $0xcc0] sm:$0xff]
    %v439 = vld [vmem:[%s1 + $0xcc8] sm:$0xff]
    %v440 = vld [vmem:[%s1 + $0xcd0] sm:$0xff]
    %v441 = vld [vmem:[%s1 + $0xcd8] sm:$0xff]
    %v442 = vld [vmem:[%s1 + $0xce0] sm:$0xff]
    %v443 = vld [vmem:[%s1 + $0xce8] sm:$0xff]
    %v444 = vld [vmem:[%s1 + $0xcf0] sm:$0xff]
    %v445 = vld [vmem:[%s1 + $0xcf8] sm:$0xff]
    %v446 = vld [vmem:[%s1 + $0xd00] sm:$0xff]
    %v447 = vld [vmem:[%s1 + $0xd08] sm:$0xff]
    %v448 = vld [vmem:[%s1 + $0xd10] sm:$0xff]
    %v449 = vld [vmem:[%s1 + $0xd18] sm:$0xff]
    %v450 = vld [vmem:[%s1 + $0xd20] sm:$0xff]
    %v451 = vld [vmem:[%s1 + $0xd28] sm:$0xff]
    %v452 = vld [vmem:[%s1 + $0xd30] sm:$0xff]
    %v453 = vld [vmem:[%s1 + $0xd38] sm:$0xff]
    %v454 = vld [vmem:[%s1 + $0xd40] sm:$0xff]
    %v455 = vld [vmem:[%s1 + $0xd48] sm:$0xff]
    %v456 = vld [vmem:[%s1 + $0xd50] sm:$0xff]
    %v457 = vld [vmem:[%s1 + $0xd58] sm:$0xff]
    %v458 = vld [vmem:[%s1 + $0xd60] sm:$0xff]
    %v459 = vld [vmem:[%s1 + $0xd68] sm:$0xff]
    %v460 = vld [vmem:[%s1 + $0xd70] sm:$0xff]
    %v461 = vld [vmem:[%s1 + $0xd78] sm:$0xff]
    %v462 = vld [vmem:[%s1 + $0xd80] sm:$0xff]
    %v463 = vld [vmem:[%s1 + $0xd88] sm:$0xff]
    %v464 = vld [vmem:[%s1 + $0xd90] sm:$0xff]
    %v465 = vld [vmem:[%s1 + $0xd98] sm:$0xff]
    %v466 = vld [vmem:[%s1 + $0xda0] sm:$0xff]
    %v467 = vld [vmem:[%s1 + $0xda8] sm:$0xff]
    %v468 = vld [vmem:[%s1 + $0xdb0] sm:$0xff]
    %v469 = vld [vmem:[%s1 + $0xdb8] sm:$0xff]
    %v470 = vld [vmem:[%s1 + $0xdc0] sm:$0xff]
    %v471 = vld [vmem:[%s1 + $0xdc8] sm:$0xff]
    %v472 = vld [vmem:[%s1 + $0xdd0] sm:$0xff]
    %v473 = vld [vmem:[%s1 + $0xdd8] sm:$0xff]
    %v474 = vld [vmem:[%s1 + $0xde0] sm:$0xff]
    %v475 = vld [vmem:[%s1 + $0xde8] sm:$0xff]
    %v476 = vld [vmem:[%s1 + $0xdf0] sm:$0xff]
    %v477 = vld [vmem:[%s1 + $0xdf8] sm:$0xff]
    %v478 = vld [vmem:[%s1 + $0xe00] sm:$0xff]
    %v479 = vld [vmem:[%s1 + $0xe08] sm:$0xff]
    %v480 = vld [vmem:[%s1 + $0xe10] sm:$0xff]
    %v481 = vld [vmem:[%s1 + $0xe18] sm:$0xff]
    %v482 = vld [vmem:[%s1 + $0xe20] sm:$0xff]
    %v483 = vld [vmem:[%s1 + $0xe28] sm:$0xff]
    %v484 = vld [vmem:[%s1 + $0xe30] sm:$0xff]
    %v485 = vld [vmem:[%s1 + $0xe38] sm:$0xff]
    %v486 = vld [vmem:[%s1 + $0xe40] sm:$0xff]
    %v487 = vld [vmem:[%s1 + $0xe48] sm:$0xff]
    %v488 = vld [vmem:[%s1 + $0xe50] sm:$0xff]
    %v489 = vld [vmem:[%s1 + $0xe58] sm:$0xff]
    %v490 = vld [vmem:[%s1 + $0xe60] sm:$0xff]
    %v491 = vld [vmem:[%s1 + $0xe68] sm:$0xff]
    %v492 = vld [vmem:[%s1 + $0xe70] sm:$0xff]
    %v493 = vld [vmem:[%s1 + $0xe78] sm:$0xff]
    %v494 = vld [vmem:[%s1 + $0xe80] sm:$0xff]
    %v495 = vld [vmem:[%s1 + $0xe88] sm:$0xff]
    %v496 = vld [vmem:[%s1 + $0xe90] sm:$0xff]
    %v497 = vld [vmem:[%s1 + $0xe98] sm:$0xff]
    %v498 = vld [vmem:[%s1 + $0xea0] sm:$0xff]
    %v499 = vld [vmem:[%s1 + $0xea8] sm:$0xff]
    %v500 = vld [vmem:[%s1 + $0xeb0] sm:$0xff]
    %v501 = vld [vmem:[%s1 + $0xeb8] sm:$0xff]
    %v502 = vld [vmem:[%s1 + $0xec0] sm:$0xff]
    %v503 = vld [vmem:[%s1 + $0xec8] sm:$0xff]
    %v504 = vld [vmem:[%s1 + $0xed0] sm:$0xff]
    %v505 = vld [vmem:[%s1 + $0xed8] sm:$0xff]
    %v506 = vld [vmem:[%s1 + $0xee0] sm:$0xff]
    %v507 = vld [vmem:[%s1 + $0xee8] sm:$0xff]
    %v508 = vld [vmem:[%s1 + $0xef0] sm:$0xff]
    %v509 = vld [vmem:[%s1 + $0xef8] sm:$0xff]
    %v510 = vld [vmem:[%s1 + $0xf00] sm:$0xff]
    %v511 = vld [vmem:[%s1 + $0xf08] sm:$0xff]
    %v512 = vld [vmem:[%s1 + $0xf10] sm:$0xff]
    %v513 = vld [vmem:[%s1 + $0xf18] sm:$0xff]
    %v514 = vld [vmem:[%s1 + $0xf20] sm:$0xff]
    %v515 = vld [vmem:[%s1 + $0xf28] sm:$0xff]
    %v516 = vld [vmem:[%s1 + $0xf30] sm:$0xff]
    %v517 = vld [vmem:[%s1 + $0xf38] sm:$0xff]
    %v518 = vld [vmem:[%s1 + $0xf40] sm:$0xff]
    %v519 = vld [vmem:[%s1 + $0xf48] sm:$0xff]
    %v520 = vld [vmem:[%s1 + $0xf50] sm:$0xff]
    %v521 = vld [vmem:[%s1 + $0xf58] sm:$0xff]
    %v522 = vld [vmem:[%s1 + $0xf60] sm:$0xff]
    %v523 = vld [vmem:[%s1 + $0xf68] sm:$0xff]
    %v524 = vld [vmem:[%s1 + $0xf70] sm:$0xff]
    %v525 = vld [vmem:[%s1 + $0xf78] sm:$0xff]
    %v526 = vld [vmem:[%s1 + $0xf80] sm:$0xff]
    %v527 = vld [vmem:[%s1 + $0xf88] sm:$0xff]
    %v528 = vld [vmem:[%s1 + $0xf90] sm:$0xff]
    %v529 = vld [vmem:[%s1 + $0xf98] sm:$0xff]
    %v530 = vld [vmem:[%s1 + $0xfa0] sm:$0xff]
    %v531 = vld [vmem:[%s1 + $0xfa8] sm:$0xff]
    %v532 = vld [vmem:[%s1 + $0xfb0] sm:$0xff]
    %v533 = vld [vmem:[%s1 + $0xfb8] sm:$0xff]
    %v534 = vld [vmem:[%s1 + $0xfc0] sm:$0xff]
    %v535 = vld [vmem:[%s1 + $0xfc8] sm:$0xff]
    %v536 = vld [vmem:[%s1 + $0xfd0] sm:$0xff]
    %v537 = vld [vmem:[%s1 + $0xfd8] sm:$0xff]
    %v538 = vld [vmem:[%s1 + $0xfe0] sm:$0xff]
    %v539 = vld [vmem:[%s1 + $0xfe8] sm:$0xff]
    %v540 = vld [vmem:[%s1 + $0xff0] sm:$0xff]
    %v541 = vld [vmem:[%s1 + $0xff8] sm:$0xff]
    %v542 = vld [vmem:[%s1 + $0x1000] sm:$0xff]
    %v543 = vld [vmem:[%s1 + $0x1008] sm:$0xff]
    %v544 = vld [vmem:[%s1 + $0x1010] sm:$0xff]
    %v545 = vld [vmem:[%s1 + $0x1018] sm:$0xff]
    %v546 = vld [vmem:[%s1 + $0x1020] sm:$0xff]
    %v547 = vld [vmem:[%s1 + $0x1028] sm:$0xff]
    %v548 = vld [vmem:[%s1 + $0x1030] sm:$0xff]
    %v549 = vld [vmem:[%s1 + $0x1038] sm:$0xff]
    %v550 = vld [vmem:[%s1 + $0x1040] sm:$0xff]
    %v551 = vld [vmem:[%s1 + $0x1048] sm:$0xff]
    %v552 = vld [vmem:[%s1 + $0x1050] sm:$0xff]
    %v553 = vld [vmem:[%s1 + $0x1058] sm:$0xff]
    %v554 = vld [vmem:[%s1 + $0x1060] sm:$0xff]
    %v555 = vld [vmem:[%s1 + $0x1068] sm:$0xff]
    %v556 = vld [vmem:[%s1 + $0x1070] sm:$0xff]
    %v557 = vld [vmem:[%s1 + $0x1078] sm:$0xff]
    %v558 = vld [vmem:[%s1 + $0x1080] sm:$0xff]
    %v559 = vld [vmem:[%s1 + $0x1088] sm:$0xff]
    %v560 = vld [vmem:[%s1 + $0x1090] sm:$0xff]
    %v561 = vld [vmem:[%s1 + $0x1098] sm:$0xff]
    %v562 = vld [vmem:[%s1 + $0x10a0] sm:$0xff]
    %v563 = vld [vmem:[%s1 + $0x10a8] sm:$0xff]
    %v564 = vld [vmem:[%s1 + $0x10b0] sm:$0xff]
    %v565 = vld [vmem:[%s1 + $0x10b8] sm:$0xff]
    %v566 = vld [vmem:[%s1 + $0x10c0] sm:$0xff]
    %v567 = vld [vmem:[%s1 + $0x10c8] sm:$0xff]
    %v568 = vld [vmem:[%s1 + $0x10d0] sm:$0xff]
    %v569 = vld [vmem:[%s1 + $0x10d8] sm:$0xff]
    %v570 = vld [vmem:[%s2] sm:$0x3f]
    %v572 = vlaneseq
    %v573 = vshrl.u32 %v572, 7
    %v574 = vsub.s32 0, %v573
    %v575 = vrot.slane %v570, %v574
    %v576 = vlaneseq
    %v577 = vshrl.u32 %v576, 7
    %v578 = vsub.s32 1, %v577
    %v579 = vrot.slane %v570, %v578
    %v580 = vlaneseq
    %v581 = vshrl.u32 %v580, 7
    %v582 = vsub.s32 2, %v581
    %v583 = vrot.slane %v570, %v582
    %v584 = vlaneseq
    %v585 = vshrl.u32 %v584, 7
    %v586 = vsub.s32 3, %v585
    %v587 = vrot.slane %v570, %v586
    %v588 = vlaneseq
    %v589 = vshrl.u32 %v588, 7
    %v590 = vsub.s32 4, %v589
    %v591 = vrot.slane %v570, %v590
    %v592 = vlaneseq
    %v593 = vshrl.u32 %v592, 7
    %v594 = vsub.s32 5, %v593
    %v595 = vrot.slane %v570, %v594
    %v604 = vcombine.high %v28, %v28
    %v606 = vunpack.c.l.s4 1966171168
    %v607 = vunpack.c.0.s8 %v606
    %v608 = vlaneseq
    %v609 = vshrl.u32 %v608, 7
    %v610 = vsub.s32 %v607, %v609
    %v611 = vrot.slane %v28, %v610
    %v613 = vunpack.c.l.s4 1966171168
    %v614 = vunpack.c.0.s8 %v613
    %v615 = vlaneseq
    %v616 = vshrl.u32 %v615, 7
    %v617 = vsub.s32 %v614, %v616
    %v618 = vrot.slane %v604, %v617
    %v619 = vcombine.high %v611, %v611
    %v620 = vcombine.high %v618, %v618
    %v622 = vunpack.c.l.s4 1966171168
    %v623 = vunpack.c.0.s8 %v622
    %v624 = vlaneseq
    %v625 = vshrl.u32 %v624, 7
    %v626 = vsub.s32 %v623, %v625
    %v627 = vrot.slane %v611, %v626
    %v629 = vunpack.c.l.s4 1966171168
    %v630 = vunpack.c.0.s8 %v629
    %v631 = vlaneseq
    %v632 = vshrl.u32 %v631, 7
    %v633 = vsub.s32 %v630, %v632
    %v634 = vrot.slane %v618, %v633
    %v636 = vunpack.c.l.s4 1966171168
    %v637 = vunpack.c.0.s8 %v636
    %v638 = vlaneseq
    %v639 = vshrl.u32 %v638, 7
    %v640 = vsub.s32 %v637, %v639
    %v641 = vrot.slane %v619, %v640
    %v643 = vunpack.c.l.s4 1966171168
    %v644 = vunpack.c.0.s8 %v643
    %v645 = vlaneseq
    %v646 = vshrl.u32 %v645, 7
    %v647 = vsub.s32 %v644, %v646
    %v648 = vrot.slane %v620, %v647
    %v649 = vcombine.high %v627, %v627
    %v650 = vcombine.high %v634, %v634
    %v651 = vcombine.high %v641, %v641
    %v652 = vcombine.high %v648, %v648
    %v654 = vunpack.c.l.s4 1966171168
    %v655 = vunpack.c.0.s8 %v654
    %v656 = vlaneseq
    %v657 = vshrl.u32 %v656, 7
    %v658 = vsub.s32 %v655, %v657
    %v659 = vrot.slane %v29, %v658
    %v660 = vcombine.high %v659, %v659
    %v662 = vunpack.c.l.s4 1966171168
    %v663 = vunpack.c.0.s8 %v662
    %v664 = vlaneseq
    %v665 = vshrl.u32 %v664, 7
    %v666 = vsub.s32 %v663, %v665
    %v667 = vrot.slane %v659, %v666
    %v669 = vunpack.c.l.s4 1966171168
    %v670 = vunpack.c.0.s8 %v669
    %v671 = vlaneseq
    %v672 = vshrl.u32 %v671, 7
    %v673 = vsub.s32 %v670, %v672
    %v674 = vrot.slane %v660, %v673
    %v675 = vcombine.high %v667, %v667
    %v676 = vcombine.high %v674, %v674
    %v1228 = vunpack.c.l.b16 %v30
    %v1229 = vunpack.c.h.b16 %v30
    %v1230 = vunpack.c.l.b16 %v31
    %v1231 = vunpack.c.h.b16 %v31
    %v1232 = vunpack.c.l.b16 %v32
    %v1233 = vunpack.c.h.b16 %v32
    %v1234 = vunpack.c.l.b16 %v33
    %v1235 = vunpack.c.h.b16 %v33
    %v1236 = vunpack.c.l.b16 %v34
    %v1237 = vunpack.c.h.b16 %v34
    %v1238 = vunpack.c.l.b16 %v35
    %v1239 = vunpack.c.h.b16 %v35
    %v1240 = vunpack.c.l.b16 %v36
    %v1241 = vunpack.c.h.b16 %v36
    %v1242 = vunpack.c.l.b16 %v37
    %v1243 = vunpack.c.h.b16 %v37
    %v1244 = vunpack.c.l.b16 %v38
    %v1245 = vunpack.c.h.b16 %v38
    %v1246 = vunpack.c.l.b16 %v39
    %v1247 = vunpack.c.h.b16 %v39
    %v1248 = vunpack.c.l.b16 %v40
    %v1249 = vunpack.c.h.b16 %v40
    %v1250 = vunpack.c.l.b16 %v41
    %v1251 = vunpack.c.h.b16 %v41
    %v1252 = vunpack.c.l.b16 %v42
    %v1253 = vunpack.c.h.b16 %v42
    %v1254 = vunpack.c.l.b16 %v43
    %v1255 = vunpack.c.h.b16 %v43
    %v1256 = vunpack.c.l.b16 %v44
    %v1257 = vunpack.c.h.b16 %v44
    %v1258 = vunpack.c.l.b16 %v45
    %v1259 = vunpack.c.h.b16 %v45
    %v1260 = vunpack.c.l.b16 %v46
    %v1261 = vunpack.c.h.b16 %v46
    %v1262 = vunpack.c.l.b16 %v47
    %v1263 = vunpack.c.h.b16 %v47
    %v1264 = vunpack.c.l.b16 %v48
    %v1265 = vunpack.c.h.b16 %v48
    %v1266 = vunpack.c.l.b16 %v49
    %v1267 = vunpack.c.h.b16 %v49
    %v1268 = vunpack.c.l.b16 %v50
    %v1269 = vunpack.c.h.b16 %v50
    %v1270 = vunpack.c.l.b16 %v51
    %v1271 = vunpack.c.h.b16 %v51
    %v1272 = vunpack.c.l.b16 %v52
    %v1273 = vunpack.c.h.b16 %v52
    %v1274 = vunpack.c.l.b16 %v53
    %v1275 = vunpack.c.h.b16 %v53
    %v1276 = vunpack.c.l.b16 %v54
    %v1277 = vunpack.c.h.b16 %v54
    %v1278 = vunpack.c.l.b16 %v55
    %v1279 = vunpack.c.h.b16 %v55
    %v1280 = vunpack.c.l.b16 %v56
    %v1281 = vunpack.c.h.b16 %v56
    %v1282 = vunpack.c.l.b16 %v57
    %v1283 = vunpack.c.h.b16 %v57
    %v1284 = vunpack.c.l.b16 %v58
    %v1285 = vunpack.c.h.b16 %v58
    %v1286 = vunpack.c.l.b16 %v59
    %v1287 = vunpack.c.h.b16 %v59
    %v1288 = vunpack.c.l.b16 %v60
    %v1289 = vunpack.c.h.b16 %v60
    %v1290 = vunpack.c.l.b16 %v61
    %v1291 = vunpack.c.h.b16 %v61
    %v1292 = vunpack.c.l.b16 %v62
    %v1293 = vunpack.c.h.b16 %v62
    %v1294 = vunpack.c.l.b16 %v63
    %v1295 = vunpack.c.h.b16 %v63
    %v1296 = vunpack.c.l.b16 %v64
    %v1297 = vunpack.c.h.b16 %v64
    %v1298 = vunpack.c.l.b16 %v65
    %v1299 = vunpack.c.h.b16 %v65
    %v1300 = vunpack.c.l.b16 %v66
    %v1301 = vunpack.c.h.b16 %v66
    %v1302 = vunpack.c.l.b16 %v67
    %v1303 = vunpack.c.h.b16 %v67
    %v1304 = vunpack.c.l.b16 %v68
    %v1305 = vunpack.c.h.b16 %v68
    %v1306 = vunpack.c.l.b16 %v69
    %v1307 = vunpack.c.h.b16 %v69
    %v1308 = vunpack.c.l.b16 %v70
    %v1309 = vunpack.c.h.b16 %v70
    %v1310 = vunpack.c.l.b16 %v71
    %v1311 = vunpack.c.h.b16 %v71
    %v1312 = vunpack.c.l.b16 %v72
    %v1313 = vunpack.c.h.b16 %v72
    %v1314 = vunpack.c.l.b16 %v73
    %v1315 = vunpack.c.h.b16 %v73
    %v1316 = vunpack.c.l.b16 %v74
    %v1317 = vunpack.c.h.b16 %v74
    %v1318 = vunpack.c.l.b16 %v75
    %v1319 = vunpack.c.h.b16 %v75
    %v1320 = vunpack.c.l.b16 %v76
    %v1321 = vunpack.c.h.b16 %v76
    %v1322 = vunpack.c.l.b16 %v77
    %v1323 = vunpack.c.h.b16 %v77
    %v1324 = vunpack.c.l.b16 %v78
    %v1325 = vunpack.c.h.b16 %v78
    %v1326 = vunpack.c.l.b16 %v79
    %v1327 = vunpack.c.h.b16 %v79
    %v1328 = vunpack.c.l.b16 %v80
    %v1329 = vunpack.c.h.b16 %v80
    %v1330 = vunpack.c.l.b16 %v81
    %v1331 = vunpack.c.h.b16 %v81
    %v1332 = vunpack.c.l.b16 %v82
    %v1333 = vunpack.c.h.b16 %v82
    %v1334 = vunpack.c.l.b16 %v83
    %v1335 = vunpack.c.h.b16 %v83
    %v1336 = vunpack.c.l.b16 %v84
    %v1337 = vunpack.c.h.b16 %v84
    %v1338 = vunpack.c.l.b16 %v85
    %v1339 = vunpack.c.h.b16 %v85
    %v1340 = vunpack.c.l.b16 %v86
    %v1341 = vunpack.c.h.b16 %v86
    %v1342 = vunpack.c.l.b16 %v87
    %v1343 = vunpack.c.h.b16 %v87
    %v1344 = vunpack.c.l.b16 %v88
    %v1345 = vunpack.c.h.b16 %v88
    %v1346 = vunpack.c.l.b16 %v89
    %v1347 = vunpack.c.h.b16 %v89
    %v1348 = vunpack.c.l.b16 %v90
    %v1349 = vunpack.c.h.b16 %v90
    %v1350 = vunpack.c.l.b16 %v91
    %v1351 = vunpack.c.h.b16 %v91
    %v1352 = vunpack.c.l.b16 %v92
    %v1353 = vunpack.c.h.b16 %v92
    %v1354 = vunpack.c.l.b16 %v93
    %v1355 = vunpack.c.h.b16 %v93
    %v1356 = vunpack.c.l.b16 %v94
    %v1357 = vunpack.c.h.b16 %v94
    %v1358 = vunpack.c.l.b16 %v95
    %v1359 = vunpack.c.h.b16 %v95
    %v1360 = vunpack.c.l.b16 %v96
    %v1361 = vunpack.c.h.b16 %v96
    %v1362 = vunpack.c.l.b16 %v97
    %v1363 = vunpack.c.h.b16 %v97
    %v1364 = vunpack.c.l.b16 %v98
    %v1365 = vunpack.c.h.b16 %v98
    %v1366 = vunpack.c.l.b16 %v99
    %v1367 = vunpack.c.h.b16 %v99
    %v1368 = vunpack.c.l.b16 %v100
    %v1369 = vunpack.c.h.b16 %v100
    %v1370 = vunpack.c.l.b16 %v101
    %v1371 = vunpack.c.h.b16 %v101
    %v1372 = vunpack.c.l.b16 %v102
    %v1373 = vunpack.c.h.b16 %v102
    %v1374 = vunpack.c.l.b16 %v103
    %v1375 = vunpack.c.h.b16 %v103
    %v1376 = vunpack.c.l.b16 %v104
    %v1377 = vunpack.c.h.b16 %v104
    %v1378 = vunpack.c.l.b16 %v105
    %v1379 = vunpack.c.h.b16 %v105
    %v1380 = vunpack.c.l.b16 %v106
    %v1381 = vunpack.c.h.b16 %v106
    %v1382 = vunpack.c.l.b16 %v107
    %v1383 = vunpack.c.h.b16 %v107
    %v1384 = vunpack.c.l.b16 %v108
    %v1385 = vunpack.c.h.b16 %v108
    %v1386 = vunpack.c.l.b16 %v109
    %v1387 = vunpack.c.h.b16 %v109
    %v1388 = vunpack.c.l.b16 %v110
    %v1389 = vunpack.c.h.b16 %v110
    %v1390 = vunpack.c.l.b16 %v111
    %v1391 = vunpack.c.h.b16 %v111
    %v1392 = vunpack.c.l.b16 %v112
    %v1393 = vunpack.c.h.b16 %v112
    %v1394 = vunpack.c.l.b16 %v113
    %v1395 = vunpack.c.h.b16 %v113
    %v1396 = vunpack.c.l.b16 %v114
    %v1397 = vunpack.c.h.b16 %v114
    %v1398 = vunpack.c.l.b16 %v115
    %v1399 = vunpack.c.h.b16 %v115
    %v1400 = vunpack.c.l.b16 %v116
    %v1401 = vunpack.c.h.b16 %v116
    %v1402 = vunpack.c.l.b16 %v117
    %v1403 = vunpack.c.h.b16 %v117
    %v1404 = vunpack.c.l.b16 %v118
    %v1405 = vunpack.c.h.b16 %v118
    %v1406 = vunpack.c.l.b16 %v119
    %v1407 = vunpack.c.h.b16 %v119
    %v1408 = vunpack.c.l.b16 %v120
    %v1409 = vunpack.c.h.b16 %v120
    %v1410 = vunpack.c.l.b16 %v121
    %v1411 = vunpack.c.h.b16 %v121
    %v1412 = vunpack.c.l.b16 %v122
    %v1413 = vunpack.c.h.b16 %v122
    %v1414 = vunpack.c.l.b16 %v123
    %v1415 = vunpack.c.h.b16 %v123
    %v1416 = vunpack.c.l.b16 %v124
    %v1417 = vunpack.c.h.b16 %v124
    %v1418 = vunpack.c.l.b16 %v125
    %v1419 = vunpack.c.h.b16 %v125
    %v1420 = vunpack.c.l.b16 %v126
    %v1421 = vunpack.c.h.b16 %v126
    %v1422 = vunpack.c.l.b16 %v127
    %v1423 = vunpack.c.h.b16 %v127
    %v1424 = vunpack.c.l.b16 %v128
    %v1425 = vunpack.c.h.b16 %v128
    %v1426 = vunpack.c.l.b16 %v129
    %v1427 = vunpack.c.h.b16 %v129
    %v1428 = vunpack.c.l.b16 %v130
    %v1429 = vunpack.c.h.b16 %v130
    %v1430 = vunpack.c.l.b16 %v131
    %v1431 = vunpack.c.h.b16 %v131
    %v1432 = vunpack.c.l.b16 %v132
    %v1433 = vunpack.c.h.b16 %v132
    %v1434 = vunpack.c.l.b16 %v133
    %v1435 = vunpack.c.h.b16 %v133
    %v1436 = vunpack.c.l.b16 %v134
    %v1437 = vunpack.c.h.b16 %v134
    %v1438 = vunpack.c.l.b16 %v135
    %v1439 = vunpack.c.h.b16 %v135
    %v1440 = vunpack.c.l.b16 %v136
    %v1441 = vunpack.c.h.b16 %v136
    %v1442 = vunpack.c.l.b16 %v137
    %v1443 = vunpack.c.h.b16 %v137
    %v1444 = vunpack.c.l.b16 %v138
    %v1445 = vunpack.c.h.b16 %v138
    %v1446 = vunpack.c.l.b16 %v139
    %v1447 = vunpack.c.h.b16 %v139
    %v1448 = vunpack.c.l.b16 %v140
    %v1449 = vunpack.c.h.b16 %v140
    %v1450 = vunpack.c.l.b16 %v141
    %v1451 = vunpack.c.h.b16 %v141
    %v1452 = vunpack.c.l.b16 %v142
    %v1453 = vunpack.c.h.b16 %v142
    %v1454 = vunpack.c.l.b16 %v143
    %v1455 = vunpack.c.h.b16 %v143
    %v1456 = vunpack.c.l.b16 %v144
    %v1457 = vunpack.c.h.b16 %v144
    %v1458 = vunpack.c.l.b16 %v145
    %v1459 = vunpack.c.h.b16 %v145
    %v1460 = vunpack.c.l.b16 %v146
    %v1461 = vunpack.c.h.b16 %v146
    %v1462 = vunpack.c.l.b16 %v147
    %v1463 = vunpack.c.h.b16 %v147
    %v1464 = vunpack.c.l.b16 %v148
    %v1465 = vunpack.c.h.b16 %v148
    %v1466 = vunpack.c.l.b16 %v149
    %v1467 = vunpack.c.h.b16 %v149
    %v1468 = vunpack.c.l.b16 %v150
    %v1469 = vunpack.c.h.b16 %v150
    %v1470 = vunpack.c.l.b16 %v151
    %v1471 = vunpack.c.h.b16 %v151
    %v1472 = vunpack.c.l.b16 %v152
    %v1473 = vunpack.c.h.b16 %v152
    %v1474 = vunpack.c.l.b16 %v153
    %v1475 = vunpack.c.h.b16 %v153
    %v1476 = vunpack.c.l.b16 %v154
    %v1477 = vunpack.c.h.b16 %v154
    %v1478 = vunpack.c.l.b16 %v155
    %v1479 = vunpack.c.h.b16 %v155
    %v1480 = vunpack.c.l.b16 %v156
    %v1481 = vunpack.c.h.b16 %v156
    %v1482 = vunpack.c.l.b16 %v157
    %v1483 = vunpack.c.h.b16 %v157
    %v1484 = vunpack.c.l.b16 %v158
    %v1485 = vunpack.c.h.b16 %v158
    %v1486 = vunpack.c.l.b16 %v159
    %v1487 = vunpack.c.h.b16 %v159
    %v1488 = vunpack.c.l.b16 %v160
    %v1489 = vunpack.c.h.b16 %v160
    %v1490 = vunpack.c.l.b16 %v161
    %v1491 = vunpack.c.h.b16 %v161
    %v1492 = vunpack.c.l.b16 %v162
    %v1493 = vunpack.c.h.b16 %v162
    %v1494 = vunpack.c.l.b16 %v163
    %v1495 = vunpack.c.h.b16 %v163
    %v1496 = vunpack.c.l.b16 %v164
    %v1497 = vunpack.c.h.b16 %v164
    %v1498 = vunpack.c.l.b16 %v165
    %v1499 = vunpack.c.h.b16 %v165
    %v1500 = vunpack.c.l.b16 %v166
    %v1501 = vunpack.c.h.b16 %v166
    %v1502 = vunpack.c.l.b16 %v167
    %v1503 = vunpack.c.h.b16 %v167
    %v1504 = vunpack.c.l.b16 %v168
    %v1505 = vunpack.c.h.b16 %v168
    %v1506 = vunpack.c.l.b16 %v169
    %v1507 = vunpack.c.h.b16 %v169
    %v1508 = vunpack.c.l.b16 %v170
    %v1509 = vunpack.c.h.b16 %v170
    %v1510 = vunpack.c.l.b16 %v171
    %v1511 = vunpack.c.h.b16 %v171
    %v1512 = vunpack.c.l.b16 %v172
    %v1513 = vunpack.c.h.b16 %v172
    %v1514 = vunpack.c.l.b16 %v173
    %v1515 = vunpack.c.h.b16 %v173
    %v1516 = vunpack.c.l.b16 %v174
    %v1517 = vunpack.c.h.b16 %v174
    %v1518 = vunpack.c.l.b16 %v175
    %v1519 = vunpack.c.h.b16 %v175
    %v1520 = vunpack.c.l.b16 %v176
    %v1521 = vunpack.c.h.b16 %v176
    %v1522 = vunpack.c.l.b16 %v177
    %v1523 = vunpack.c.h.b16 %v177
    %v1524 = vunpack.c.l.b16 %v178
    %v1525 = vunpack.c.h.b16 %v178
    %v1526 = vunpack.c.l.b16 %v179
    %v1527 = vunpack.c.h.b16 %v179
    %v1528 = vunpack.c.l.b16 %v180
    %v1529 = vunpack.c.h.b16 %v180
    %v1530 = vunpack.c.l.b16 %v181
    %v1531 = vunpack.c.h.b16 %v181
    %v1532 = vunpack.c.l.b16 %v182
    %v1533 = vunpack.c.h.b16 %v182
    %v1534 = vunpack.c.l.b16 %v183
    %v1535 = vunpack.c.h.b16 %v183
    %v1536 = vunpack.c.l.b16 %v184
    %v1537 = vunpack.c.h.b16 %v184
    %v1538 = vunpack.c.l.b16 %v185
    %v1539 = vunpack.c.h.b16 %v185
    %v1540 = vunpack.c.l.b16 %v186
    %v1541 = vunpack.c.h.b16 %v186
    %v1542 = vunpack.c.l.b16 %v187
    %v1543 = vunpack.c.h.b16 %v187
    %v1544 = vunpack.c.l.b16 %v188
    %v1545 = vunpack.c.h.b16 %v188
    %v1546 = vunpack.c.l.b16 %v189
    %v1547 = vunpack.c.h.b16 %v189
    %v1548 = vunpack.c.l.b16 %v190
    %v1549 = vunpack.c.h.b16 %v190
    %v1550 = vunpack.c.l.b16 %v191
    %v1551 = vunpack.c.h.b16 %v191
    %v1552 = vunpack.c.l.b16 %v192
    %v1553 = vunpack.c.h.b16 %v192
    %v1554 = vunpack.c.l.b16 %v193
    %v1555 = vunpack.c.h.b16 %v193
    %v1556 = vunpack.c.l.b16 %v194
    %v1557 = vunpack.c.h.b16 %v194
    %v1558 = vunpack.c.l.b16 %v195
    %v1559 = vunpack.c.h.b16 %v195
    %v1560 = vunpack.c.l.b16 %v196
    %v1561 = vunpack.c.h.b16 %v196
    %v1562 = vunpack.c.l.b16 %v197
    %v1563 = vunpack.c.h.b16 %v197
    %v1564 = vunpack.c.l.b16 %v198
    %v1565 = vunpack.c.h.b16 %v198
    %v1566 = vunpack.c.l.b16 %v199
    %v1567 = vunpack.c.h.b16 %v199
    %v1568 = vunpack.c.l.b16 %v200
    %v1569 = vunpack.c.h.b16 %v200
    %v1570 = vunpack.c.l.b16 %v201
    %v1571 = vunpack.c.h.b16 %v201
    %v1572 = vunpack.c.l.b16 %v202
    %v1573 = vunpack.c.h.b16 %v202
    %v1574 = vunpack.c.l.b16 %v203
    %v1575 = vunpack.c.h.b16 %v203
    %v1576 = vunpack.c.l.b16 %v204
    %v1577 = vunpack.c.h.b16 %v204
    %v1578 = vunpack.c.l.b16 %v205
    %v1579 = vunpack.c.h.b16 %v205
    %v1580 = vunpack.c.l.b16 %v206
    %v1581 = vunpack.c.h.b16 %v206
    %v1582 = vunpack.c.l.b16 %v207
    %v1583 = vunpack.c.h.b16 %v207
    %v1584 = vunpack.c.l.b16 %v208
    %v1585 = vunpack.c.h.b16 %v208
    %v1586 = vunpack.c.l.b16 %v209
    %v1587 = vunpack.c.h.b16 %v209
    %v1588 = vunpack.c.l.b16 %v210
    %v1589 = vunpack.c.h.b16 %v210
    %v1590 = vunpack.c.l.b16 %v211
    %v1591 = vunpack.c.h.b16 %v211
    %v1592 = vunpack.c.l.b16 %v212
    %v1593 = vunpack.c.h.b16 %v212
    %v1594 = vunpack.c.l.b16 %v213
    %v1595 = vunpack.c.h.b16 %v213
    %v1596 = vunpack.c.l.b16 %v214
    %v1597 = vunpack.c.h.b16 %v214
    %v1598 = vunpack.c.l.b16 %v215
    %v1599 = vunpack.c.h.b16 %v215
    %v1600 = vunpack.c.l.b16 %v216
    %v1601 = vunpack.c.h.b16 %v216
    %v1602 = vunpack.c.l.b16 %v217
    %v1603 = vunpack.c.h.b16 %v217
    %v1604 = vunpack.c.l.b16 %v218
    %v1605 = vunpack.c.h.b16 %v218
    %v1606 = vunpack.c.l.b16 %v219
    %v1607 = vunpack.c.h.b16 %v219
    %v1608 = vunpack.c.l.b16 %v220
    %v1609 = vunpack.c.h.b16 %v220
    %v1610 = vunpack.c.l.b16 %v221
    %v1611 = vunpack.c.h.b16 %v221
    %v1612 = vunpack.c.l.b16 %v222
    %v1613 = vunpack.c.h.b16 %v222
    %v1614 = vunpack.c.l.b16 %v223
    %v1615 = vunpack.c.h.b16 %v223
    %v1616 = vunpack.c.l.b16 %v224
    %v1617 = vunpack.c.h.b16 %v224
    %v1618 = vunpack.c.l.b16 %v225
    %v1619 = vunpack.c.h.b16 %v225
    %v1620 = vunpack.c.l.b16 %v226
    %v1621 = vunpack.c.h.b16 %v226
    %v1622 = vunpack.c.l.b16 %v227
    %v1623 = vunpack.c.h.b16 %v227
    %v1624 = vunpack.c.l.b16 %v228
    %v1625 = vunpack.c.h.b16 %v228
    %v1626 = vunpack.c.l.b16 %v229
    %v1627 = vunpack.c.h.b16 %v229
    %v1628 = vunpack.c.l.b16 %v230
    %v1629 = vunpack.c.h.b16 %v230
    %v1630 = vunpack.c.l.b16 %v231
    %v1631 = vunpack.c.h.b16 %v231
    %v1632 = vunpack.c.l.b16 %v232
    %v1633 = vunpack.c.h.b16 %v232
    %v1634 = vunpack.c.l.b16 %v233
    %v1635 = vunpack.c.h.b16 %v233
    %v1636 = vunpack.c.l.b16 %v234
    %v1637 = vunpack.c.h.b16 %v234
    %v1638 = vunpack.c.l.b16 %v235
    %v1639 = vunpack.c.h.b16 %v235
    %v1640 = vunpack.c.l.b16 %v236
    %v1641 = vunpack.c.h.b16 %v236
    %v1642 = vunpack.c.l.b16 %v237
    %v1643 = vunpack.c.h.b16 %v237
    %v1644 = vunpack.c.l.b16 %v238
    %v1645 = vunpack.c.h.b16 %v238
    %v1646 = vunpack.c.l.b16 %v239
    %v1647 = vunpack.c.h.b16 %v239
    %v1648 = vunpack.c.l.b16 %v240
    %v1649 = vunpack.c.h.b16 %v240
    %v1650 = vunpack.c.l.b16 %v241
    %v1651 = vunpack.c.h.b16 %v241
    %v1652 = vunpack.c.l.b16 %v242
    %v1653 = vunpack.c.h.b16 %v242
    %v1654 = vunpack.c.l.b16 %v243
    %v1655 = vunpack.c.h.b16 %v243
    %v1656 = vunpack.c.l.b16 %v244
    %v1657 = vunpack.c.h.b16 %v244
    %v1658 = vunpack.c.l.b16 %v245
    %v1659 = vunpack.c.h.b16 %v245
    %v1660 = vunpack.c.l.b16 %v246
    %v1661 = vunpack.c.h.b16 %v246
    %v1662 = vunpack.c.l.b16 %v247
    %v1663 = vunpack.c.h.b16 %v247
    %v1664 = vunpack.c.l.b16 %v248
    %v1665 = vunpack.c.h.b16 %v248
    %v1666 = vunpack.c.l.b16 %v249
    %v1667 = vunpack.c.h.b16 %v249
    %v1668 = vunpack.c.l.b16 %v250
    %v1669 = vunpack.c.h.b16 %v250
    %v1670 = vunpack.c.l.b16 %v251
    %v1671 = vunpack.c.h.b16 %v251
    %v1672 = vunpack.c.l.b16 %v252
    %v1673 = vunpack.c.h.b16 %v252
    %v1674 = vunpack.c.l.b16 %v253
    %v1675 = vunpack.c.h.b16 %v253
    %v1676 = vunpack.c.l.b16 %v254
    %v1677 = vunpack.c.h.b16 %v254
    %v1678 = vunpack.c.l.b16 %v255
    %v1679 = vunpack.c.h.b16 %v255
    %v1680 = vunpack.c.l.b16 %v256
    %v1681 = vunpack.c.h.b16 %v256
    %v1682 = vunpack.c.l.b16 %v257
    %v1683 = vunpack.c.h.b16 %v257
    %v1684 = vunpack.c.l.b16 %v258
    %v1685 = vunpack.c.h.b16 %v258
    %v1686 = vunpack.c.l.b16 %v259
    %v1687 = vunpack.c.h.b16 %v259
    %v1688 = vunpack.c.l.b16 %v260
    %v1689 = vunpack.c.h.b16 %v260
    %v1690 = vunpack.c.l.b16 %v261
    %v1691 = vunpack.c.h.b16 %v261
    %v1692 = vunpack.c.l.b16 %v262
    %v1693 = vunpack.c.h.b16 %v262
    %v1694 = vunpack.c.l.b16 %v263
    %v1695 = vunpack.c.h.b16 %v263
    %v1696 = vunpack.c.l.b16 %v264
    %v1697 = vunpack.c.h.b16 %v264
    %v1698 = vunpack.c.l.b16 %v265
    %v1699 = vunpack.c.h.b16 %v265
    %v1700 = vunpack.c.l.b16 %v266
    %v1701 = vunpack.c.h.b16 %v266
    %v1702 = vunpack.c.l.b16 %v267
    %v1703 = vunpack.c.h.b16 %v267
    %v1704 = vunpack.c.l.b16 %v268
    %v1705 = vunpack.c.h.b16 %v268
    %v1706 = vunpack.c.l.b16 %v269
    %v1707 = vunpack.c.h.b16 %v269
    %v1708 = vunpack.c.l.b16 %v270
    %v1709 = vunpack.c.h.b16 %v270
    %v1710 = vunpack.c.l.b16 %v271
    %v1711 = vunpack.c.h.b16 %v271
    %v1712 = vunpack.c.l.b16 %v272
    %v1713 = vunpack.c.h.b16 %v272
    %v1714 = vunpack.c.l.b16 %v273
    %v1715 = vunpack.c.h.b16 %v273
    %v1716 = vunpack.c.l.b16 %v274
    %v1717 = vunpack.c.h.b16 %v274
    %v1718 = vunpack.c.l.b16 %v275
    %v1719 = vunpack.c.h.b16 %v275
    %v1720 = vunpack.c.l.b16 %v276
    %v1721 = vunpack.c.h.b16 %v276
    %v1722 = vunpack.c.l.b16 %v277
    %v1723 = vunpack.c.h.b16 %v277
    %v1724 = vunpack.c.l.b16 %v278
    %v1725 = vunpack.c.h.b16 %v278
    %v1726 = vunpack.c.l.b16 %v279
    %v1727 = vunpack.c.h.b16 %v279
    %v1728 = vunpack.c.l.b16 %v280
    %v1729 = vunpack.c.h.b16 %v280
    %v1730 = vunpack.c.l.b16 %v281
    %v1731 = vunpack.c.h.b16 %v281
    %v1732 = vunpack.c.l.b16 %v282
    %v1733 = vunpack.c.h.b16 %v282
    %v1734 = vunpack.c.l.b16 %v283
    %v1735 = vunpack.c.h.b16 %v283
    %v1736 = vunpack.c.l.b16 %v284
    %v1737 = vunpack.c.h.b16 %v284
    %v1738 = vunpack.c.l.b16 %v285
    %v1739 = vunpack.c.h.b16 %v285
    %v1740 = vunpack.c.l.b16 %v286
    %v1741 = vunpack.c.h.b16 %v286
    %v1742 = vunpack.c.l.b16 %v287
    %v1743 = vunpack.c.h.b16 %v287
    %v1744 = vunpack.c.l.b16 %v288
    %v1745 = vunpack.c.h.b16 %v288
    %v1746 = vunpack.c.l.b16 %v289
    %v1747 = vunpack.c.h.b16 %v289
    %v1748 = vunpack.c.l.b16 %v290
    %v1749 = vunpack.c.h.b16 %v290
    %v1750 = vunpack.c.l.b16 %v291
    %v1751 = vunpack.c.h.b16 %v291
    %v1752 = vunpack.c.l.b16 %v292
    %v1753 = vunpack.c.h.b16 %v292
    %v1754 = vunpack.c.l.b16 %v293
    %v1755 = vunpack.c.h.b16 %v293
    %v1756 = vunpack.c.l.b16 %v294
    %v1757 = vunpack.c.h.b16 %v294
    %v1758 = vunpack.c.l.b16 %v295
    %v1759 = vunpack.c.h.b16 %v295
    %v1760 = vunpack.c.l.b16 %v296
    %v1761 = vunpack.c.h.b16 %v296
    %v1762 = vunpack.c.l.b16 %v297
    %v1763 = vunpack.c.h.b16 %v297
    %v1764 = vunpack.c.l.b16 %v298
    %v1765 = vunpack.c.h.b16 %v298
    %v1766 = vunpack.c.l.b16 %v299
    %v1767 = vunpack.c.h.b16 %v299
    %v1768 = vunpack.c.l.b16 %v300
    %v1769 = vunpack.c.h.b16 %v300
    %v1770 = vunpack.c.l.b16 %v301
    %v1771 = vunpack.c.h.b16 %v301
    %v1772 = vunpack.c.l.b16 %v302
    %v1773 = vunpack.c.h.b16 %v302
    %v1774 = vunpack.c.l.b16 %v303
    %v1775 = vunpack.c.h.b16 %v303
    %v1776 = vunpack.c.l.b16 %v304
    %v1777 = vunpack.c.h.b16 %v304
    %v1778 = vunpack.c.l.b16 %v305
    %v1779 = vunpack.c.h.b16 %v305
    %v1780 = vunpack.c.l.b16 %v306
    %v1781 = vunpack.c.h.b16 %v306
    %v1782 = vunpack.c.l.b16 %v307
    %v1783 = vunpack.c.h.b16 %v307
    %v1784 = vunpack.c.l.b16 %v308
    %v1785 = vunpack.c.h.b16 %v308
    %v1786 = vunpack.c.l.b16 %v309
    %v1787 = vunpack.c.h.b16 %v309
    %v1788 = vunpack.c.l.b16 %v310
    %v1789 = vunpack.c.h.b16 %v310
    %v1790 = vunpack.c.l.b16 %v311
    %v1791 = vunpack.c.h.b16 %v311
    %v1792 = vunpack.c.l.b16 %v312
    %v1793 = vunpack.c.h.b16 %v312
    %v1794 = vunpack.c.l.b16 %v313
    %v1795 = vunpack.c.h.b16 %v313
    %v1796 = vunpack.c.l.b16 %v314
    %v1797 = vunpack.c.h.b16 %v314
    %v1798 = vunpack.c.l.b16 %v315
    %v1799 = vunpack.c.h.b16 %v315
    %v1800 = vunpack.c.l.b16 %v316
    %v1801 = vunpack.c.h.b16 %v316
    %v1802 = vunpack.c.l.b16 %v317
    %v1803 = vunpack.c.h.b16 %v317
    %v1804 = vunpack.c.l.b16 %v318
    %v1805 = vunpack.c.h.b16 %v318
    %v1806 = vunpack.c.l.b16 %v319
    %v1807 = vunpack.c.h.b16 %v319
    %v1808 = vunpack.c.l.b16 %v320
    %v1809 = vunpack.c.h.b16 %v320
    %v1810 = vunpack.c.l.b16 %v321
    %v1811 = vunpack.c.h.b16 %v321
    %v1812 = vunpack.c.l.b16 %v322
    %v1813 = vunpack.c.h.b16 %v322
    %v1814 = vunpack.c.l.b16 %v323
    %v1815 = vunpack.c.h.b16 %v323
    %v1816 = vunpack.c.l.b16 %v324
    %v1817 = vunpack.c.h.b16 %v324
    %v1818 = vunpack.c.l.b16 %v325
    %v1819 = vunpack.c.h.b16 %v325
    %v1820 = vunpack.c.l.b16 %v326
    %v1821 = vunpack.c.h.b16 %v326
    %v1822 = vunpack.c.l.b16 %v327
    %v1823 = vunpack.c.h.b16 %v327
    %v1824 = vunpack.c.l.b16 %v328
    %v1825 = vunpack.c.h.b16 %v328
    %v1826 = vunpack.c.l.b16 %v329
    %v1827 = vunpack.c.h.b16 %v329
    %v1828 = vunpack.c.l.b16 %v330
    %v1829 = vunpack.c.h.b16 %v330
    %v1830 = vunpack.c.l.b16 %v331
    %v1831 = vunpack.c.h.b16 %v331
    %v1832 = vunpack.c.l.b16 %v332
    %v1833 = vunpack.c.h.b16 %v332
    %v1834 = vunpack.c.l.b16 %v333
    %v1835 = vunpack.c.h.b16 %v333
    %v1836 = vunpack.c.l.b16 %v334
    %v1837 = vunpack.c.h.b16 %v334
    %v1838 = vunpack.c.l.b16 %v335
    %v1839 = vunpack.c.h.b16 %v335
    %v1840 = vunpack.c.l.b16 %v336
    %v1841 = vunpack.c.h.b16 %v336
    %v1842 = vunpack.c.l.b16 %v337
    %v1843 = vunpack.c.h.b16 %v337
    %v1844 = vunpack.c.l.b16 %v338
    %v1845 = vunpack.c.h.b16 %v338
    %v1846 = vunpack.c.l.b16 %v339
    %v1847 = vunpack.c.h.b16 %v339
    %v1848 = vunpack.c.l.b16 %v340
    %v1849 = vunpack.c.h.b16 %v340
    %v1850 = vunpack.c.l.b16 %v341
    %v1851 = vunpack.c.h.b16 %v341
    %v1852 = vunpack.c.l.b16 %v342
    %v1853 = vunpack.c.h.b16 %v342
    %v1854 = vunpack.c.l.b16 %v343
    %v1855 = vunpack.c.h.b16 %v343
    %v1856 = vunpack.c.l.b16 %v344
    %v1857 = vunpack.c.h.b16 %v344
    %v1858 = vunpack.c.l.b16 %v345
    %v1859 = vunpack.c.h.b16 %v345
    %v1860 = vunpack.c.l.b16 %v346
    %v1861 = vunpack.c.h.b16 %v346
    %v1862 = vunpack.c.l.b16 %v347
    %v1863 = vunpack.c.h.b16 %v347
    %v1864 = vunpack.c.l.b16 %v348
    %v1865 = vunpack.c.h.b16 %v348
    %v1866 = vunpack.c.l.b16 %v349
    %v1867 = vunpack.c.h.b16 %v349
    %v1868 = vunpack.c.l.b16 %v350
    %v1869 = vunpack.c.h.b16 %v350
    %v1870 = vunpack.c.l.b16 %v351
    %v1871 = vunpack.c.h.b16 %v351
    %v1872 = vunpack.c.l.b16 %v352
    %v1873 = vunpack.c.h.b16 %v352
    %v1874 = vunpack.c.l.b16 %v353
    %v1875 = vunpack.c.h.b16 %v353
    %v1876 = vunpack.c.l.b16 %v354
    %v1877 = vunpack.c.h.b16 %v354
    %v1878 = vunpack.c.l.b16 %v355
    %v1879 = vunpack.c.h.b16 %v355
    %v1880 = vunpack.c.l.b16 %v356
    %v1881 = vunpack.c.h.b16 %v356
    %v1882 = vunpack.c.l.b16 %v357
    %v1883 = vunpack.c.h.b16 %v357
    %v1884 = vunpack.c.l.b16 %v358
    %v1885 = vunpack.c.h.b16 %v358
    %v1886 = vunpack.c.l.b16 %v359
    %v1887 = vunpack.c.h.b16 %v359
    %v1888 = vunpack.c.l.b16 %v360
    %v1889 = vunpack.c.h.b16 %v360
    %v1890 = vunpack.c.l.b16 %v361
    %v1891 = vunpack.c.h.b16 %v361
    %v1892 = vunpack.c.l.b16 %v362
    %v1893 = vunpack.c.h.b16 %v362
    %v1894 = vunpack.c.l.b16 %v363
    %v1895 = vunpack.c.h.b16 %v363
    %v1896 = vunpack.c.l.b16 %v364
    %v1897 = vunpack.c.h.b16 %v364
    %v1898 = vunpack.c.l.b16 %v365
    %v1899 = vunpack.c.h.b16 %v365
    %v1900 = vunpack.c.l.b16 %v366
    %v1901 = vunpack.c.h.b16 %v366
    %v1902 = vunpack.c.l.b16 %v367
    %v1903 = vunpack.c.h.b16 %v367
    %v1904 = vunpack.c.l.b16 %v368
    %v1905 = vunpack.c.h.b16 %v368
    %v1906 = vunpack.c.l.b16 %v369
    %v1907 = vunpack.c.h.b16 %v369
    %v1908 = vunpack.c.l.b16 %v370
    %v1909 = vunpack.c.h.b16 %v370
    %v1910 = vunpack.c.l.b16 %v371
    %v1911 = vunpack.c.h.b16 %v371
    %v1912 = vunpack.c.l.b16 %v372
    %v1913 = vunpack.c.h.b16 %v372
    %v1914 = vunpack.c.l.b16 %v373
    %v1915 = vunpack.c.h.b16 %v373
    %v1916 = vunpack.c.l.b16 %v374
    %v1917 = vunpack.c.h.b16 %v374
    %v1918 = vunpack.c.l.b16 %v375
    %v1919 = vunpack.c.h.b16 %v375
    %v1920 = vunpack.c.l.b16 %v376
    %v1921 = vunpack.c.h.b16 %v376
    %v1922 = vunpack.c.l.b16 %v377
    %v1923 = vunpack.c.h.b16 %v377
    %v1924 = vunpack.c.l.b16 %v378
    %v1925 = vunpack.c.h.b16 %v378
    %v1926 = vunpack.c.l.b16 %v379
    %v1927 = vunpack.c.h.b16 %v379
    %v1928 = vunpack.c.l.b16 %v380
    %v1929 = vunpack.c.h.b16 %v380
    %v1930 = vunpack.c.l.b16 %v381
    %v1931 = vunpack.c.h.b16 %v381
    %v1932 = vunpack.c.l.b16 %v382
    %v1933 = vunpack.c.h.b16 %v382
    %v1934 = vunpack.c.l.b16 %v383
    %v1935 = vunpack.c.h.b16 %v383
    %v1936 = vunpack.c.l.b16 %v384
    %v1937 = vunpack.c.h.b16 %v384
    %v1938 = vunpack.c.l.b16 %v385
    %v1939 = vunpack.c.h.b16 %v385
    %v1940 = vunpack.c.l.b16 %v386
    %v1941 = vunpack.c.h.b16 %v386
    %v1942 = vunpack.c.l.b16 %v387
    %v1943 = vunpack.c.h.b16 %v387
    %v1944 = vunpack.c.l.b16 %v388
    %v1945 = vunpack.c.h.b16 %v388
    %v1946 = vunpack.c.l.b16 %v389
    %v1947 = vunpack.c.h.b16 %v389
    %v1948 = vunpack.c.l.b16 %v390
    %v1949 = vunpack.c.h.b16 %v390
    %v1950 = vunpack.c.l.b16 %v391
    %v1951 = vunpack.c.h.b16 %v391
    %v1952 = vunpack.c.l.b16 %v392
    %v1953 = vunpack.c.h.b16 %v392
    %v1954 = vunpack.c.l.b16 %v393
    %v1955 = vunpack.c.h.b16 %v393
    %v1956 = vunpack.c.l.b16 %v394
    %v1957 = vunpack.c.h.b16 %v394
    %v1958 = vunpack.c.l.b16 %v395
    %v1959 = vunpack.c.h.b16 %v395
    %v1960 = vunpack.c.l.b16 %v396
    %v1961 = vunpack.c.h.b16 %v396
    %v1962 = vunpack.c.l.b16 %v397
    %v1963 = vunpack.c.h.b16 %v397
    %v1964 = vunpack.c.l.b16 %v398
    %v1965 = vunpack.c.h.b16 %v398
    %v1966 = vunpack.c.l.b16 %v399
    %v1967 = vunpack.c.h.b16 %v399
    %v1968 = vunpack.c.l.b16 %v400
    %v1969 = vunpack.c.h.b16 %v400
    %v1970 = vunpack.c.l.b16 %v401
    %v1971 = vunpack.c.h.b16 %v401
    %v1972 = vunpack.c.l.b16 %v402
    %v1973 = vunpack.c.h.b16 %v402
    %v1974 = vunpack.c.l.b16 %v403
    %v1975 = vunpack.c.h.b16 %v403
    %v1976 = vunpack.c.l.b16 %v404
    %v1977 = vunpack.c.h.b16 %v404
    %v1978 = vunpack.c.l.b16 %v405
    %v1979 = vunpack.c.h.b16 %v405
    %v1980 = vunpack.c.l.b16 %v406
    %v1981 = vunpack.c.h.b16 %v406
    %v1982 = vunpack.c.l.b16 %v407
    %v1983 = vunpack.c.h.b16 %v407
    %v1984 = vunpack.c.l.b16 %v408
    %v1985 = vunpack.c.h.b16 %v408
    %v1986 = vunpack.c.l.b16 %v409
    %v1987 = vunpack.c.h.b16 %v409
    %v1988 = vunpack.c.l.b16 %v410
    %v1989 = vunpack.c.h.b16 %v410
    %v1990 = vunpack.c.l.b16 %v411
    %v1991 = vunpack.c.h.b16 %v411
    %v1992 = vunpack.c.l.b16 %v412
    %v1993 = vunpack.c.h.b16 %v412
    %v1994 = vunpack.c.l.b16 %v413
    %v1995 = vunpack.c.h.b16 %v413
    %v1996 = vunpack.c.l.b16 %v414
    %v1997 = vunpack.c.h.b16 %v414
    %v1998 = vunpack.c.l.b16 %v415
    %v1999 = vunpack.c.h.b16 %v415
    %v2000 = vunpack.c.l.b16 %v416
    %v2001 = vunpack.c.h.b16 %v416
    %v2002 = vunpack.c.l.b16 %v417
    %v2003 = vunpack.c.h.b16 %v417
    %v2004 = vunpack.c.l.b16 %v418
    %v2005 = vunpack.c.h.b16 %v418
    %v2006 = vunpack.c.l.b16 %v419
    %v2007 = vunpack.c.h.b16 %v419
    %v2008 = vunpack.c.l.b16 %v420
    %v2009 = vunpack.c.h.b16 %v420
    %v2010 = vunpack.c.l.b16 %v421
    %v2011 = vunpack.c.h.b16 %v421
    %v2012 = vunpack.c.l.b16 %v422
    %v2013 = vunpack.c.h.b16 %v422
    %v2014 = vunpack.c.l.b16 %v423
    %v2015 = vunpack.c.h.b16 %v423
    %v2016 = vunpack.c.l.b16 %v424
    %v2017 = vunpack.c.h.b16 %v424
    %v2018 = vunpack.c.l.b16 %v425
    %v2019 = vunpack.c.h.b16 %v425
    %v2020 = vunpack.c.l.b16 %v426
    %v2021 = vunpack.c.h.b16 %v426
    %v2022 = vunpack.c.l.b16 %v427
    %v2023 = vunpack.c.h.b16 %v427
    %v2024 = vunpack.c.l.b16 %v428
    %v2025 = vunpack.c.h.b16 %v428
    %v2026 = vunpack.c.l.b16 %v429
    %v2027 = vunpack.c.h.b16 %v429
    %v2028 = vunpack.c.l.b16 %v430
    %v2029 = vunpack.c.h.b16 %v430
    %v2030 = vunpack.c.l.b16 %v431
    %v2031 = vunpack.c.h.b16 %v431
    %v2032 = vunpack.c.l.b16 %v432
    %v2033 = vunpack.c.h.b16 %v432
    %v2034 = vunpack.c.l.b16 %v433
    %v2035 = vunpack.c.h.b16 %v433
    %v2036 = vunpack.c.l.b16 %v434
    %v2037 = vunpack.c.h.b16 %v434
    %v2038 = vunpack.c.l.b16 %v435
    %v2039 = vunpack.c.h.b16 %v435
    %v2040 = vunpack.c.l.b16 %v436
    %v2041 = vunpack.c.h.b16 %v436
    %v2042 = vunpack.c.l.b16 %v437
    %v2043 = vunpack.c.h.b16 %v437
    %v2044 = vunpack.c.l.b16 %v438
    %v2045 = vunpack.c.h.b16 %v438
    %v2046 = vunpack.c.l.b16 %v439
    %v2047 = vunpack.c.h.b16 %v439
    %v2048 = vunpack.c.l.b16 %v440
    %v2049 = vunpack.c.h.b16 %v440
    %v2050 = vunpack.c.l.b16 %v441
    %v2051 = vunpack.c.h.b16 %v441
    %v2052 = vunpack.c.l.b16 %v442
    %v2053 = vunpack.c.h.b16 %v442
    %v2054 = vunpack.c.l.b16 %v443
    %v2055 = vunpack.c.h.b16 %v443
    %v2056 = vunpack.c.l.b16 %v444
    %v2057 = vunpack.c.h.b16 %v444
    %v2058 = vunpack.c.l.b16 %v445
    %v2059 = vunpack.c.h.b16 %v445
    %v2060 = vunpack.c.l.b16 %v446
    %v2061 = vunpack.c.h.b16 %v446
    %v2062 = vunpack.c.l.b16 %v447
    %v2063 = vunpack.c.h.b16 %v447
    %v2064 = vunpack.c.l.b16 %v448
    %v2065 = vunpack.c.h.b16 %v448
    %v2066 = vunpack.c.l.b16 %v449
    %v2067 = vunpack.c.h.b16 %v449
    %v2068 = vunpack.c.l.b16 %v450
    %v2069 = vunpack.c.h.b16 %v450
    %v2070 = vunpack.c.l.b16 %v451
    %v2071 = vunpack.c.h.b16 %v451
    %v2072 = vunpack.c.l.b16 %v452
    %v2073 = vunpack.c.h.b16 %v452
    %v2074 = vunpack.c.l.b16 %v453
    %v2075 = vunpack.c.h.b16 %v453
    %v2076 = vunpack.c.l.b16 %v454
    %v2077 = vunpack.c.h.b16 %v454
    %v2078 = vunpack.c.l.b16 %v455
    %v2079 = vunpack.c.h.b16 %v455
    %v2080 = vunpack.c.l.b16 %v456
    %v2081 = vunpack.c.h.b16 %v456
    %v2082 = vunpack.c.l.b16 %v457
    %v2083 = vunpack.c.h.b16 %v457
    %v2084 = vunpack.c.l.b16 %v458
    %v2085 = vunpack.c.h.b16 %v458
    %v2086 = vunpack.c.l.b16 %v459
    %v2087 = vunpack.c.h.b16 %v459
    %v2088 = vunpack.c.l.b16 %v460
    %v2089 = vunpack.c.h.b16 %v460
    %v2090 = vunpack.c.l.b16 %v461
    %v2091 = vunpack.c.h.b16 %v461
    %v2092 = vunpack.c.l.b16 %v462
    %v2093 = vunpack.c.h.b16 %v462
    %v2094 = vunpack.c.l.b16 %v463
    %v2095 = vunpack.c.h.b16 %v463
    %v2096 = vunpack.c.l.b16 %v464
    %v2097 = vunpack.c.h.b16 %v464
    %v2098 = vunpack.c.l.b16 %v465
    %v2099 = vunpack.c.h.b16 %v465
    %v2100 = vunpack.c.l.b16 %v466
    %v2101 = vunpack.c.h.b16 %v466
    %v2102 = vunpack.c.l.b16 %v467
    %v2103 = vunpack.c.h.b16 %v467
    %v2104 = vunpack.c.l.b16 %v468
    %v2105 = vunpack.c.h.b16 %v468
    %v2106 = vunpack.c.l.b16 %v469
    %v2107 = vunpack.c.h.b16 %v469
    %v2108 = vunpack.c.l.b16 %v470
    %v2109 = vunpack.c.h.b16 %v470
    %v2110 = vunpack.c.l.b16 %v471
    %v2111 = vunpack.c.h.b16 %v471
    %v2112 = vunpack.c.l.b16 %v472
    %v2113 = vunpack.c.h.b16 %v472
    %v2114 = vunpack.c.l.b16 %v473
    %v2115 = vunpack.c.h.b16 %v473
    %v2116 = vunpack.c.l.b16 %v474
    %v2117 = vunpack.c.h.b16 %v474
    %v2118 = vunpack.c.l.b16 %v475
    %v2119 = vunpack.c.h.b16 %v475
    %v2120 = vunpack.c.l.b16 %v476
    %v2121 = vunpack.c.h.b16 %v476
    %v2122 = vunpack.c.l.b16 %v477
    %v2123 = vunpack.c.h.b16 %v477
    %v2124 = vunpack.c.l.b16 %v478
    %v2125 = vunpack.c.h.b16 %v478
    %v2126 = vunpack.c.l.b16 %v479
    %v2127 = vunpack.c.h.b16 %v479
    %v2128 = vunpack.c.l.b16 %v480
    %v2129 = vunpack.c.h.b16 %v480
    %v2130 = vunpack.c.l.b16 %v481
    %v2131 = vunpack.c.h.b16 %v481
    %v2132 = vunpack.c.l.b16 %v482
    %v2133 = vunpack.c.h.b16 %v482
    %v2134 = vunpack.c.l.b16 %v483
    %v2135 = vunpack.c.h.b16 %v483
    %v2136 = vunpack.c.l.b16 %v484
    %v2137 = vunpack.c.h.b16 %v484
    %v2138 = vunpack.c.l.b16 %v485
    %v2139 = vunpack.c.h.b16 %v485
    %v2140 = vunpack.c.l.b16 %v486
    %v2141 = vunpack.c.h.b16 %v486
    %v2142 = vunpack.c.l.b16 %v487
    %v2143 = vunpack.c.h.b16 %v487
    %v2144 = vunpack.c.l.b16 %v488
    %v2145 = vunpack.c.h.b16 %v488
    %v2146 = vunpack.c.l.b16 %v489
    %v2147 = vunpack.c.h.b16 %v489
    %v2148 = vunpack.c.l.b16 %v490
    %v2149 = vunpack.c.h.b16 %v490
    %v2150 = vunpack.c.l.b16 %v491
    %v2151 = vunpack.c.h.b16 %v491
    %v2152 = vunpack.c.l.b16 %v492
    %v2153 = vunpack.c.h.b16 %v492
    %v2154 = vunpack.c.l.b16 %v493
    %v2155 = vunpack.c.h.b16 %v493
    %v2156 = vunpack.c.l.b16 %v494
    %v2157 = vunpack.c.h.b16 %v494
    %v2158 = vunpack.c.l.b16 %v495
    %v2159 = vunpack.c.h.b16 %v495
    %v2160 = vunpack.c.l.b16 %v496
    %v2161 = vunpack.c.h.b16 %v496
    %v2162 = vunpack.c.l.b16 %v497
    %v2163 = vunpack.c.h.b16 %v497
    %v2164 = vunpack.c.l.b16 %v498
    %v2165 = vunpack.c.h.b16 %v498
    %v2166 = vunpack.c.l.b16 %v499
    %v2167 = vunpack.c.h.b16 %v499
    %v2168 = vunpack.c.l.b16 %v500
    %v2169 = vunpack.c.h.b16 %v500
    %v2170 = vunpack.c.l.b16 %v501
    %v2171 = vunpack.c.h.b16 %v501
    %v2172 = vunpack.c.l.b16 %v502
    %v2173 = vunpack.c.h.b16 %v502
    %v2174 = vunpack.c.l.b16 %v503
    %v2175 = vunpack.c.h.b16 %v503
    %v2176 = vunpack.c.l.b16 %v504
    %v2177 = vunpack.c.h.b16 %v504
    %v2178 = vunpack.c.l.b16 %v505
    %v2179 = vunpack.c.h.b16 %v505
    %v2180 = vunpack.c.l.b16 %v506
    %v2181 = vunpack.c.h.b16 %v506
    %v2182 = vunpack.c.l.b16 %v507
    %v2183 = vunpack.c.h.b16 %v507
    %v2184 = vunpack.c.l.b16 %v508
    %v2185 = vunpack.c.h.b16 %v508
    %v2186 = vunpack.c.l.b16 %v509
    %v2187 = vunpack.c.h.b16 %v509
    %v2188 = vunpack.c.l.b16 %v510
    %v2189 = vunpack.c.h.b16 %v510
    %v2190 = vunpack.c.l.b16 %v511
    %v2191 = vunpack.c.h.b16 %v511
    %v2192 = vunpack.c.l.b16 %v512
    %v2193 = vunpack.c.h.b16 %v512
    %v2194 = vunpack.c.l.b16 %v513
    %v2195 = vunpack.c.h.b16 %v513
    %v2196 = vunpack.c.l.b16 %v514
    %v2197 = vunpack.c.h.b16 %v514
    %v2198 = vunpack.c.l.b16 %v515
    %v2199 = vunpack.c.h.b16 %v515
    %v2200 = vunpack.c.l.b16 %v516
    %v2201 = vunpack.c.h.b16 %v516
    %v2202 = vunpack.c.l.b16 %v517
    %v2203 = vunpack.c.h.b16 %v517
    %v2204 = vunpack.c.l.b16 %v518
    %v2205 = vunpack.c.h.b16 %v518
    %v2206 = vunpack.c.l.b16 %v519
    %v2207 = vunpack.c.h.b16 %v519
    %v2208 = vunpack.c.l.b16 %v520
    %v2209 = vunpack.c.h.b16 %v520
    %v2210 = vunpack.c.l.b16 %v521
    %v2211 = vunpack.c.h.b16 %v521
    %v2212 = vunpack.c.l.b16 %v522
    %v2213 = vunpack.c.h.b16 %v522
    %v2214 = vunpack.c.l.b16 %v523
    %v2215 = vunpack.c.h.b16 %v523
    %v2216 = vunpack.c.l.b16 %v524
    %v2217 = vunpack.c.h.b16 %v524
    %v2218 = vunpack.c.l.b16 %v525
    %v2219 = vunpack.c.h.b16 %v525
    %v2220 = vunpack.c.l.b16 %v526
    %v2221 = vunpack.c.h.b16 %v526
    %v2222 = vunpack.c.l.b16 %v527
    %v2223 = vunpack.c.h.b16 %v527
    %v2224 = vunpack.c.l.b16 %v528
    %v2225 = vunpack.c.h.b16 %v528
    %v2226 = vunpack.c.l.b16 %v529
    %v2227 = vunpack.c.h.b16 %v529
    %v2228 = vunpack.c.l.b16 %v530
    %v2229 = vunpack.c.h.b16 %v530
    %v2230 = vunpack.c.l.b16 %v531
    %v2231 = vunpack.c.h.b16 %v531
    %v2232 = vunpack.c.l.b16 %v532
    %v2233 = vunpack.c.h.b16 %v532
    %v2234 = vunpack.c.l.b16 %v533
    %v2235 = vunpack.c.h.b16 %v533
    %v2236 = vunpack.c.l.b16 %v534
    %v2237 = vunpack.c.h.b16 %v534
    %v2238 = vunpack.c.l.b16 %v535
    %v2239 = vunpack.c.h.b16 %v535
    %v2240 = vunpack.c.l.b16 %v536
    %v2241 = vunpack.c.h.b16 %v536
    %v2242 = vunpack.c.l.b16 %v537
    %v2243 = vunpack.c.h.b16 %v537
    %v2244 = vunpack.c.l.b16 %v538
    %v2245 = vunpack.c.h.b16 %v538
    %v2246 = vunpack.c.l.b16 %v539
    %v2247 = vunpack.c.h.b16 %v539
    %v2248 = vunpack.c.l.b16 %v540
    %v2249 = vunpack.c.h.b16 %v540
    %v2250 = vunpack.c.l.b16 %v541
    %v2251 = vunpack.c.h.b16 %v541
    %v2252 = vunpack.c.l.b16 %v542
    %v2253 = vunpack.c.h.b16 %v542
    %v2254 = vunpack.c.l.b16 %v543
    %v2255 = vunpack.c.h.b16 %v543
    %v2256 = vunpack.c.l.b16 %v544
    %v2257 = vunpack.c.h.b16 %v544
    %v2258 = vunpack.c.l.b16 %v545
    %v2259 = vunpack.c.h.b16 %v545
    %v2260 = vunpack.c.l.b16 %v546
    %v2261 = vunpack.c.h.b16 %v546
    %v2262 = vunpack.c.l.b16 %v547
    %v2263 = vunpack.c.h.b16 %v547
    %v2264 = vunpack.c.l.b16 %v548
    %v2265 = vunpack.c.h.b16 %v548
    %v2266 = vunpack.c.l.b16 %v549
    %v2267 = vunpack.c.h.b16 %v549
    %v2268 = vunpack.c.l.b16 %v550
    %v2269 = vunpack.c.h.b16 %v550
    %v2270 = vunpack.c.l.b16 %v551
    %v2271 = vunpack.c.h.b16 %v551
    %v2272 = vunpack.c.l.b16 %v552
    %v2273 = vunpack.c.h.b16 %v552
    %v2274 = vunpack.c.l.b16 %v553
    %v2275 = vunpack.c.h.b16 %v553
    %v2276 = vunpack.c.l.b16 %v554
    %v2277 = vunpack.c.h.b16 %v554
    %v2278 = vunpack.c.l.b16 %v555
    %v2279 = vunpack.c.h.b16 %v555
    %v2280 = vunpack.c.l.b16 %v556
    %v2281 = vunpack.c.h.b16 %v556
    %v2282 = vunpack.c.l.b16 %v557
    %v2283 = vunpack.c.h.b16 %v557
    %v2284 = vunpack.c.l.b16 %v558
    %v2285 = vunpack.c.h.b16 %v558
    %v2286 = vunpack.c.l.b16 %v559
    %v2287 = vunpack.c.h.b16 %v559
    %v2288 = vunpack.c.l.b16 %v560
    %v2289 = vunpack.c.h.b16 %v560
    %v2290 = vunpack.c.l.b16 %v561
    %v2291 = vunpack.c.h.b16 %v561
    %v2292 = vunpack.c.l.b16 %v562
    %v2293 = vunpack.c.h.b16 %v562
    %v2294 = vunpack.c.l.b16 %v563
    %v2295 = vunpack.c.h.b16 %v563
    %v2296 = vunpack.c.l.b16 %v564
    %v2297 = vunpack.c.h.b16 %v564
    %v2298 = vunpack.c.l.b16 %v565
    %v2299 = vunpack.c.h.b16 %v565
    %v2300 = vunpack.c.l.b16 %v566
    %v2301 = vunpack.c.h.b16 %v566
    %v2302 = vunpack.c.l.b16 %v567
    %v2303 = vunpack.c.h.b16 %v567
    %v2304 = vunpack.c.l.b16 %v568
    %v2305 = vunpack.c.h.b16 %v568
    %v2306 = vunpack.c.l.b16 %v569
    %v2307 = vunpack.c.h.b16 %v569
    %v2308 = vpack.c.b16 %v1234, %v1228
    %v2309 = vpack.c.b16 %v1235, %v1229
    %v2310 = vpack.c.b16 %v1236, %v1230
    %v2311 = vpack.c.b16 %v1237, %v1231
    %v2312 = vpack.c.b16 %v1238, %v1232
    %v2313 = vpack.c.b16 %v1239, %v1233
    %v2314 = vpack.c.b16 %v1246, %v1240
    %v2315 = vpack.c.b16 %v1247, %v1241
    %v2316 = vpack.c.b16 %v1248, %v1242
    %v2317 = vpack.c.b16 %v1249, %v1243
    %v2318 = vpack.c.b16 %v1250, %v1244
    %v2319 = vpack.c.b16 %v1251, %v1245
    %v2320 = vpack.c.b16 %v1258, %v1252
    %v2321 = vpack.c.b16 %v1259, %v1253
    %v2322 = vpack.c.b16 %v1260, %v1254
    %v2323 = vpack.c.b16 %v1261, %v1255
    %v2324 = vpack.c.b16 %v1262, %v1256
    %v2325 = vpack.c.b16 %v1263, %v1257
    %v2326 = vpack.c.b16 %v1270, %v1264
    %v2327 = vpack.c.b16 %v1271, %v1265
    %v2328 = vpack.c.b16 %v1272, %v1266
    %v2329 = vpack.c.b16 %v1273, %v1267
    %v2330 = vpack.c.b16 %v1274, %v1268
    %v2331 = vpack.c.b16 %v1275, %v1269
    %v2332 = vpack.c.b16 %v1282, %v1276
    %v2333 = vpack.c.b16 %v1283, %v1277
    %v2334 = vpack.c.b16 %v1284, %v1278
    %v2335 = vpack.c.b16 %v1285, %v1279
    %v2336 = vpack.c.b16 %v1286, %v1280
    %v2337 = vpack.c.b16 %v1287, %v1281
    %v2338 = vpack.c.b16 %v1294, %v1288
    %v2339 = vpack.c.b16 %v1295, %v1289
    %v2340 = vpack.c.b16 %v1296, %v1290
    %v2341 = vpack.c.b16 %v1297, %v1291
    %v2342 = vpack.c.b16 %v1298, %v1292
    %v2343 = vpack.c.b16 %v1299, %v1293
    %v2344 = vpack.c.b16 %v1306, %v1300
    %v2345 = vpack.c.b16 %v1307, %v1301
    %v2346 = vpack.c.b16 %v1308, %v1302
    %v2347 = vpack.c.b16 %v1309, %v1303
    %v2348 = vpack.c.b16 %v1310, %v1304
    %v2349 = vpack.c.b16 %v1311, %v1305
    %v2350 = vpack.c.b16 %v1318, %v1312
    %v2351 = vpack.c.b16 %v1319, %v1313
    %v2352 = vpack.c.b16 %v1320, %v1314
    %v2353 = vpack.c.b16 %v1321, %v1315
    %v2354 = vpack.c.b16 %v1322, %v1316
    %v2355 = vpack.c.b16 %v1323, %v1317
    %v2356 = vpack.c.b16 %v1330, %v1324
    %v2357 = vpack.c.b16 %v1331, %v1325
    %v2358 = vpack.c.b16 %v1332, %v1326
    %v2359 = vpack.c.b16 %v1333, %v1327
    %v2360 = vpack.c.b16 %v1334, %v1328
    %v2361 = vpack.c.b16 %v1335, %v1329
    %v2362 = vpack.c.b16 %v1342, %v1336
    %v2363 = vpack.c.b16 %v1343, %v1337
    %v2364 = vpack.c.b16 %v1344, %v1338
    %v2365 = vpack.c.b16 %v1345, %v1339
    %v2366 = vpack.c.b16 %v1346, %v1340
    %v2367 = vpack.c.b16 %v1347, %v1341
    %v2368 = vpack.c.b16 %v1354, %v1348
    %v2369 = vpack.c.b16 %v1355, %v1349
    %v2370 = vpack.c.b16 %v1356, %v1350
    %v2371 = vpack.c.b16 %v1357, %v1351
    %v2372 = vpack.c.b16 %v1358, %v1352
    %v2373 = vpack.c.b16 %v1359, %v1353
    %v2374 = vpack.c.b16 %v1366, %v1360
    %v2375 = vpack.c.b16 %v1367, %v1361
    %v2376 = vpack.c.b16 %v1368, %v1362
    %v2377 = vpack.c.b16 %v1369, %v1363
    %v2378 = vpack.c.b16 %v1370, %v1364
    %v2379 = vpack.c.b16 %v1371, %v1365
    %v2380 = vpack.c.b16 %v1378, %v1372
    %v2381 = vpack.c.b16 %v1379, %v1373
    %v2382 = vpack.c.b16 %v1380, %v1374
    %v2383 = vpack.c.b16 %v1381, %v1375
    %v2384 = vpack.c.b16 %v1382, %v1376
    %v2385 = vpack.c.b16 %v1383, %v1377
    %v2386 = vpack.c.b16 %v1390, %v1384
    %v2387 = vpack.c.b16 %v1391, %v1385
    %v2388 = vpack.c.b16 %v1392, %v1386
    %v2389 = vpack.c.b16 %v1393, %v1387
    %v2390 = vpack.c.b16 %v1394, %v1388
    %v2391 = vpack.c.b16 %v1395, %v1389
    %v2392 = vpack.c.b16 %v1402, %v1396
    %v2393 = vpack.c.b16 %v1403, %v1397
    %v2394 = vpack.c.b16 %v1404, %v1398
    %v2395 = vpack.c.b16 %v1405, %v1399
    %v2396 = vpack.c.b16 %v1406, %v1400
    %v2397 = vpack.c.b16 %v1407, %v1401
    %v2398 = vpack.c.b16 %v1414, %v1408
    %v2399 = vpack.c.b16 %v1415, %v1409
    %v2400 = vpack.c.b16 %v1416, %v1410
    %v2401 = vpack.c.b16 %v1417, %v1411
    %v2402 = vpack.c.b16 %v1418, %v1412
    %v2403 = vpack.c.b16 %v1419, %v1413
    %v2404 = vpack.c.b16 %v1426, %v1420
    %v2405 = vpack.c.b16 %v1427, %v1421
    %v2406 = vpack.c.b16 %v1428, %v1422
    %v2407 = vpack.c.b16 %v1429, %v1423
    %v2408 = vpack.c.b16 %v1430, %v1424
    %v2409 = vpack.c.b16 %v1431, %v1425
    %v2410 = vpack.c.b16 %v1438, %v1432
    %v2411 = vpack.c.b16 %v1439, %v1433
    %v2412 = vpack.c.b16 %v1440, %v1434
    %v2413 = vpack.c.b16 %v1441, %v1435
    %v2414 = vpack.c.b16 %v1442, %v1436
    %v2415 = vpack.c.b16 %v1443, %v1437
    %v2416 = vpack.c.b16 %v1450, %v1444
    %v2417 = vpack.c.b16 %v1451, %v1445
    %v2418 = vpack.c.b16 %v1452, %v1446
    %v2419 = vpack.c.b16 %v1453, %v1447
    %v2420 = vpack.c.b16 %v1454, %v1448
    %v2421 = vpack.c.b16 %v1455, %v1449
    %v2422 = vpack.c.b16 %v1462, %v1456
    %v2423 = vpack.c.b16 %v1463, %v1457
    %v2424 = vpack.c.b16 %v1464, %v1458
    %v2425 = vpack.c.b16 %v1465, %v1459
    %v2426 = vpack.c.b16 %v1466, %v1460
    %v2427 = vpack.c.b16 %v1467, %v1461
    %v2428 = vpack.c.b16 %v1474, %v1468
    %v2429 = vpack.c.b16 %v1475, %v1469
    %v2430 = vpack.c.b16 %v1476, %v1470
    %v2431 = vpack.c.b16 %v1477, %v1471
    %v2432 = vpack.c.b16 %v1478, %v1472
    %v2433 = vpack.c.b16 %v1479, %v1473
    %v2434 = vpack.c.b16 %v1486, %v1480
    %v2435 = vpack.c.b16 %v1487, %v1481
    %v2436 = vpack.c.b16 %v1488, %v1482
    %v2437 = vpack.c.b16 %v1489, %v1483
    %v2438 = vpack.c.b16 %v1490, %v1484
    %v2439 = vpack.c.b16 %v1491, %v1485
    %v2440 = vpack.c.b16 %v1498, %v1492
    %v2441 = vpack.c.b16 %v1499, %v1493
    %v2442 = vpack.c.b16 %v1500, %v1494
    %v2443 = vpack.c.b16 %v1501, %v1495
    %v2444 = vpack.c.b16 %v1502, %v1496
    %v2445 = vpack.c.b16 %v1503, %v1497
    %v2446 = vpack.c.b16 %v1510, %v1504
    %v2447 = vpack.c.b16 %v1511, %v1505
    %v2448 = vpack.c.b16 %v1512, %v1506
    %v2449 = vpack.c.b16 %v1513, %v1507
    %v2450 = vpack.c.b16 %v1514, %v1508
    %v2451 = vpack.c.b16 %v1515, %v1509
    %v2452 = vpack.c.b16 %v1522, %v1516
    %v2453 = vpack.c.b16 %v1523, %v1517
    %v2454 = vpack.c.b16 %v1524, %v1518
    %v2455 = vpack.c.b16 %v1525, %v1519
    %v2456 = vpack.c.b16 %v1526, %v1520
    %v2457 = vpack.c.b16 %v1527, %v1521
    %v2458 = vpack.c.b16 %v1534, %v1528
    %v2459 = vpack.c.b16 %v1535, %v1529
    %v2460 = vpack.c.b16 %v1536, %v1530
    %v2461 = vpack.c.b16 %v1537, %v1531
    %v2462 = vpack.c.b16 %v1538, %v1532
    %v2463 = vpack.c.b16 %v1539, %v1533
    %v2464 = vpack.c.b16 %v1546, %v1540
    %v2465 = vpack.c.b16 %v1547, %v1541
    %v2466 = vpack.c.b16 %v1548, %v1542
    %v2467 = vpack.c.b16 %v1549, %v1543
    %v2468 = vpack.c.b16 %v1550, %v1544
    %v2469 = vpack.c.b16 %v1551, %v1545
    %v2470 = vpack.c.b16 %v1558, %v1552
    %v2471 = vpack.c.b16 %v1559, %v1553
    %v2472 = vpack.c.b16 %v1560, %v1554
    %v2473 = vpack.c.b16 %v1561, %v1555
    %v2474 = vpack.c.b16 %v1562, %v1556
    %v2475 = vpack.c.b16 %v1563, %v1557
    %v2476 = vpack.c.b16 %v1570, %v1564
    %v2477 = vpack.c.b16 %v1571, %v1565
    %v2478 = vpack.c.b16 %v1572, %v1566
    %v2479 = vpack.c.b16 %v1573, %v1567
    %v2480 = vpack.c.b16 %v1574, %v1568
    %v2481 = vpack.c.b16 %v1575, %v1569
    %v2482 = vpack.c.b16 %v1582, %v1576
    %v2483 = vpack.c.b16 %v1583, %v1577
    %v2484 = vpack.c.b16 %v1584, %v1578
    %v2485 = vpack.c.b16 %v1585, %v1579
    %v2486 = vpack.c.b16 %v1586, %v1580
    %v2487 = vpack.c.b16 %v1587, %v1581
    %v2488 = vpack.c.b16 %v1594, %v1588
    %v2489 = vpack.c.b16 %v1595, %v1589
    %v2490 = vpack.c.b16 %v1596, %v1590
    %v2491 = vpack.c.b16 %v1597, %v1591
    %v2492 = vpack.c.b16 %v1598, %v1592
    %v2493 = vpack.c.b16 %v1599, %v1593
    %v2494 = vpack.c.b16 %v1606, %v1600
    %v2495 = vpack.c.b16 %v1607, %v1601
    %v2496 = vpack.c.b16 %v1608, %v1602
    %v2497 = vpack.c.b16 %v1609, %v1603
    %v2498 = vpack.c.b16 %v1610, %v1604
    %v2499 = vpack.c.b16 %v1611, %v1605
    %v2500 = vpack.c.b16 %v1618, %v1612
    %v2501 = vpack.c.b16 %v1619, %v1613
    %v2502 = vpack.c.b16 %v1620, %v1614
    %v2503 = vpack.c.b16 %v1621, %v1615
    %v2504 = vpack.c.b16 %v1622, %v1616
    %v2505 = vpack.c.b16 %v1623, %v1617
    %v2506 = vpack.c.b16 %v1630, %v1624
    %v2507 = vpack.c.b16 %v1631, %v1625
    %v2508 = vpack.c.b16 %v1632, %v1626
    %v2509 = vpack.c.b16 %v1633, %v1627
    %v2510 = vpack.c.b16 %v1634, %v1628
    %v2511 = vpack.c.b16 %v1635, %v1629
    %v2512 = vpack.c.b16 %v1642, %v1636
    %v2513 = vpack.c.b16 %v1643, %v1637
    %v2514 = vpack.c.b16 %v1644, %v1638
    %v2515 = vpack.c.b16 %v1645, %v1639
    %v2516 = vpack.c.b16 %v1646, %v1640
    %v2517 = vpack.c.b16 %v1647, %v1641
    %v2518 = vpack.c.b16 %v1654, %v1648
    %v2519 = vpack.c.b16 %v1655, %v1649
    %v2520 = vpack.c.b16 %v1656, %v1650
    %v2521 = vpack.c.b16 %v1657, %v1651
    %v2522 = vpack.c.b16 %v1658, %v1652
    %v2523 = vpack.c.b16 %v1659, %v1653
    %v2524 = vpack.c.b16 %v1666, %v1660
    %v2525 = vpack.c.b16 %v1667, %v1661
    %v2526 = vpack.c.b16 %v1668, %v1662
    %v2527 = vpack.c.b16 %v1669, %v1663
    %v2528 = vpack.c.b16 %v1670, %v1664
    %v2529 = vpack.c.b16 %v1671, %v1665
    %v2530 = vpack.c.b16 %v1678, %v1672
    %v2531 = vpack.c.b16 %v1679, %v1673
    %v2532 = vpack.c.b16 %v1680, %v1674
    %v2533 = vpack.c.b16 %v1681, %v1675
    %v2534 = vpack.c.b16 %v1682, %v1676
    %v2535 = vpack.c.b16 %v1683, %v1677
    %v2536 = vpack.c.b16 %v1690, %v1684
    %v2537 = vpack.c.b16 %v1691, %v1685
    %v2538 = vpack.c.b16 %v1692, %v1686
    %v2539 = vpack.c.b16 %v1693, %v1687
    %v2540 = vpack.c.b16 %v1694, %v1688
    %v2541 = vpack.c.b16 %v1695, %v1689
    %v2542 = vpack.c.b16 %v1702, %v1696
    %v2543 = vpack.c.b16 %v1703, %v1697
    %v2544 = vpack.c.b16 %v1704, %v1698
    %v2545 = vpack.c.b16 %v1705, %v1699
    %v2546 = vpack.c.b16 %v1706, %v1700
    %v2547 = vpack.c.b16 %v1707, %v1701
    %v2548 = vpack.c.b16 %v1714, %v1708
    %v2549 = vpack.c.b16 %v1715, %v1709
    %v2550 = vpack.c.b16 %v1716, %v1710
    %v2551 = vpack.c.b16 %v1717, %v1711
    %v2552 = vpack.c.b16 %v1718, %v1712
    %v2553 = vpack.c.b16 %v1719, %v1713
    %v2554 = vpack.c.b16 %v1726, %v1720
    %v2555 = vpack.c.b16 %v1727, %v1721
    %v2556 = vpack.c.b16 %v1728, %v1722
    %v2557 = vpack.c.b16 %v1729, %v1723
    %v2558 = vpack.c.b16 %v1730, %v1724
    %v2559 = vpack.c.b16 %v1731, %v1725
    %v2560 = vpack.c.b16 %v1738, %v1732
    %v2561 = vpack.c.b16 %v1739, %v1733
    %v2562 = vpack.c.b16 %v1740, %v1734
    %v2563 = vpack.c.b16 %v1741, %v1735
    %v2564 = vpack.c.b16 %v1742, %v1736
    %v2565 = vpack.c.b16 %v1743, %v1737
    %v2566 = vpack.c.b16 %v1750, %v1744
    %v2567 = vpack.c.b16 %v1751, %v1745
    %v2568 = vpack.c.b16 %v1752, %v1746
    %v2569 = vpack.c.b16 %v1753, %v1747
    %v2570 = vpack.c.b16 %v1754, %v1748
    %v2571 = vpack.c.b16 %v1755, %v1749
    %v2572 = vpack.c.b16 %v1762, %v1756
    %v2573 = vpack.c.b16 %v1763, %v1757
    %v2574 = vpack.c.b16 %v1764, %v1758
    %v2575 = vpack.c.b16 %v1765, %v1759
    %v2576 = vpack.c.b16 %v1766, %v1760
    %v2577 = vpack.c.b16 %v1767, %v1761
    %v2578 = vpack.c.b16 %v1774, %v1768
    %v2579 = vpack.c.b16 %v1775, %v1769
    %v2580 = vpack.c.b16 %v1776, %v1770
    %v2581 = vpack.c.b16 %v1777, %v1771
    %v2582 = vpack.c.b16 %v1778, %v1772
    %v2583 = vpack.c.b16 %v1779, %v1773
    %v2584 = vpack.c.b16 %v1786, %v1780
    %v2585 = vpack.c.b16 %v1787, %v1781
    %v2586 = vpack.c.b16 %v1788, %v1782
    %v2587 = vpack.c.b16 %v1789, %v1783
    %v2588 = vpack.c.b16 %v1790, %v1784
    %v2589 = vpack.c.b16 %v1791, %v1785
    %v2590 = vpack.c.b16 %v1798, %v1792
    %v2591 = vpack.c.b16 %v1799, %v1793
    %v2592 = vpack.c.b16 %v1800, %v1794
    %v2593 = vpack.c.b16 %v1801, %v1795
    %v2594 = vpack.c.b16 %v1802, %v1796
    %v2595 = vpack.c.b16 %v1803, %v1797
    %v2596 = vpack.c.b16 %v1810, %v1804
    %v2597 = vpack.c.b16 %v1811, %v1805
    %v2598 = vpack.c.b16 %v1812, %v1806
    %v2599 = vpack.c.b16 %v1813, %v1807
    %v2600 = vpack.c.b16 %v1814, %v1808
    %v2601 = vpack.c.b16 %v1815, %v1809
    %v2602 = vpack.c.b16 %v1822, %v1816
    %v2603 = vpack.c.b16 %v1823, %v1817
    %v2604 = vpack.c.b16 %v1824, %v1818
    %v2605 = vpack.c.b16 %v1825, %v1819
    %v2606 = vpack.c.b16 %v1826, %v1820
    %v2607 = vpack.c.b16 %v1827, %v1821
    %v2608 = vpack.c.b16 %v1834, %v1828
    %v2609 = vpack.c.b16 %v1835, %v1829
    %v2610 = vpack.c.b16 %v1836, %v1830
    %v2611 = vpack.c.b16 %v1837, %v1831
    %v2612 = vpack.c.b16 %v1838, %v1832
    %v2613 = vpack.c.b16 %v1839, %v1833
    %v2614 = vpack.c.b16 %v1846, %v1840
    %v2615 = vpack.c.b16 %v1847, %v1841
    %v2616 = vpack.c.b16 %v1848, %v1842
    %v2617 = vpack.c.b16 %v1849, %v1843
    %v2618 = vpack.c.b16 %v1850, %v1844
    %v2619 = vpack.c.b16 %v1851, %v1845
    %v2620 = vpack.c.b16 %v1858, %v1852
    %v2621 = vpack.c.b16 %v1859, %v1853
    %v2622 = vpack.c.b16 %v1860, %v1854
    %v2623 = vpack.c.b16 %v1861, %v1855
    %v2624 = vpack.c.b16 %v1862, %v1856
    %v2625 = vpack.c.b16 %v1863, %v1857
    %v2626 = vpack.c.b16 %v1870, %v1864
    %v2627 = vpack.c.b16 %v1871, %v1865
    %v2628 = vpack.c.b16 %v1872, %v1866
    %v2629 = vpack.c.b16 %v1873, %v1867
    %v2630 = vpack.c.b16 %v1874, %v1868
    %v2631 = vpack.c.b16 %v1875, %v1869
    %v2632 = vpack.c.b16 %v1882, %v1876
    %v2633 = vpack.c.b16 %v1883, %v1877
    %v2634 = vpack.c.b16 %v1884, %v1878
    %v2635 = vpack.c.b16 %v1885, %v1879
    %v2636 = vpack.c.b16 %v1886, %v1880
    %v2637 = vpack.c.b16 %v1887, %v1881
    %v2638 = vpack.c.b16 %v1894, %v1888
    %v2639 = vpack.c.b16 %v1895, %v1889
    %v2640 = vpack.c.b16 %v1896, %v1890
    %v2641 = vpack.c.b16 %v1897, %v1891
    %v2642 = vpack.c.b16 %v1898, %v1892
    %v2643 = vpack.c.b16 %v1899, %v1893
    %v2644 = vpack.c.b16 %v1906, %v1900
    %v2645 = vpack.c.b16 %v1907, %v1901
    %v2646 = vpack.c.b16 %v1908, %v1902
    %v2647 = vpack.c.b16 %v1909, %v1903
    %v2648 = vpack.c.b16 %v1910, %v1904
    %v2649 = vpack.c.b16 %v1911, %v1905
    %v2650 = vpack.c.b16 %v1918, %v1912
    %v2651 = vpack.c.b16 %v1919, %v1913
    %v2652 = vpack.c.b16 %v1920, %v1914
    %v2653 = vpack.c.b16 %v1921, %v1915
    %v2654 = vpack.c.b16 %v1922, %v1916
    %v2655 = vpack.c.b16 %v1923, %v1917
    %v2656 = vpack.c.b16 %v1930, %v1924
    %v2657 = vpack.c.b16 %v1931, %v1925
    %v2658 = vpack.c.b16 %v1932, %v1926
    %v2659 = vpack.c.b16 %v1933, %v1927
    %v2660 = vpack.c.b16 %v1934, %v1928
    %v2661 = vpack.c.b16 %v1935, %v1929
    %v2662 = vpack.c.b16 %v1942, %v1936
    %v2663 = vpack.c.b16 %v1943, %v1937
    %v2664 = vpack.c.b16 %v1944, %v1938
    %v2665 = vpack.c.b16 %v1945, %v1939
    %v2666 = vpack.c.b16 %v1946, %v1940
    %v2667 = vpack.c.b16 %v1947, %v1941
    %v2668 = vpack.c.b16 %v1954, %v1948
    %v2669 = vpack.c.b16 %v1955, %v1949
    %v2670 = vpack.c.b16 %v1956, %v1950
    %v2671 = vpack.c.b16 %v1957, %v1951
    %v2672 = vpack.c.b16 %v1958, %v1952
    %v2673 = vpack.c.b16 %v1959, %v1953
    %v2674 = vpack.c.b16 %v1966, %v1960
    %v2675 = vpack.c.b16 %v1967, %v1961
    %v2676 = vpack.c.b16 %v1968, %v1962
    %v2677 = vpack.c.b16 %v1969, %v1963
    %v2678 = vpack.c.b16 %v1970, %v1964
    %v2679 = vpack.c.b16 %v1971, %v1965
    %v2680 = vpack.c.b16 %v1978, %v1972
    %v2681 = vpack.c.b16 %v1979, %v1973
    %v2682 = vpack.c.b16 %v1980, %v1974
    %v2683 = vpack.c.b16 %v1981, %v1975
    %v2684 = vpack.c.b16 %v1982, %v1976
    %v2685 = vpack.c.b16 %v1983, %v1977
    %v2686 = vpack.c.b16 %v1990, %v1984
    %v2687 = vpack.c.b16 %v1991, %v1985
    %v2688 = vpack.c.b16 %v1992, %v1986
    %v2689 = vpack.c.b16 %v1993, %v1987
    %v2690 = vpack.c.b16 %v1994, %v1988
    %v2691 = vpack.c.b16 %v1995, %v1989
    %v2692 = vpack.c.b16 %v2002, %v1996
    %v2693 = vpack.c.b16 %v2003, %v1997
    %v2694 = vpack.c.b16 %v2004, %v1998
    %v2695 = vpack.c.b16 %v2005, %v1999
    %v2696 = vpack.c.b16 %v2006, %v2000
    %v2697 = vpack.c.b16 %v2007, %v2001
    %v2698 = vpack.c.b16 %v2014, %v2008
    %v2699 = vpack.c.b16 %v2015, %v2009
    %v2700 = vpack.c.b16 %v2016, %v2010
    %v2701 = vpack.c.b16 %v2017, %v2011
    %v2702 = vpack.c.b16 %v2018, %v2012
    %v2703 = vpack.c.b16 %v2019, %v2013
    %v2704 = vpack.c.b16 %v2026, %v2020
    %v2705 = vpack.c.b16 %v2027, %v2021
    %v2706 = vpack.c.b16 %v2028, %v2022
    %v2707 = vpack.c.b16 %v2029, %v2023
    %v2708 = vpack.c.b16 %v2030, %v2024
    %v2709 = vpack.c.b16 %v2031, %v2025
    %v2710 = vpack.c.b16 %v2038, %v2032
    %v2711 = vpack.c.b16 %v2039, %v2033
    %v2712 = vpack.c.b16 %v2040, %v2034
    %v2713 = vpack.c.b16 %v2041, %v2035
    %v2714 = vpack.c.b16 %v2042, %v2036
    %v2715 = vpack.c.b16 %v2043, %v2037
    %v2716 = vpack.c.b16 %v2050, %v2044
    %v2717 = vpack.c.b16 %v2051, %v2045
    %v2718 = vpack.c.b16 %v2052, %v2046
    %v2719 = vpack.c.b16 %v2053, %v2047
    %v2720 = vpack.c.b16 %v2054, %v2048
    %v2721 = vpack.c.b16 %v2055, %v2049
    %v2722 = vpack.c.b16 %v2062, %v2056
    %v2723 = vpack.c.b16 %v2063, %v2057
    %v2724 = vpack.c.b16 %v2064, %v2058
    %v2725 = vpack.c.b16 %v2065, %v2059
    %v2726 = vpack.c.b16 %v2066, %v2060
    %v2727 = vpack.c.b16 %v2067, %v2061
    %v2728 = vpack.c.b16 %v2074, %v2068
    %v2729 = vpack.c.b16 %v2075, %v2069
    %v2730 = vpack.c.b16 %v2076, %v2070
    %v2731 = vpack.c.b16 %v2077, %v2071
    %v2732 = vpack.c.b16 %v2078, %v2072
    %v2733 = vpack.c.b16 %v2079, %v2073
    %v2734 = vpack.c.b16 %v2086, %v2080
    %v2735 = vpack.c.b16 %v2087, %v2081
    %v2736 = vpack.c.b16 %v2088, %v2082
    %v2737 = vpack.c.b16 %v2089, %v2083
    %v2738 = vpack.c.b16 %v2090, %v2084
    %v2739 = vpack.c.b16 %v2091, %v2085
    %v2740 = vpack.c.b16 %v2098, %v2092
    %v2741 = vpack.c.b16 %v2099, %v2093
    %v2742 = vpack.c.b16 %v2100, %v2094
    %v2743 = vpack.c.b16 %v2101, %v2095
    %v2744 = vpack.c.b16 %v2102, %v2096
    %v2745 = vpack.c.b16 %v2103, %v2097
    %v2746 = vpack.c.b16 %v2110, %v2104
    %v2747 = vpack.c.b16 %v2111, %v2105
    %v2748 = vpack.c.b16 %v2112, %v2106
    %v2749 = vpack.c.b16 %v2113, %v2107
    %v2750 = vpack.c.b16 %v2114, %v2108
    %v2751 = vpack.c.b16 %v2115, %v2109
    %v2752 = vpack.c.b16 %v2122, %v2116
    %v2753 = vpack.c.b16 %v2123, %v2117
    %v2754 = vpack.c.b16 %v2124, %v2118
    %v2755 = vpack.c.b16 %v2125, %v2119
    %v2756 = vpack.c.b16 %v2126, %v2120
    %v2757 = vpack.c.b16 %v2127, %v2121
    %v2758 = vpack.c.b16 %v2134, %v2128
    %v2759 = vpack.c.b16 %v2135, %v2129
    %v2760 = vpack.c.b16 %v2136, %v2130
    %v2761 = vpack.c.b16 %v2137, %v2131
    %v2762 = vpack.c.b16 %v2138, %v2132
    %v2763 = vpack.c.b16 %v2139, %v2133
    %v2764 = vpack.c.b16 %v2146, %v2140
    %v2765 = vpack.c.b16 %v2147, %v2141
    %v2766 = vpack.c.b16 %v2148, %v2142
    %v2767 = vpack.c.b16 %v2149, %v2143
    %v2768 = vpack.c.b16 %v2150, %v2144
    %v2769 = vpack.c.b16 %v2151, %v2145
    %v2770 = vpack.c.b16 %v2158, %v2152
    %v2771 = vpack.c.b16 %v2159, %v2153
    %v2772 = vpack.c.b16 %v2160, %v2154
    %v2773 = vpack.c.b16 %v2161, %v2155
    %v2774 = vpack.c.b16 %v2162, %v2156
    %v2775 = vpack.c.b16 %v2163, %v2157
    %v2776 = vpack.c.b16 %v2170, %v2164
    %v2777 = vpack.c.b16 %v2171, %v2165
    %v2778 = vpack.c.b16 %v2172, %v2166
    %v2779 = vpack.c.b16 %v2173, %v2167
    %v2780 = vpack.c.b16 %v2174, %v2168
    %v2781 = vpack.c.b16 %v2175, %v2169
    %v2782 = vpack.c.b16 %v2182, %v2176
    %v2783 = vpack.c.b16 %v2183, %v2177
    %v2784 = vpack.c.b16 %v2184, %v2178
    %v2785 = vpack.c.b16 %v2185, %v2179
    %v2786 = vpack.c.b16 %v2186, %v2180
    %v2787 = vpack.c.b16 %v2187, %v2181
    %v2788 = vpack.c.b16 %v2194, %v2188
    %v2789 = vpack.c.b16 %v2195, %v2189
    %v2790 = vpack.c.b16 %v2196, %v2190
    %v2791 = vpack.c.b16 %v2197, %v2191
    %v2792 = vpack.c.b16 %v2198, %v2192
    %v2793 = vpack.c.b16 %v2199, %v2193
    %v2794 = vpack.c.b16 %v2206, %v2200
    %v2795 = vpack.c.b16 %v2207, %v2201
    %v2796 = vpack.c.b16 %v2208, %v2202
    %v2797 = vpack.c.b16 %v2209, %v2203
    %v2798 = vpack.c.b16 %v2210, %v2204
    %v2799 = vpack.c.b16 %v2211, %v2205
    %v2800 = vpack.c.b16 %v2218, %v2212
    %v2801 = vpack.c.b16 %v2219, %v2213
    %v2802 = vpack.c.b16 %v2220, %v2214
    %v2803 = vpack.c.b16 %v2221, %v2215
    %v2804 = vpack.c.b16 %v2222, %v2216
    %v2805 = vpack.c.b16 %v2223, %v2217
    %v2806 = vpack.c.b16 %v2230, %v2224
    %v2807 = vpack.c.b16 %v2231, %v2225
    %v2808 = vpack.c.b16 %v2232, %v2226
    %v2809 = vpack.c.b16 %v2233, %v2227
    %v2810 = vpack.c.b16 %v2234, %v2228
    %v2811 = vpack.c.b16 %v2235, %v2229
    %v2812 = vpack.c.b16 %v2242, %v2236
    %v2813 = vpack.c.b16 %v2243, %v2237
    %v2814 = vpack.c.b16 %v2244, %v2238
    %v2815 = vpack.c.b16 %v2245, %v2239
    %v2816 = vpack.c.b16 %v2246, %v2240
    %v2817 = vpack.c.b16 %v2247, %v2241
    %v2818 = vpack.c.b16 %v2254, %v2248
    %v2819 = vpack.c.b16 %v2255, %v2249
    %v2820 = vpack.c.b16 %v2256, %v2250
    %v2821 = vpack.c.b16 %v2257, %v2251
    %v2822 = vpack.c.b16 %v2258, %v2252
    %v2823 = vpack.c.b16 %v2259, %v2253
    %v2824 = vpack.c.b16 %v2266, %v2260
    %v2825 = vpack.c.b16 %v2267, %v2261
    %v2826 = vpack.c.b16 %v2268, %v2262
    %v2827 = vpack.c.b16 %v2269, %v2263
    %v2828 = vpack.c.b16 %v2270, %v2264
    %v2829 = vpack.c.b16 %v2271, %v2265
    %v2830 = vpack.c.b16 %v2278, %v2272
    %v2831 = vpack.c.b16 %v2279, %v2273
    %v2832 = vpack.c.b16 %v2280, %v2274
    %v2833 = vpack.c.b16 %v2281, %v2275
    %v2834 = vpack.c.b16 %v2282, %v2276
    %v2835 = vpack.c.b16 %v2283, %v2277
    %v2836 = vpack.c.b16 %v2290, %v2284
    %v2837 = vpack.c.b16 %v2291, %v2285
    %v2838 = vpack.c.b16 %v2292, %v2286
    %v2839 = vpack.c.b16 %v2293, %v2287
    %v2840 = vpack.c.b16 %v2294, %v2288
    %v2841 = vpack.c.b16 %v2295, %v2289
    %v2842 = vpack.c.b16 %v2302, %v2296
    %v2843 = vpack.c.b16 %v2303, %v2297
    %v2844 = vpack.c.b16 %v2304, %v2298
    %v2845 = vpack.c.b16 %v2305, %v2299
    %v2846 = vpack.c.b16 %v2306, %v2300
    %v2847 = vpack.c.b16 %v2307, %v2301
    %vm3388 = vcmask 261120
    %v3390 = vsel %vm3388, %v676, 0
    %3392 = vmatprep.subr.bf16.mxu0 %v2309
    %3393 = vmatpush1.bf16.msra.mxu0 %v2308
    %3394 = vmatprep.subr.bf16.mxu0 %v2315
    %3395 = vmatpush1.bf16.msra.mxu0 %v2314
    %3396 = vmatprep.subr.bf16.mxu0 %v2321
    %3397 = vmatpush1.bf16.msra.mxu0 %v2320
    %3398 = vmatprep.subr.bf16.mxu0 %v2327
    %3399 = vmatpush1.bf16.msra.mxu0 %v2326
    %3400 = vmatprep.subr.bf16.mxu0 %v2333
    %3401 = vmatpush1.bf16.msra.mxu0 %v2332
    %3402 = vmatprep.subr.bf16.mxu0 %v2339
    %3403 = vmatpush1.bf16.msra.mxu0 %v2338
    %3404 = vmatprep.subr.bf16.mxu0 %v2345
    %3405 = vmatpush1.bf16.msra.mxu0 %v2344
    %3406 = vmatprep.subr.bf16.mxu0 %v2351
    %3407 = vmatpush1.bf16.msra.mxu0 %v2350
    %3408 = vmatprep.subr.bf16.mxu0 %v2357
    %3409 = vmatpush1.bf16.msra.mxu0 %v2356
    %3410 = vmatprep.subr.bf16.mxu0 %v2363
    %3411 = vmatpush1.bf16.msra.mxu0 %v2362
    %3412 = vmatprep.subr.bf16.mxu0 %v2369
    %3413 = vmatpush1.bf16.msra.mxu0 %v2368
    %3414 = vmatprep.subr.bf16.mxu0 %v2375
    %3415 = vmatpush1.bf16.msra.mxu0 %v2374
    %3416 = vmatprep.subr.bf16.mxu0 %v2381
    %3417 = vmatpush1.bf16.msra.mxu0 %v2380
    %3418 = vmatprep.subr.bf16.mxu0 %v2387
    %3419 = vmatpush1.bf16.msra.mxu0 %v2386
    %3420 = vmatprep.subr.bf16.mxu0 %v2393
    %3421 = vmatpush1.bf16.msra.mxu0 %v2392
    %3422 = vmatprep.subr.bf16.mxu0 %v2399
    %3423 = vmatpush1.bf16.msra.mxu0 %v2398
    %3424 = vmatprep.mubr.bf16.mxu0 %v641
    %3425 = vmatmul.mubr.bf16.gmra.mrb[0].mxu0 %v627
    %v3426 = vpop.f32.mrb[0].mxu0
    %v3427 = vadd.f32 %v575, %v3426
    %v3428 = vpop.f32.mrb[0].mxu0
    %v3429 = vadd.f32 %v579, %v3428
    %v3430 = vpop.f32.mrb[0].mxu0
    %v3431 = vpop.f32.mrb[0].mxu0
    %3432 = vdwg.mxu0
    %3433 = vmatprep.subr.bf16.mxu0 %v2405
    %3434 = vmatpush1.bf16.msra.mxu0 %v2404
    %3435 = vmatprep.subr.bf16.mxu0 %v2411
    %3436 = vmatpush1.bf16.msra.mxu0 %v2410
    %3437 = vmatprep.subr.bf16.mxu0 %v2417
    %3438 = vmatpush1.bf16.msra.mxu0 %v2416
    %3439 = vmatprep.subr.bf16.mxu0 %v2423
    %3440 = vmatpush1.bf16.msra.mxu0 %v2422
    %3441 = vmatprep.subr.bf16.mxu0 %v2429
    %3442 = vmatpush1.bf16.msra.mxu0 %v2428
    %3443 = vmatprep.subr.bf16.mxu0 %v2435
    %3444 = vmatpush1.bf16.msra.mxu0 %v2434
    %3445 = vmatprep.subr.bf16.mxu0 %v2441
    %3446 = vmatpush1.bf16.msra.mxu0 %v2440
    %3447 = vmatprep.subr.bf16.mxu0 %v2447
    %3448 = vmatpush1.bf16.msra.mxu0 %v2446
    %3449 = vmatprep.subr.bf16.mxu0 %v2453
    %3450 = vmatpush1.bf16.msra.mxu0 %v2452
    %3451 = vmatprep.subr.bf16.mxu0 %v2459
    %3452 = vmatpush1.bf16.msra.mxu0 %v2458
    %3453 = vmatprep.subr.bf16.mxu0 %v2465
    %3454 = vmatpush1.bf16.msra.mxu0 %v2464
    %3455 = vmatprep.subr.bf16.mxu0 %v2471
    %3456 = vmatpush1.bf16.msra.mxu0 %v2470
    %3457 = vmatprep.subr.bf16.mxu0 %v2477
    %3458 = vmatpush1.bf16.msra.mxu0 %v2476
    %3459 = vmatprep.subr.bf16.mxu0 %v2483
    %3460 = vmatpush1.bf16.msra.mxu0 %v2482
    %3461 = vmatprep.subr.bf16.mxu0 %v2489
    %3462 = vmatpush1.bf16.msra.mxu0 %v2488
    %3463 = vmatprep.subr.bf16.mxu0 %v2495
    %3464 = vmatpush1.bf16.msra.mxu0 %v2494
    %3465 = vmatprep.mubr.bf16.mxu0 %v651
    %3466 = vmatmul.mubr.bf16.gmra.mrb[0].mxu0 %v649
    %v3467 = vpop.f32.mrb[0].mxu0
    %v3468 = vadd.f32 %v3427, %v3467
    %v3469 = vpop.f32.mrb[0].mxu0
    %v3470 = vadd.f32 %v3429, %v3469
    %v3471 = vpop.f32.mrb[0].mxu0
    %v3472 = vpop.f32.mrb[0].mxu0
    %3473 = vdwg.mxu0
    %3474 = vmatprep.subr.bf16.mxu0 %v2501
    %3475 = vmatpush1.bf16.msra.mxu0 %v2500
    %3476 = vmatprep.subr.bf16.mxu0 %v2507
    %3477 = vmatpush1.bf16.msra.mxu0 %v2506
    %3478 = vmatprep.subr.bf16.mxu0 %v2513
    %3479 = vmatpush1.bf16.msra.mxu0 %v2512
    %3480 = vmatprep.subr.bf16.mxu0 %v2519
    %3481 = vmatpush1.bf16.msra.mxu0 %v2518
    %3482 = vmatprep.subr.bf16.mxu0 %v2525
    %3483 = vmatpush1.bf16.msra.mxu0 %v2524
    %3484 = vmatprep.subr.bf16.mxu0 %v2531
    %3485 = vmatpush1.bf16.msra.mxu0 %v2530
    %3486 = vmatprep.subr.bf16.mxu0 %v2537
    %3487 = vmatpush1.bf16.msra.mxu0 %v2536
    %3488 = vmatprep.subr.bf16.mxu0 %v2543
    %3489 = vmatpush1.bf16.msra.mxu0 %v2542
    %3490 = vmatprep.subr.bf16.mxu0 %v2549
    %3491 = vmatpush1.bf16.msra.mxu0 %v2548
    %3492 = vmatprep.subr.bf16.mxu0 %v2555
    %3493 = vmatpush1.bf16.msra.mxu0 %v2554
    %3494 = vmatprep.subr.bf16.mxu0 %v2561
    %3495 = vmatpush1.bf16.msra.mxu0 %v2560
    %3496 = vmatprep.subr.bf16.mxu0 %v2567
    %3497 = vmatpush1.bf16.msra.mxu0 %v2566
    %3498 = vmatprep.subr.bf16.mxu0 %v2573
    %3499 = vmatpush1.bf16.msra.mxu0 %v2572
    %3500 = vmatprep.subr.bf16.mxu0 %v2579
    %3501 = vmatpush1.bf16.msra.mxu0 %v2578
    %3502 = vmatprep.subr.bf16.mxu0 %v2585
    %3503 = vmatpush1.bf16.msra.mxu0 %v2584
    %3504 = vmatprep.subr.bf16.mxu0 %v2591
    %3505 = vmatpush1.bf16.msra.mxu0 %v2590
    %3506 = vmatprep.mubr.bf16.mxu0 %v648
    %3507 = vmatmul.mubr.bf16.gmra.mrb[0].mxu0 %v634
    %v3508 = vpop.f32.mrb[0].mxu0
    %v3509 = vadd.f32 %v3468, %v3508
    %v3510 = vpop.f32.mrb[0].mxu0
    %v3511 = vadd.f32 %v3470, %v3510
    %v3512 = vpop.f32.mrb[0].mxu0
    %v3513 = vpop.f32.mrb[0].mxu0
    %3514 = vdwg.mxu0
    %3515 = vmatprep.subr.bf16.mxu0 %v2597
    %3516 = vmatpush1.bf16.msra.mxu0 %v2596
    %3517 = vmatprep.subr.bf16.mxu0 %v2603
    %3518 = vmatpush1.bf16.msra.mxu0 %v2602
    %3519 = vmatprep.subr.bf16.mxu0 %v2609
    %3520 = vmatpush1.bf16.msra.mxu0 %v2608
    %3521 = vmatprep.subr.bf16.mxu0 %v2615
    %3522 = vmatpush1.bf16.msra.mxu0 %v2614
    %3523 = vmatprep.subr.bf16.mxu0 %v2621
    %3524 = vmatpush1.bf16.msra.mxu0 %v2620
    %3525 = vmatprep.subr.bf16.mxu0 %v2627
    %3526 = vmatpush1.bf16.msra.mxu0 %v2626
    %3527 = vmatprep.subr.bf16.mxu0 %v2633
    %3528 = vmatpush1.bf16.msra.mxu0 %v2632
    %3529 = vmatprep.subr.bf16.mxu0 %v2639
    %3530 = vmatpush1.bf16.msra.mxu0 %v2638
    %3531 = vmatprep.subr.bf16.mxu0 %v2645
    %3532 = vmatpush1.bf16.msra.mxu0 %v2644
    %3533 = vmatprep.subr.bf16.mxu0 %v2651
    %3534 = vmatpush1.bf16.msra.mxu0 %v2650
    %3535 = vmatprep.subr.bf16.mxu0 %v2657
    %3536 = vmatpush1.bf16.msra.mxu0 %v2656
    %3537 = vmatprep.subr.bf16.mxu0 %v2663
    %3538 = vmatpush1.bf16.msra.mxu0 %v2662
    %3539 = vmatprep.subr.bf16.mxu0 %v2669
    %3540 = vmatpush1.bf16.msra.mxu0 %v2668
    %3541 = vmatprep.subr.bf16.mxu0 %v2675
    %3542 = vmatpush1.bf16.msra.mxu0 %v2674
    %3543 = vmatprep.subr.bf16.mxu0 %v2681
    %3544 = vmatpush1.bf16.msra.mxu0 %v2680
    %3545 = vmatprep.subr.bf16.mxu0 %v2687
    %3546 = vmatpush1.bf16.msra.mxu0 %v2686
    %3547 = vmatprep.mubr.bf16.mxu0 %v652
    %3548 = vmatmul.mubr.bf16.gmra.mrb[0].mxu0 %v650
    %v3549 = vpop.f32.mrb[0].mxu0
    %v3550 = vadd.f32 %v3509, %v3549
    %v3551 = vpop.f32.mrb[0].mxu0
    %v3552 = vadd.f32 %v3511, %v3551
    %v3553 = vpop.f32.mrb[0].mxu0
    %v3554 = vpop.f32.mrb[0].mxu0
    %3555 = vdwg.mxu0
    %3556 = vmatprep.subr.bf16.mxu0 %v2693
    %3557 = vmatpush1.bf16.msra.mxu0 %v2692
    %3558 = vmatprep.subr.bf16.mxu0 %v2699
    %3559 = vmatpush1.bf16.msra.mxu0 %v2698
    %3560 = vmatprep.subr.bf16.mxu0 %v2705
    %3561 = vmatpush1.bf16.msra.mxu0 %v2704
    %3562 = vmatprep.subr.bf16.mxu0 %v2711
    %3563 = vmatpush1.bf16.msra.mxu0 %v2710
    %3564 = vmatprep.subr.bf16.mxu0 %v2717
    %3565 = vmatpush1.bf16.msra.mxu0 %v2716
    %3566 = vmatprep.subr.bf16.mxu0 %v2723
    %3567 = vmatpush1.bf16.msra.mxu0 %v2722
    %3568 = vmatprep.subr.bf16.mxu0 %v2729
    %3569 = vmatpush1.bf16.msra.mxu0 %v2728
    %3570 = vmatprep.subr.bf16.mxu0 %v2735
    %3571 = vmatpush1.bf16.msra.mxu0 %v2734
    %3572 = vmatprep.subr.bf16.mxu0 %v2741
    %3573 = vmatpush1.bf16.msra.mxu0 %v2740
    %3574 = vmatprep.subr.bf16.mxu0 %v2747
    %3575 = vmatpush1.bf16.msra.mxu0 %v2746
    %3576 = vmatprep.subr.bf16.mxu0 %v2753
    %3577 = vmatpush1.bf16.msra.mxu0 %v2752
    %3578 = vmatprep.subr.bf16.mxu0 %v2759
    %3579 = vmatpush1.bf16.msra.mxu0 %v2758
    %3580 = vmatprep.subr.bf16.mxu0 %v2765
    %3581 = vmatpush1.bf16.msra.mxu0 %v2764
    %3582 = vmatprep.subr.bf16.mxu0 %v2771
    %3583 = vmatpush1.bf16.msra.mxu0 %v2770
    %3584 = vmatprep.subr.bf16.mxu0 %v2777
    %3585 = vmatpush1.bf16.msra.mxu0 %v2776
    %3586 = vmatprep.subr.bf16.mxu0 %v2783
    %3587 = vmatpush1.bf16.msra.mxu0 %v2782
    %3588 = vmatprep.mubr.bf16.mxu0 %v674
    %3589 = vmatmul.mubr.bf16.gmra.mrb[0].mxu0 %v667
    %v3590 = vpop.f32.mrb[0].mxu0
    %v3591 = vadd.f32 %v3550, %v3590
    %v3592 = vpop.f32.mrb[0].mxu0
    %v3593 = vadd.f32 %v3552, %v3592
    %v3594 = vpop.f32.mrb[0].mxu0
    %v3595 = vpop.f32.mrb[0].mxu0
    %3596 = vdwg.mxu0
    %3597 = vmatprep.subr.bf16.mxu0 %v2789
    %3598 = vmatpush1.bf16.msra.mxu0 %v2788
    %3599 = vmatprep.subr.bf16.mxu0 %v2795
    %3600 = vmatpush1.bf16.msra.mxu0 %v2794
    %3601 = vmatprep.subr.bf16.mxu0 %v2801
    %3602 = vmatpush1.bf16.msra.mxu0 %v2800
    %3603 = vmatprep.subr.bf16.mxu0 %v2807
    %3604 = vmatpush1.bf16.msra.mxu0 %v2806
    %3605 = vmatprep.subr.bf16.mxu0 %v2813
    %3606 = vmatpush1.bf16.msra.mxu0 %v2812
    %3607 = vmatprep.subr.bf16.mxu0 %v2819
    %3608 = vmatpush1.bf16.msra.mxu0 %v2818
    %3609 = vmatprep.subr.bf16.mxu0 %v2825
    %3610 = vmatpush1.bf16.msra.mxu0 %v2824
    %3611 = vmatprep.subr.bf16.mxu0 %v2831
    %3612 = vmatpush1.bf16.msra.mxu0 %v2830
    %3613 = vmatprep.subr.bf16.mxu0 %v2837
    %3614 = vmatpush1.bf16.msra.mxu0 %v2836
    %3615 = vmatprep.subr.bf16.mxu0 %v2843
    %3616 = vmatpush1.bf16.msra.mxu0 %v2842
    %3617 = vmatprep.subr.bf16.mxu0 0
    %3618 = vmatpush1.bf16.msra.mxu0 0
    %3619 = vmatprep.subr.bf16.mxu0 0
    %3620 = vmatpush1.bf16.msra.mxu0 0
    %3621 = vmatprep.subr.bf16.mxu0 0
    %3622 = vmatpush1.bf16.msra.mxu0 0
    %3623 = vmatprep.subr.bf16.mxu0 0
    %3624 = vmatpush1.bf16.msra.mxu0 0
    %3625 = vmatprep.subr.bf16.mxu0 0
    %3626 = vmatpush1.bf16.msra.mxu0 0
    %3627 = vmatprep.subr.bf16.mxu0 0
    %3628 = vmatpush1.bf16.msra.mxu0 0
    %3629 = vmatprep.mubr.bf16.mxu0 %v3390
    %3630 = vmatmul.mubr.bf16.gmra.mrb[0].mxu0 %v675
    %v3631 = vpop.f32.mrb[0].mxu0
    %v3632 = vadd.f32 %v3591, %v3631
    %v3633 = vpop.f32.mrb[0].mxu0
    %v3634 = vadd.f32 %v3593, %v3633
    %v3635 = vpop.f32.mrb[0].mxu0
    %v3636 = vpop.f32.mrb[0].mxu0
    %3637 = vdwg.mxu0
    %3638 = vmatprep.subr.bf16.mxu0 %v2311
    %3639 = vmatpush1.bf16.msra.mxu0 %v2310
    %3640 = vmatprep.subr.bf16.mxu0 %v2317
    %3641 = vmatpush1.bf16.msra.mxu0 %v2316
    %3642 = vmatprep.subr.bf16.mxu0 %v2323
    %3643 = vmatpush1.bf16.msra.mxu0 %v2322
    %3644 = vmatprep.subr.bf16.mxu0 %v2329
    %3645 = vmatpush1.bf16.msra.mxu0 %v2328
    %3646 = vmatprep.subr.bf16.mxu0 %v2335
    %3647 = vmatpush1.bf16.msra.mxu0 %v2334
    %3648 = vmatprep.subr.bf16.mxu0 %v2341
    %3649 = vmatpush1.bf16.msra.mxu0 %v2340
    %3650 = vmatprep.subr.bf16.mxu0 %v2347
    %3651 = vmatpush1.bf16.msra.mxu0 %v2346
    %3652 = vmatprep.subr.bf16.mxu0 %v2353
    %3653 = vmatpush1.bf16.msra.mxu0 %v2352
    %3654 = vmatprep.subr.bf16.mxu0 %v2359
    %3655 = vmatpush1.bf16.msra.mxu0 %v2358
    %3656 = vmatprep.subr.bf16.mxu0 %v2365
    %3657 = vmatpush1.bf16.msra.mxu0 %v2364
    %3658 = vmatprep.subr.bf16.mxu0 %v2371
    %3659 = vmatpush1.bf16.msra.mxu0 %v2370
    %3660 = vmatprep.subr.bf16.mxu0 %v2377
    %3661 = vmatpush1.bf16.msra.mxu0 %v2376
    %3662 = vmatprep.subr.bf16.mxu0 %v2383
    %3663 = vmatpush1.bf16.msra.mxu0 %v2382
    %3664 = vmatprep.subr.bf16.mxu0 %v2389
    %3665 = vmatpush1.bf16.msra.mxu0 %v2388
    %3666 = vmatprep.subr.bf16.mxu0 %v2395
    %3667 = vmatpush1.bf16.msra.mxu0 %v2394
    %3668 = vmatprep.subr.bf16.mxu0 %v2401
    %3669 = vmatpush1.bf16.msra.mxu0 %v2400
    %3670 = vmatprep.mubr.bf16.mxu0 %v641
    %3671 = vmatmul.mubr.bf16.gmra.mrb[0].mxu0 %v627
    %v3672 = vpop.f32.mrb[0].mxu0
    %v3673 = vadd.f32 %v583, %v3672
    %v3674 = vpop.f32.mrb[0].mxu0
    %v3675 = vadd.f32 %v587, %v3674
    %v3676 = vpop.f32.mrb[0].mxu0
    %v3677 = vpop.f32.mrb[0].mxu0
    %3678 = vdwg.mxu0
    %3679 = vmatprep.subr.bf16.mxu0 %v2407
    %3680 = vmatpush1.bf16.msra.mxu0 %v2406
    %3681 = vmatprep.subr.bf16.mxu0 %v2413
    %3682 = vmatpush1.bf16.msra.mxu0 %v2412
    %3683 = vmatprep.subr.bf16.mxu0 %v2419
    %3684 = vmatpush1.bf16.msra.mxu0 %v2418
    %3685 = vmatprep.subr.bf16.mxu0 %v2425
    %3686 = vmatpush1.bf16.msra.mxu0 %v2424
    %3687 = vmatprep.subr.bf16.mxu0 %v2431
    %3688 = vmatpush1.bf16.msra.mxu0 %v2430
    %3689 = vmatprep.subr.bf16.mxu0 %v2437
    %3690 = vmatpush1.bf16.msra.mxu0 %v2436
    %3691 = vmatprep.subr.bf16.mxu0 %v2443
    %3692 = vmatpush1.bf16.msra.mxu0 %v2442
    %3693 = vmatprep.subr.bf16.mxu0 %v2449
    %3694 = vmatpush1.bf16.msra.mxu0 %v2448
    %3695 = vmatprep.subr.bf16.mxu0 %v2455
    %3696 = vmatpush1.bf16.msra.mxu0 %v2454
    %3697 = vmatprep.subr.bf16.mxu0 %v2461
    %3698 = vmatpush1.bf16.msra.mxu0 %v2460
    %3699 = vmatprep.subr.bf16.mxu0 %v2467
    %3700 = vmatpush1.bf16.msra.mxu0 %v2466
    %3701 = vmatprep.subr.bf16.mxu0 %v2473
    %3702 = vmatpush1.bf16.msra.mxu0 %v2472
    %3703 = vmatprep.subr.bf16.mxu0 %v2479
    %3704 = vmatpush1.bf16.msra.mxu0 %v2478
    %3705 = vmatprep.subr.bf16.mxu0 %v2485
    %3706 = vmatpush1.bf16.msra.mxu0 %v2484
    %3707 = vmatprep.subr.bf16.mxu0 %v2491
    %3708 = vmatpush1.bf16.msra.mxu0 %v2490
    %3709 = vmatprep.subr.bf16.mxu0 %v2497
    %3710 = vmatpush1.bf16.msra.mxu0 %v2496
    %3711 = vmatprep.mubr.bf16.mxu0 %v651
    %3712 = vmatmul.mubr.bf16.gmra.mrb[0].mxu0 %v649
    %v3713 = vpop.f32.mrb[0].mxu0
    %v3714 = vadd.f32 %v3673, %v3713
    %v3715 = vpop.f32.mrb[0].mxu0
    %v3716 = vadd.f32 %v3675, %v3715
    %v3717 = vpop.f32.mrb[0].mxu0
    %v3718 = vpop.f32.mrb[0].mxu0
    %3719 = vdwg.mxu0
    %3720 = vmatprep.subr.bf16.mxu0 %v2503
    %3721 = vmatpush1.bf16.msra.mxu0 %v2502
    %3722 = vmatprep.subr.bf16.mxu0 %v2509
    %3723 = vmatpush1.bf16.msra.mxu0 %v2508
    %3724 = vmatprep.subr.bf16.mxu0 %v2515
    %3725 = vmatpush1.bf16.msra.mxu0 %v2514
    %3726 = vmatprep.subr.bf16.mxu0 %v2521
    %3727 = vmatpush1.bf16.msra.mxu0 %v2520
    %3728 = vmatprep.subr.bf16.mxu0 %v2527
    %3729 = vmatpush1.bf16.msra.mxu0 %v2526
    %3730 = vmatprep.subr.bf16.mxu0 %v2533
    %3731 = vmatpush1.bf16.msra.mxu0 %v2532
    %3732 = vmatprep.subr.bf16.mxu0 %v2539
    %3733 = vmatpush1.bf16.msra.mxu0 %v2538
    %3734 = vmatprep.subr.bf16.mxu0 %v2545
    %3735 = vmatpush1.bf16.msra.mxu0 %v2544
    %3736 = vmatprep.subr.bf16.mxu0 %v2551
    %3737 = vmatpush1.bf16.msra.mxu0 %v2550
    %3738 = vmatprep.subr.bf16.mxu0 %v2557
    %3739 = vmatpush1.bf16.msra.mxu0 %v2556
    %3740 = vmatprep.subr.bf16.mxu0 %v2563
    %3741 = vmatpush1.bf16.msra.mxu0 %v2562
    %3742 = vmatprep.subr.bf16.mxu0 %v2569
    %3743 = vmatpush1.bf16.msra.mxu0 %v2568
    %3744 = vmatprep.subr.bf16.mxu0 %v2575
    %3745 = vmatpush1.bf16.msra.mxu0 %v2574
    %3746 = vmatprep.subr.bf16.mxu0 %v2581
    %3747 = vmatpush1.bf16.msra.mxu0 %v2580
    %3748 = vmatprep.subr.bf16.mxu0 %v2587
    %3749 = vmatpush1.bf16.msra.mxu0 %v2586
    %3750 = vmatprep.subr.bf16.mxu0 %v2593
    %3751 = vmatpush1.bf16.msra.mxu0 %v2592
    %3752 = vmatprep.mubr.bf16.mxu0 %v648
    %3753 = vmatmul.mubr.bf16.gmra.mrb[0].mxu0 %v634
    %v3754 = vpop.f32.mrb[0].mxu0
    %v3755 = vadd.f32 %v3714, %v3754
    %v3756 = vpop.f32.mrb[0].mxu0
    %v3757 = vadd.f32 %v3716, %v3756
    %v3758 = vpop.f32.mrb[0].mxu0
    %v3759 = vpop.f32.mrb[0].mxu0
    %3760 = vdwg.mxu0
    %3761 = vmatprep.subr.bf16.mxu0 %v2599
    %3762 = vmatpush1.bf16.msra.mxu0 %v2598
    %3763 = vmatprep.subr.bf16.mxu0 %v2605
    %3764 = vmatpush1.bf16.msra.mxu0 %v2604
    %3765 = vmatprep.subr.bf16.mxu0 %v2611
    %3766 = vmatpush1.bf16.msra.mxu0 %v2610
    %3767 = vmatprep.subr.bf16.mxu0 %v2617
    %3768 = vmatpush1.bf16.msra.mxu0 %v2616
    %3769 = vmatprep.subr.bf16.mxu0 %v2623
    %3770 = vmatpush1.bf16.msra.mxu0 %v2622
    %3771 = vmatprep.subr.bf16.mxu0 %v2629
    %3772 = vmatpush1.bf16.msra.mxu0 %v2628
    %3773 = vmatprep.subr.bf16.mxu0 %v2635
    %3774 = vmatpush1.bf16.msra.mxu0 %v2634
    %3775 = vmatprep.subr.bf16.mxu0 %v2641
    %3776 = vmatpush1.bf16.msra.mxu0 %v2640
    %3777 = vmatprep.subr.bf16.mxu0 %v2647
    %3778 = vmatpush1.bf16.msra.mxu0 %v2646
    %3779 = vmatprep.subr.bf16.mxu0 %v2653
    %3780 = vmatpush1.bf16.msra.mxu0 %v2652
    %3781 = vmatprep.subr.bf16.mxu0 %v2659
    %3782 = vmatpush1.bf16.msra.mxu0 %v2658
    %3783 = vmatprep.subr.bf16.mxu0 %v2665
    %3784 = vmatpush1.bf16.msra.mxu0 %v2664
    %3785 = vmatprep.subr.bf16.mxu0 %v2671
    %3786 = vmatpush1.bf16.msra.mxu0 %v2670
    %3787 = vmatprep.subr.bf16.mxu0 %v2677
    %3788 = vmatpush1.bf16.msra.mxu0 %v2676
    %3789 = vmatprep.subr.bf16.mxu0 %v2683
    %3790 = vmatpush1.bf16.msra.mxu0 %v2682
    %3791 = vmatprep.subr.bf16.mxu0 %v2689
    %3792 = vmatpush1.bf16.msra.mxu0 %v2688
    %3793 = vmatprep.mubr.bf16.mxu0 %v652
    %3794 = vmatmul.mubr.bf16.gmra.mrb[0].mxu0 %v650
    %v3795 = vpop.f32.mrb[0].mxu0
    %v3796 = vadd.f32 %v3755, %v3795
    %v3797 = vpop.f32.mrb[0].mxu0
    %v3798 = vadd.f32 %v3757, %v3797
    %v3799 = vpop.f32.mrb[0].mxu0
    %v3800 = vpop.f32.mrb[0].mxu0
    %3801 = vdwg.mxu0
    %3802 = vmatprep.subr.bf16.mxu0 %v2695
    %3803 = vmatpush1.bf16.msra.mxu0 %v2694
    %3804 = vmatprep.subr.bf16.mxu0 %v2701
    %3805 = vmatpush1.bf16.msra.mxu0 %v2700
    %3806 = vmatprep.subr.bf16.mxu0 %v2707
    %3807 = vmatpush1.bf16.msra.mxu0 %v2706
    %3808 = vmatprep.subr.bf16.mxu0 %v2713
    %3809 = vmatpush1.bf16.msra.mxu0 %v2712
    %3810 = vmatprep.subr.bf16.mxu0 %v2719
    %3811 = vmatpush1.bf16.msra.mxu0 %v2718
    %3812 = vmatprep.subr.bf16.mxu0 %v2725
    %3813 = vmatpush1.bf16.msra.mxu0 %v2724
    %3814 = vmatprep.subr.bf16.mxu0 %v2731
    %3815 = vmatpush1.bf16.msra.mxu0 %v2730
    %3816 = vmatprep.subr.bf16.mxu0 %v2737
    %3817 = vmatpush1.bf16.msra.mxu0 %v2736
    %3818 = vmatprep.subr.bf16.mxu0 %v2743
    %3819 = vmatpush1.bf16.msra.mxu0 %v2742
    %3820 = vmatprep.subr.bf16.mxu0 %v2749
    %3821 = vmatpush1.bf16.msra.mxu0 %v2748
    %3822 = vmatprep.subr.bf16.mxu0 %v2755
    %3823 = vmatpush1.bf16.msra.mxu0 %v2754
    %3824 = vmatprep.subr.bf16.mxu0 %v2761
    %3825 = vmatpush1.bf16.msra.mxu0 %v2760
    %3826 = vmatprep.subr.bf16.mxu0 %v2767
    %3827 = vmatpush1.bf16.msra.mxu0 %v2766
    %3828 = vmatprep.subr.bf16.mxu0 %v2773
    %3829 = vmatpush1.bf16.msra.mxu0 %v2772
    %3830 = vmatprep.subr.bf16.mxu0 %v2779
    %3831 = vmatpush1.bf16.msra.mxu0 %v2778
    %3832 = vmatprep.subr.bf16.mxu0 %v2785
    %3833 = vmatpush1.bf16.msra.mxu0 %v2784
    %3834 = vmatprep.mubr.bf16.mxu0 %v674
    %3835 = vmatmul.mubr.bf16.gmra.mrb[0].mxu0 %v667
    %v3836 = vpop.f32.mrb[0].mxu0
    %v3837 = vadd.f32 %v3796, %v3836
    %v3838 = vpop.f32.mrb[0].mxu0
    %v3839 = vadd.f32 %v3798, %v3838
    %v3840 = vpop.f32.mrb[0].mxu0
    %v3841 = vpop.f32.mrb[0].mxu0
    %3842 = vdwg.mxu0
    %3843 = vmatprep.subr.bf16.mxu0 %v2791
    %3844 = vmatpush1.bf16.msra.mxu0 %v2790
    %3845 = vmatprep.subr.bf16.mxu0 %v2797
    %3846 = vmatpush1.bf16.msra.mxu0 %v2796
    %3847 = vmatprep.subr.bf16.mxu0 %v2803
    %3848 = vmatpush1.bf16.msra.mxu0 %v2802
    %3849 = vmatprep.subr.bf16.mxu0 %v2809
    %3850 = vmatpush1.bf16.msra.mxu0 %v2808
    %3851 = vmatprep.subr.bf16.mxu0 %v2815
    %3852 = vmatpush1.bf16.msra.mxu0 %v2814
    %3853 = vmatprep.subr.bf16.mxu0 %v2821
    %3854 = vmatpush1.bf16.msra.mxu0 %v2820
    %3855 = vmatprep.subr.bf16.mxu0 %v2827
    %3856 = vmatpush1.bf16.msra.mxu0 %v2826
    %3857 = vmatprep.subr.bf16.mxu0 %v2833
    %3858 = vmatpush1.bf16.msra.mxu0 %v2832
    %3859 = vmatprep.subr.bf16.mxu0 %v2839
    %3860 = vmatpush1.bf16.msra.mxu0 %v2838
    %3861 = vmatprep.subr.bf16.mxu0 %v2845
    %3862 = vmatpush1.bf16.msra.mxu0 %v2844
    %3863 = vmatprep.subr.bf16.mxu0 0
    %3864 = vmatpush1.bf16.msra.mxu0 0
    %3865 = vmatprep.subr.bf16.mxu0 0
    %3866 = vmatpush1.bf16.msra.mxu0 0
    %3867 = vmatprep.subr.bf16.mxu0 0
    %3868 = vmatpush1.bf16.msra.mxu0 0
    %3869 = vmatprep.subr.bf16.mxu0 0
    %3870 = vmatpush1.bf16.msra.mxu0 0
    %3871 = vmatprep.subr.bf16.mxu0 0
    %3872 = vmatpush1.bf16.msra.mxu0 0
    %3873 = vmatprep.subr.bf16.mxu0 0
    %3874 = vmatpush1.bf16.msra.mxu0 0
    %3875 = vmatprep.mubr.bf16.mxu0 %v3390
    %3876 = vmatmul.mubr.bf16.gmra.mrb[0].mxu0 %v675
    %v3877 = vpop.f32.mrb[0].mxu0
    %v3878 = vadd.f32 %v3837, %v3877
    %v3879 = vpop.f32.mrb[0].mxu0
    %v3880 = vadd.f32 %v3839, %v3879
    %v3881 = vpop.f32.mrb[0].mxu0
    %v3882 = vpop.f32.mrb[0].mxu0
    %3883 = vdwg.mxu0
    %3884 = vmatprep.subr.bf16.mxu0 %v2313
    %3885 = vmatpush1.bf16.msra.mxu0 %v2312
    %3886 = vmatprep.subr.bf16.mxu0 %v2319
    %3887 = vmatpush1.bf16.msra.mxu0 %v2318
    %3888 = vmatprep.subr.bf16.mxu0 %v2325
    %3889 = vmatpush1.bf16.msra.mxu0 %v2324
    %3890 = vmatprep.subr.bf16.mxu0 %v2331
    %3891 = vmatpush1.bf16.msra.mxu0 %v2330
    %3892 = vmatprep.subr.bf16.mxu0 %v2337
    %3893 = vmatpush1.bf16.msra.mxu0 %v2336
    %3894 = vmatprep.subr.bf16.mxu0 %v2343
    %3895 = vmatpush1.bf16.msra.mxu0 %v2342
    %3896 = vmatprep.subr.bf16.mxu0 %v2349
    %3897 = vmatpush1.bf16.msra.mxu0 %v2348
    %3898 = vmatprep.subr.bf16.mxu0 %v2355
    %3899 = vmatpush1.bf16.msra.mxu0 %v2354
    %3900 = vmatprep.subr.bf16.mxu0 %v2361
    %3901 = vmatpush1.bf16.msra.mxu0 %v2360
    %3902 = vmatprep.subr.bf16.mxu0 %v2367
    %3903 = vmatpush1.bf16.msra.mxu0 %v2366
    %3904 = vmatprep.subr.bf16.mxu0 %v2373
    %3905 = vmatpush1.bf16.msra.mxu0 %v2372
    %3906 = vmatprep.subr.bf16.mxu0 %v2379
    %3907 = vmatpush1.bf16.msra.mxu0 %v2378
    %3908 = vmatprep.subr.bf16.mxu0 %v2385
    %3909 = vmatpush1.bf16.msra.mxu0 %v2384
    %3910 = vmatprep.subr.bf16.mxu0 %v2391
    %3911 = vmatpush1.bf16.msra.mxu0 %v2390
    %3912 = vmatprep.subr.bf16.mxu0 %v2397
    %3913 = vmatpush1.bf16.msra.mxu0 %v2396
    %3914 = vmatprep.subr.bf16.mxu0 %v2403
    %3915 = vmatpush1.bf16.msra.mxu0 %v2402
    %3916 = vmatprep.mubr.bf16.mxu0 %v641
    %3917 = vmatmul.mubr.bf16.gmra.mrb[0].mxu0 %v627
    %v3918 = vpop.f32.mrb[0].mxu0
    %v3919 = vadd.f32 %v591, %v3918
    %v3920 = vpop.f32.mrb[0].mxu0
    %v3921 = vadd.f32 %v595, %v3920
    %v3922 = vpop.f32.mrb[0].mxu0
    %v3923 = vpop.f32.mrb[0].mxu0
    %3924 = vdwg.mxu0
    %3925 = vmatprep.subr.bf16.mxu0 %v2409
    %3926 = vmatpush1.bf16.msra.mxu0 %v2408
    %3927 = vmatprep.subr.bf16.mxu0 %v2415
    %3928 = vmatpush1.bf16.msra.mxu0 %v2414
    %3929 = vmatprep.subr.bf16.mxu0 %v2421
    %3930 = vmatpush1.bf16.msra.mxu0 %v2420
    %3931 = vmatprep.subr.bf16.mxu0 %v2427
    %3932 = vmatpush1.bf16.msra.mxu0 %v2426
    %3933 = vmatprep.subr.bf16.mxu0 %v2433
    %3934 = vmatpush1.bf16.msra.mxu0 %v2432
    %3935 = vmatprep.subr.bf16.mxu0 %v2439
    %3936 = vmatpush1.bf16.msra.mxu0 %v2438
    %3937 = vmatprep.subr.bf16.mxu0 %v2445
    %3938 = vmatpush1.bf16.msra.mxu0 %v2444
    %3939 = vmatprep.subr.bf16.mxu0 %v2451
    %3940 = vmatpush1.bf16.msra.mxu0 %v2450
    %3941 = vmatprep.subr.bf16.mxu0 %v2457
    %3942 = vmatpush1.bf16.msra.mxu0 %v2456
    %3943 = vmatprep.subr.bf16.mxu0 %v2463
    %3944 = vmatpush1.bf16.msra.mxu0 %v2462
    %3945 = vmatprep.subr.bf16.mxu0 %v2469
    %3946 = vmatpush1.bf16.msra.mxu0 %v2468
    %3947 = vmatprep.subr.bf16.mxu0 %v2475
    %3948 = vmatpush1.bf16.msra.mxu0 %v2474
    %3949 = vmatprep.subr.bf16.mxu0 %v2481
    %3950 = vmatpush1.bf16.msra.mxu0 %v2480
    %3951 = vmatprep.subr.bf16.mxu0 %v2487
    %3952 = vmatpush1.bf16.msra.mxu0 %v2486
    %3953 = vmatprep.subr.bf16.mxu0 %v2493
    %3954 = vmatpush1.bf16.msra.mxu0 %v2492
    %3955 = vmatprep.subr.bf16.mxu0 %v2499
    %3956 = vmatpush1.bf16.msra.mxu0 %v2498
    %3957 = vmatprep.mubr.bf16.mxu0 %v651
    %3958 = vmatmul.mubr.bf16.gmra.mrb[0].mxu0 %v649
    %v3959 = vpop.f32.mrb[0].mxu0
    %v3960 = vadd.f32 %v3919, %v3959
    %v3961 = vpop.f32.mrb[0].mxu0
    %v3962 = vadd.f32 %v3921, %v3961
    %v3963 = vpop.f32.mrb[0].mxu0
    %v3964 = vpop.f32.mrb[0].mxu0
    %3965 = vdwg.mxu0
    %3966 = vmatprep.subr.bf16.mxu0 %v2505
    %3967 = vmatpush1.bf16.msra.mxu0 %v2504
    %3968 = vmatprep.subr.bf16.mxu0 %v2511
    %3969 = vmatpush1.bf16.msra.mxu0 %v2510
    %3970 = vmatprep.subr.bf16.mxu0 %v2517
    %3971 = vmatpush1.bf16.msra.mxu0 %v2516
    %3972 = vmatprep.subr.bf16.mxu0 %v2523
    %3973 = vmatpush1.bf16.msra.mxu0 %v2522
    %3974 = vmatprep.subr.bf16.mxu0 %v2529
    %3975 = vmatpush1.bf16.msra.mxu0 %v2528
    %3976 = vmatprep.subr.bf16.mxu0 %v2535
    %3977 = vmatpush1.bf16.msra.mxu0 %v2534
    %3978 = vmatprep.subr.bf16.mxu0 %v2541
    %3979 = vmatpush1.bf16.msra.mxu0 %v2540
    %3980 = vmatprep.subr.bf16.mxu0 %v2547
    %3981 = vmatpush1.bf16.msra.mxu0 %v2546
    %3982 = vmatprep.subr.bf16.mxu0 %v2553
    %3983 = vmatpush1.bf16.msra.mxu0 %v2552
    %3984 = vmatprep.subr.bf16.mxu0 %v2559
    %3985 = vmatpush1.bf16.msra.mxu0 %v2558
    %3986 = vmatprep.subr.bf16.mxu0 %v2565
    %3987 = vmatpush1.bf16.msra.mxu0 %v2564
    %3988 = vmatprep.subr.bf16.mxu0 %v2571
    %3989 = vmatpush1.bf16.msra.mxu0 %v2570
    %3990 = vmatprep.subr.bf16.mxu0 %v2577
    %3991 = vmatpush1.bf16.msra.mxu0 %v2576
    %3992 = vmatprep.subr.bf16.mxu0 %v2583
    %3993 = vmatpush1.bf16.msra.mxu0 %v2582
    %3994 = vmatprep.subr.bf16.mxu0 %v2589
    %3995 = vmatpush1.bf16.msra.mxu0 %v2588
    %3996 = vmatprep.subr.bf16.mxu0 %v2595
    %3997 = vmatpush1.bf16.msra.mxu0 %v2594
    %3998 = vmatprep.mubr.bf16.mxu0 %v648
    %3999 = vmatmul.mubr.bf16.gmra.mrb[0].mxu0 %v634
    %v4000 = vpop.f32.mrb[0].mxu0
    %v4001 = vadd.f32 %v3960, %v4000
    %v4002 = vpop.f32.mrb[0].mxu0
    %v4003 = vadd.f32 %v3962, %v4002
    %v4004 = vpop.f32.mrb[0].mxu0
    %v4005 = vpop.f32.mrb[0].mxu0
    %4006 = vdwg.mxu0
    %4007 = vmatprep.subr.bf16.mxu0 %v2601
    %4008 = vmatpush1.bf16.msra.mxu0 %v2600
    %4009 = vmatprep.subr.bf16.mxu0 %v2607
    %4010 = vmatpush1.bf16.msra.mxu0 %v2606
    %4011 = vmatprep.subr.bf16.mxu0 %v2613
    %4012 = vmatpush1.bf16.msra.mxu0 %v2612
    %4013 = vmatprep.subr.bf16.mxu0 %v2619
    %4014 = vmatpush1.bf16.msra.mxu0 %v2618
    %4015 = vmatprep.subr.bf16.mxu0 %v2625
    %4016 = vmatpush1.bf16.msra.mxu0 %v2624
    %4017 = vmatprep.subr.bf16.mxu0 %v2631
    %4018 = vmatpush1.bf16.msra.mxu0 %v2630
    %4019 = vmatprep.subr.bf16.mxu0 %v2637
    %4020 = vmatpush1.bf16.msra.mxu0 %v2636
    %4021 = vmatprep.subr.bf16.mxu0 %v2643
    %4022 = vmatpush1.bf16.msra.mxu0 %v2642
    %4023 = vmatprep.subr.bf16.mxu0 %v2649
    %4024 = vmatpush1.bf16.msra.mxu0 %v2648
    %4025 = vmatprep.subr.bf16.mxu0 %v2655
    %4026 = vmatpush1.bf16.msra.mxu0 %v2654
    %4027 = vmatprep.subr.bf16.mxu0 %v2661
    %4028 = vmatpush1.bf16.msra.mxu0 %v2660
    %4029 = vmatprep.subr.bf16.mxu0 %v2667
    %4030 = vmatpush1.bf16.msra.mxu0 %v2666
    %4031 = vmatprep.subr.bf16.mxu0 %v2673
    %4032 = vmatpush1.bf16.msra.mxu0 %v2672
    %4033 = vmatprep.subr.bf16.mxu0 %v2679
    %4034 = vmatpush1.bf16.msra.mxu0 %v2678
    %4035 = vmatprep.subr.bf16.mxu0 %v2685
    %4036 = vmatpush1.bf16.msra.mxu0 %v2684
    %4037 = vmatprep.subr.bf16.mxu0 %v2691
    %4038 = vmatpush1.bf16.msra.mxu0 %v2690
    %4039 = vmatprep.mubr.bf16.mxu0 %v652
    %4040 = vmatmul.mubr.bf16.gmra.mrb[0].mxu0 %v650
    %v4041 = vpop.f32.mrb[0].mxu0
    %v4042 = vadd.f32 %v4001, %v4041
    %v4043 = vpop.f32.mrb[0].mxu0
    %v4044 = vadd.f32 %v4003, %v4043
    %v4045 = vpop.f32.mrb[0].mxu0
    %v4046 = vpop.f32.mrb[0].mxu0
    %4047 = vdwg.mxu0
    %4048 = vmatprep.subr.bf16.mxu0 %v2697
    %4049 = vmatpush1.bf16.msra.mxu0 %v2696
    %4050 = vmatprep.subr.bf16.mxu0 %v2703
    %4051 = vmatpush1.bf16.msra.mxu0 %v2702
    %4052 = vmatprep.subr.bf16.mxu0 %v2709
    %4053 = vmatpush1.bf16.msra.mxu0 %v2708
    %4054 = vmatprep.subr.bf16.mxu0 %v2715
    %4055 = vmatpush1.bf16.msra.mxu0 %v2714
    %4056 = vmatprep.subr.bf16.mxu0 %v2721
    %4057 = vmatpush1.bf16.msra.mxu0 %v2720
    %4058 = vmatprep.subr.bf16.mxu0 %v2727
    %4059 = vmatpush1.bf16.msra.mxu0 %v2726
    %4060 = vmatprep.subr.bf16.mxu0 %v2733
    %4061 = vmatpush1.bf16.msra.mxu0 %v2732
    %4062 = vmatprep.subr.bf16.mxu0 %v2739
    %4063 = vmatpush1.bf16.msra.mxu0 %v2738
    %4064 = vmatprep.subr.bf16.mxu0 %v2745
    %4065 = vmatpush1.bf16.msra.mxu0 %v2744
    %4066 = vmatprep.subr.bf16.mxu0 %v2751
    %4067 = vmatpush1.bf16.msra.mxu0 %v2750
    %4068 = vmatprep.subr.bf16.mxu0 %v2757
    %4069 = vmatpush1.bf16.msra.mxu0 %v2756
    %4070 = vmatprep.subr.bf16.mxu0 %v2763
    %4071 = vmatpush1.bf16.msra.mxu0 %v2762
    %4072 = vmatprep.subr.bf16.mxu0 %v2769
    %4073 = vmatpush1.bf16.msra.mxu0 %v2768
    %4074 = vmatprep.subr.bf16.mxu0 %v2775
    %4075 = vmatpush1.bf16.msra.mxu0 %v2774
    %4076 = vmatprep.subr.bf16.mxu0 %v2781
    %4077 = vmatpush1.bf16.msra.mxu0 %v2780
    %4078 = vmatprep.subr.bf16.mxu0 %v2787
    %4079 = vmatpush1.bf16.msra.mxu0 %v2786
    %4080 = vmatprep.mubr.bf16.mxu0 %v674
    %4081 = vmatmul.mubr.bf16.gmra.mrb[0].mxu0 %v667
    %v4082 = vpop.f32.mrb[0].mxu0
    %v4083 = vadd.f32 %v4042, %v4082
    %v4084 = vpop.f32.mrb[0].mxu0
    %v4085 = vadd.f32 %v4044, %v4084
    %v4086 = vpop.f32.mrb[0].mxu0
    %v4087 = vpop.f32.mrb[0].mxu0
    %4088 = vdwg.mxu0
    %4089 = vmatprep.subr.bf16.mxu0 %v2793
    %4090 = vmatpush1.bf16.msra.mxu0 %v2792
    %4091 = vmatprep.subr.bf16.mxu0 %v2799
    %4092 = vmatpush1.bf16.msra.mxu0 %v2798
    %4093 = vmatprep.subr.bf16.mxu0 %v2805
    %4094 = vmatpush1.bf16.msra.mxu0 %v2804
    %4095 = vmatprep.subr.bf16.mxu0 %v2811
    %4096 = vmatpush1.bf16.msra.mxu0 %v2810
    %4097 = vmatprep.subr.bf16.mxu0 %v2817
    %4098 = vmatpush1.bf16.msra.mxu0 %v2816
    %4099 = vmatprep.subr.bf16.mxu0 %v2823
    %4100 = vmatpush1.bf16.msra.mxu0 %v2822
    %4101 = vmatprep.subr.bf16.mxu0 %v2829
    %4102 = vmatpush1.bf16.msra.mxu0 %v2828
    %4103 = vmatprep.subr.bf16.mxu0 %v2835
    %4104 = vmatpush1.bf16.msra.mxu0 %v2834
    %4105 = vmatprep.subr.bf16.mxu0 %v2841
    %4106 = vmatpush1.bf16.msra.mxu0 %v2840
    %4107 = vmatprep.subr.bf16.mxu0 %v2847
    %4108 = vmatpush1.bf16.msra.mxu0 %v2846
    %4109 = vmatprep.subr.bf16.mxu0 0
    %4110 = vmatpush1.bf16.msra.mxu0 0
    %4111 = vmatprep.subr.bf16.mxu0 0
    %4112 = vmatpush1.bf16.msra.mxu0 0
    %4113 = vmatprep.subr.bf16.mxu0 0
    %4114 = vmatpush1.bf16.msra.mxu0 0
    %4115 = vmatprep.subr.bf16.mxu0 0
    %4116 = vmatpush1.bf16.msra.mxu0 0
    %4117 = vmatprep.subr.bf16.mxu0 0
    %4118 = vmatpush1.bf16.msra.mxu0 0
    %4119 = vmatprep.subr.bf16.mxu0 0
    %4120 = vmatpush1.bf16.msra.mxu0 0
    %4121 = vmatprep.mubr.bf16.mxu0 %v3390
    %4122 = vmatmul.mubr.bf16.gmra.mrb[0].mxu0 %v675
    %v4123 = vpop.f32.mrb[0].mxu0
    %v4124 = vadd.f32 %v4083, %v4123
    %v4125 = vpop.f32.mrb[0].mxu0
    %v4126 = vadd.f32 %v4085, %v4125
    %v4127 = vpop.f32.mrb[0].mxu0
    %v4128 = vpop.f32.mrb[0].mxu0
    %4129 = vdwg.mxu0
    %v4130 = vmax.f32 %v3632, 0.0
    %v4131 = vmax.f32 %v3634, 0.0
    %v4132 = vmax.f32 %v3878, 0.0
    %v4133 = vmax.f32 %v3880, 0.0
    %v4134 = vmax.f32 %v4124, 0.0
    %v4135 = vmax.f32 %v4126, 0.0
    %v4136 = vpack.c.bf16 %v4130, %v4130
    %v4137 = vpack.c.bf16 %v4131, %v4131
    %v4138 = vpack.c.bf16 %v4132, %v4132
    %v4139 = vpack.c.bf16 %v4133, %v4133
    %v4140 = vpack.c.bf16 %v4134, %v4134
    %v4141 = vpack.c.bf16 %v4135, %v4135
    %v4142 = vld [vmem:[%s3] sm:$0xff]
    %v4143 = vld [vmem:[%s3 + $0x8] sm:$0xf]
    %v4144 = vld [vmem:[%s3 + $0xc] sm:$0xff]
    %v4145 = vld [vmem:[%s3 + $0x14] sm:$0xf]
    %v4146 = vld [vmem:[%s3 + $0x18] sm:$0xff]
    %v4147 = vld [vmem:[%s3 + $0x20] sm:$0xf]
    %v4148 = vld [vmem:[%s3 + $0x24] sm:$0xff]
    %v4149 = vld [vmem:[%s3 + $0x2c] sm:$0xf]
    %v4150 = vld [vmem:[%s3 + $0x30] sm:$0xff]
    %v4151 = vld [vmem:[%s3 + $0x38] sm:$0xf]
    %v4152 = vld [vmem:[%s3 + $0x3c] sm:$0xff]
    %v4153 = vld [vmem:[%s3 + $0x44] sm:$0xf]
    %v4154 = vld [vmem:[%s3 + $0x48] sm:$0xff]
    %v4155 = vld [vmem:[%s3 + $0x50] sm:$0xf]
    %v4156 = vld [vmem:[%s3 + $0x54] sm:$0xff]
    %v4157 = vld [vmem:[%s3 + $0x5c] sm:$0xf]
    %v4158 = vld [vmem:[%s3 + $0x60] sm:$0xff]
    %v4159 = vld [vmem:[%s3 + $0x68] sm:$0xf]
    %v4160 = vld [vmem:[%s3 + $0x6c] sm:$0xff]
    %v4161 = vld [vmem:[%s3 + $0x74] sm:$0xf]
    %v4162 = vld [vmem:[%s3 + $0x78] sm:$0xff]
    %v4163 = vld [vmem:[%s3 + $0x80] sm:$0xf]
    %v4164 = vld [vmem:[%s3 + $0x84] sm:$0xff]
    %v4165 = vld [vmem:[%s3 + $0x8c] sm:$0xf]
    %v4166 = vld [vmem:[%s3 + $0x90] sm:$0xff]
    %v4167 = vld [vmem:[%s3 + $0x98] sm:$0xf]
    %v4168 = vld [vmem:[%s3 + $0x9c] sm:$0xff]
    %v4169 = vld [vmem:[%s3 + $0xa4] sm:$0xf]
    %v4170 = vld [vmem:[%s3 + $0xa8] sm:$0xff]
    %v4171 = vld [vmem:[%s3 + $0xb0] sm:$0xf]
    %v4172 = vld [vmem:[%s3 + $0xb4] sm:$0xff]
    %v4173 = vld [vmem:[%s3 + $0xbc] sm:$0xf]
    %v4174 = vld [vmem:[%s3 + $0xc0] sm:$0xff]
    %v4175 = vld [vmem:[%s3 + $0xc8] sm:$0xf]
    %v4176 = vld [vmem:[%s3 + $0xcc] sm:$0xff]
    %v4177 = vld [vmem:[%s3 + $0xd4] sm:$0xf]
    %v4178 = vld [vmem:[%s3 + $0xd8] sm:$0xff]
    %v4179 = vld [vmem:[%s3 + $0xe0] sm:$0xf]
    %v4180 = vld [vmem:[%s3 + $0xe4] sm:$0xff]
    %v4181 = vld [vmem:[%s3 + $0xec] sm:$0xf]
    %v4182 = vld [vmem:[%s3 + $0xf0] sm:$0xff]
    %v4183 = vld [vmem:[%s3 + $0xf8] sm:$0xf]
    %v4184 = vld [vmem:[%s3 + $0xfc] sm:$0xff]
    %v4185 = vld [vmem:[%s3 + $0x104] sm:$0xf]
    %v4186 = vld [vmem:[%s3 + $0x108] sm:$0xff]
    %v4187 = vld [vmem:[%s3 + $0x110] sm:$0xf]
    %v4188 = vld [vmem:[%s3 + $0x114] sm:$0xff]
    %v4189 = vld [vmem:[%s3 + $0x11c] sm:$0xf]
    %v4190 = vld [vmem:[%s3 + $0x120] sm:$0xff]
    %v4191 = vld [vmem:[%s3 + $0x128] sm:$0xf]
    %v4192 = vld [vmem:[%s3 + $0x12c] sm:$0xff]
    %v4193 = vld [vmem:[%s3 + $0x134] sm:$0xf]
    %v4194 = vld [vmem:[%s3 + $0x138] sm:$0xff]
    %v4195 = vld [vmem:[%s3 + $0x140] sm:$0xf]
    %v4196 = vld [vmem:[%s3 + $0x144] sm:$0xff]
    %v4197 = vld [vmem:[%s3 + $0x14c] sm:$0xf]
    %v4198 = vld [vmem:[%s3 + $0x150] sm:$0xff]
    %v4199 = vld [vmem:[%s3 + $0x158] sm:$0xf]
    %v4200 = vld [vmem:[%s3 + $0x15c] sm:$0xff]
    %v4201 = vld [vmem:[%s3 + $0x164] sm:$0xf]
    %v4202 = vld [vmem:[%s3 + $0x168] sm:$0xff]
    %v4203 = vld [vmem:[%s3 + $0x170] sm:$0xf]
    %v4204 = vld [vmem:[%s3 + $0x174] sm:$0xff]
    %v4205 = vld [vmem:[%s3 + $0x17c] sm:$0xf]
    %v4206 = vld [vmem:[%s3 + $0x180] sm:$0xff]
    %v4207 = vld [vmem:[%s3 + $0x188] sm:$0xf]
    %v4208 = vld [vmem:[%s3 + $0x18c] sm:$0xff]
    %v4209 = vld [vmem:[%s3 + $0x194] sm:$0xf]
    %v4210 = vld [vmem:[%s3 + $0x198] sm:$0xff]
    %v4211 = vld [vmem:[%s3 + $0x1a0] sm:$0xf]
    %v4212 = vld [vmem:[%s3 + $0x1a4] sm:$0xff]
    %v4213 = vld [vmem:[%s3 + $0x1ac] sm:$0xf]
    %v4214 = vld [vmem:[%s3 + $0x1b0] sm:$0xff]
    %v4215 = vld [vmem:[%s3 + $0x1b8] sm:$0xf]
    %v4216 = vld [vmem:[%s3 + $0x1bc] sm:$0xff]
    %v4217 = vld [vmem:[%s3 + $0x1c4] sm:$0xf]
    %v4218 = vld [vmem:[%s3 + $0x1c8] sm:$0xff]
    %v4219 = vld [vmem:[%s3 + $0x1d0] sm:$0xf]
    %v4220 = vld [vmem:[%s3 + $0x1d4] sm:$0xff]
    %v4221 = vld [vmem:[%s3 + $0x1dc] sm:$0xf]
    %v4222 = vld [vmem:[%s3 + $0x1e0] sm:$0xff]
    %v4223 = vld [vmem:[%s3 + $0x1e8] sm:$0xf]
    %v4224 = vld [vmem:[%s3 + $0x1ec] sm:$0xff]
    %v4225 = vld [vmem:[%s3 + $0x1f4] sm:$0xf]
    %v4226 = vld [vmem:[%s3 + $0x1f8] sm:$0xff]
    %v4227 = vld [vmem:[%s3 + $0x200] sm:$0xf]
    %v4228 = vld [vmem:[%s3 + $0x204] sm:$0xff]
    %v4229 = vld [vmem:[%s3 + $0x20c] sm:$0xf]
    %v4230 = vld [vmem:[%s3 + $0x210] sm:$0xff]
    %v4231 = vld [vmem:[%s3 + $0x218] sm:$0xf]
    %v4232 = vld [vmem:[%s3 + $0x21c] sm:$0xff]
    %v4233 = vld [vmem:[%s3 + $0x224] sm:$0xf]
    %v4234 = vld [vmem:[%s3 + $0x228] sm:$0xff]
    %v4235 = vld [vmem:[%s3 + $0x230] sm:$0xf]
    %v4236 = vld [vmem:[%s3 + $0x234] sm:$0xff]
    %v4237 = vld [vmem:[%s3 + $0x23c] sm:$0xf]
    %v4238 = vld [vmem:[%s3 + $0x240] sm:$0xff]
    %v4239 = vld [vmem:[%s3 + $0x248] sm:$0xf]
    %v4240 = vld [vmem:[%s3 + $0x24c] sm:$0xff]
    %v4241 = vld [vmem:[%s3 + $0x254] sm:$0xf]
    %v4242 = vld [vmem:[%s3 + $0x258] sm:$0xff]
    %v4243 = vld [vmem:[%s3 + $0x260] sm:$0xf]
    %v4244 = vld [vmem:[%s3 + $0x264] sm:$0xff]
    %v4245 = vld [vmem:[%s3 + $0x26c] sm:$0xf]
    %v4246 = vld [vmem:[%s3 + $0x270] sm:$0xff]
    %v4247 = vld [vmem:[%s3 + $0x278] sm:$0xf]
    %v4248 = vld [vmem:[%s3 + $0x27c] sm:$0xff]
    %v4249 = vld [vmem:[%s3 + $0x284] sm:$0xf]
    %v4250 = vld [vmem:[%s3 + $0x288] sm:$0xff]
    %v4251 = vld [vmem:[%s3 + $0x290] sm:$0xf]
    %v4252 = vld [vmem:[%s3 + $0x294] sm:$0xff]
    %v4253 = vld [vmem:[%s3 + $0x29c] sm:$0xf]
    %v4254 = vld [vmem:[%s3 + $0x2a0] sm:$0xff]
    %v4255 = vld [vmem:[%s3 + $0x2a8] sm:$0xf]
    %v4256 = vld [vmem:[%s3 + $0x2ac] sm:$0xff]
    %v4257 = vld [vmem:[%s3 + $0x2b4] sm:$0xf]
    %v4258 = vld [vmem:[%s3 + $0x2b8] sm:$0xff]
    %v4259 = vld [vmem:[%s3 + $0x2c0] sm:$0xf]
    %v4260 = vld [vmem:[%s3 + $0x2c4] sm:$0xff]
    %v4261 = vld [vmem:[%s3 + $0x2cc] sm:$0xf]
    %v4262 = vld [vmem:[%s3 + $0x2d0] sm:$0xff]
    %v4263 = vld [vmem:[%s3 + $0x2d8] sm:$0xf]
    %v4264 = vld [vmem:[%s3 + $0x2dc] sm:$0xff]
    %v4265 = vld [vmem:[%s3 + $0x2e4] sm:$0xf]
    %v4266 = vld [vmem:[%s3 + $0x2e8] sm:$0xff]
    %v4267 = vld [vmem:[%s3 + $0x2f0] sm:$0xf]
    %v4268 = vld [vmem:[%s3 + $0x2f4] sm:$0xff]
    %v4269 = vld [vmem:[%s3 + $0x2fc] sm:$0xf]
    %v4270 = vld [vmem:[%s3 + $0x300] sm:$0xff]
    %v4271 = vld [vmem:[%s3 + $0x308] sm:$0xf]
    %v4272 = vld [vmem:[%s3 + $0x30c] sm:$0xff]
    %v4273 = vld [vmem:[%s3 + $0x314] sm:$0xf]
    %v4274 = vld [vmem:[%s3 + $0x318] sm:$0xff]
    %v4275 = vld [vmem:[%s3 + $0x320] sm:$0xf]
    %v4276 = vld [vmem:[%s3 + $0x324] sm:$0xff]
    %v4277 = vld [vmem:[%s3 + $0x32c] sm:$0xf]
    %v4278 = vld [vmem:[%s3 + $0x330] sm:$0xff]
    %v4279 = vld [vmem:[%s3 + $0x338] sm:$0xf]
    %v4280 = vld [vmem:[%s3 + $0x33c] sm:$0xff]
    %v4281 = vld [vmem:[%s3 + $0x344] sm:$0xf]
    %v4282 = vld [vmem:[%s3 + $0x348] sm:$0xff]
    %v4283 = vld [vmem:[%s3 + $0x350] sm:$0xf]
    %v4284 = vld [vmem:[%s3 + $0x354] sm:$0xff]
    %v4285 = vld [vmem:[%s3 + $0x35c] sm:$0xf]
    %v4286 = vld [vmem:[%s3 + $0x360] sm:$0xff]
    %v4287 = vld [vmem:[%s3 + $0x368] sm:$0xf]
    %v4288 = vld [vmem:[%s3 + $0x36c] sm:$0xff]
    %v4289 = vld [vmem:[%s3 + $0x374] sm:$0xf]
    %v4290 = vld [vmem:[%s3 + $0x378] sm:$0xff]
    %v4291 = vld [vmem:[%s3 + $0x380] sm:$0xf]
    %v4292 = vld [vmem:[%s3 + $0x384] sm:$0xff]
    %v4293 = vld [vmem:[%s3 + $0x38c] sm:$0xf]
    %v4294 = vld [vmem:[%s3 + $0x390] sm:$0xff]
    %v4295 = vld [vmem:[%s3 + $0x398] sm:$0xf]
    %v4296 = vld [vmem:[%s3 + $0x39c] sm:$0xff]
    %v4297 = vld [vmem:[%s3 + $0x3a4] sm:$0xf]
    %v4298 = vld [vmem:[%s3 + $0x3a8] sm:$0xff]
    %v4299 = vld [vmem:[%s3 + $0x3b0] sm:$0xf]
    %v4300 = vld [vmem:[%s3 + $0x3b4] sm:$0xff]
    %v4301 = vld [vmem:[%s3 + $0x3bc] sm:$0xf]
    %v4302 = vld [vmem:[%s3 + $0x3c0] sm:$0xff]
    %v4303 = vld [vmem:[%s3 + $0x3c8] sm:$0xf]
    %v4304 = vld [vmem:[%s3 + $0x3cc] sm:$0xff]
    %v4305 = vld [vmem:[%s3 + $0x3d4] sm:$0xf]
    %v4306 = vld [vmem:[%s3 + $0x3d8] sm:$0xff]
    %v4307 = vld [vmem:[%s3 + $0x3e0] sm:$0xf]
    %v4308 = vld [vmem:[%s3 + $0x3e4] sm:$0xff]
    %v4309 = vld [vmem:[%s3 + $0x3ec] sm:$0xf]
    %v4310 = vld [vmem:[%s3 + $0x3f0] sm:$0xff]
    %v4311 = vld [vmem:[%s3 + $0x3f8] sm:$0xf]
    %v4312 = vld [vmem:[%s3 + $0x3fc] sm:$0xff]
    %v4313 = vld [vmem:[%s3 + $0x404] sm:$0xf]
    %v4314 = vld [vmem:[%s3 + $0x408] sm:$0xff]
    %v4315 = vld [vmem:[%s3 + $0x410] sm:$0xf]
    %v4316 = vld [vmem:[%s3 + $0x414] sm:$0xff]
    %v4317 = vld [vmem:[%s3 + $0x41c] sm:$0xf]
    %v4318 = vld [vmem:[%s3 + $0x420] sm:$0xff]
    %v4319 = vld [vmem:[%s3 + $0x428] sm:$0xf]
    %v4320 = vld [vmem:[%s3 + $0x42c] sm:$0xff]
    %v4321 = vld [vmem:[%s3 + $0x434] sm:$0xf]
    %v4322 = vld [vmem:[%s4] sm:$0x7]
    %v4324 = vlaneseq
    %v4325 = vshrl.u32 %v4324, 7
    %v4326 = vsub.s32 0, %v4325
    %v4327 = vrot.slane %v4322, %v4326
    %v4328 = vlaneseq
    %v4329 = vshrl.u32 %v4328, 7
    %v4330 = vsub.s32 1, %v4329
    %v4331 = vrot.slane %v4322, %v4330
    %v4332 = vlaneseq
    %v4333 = vshrl.u32 %v4332, 7
    %v4334 = vsub.s32 2, %v4333
    %v4335 = vrot.slane %v4322, %v4334
    %v4519 = vunpack.c.l.b16 %v4142
    %v4520 = vunpack.c.h.b16 %v4142
    %v4521 = vunpack.c.l.b16 %v4143
    %v4522 = vunpack.c.l.b16 %v4144
    %v4523 = vunpack.c.h.b16 %v4144
    %v4524 = vunpack.c.l.b16 %v4145
    %v4525 = vunpack.c.l.b16 %v4146
    %v4526 = vunpack.c.h.b16 %v4146
    %v4527 = vunpack.c.l.b16 %v4147
    %v4528 = vunpack.c.l.b16 %v4148
    %v4529 = vunpack.c.h.b16 %v4148
    %v4530 = vunpack.c.l.b16 %v4149
    %v4531 = vunpack.c.l.b16 %v4150
    %v4532 = vunpack.c.h.b16 %v4150
    %v4533 = vunpack.c.l.b16 %v4151
    %v4534 = vunpack.c.l.b16 %v4152
    %v4535 = vunpack.c.h.b16 %v4152
    %v4536 = vunpack.c.l.b16 %v4153
    %v4537 = vunpack.c.l.b16 %v4154
    %v4538 = vunpack.c.h.b16 %v4154
    %v4539 = vunpack.c.l.b16 %v4155
    %v4540 = vunpack.c.l.b16 %v4156
    %v4541 = vunpack.c.h.b16 %v4156
    %v4542 = vunpack.c.l.b16 %v4157
    %v4543 = vunpack.c.l.b16 %v4158
    %v4544 = vunpack.c.h.b16 %v4158
    %v4545 = vunpack.c.l.b16 %v4159
    %v4546 = vunpack.c.l.b16 %v4160
    %v4547 = vunpack.c.h.b16 %v4160
    %v4548 = vunpack.c.l.b16 %v4161
    %v4549 = vunpack.c.l.b16 %v4162
    %v4550 = vunpack.c.h.b16 %v4162
    %v4551 = vunpack.c.l.b16 %v4163
    %v4552 = vunpack.c.l.b16 %v4164
    %v4553 = vunpack.c.h.b16 %v4164
    %v4554 = vunpack.c.l.b16 %v4165
    %v4555 = vunpack.c.l.b16 %v4166
    %v4556 = vunpack.c.h.b16 %v4166
    %v4557 = vunpack.c.l.b16 %v4167
    %v4558 = vunpack.c.l.b16 %v4168
    %v4559 = vunpack.c.h.b16 %v4168
    %v4560 = vunpack.c.l.b16 %v4169
    %v4561 = vunpack.c.l.b16 %v4170
    %v4562 = vunpack.c.h.b16 %v4170
    %v4563 = vunpack.c.l.b16 %v4171
    %v4564 = vunpack.c.l.b16 %v4172
    %v4565 = vunpack.c.h.b16 %v4172
    %v4566 = vunpack.c.l.b16 %v4173
    %v4567 = vunpack.c.l.b16 %v4174
    %v4568 = vunpack.c.h.b16 %v4174
    %v4569 = vunpack.c.l.b16 %v4175
    %v4570 = vunpack.c.l.b16 %v4176
    %v4571 = vunpack.c.h.b16 %v4176
    %v4572 = vunpack.c.l.b16 %v4177
    %v4573 = vunpack.c.l.b16 %v4178
    %v4574 = vunpack.c.h.b16 %v4178
    %v4575 = vunpack.c.l.b16 %v4179
    %v4576 = vunpack.c.l.b16 %v4180
    %v4577 = vunpack.c.h.b16 %v4180
    %v4578 = vunpack.c.l.b16 %v4181
    %v4579 = vunpack.c.l.b16 %v4182
    %v4580 = vunpack.c.h.b16 %v4182
    %v4581 = vunpack.c.l.b16 %v4183
    %v4582 = vunpack.c.l.b16 %v4184
    %v4583 = vunpack.c.h.b16 %v4184
    %v4584 = vunpack.c.l.b16 %v4185
    %v4585 = vunpack.c.l.b16 %v4186
    %v4586 = vunpack.c.h.b16 %v4186
    %v4587 = vunpack.c.l.b16 %v4187
    %v4588 = vunpack.c.l.b16 %v4188
    %v4589 = vunpack.c.h.b16 %v4188
    %v4590 = vunpack.c.l.b16 %v4189
    %v4591 = vunpack.c.l.b16 %v4190
    %v4592 = vunpack.c.h.b16 %v4190
    %v4593 = vunpack.c.l.b16 %v4191
    %v4594 = vunpack.c.l.b16 %v4192
    %v4595 = vunpack.c.h.b16 %v4192
    %v4596 = vunpack.c.l.b16 %v4193
    %v4597 = vunpack.c.l.b16 %v4194
    %v4598 = vunpack.c.h.b16 %v4194
    %v4599 = vunpack.c.l.b16 %v4195
    %v4600 = vunpack.c.l.b16 %v4196
    %v4601 = vunpack.c.h.b16 %v4196
    %v4602 = vunpack.c.l.b16 %v4197
    %v4603 = vunpack.c.l.b16 %v4198
    %v4604 = vunpack.c.h.b16 %v4198
    %v4605 = vunpack.c.l.b16 %v4199
    %v4606 = vunpack.c.l.b16 %v4200
    %v4607 = vunpack.c.h.b16 %v4200
    %v4608 = vunpack.c.l.b16 %v4201
    %v4609 = vunpack.c.l.b16 %v4202
    %v4610 = vunpack.c.h.b16 %v4202
    %v4611 = vunpack.c.l.b16 %v4203
    %v4612 = vunpack.c.l.b16 %v4204
    %v4613 = vunpack.c.h.b16 %v4204
    %v4614 = vunpack.c.l.b16 %v4205
    %v4615 = vunpack.c.l.b16 %v4206
    %v4616 = vunpack.c.h.b16 %v4206
    %v4617 = vunpack.c.l.b16 %v4207
    %v4618 = vunpack.c.l.b16 %v4208
    %v4619 = vunpack.c.h.b16 %v4208
    %v4620 = vunpack.c.l.b16 %v4209
    %v4621 = vunpack.c.l.b16 %v4210
    %v4622 = vunpack.c.h.b16 %v4210
    %v4623 = vunpack.c.l.b16 %v4211
    %v4624 = vunpack.c.l.b16 %v4212
    %v4625 = vunpack.c.h.b16 %v4212
    %v4626 = vunpack.c.l.b16 %v4213
    %v4627 = vunpack.c.l.b16 %v4214
    %v4628 = vunpack.c.h.b16 %v4214
    %v4629 = vunpack.c.l.b16 %v4215
    %v4630 = vunpack.c.l.b16 %v4216
    %v4631 = vunpack.c.h.b16 %v4216
    %v4632 = vunpack.c.l.b16 %v4217
    %v4633 = vunpack.c.l.b16 %v4218
    %v4634 = vunpack.c.h.b16 %v4218
    %v4635 = vunpack.c.l.b16 %v4219
    %v4636 = vunpack.c.l.b16 %v4220
    %v4637 = vunpack.c.h.b16 %v4220
    %v4638 = vunpack.c.l.b16 %v4221
    %v4639 = vunpack.c.l.b16 %v4222
    %v4640 = vunpack.c.h.b16 %v4222
    %v4641 = vunpack.c.l.b16 %v4223
    %v4642 = vunpack.c.l.b16 %v4224
    %v4643 = vunpack.c.h.b16 %v4224
    %v4644 = vunpack.c.l.b16 %v4225
    %v4645 = vunpack.c.l.b16 %v4226
    %v4646 = vunpack.c.h.b16 %v4226
    %v4647 = vunpack.c.l.b16 %v4227
    %v4648 = vunpack.c.l.b16 %v4228
    %v4649 = vunpack.c.h.b16 %v4228
    %v4650 = vunpack.c.l.b16 %v4229
    %v4651 = vunpack.c.l.b16 %v4230
    %v4652 = vunpack.c.h.b16 %v4230
    %v4653 = vunpack.c.l.b16 %v4231
    %v4654 = vunpack.c.l.b16 %v4232
    %v4655 = vunpack.c.h.b16 %v4232
    %v4656 = vunpack.c.l.b16 %v4233
    %v4657 = vunpack.c.l.b16 %v4234
    %v4658 = vunpack.c.h.b16 %v4234
    %v4659 = vunpack.c.l.b16 %v4235
    %v4660 = vunpack.c.l.b16 %v4236
    %v4661 = vunpack.c.h.b16 %v4236
    %v4662 = vunpack.c.l.b16 %v4237
    %v4663 = vunpack.c.l.b16 %v4238
    %v4664 = vunpack.c.h.b16 %v4238
    %v4665 = vunpack.c.l.b16 %v4239
    %v4666 = vunpack.c.l.b16 %v4240
    %v4667 = vunpack.c.h.b16 %v4240
    %v4668 = vunpack.c.l.b16 %v4241
    %v4669 = vunpack.c.l.b16 %v4242
    %v4670 = vunpack.c.h.b16 %v4242
    %v4671 = vunpack.c.l.b16 %v4243
    %v4672 = vunpack.c.l.b16 %v4244
    %v4673 = vunpack.c.h.b16 %v4244
    %v4674 = vunpack.c.l.b16 %v4245
    %v4675 = vunpack.c.l.b16 %v4246
    %v4676 = vunpack.c.h.b16 %v4246
    %v4677 = vunpack.c.l.b16 %v4247
    %v4678 = vunpack.c.l.b16 %v4248
    %v4679 = vunpack.c.h.b16 %v4248
    %v4680 = vunpack.c.l.b16 %v4249
    %v4681 = vunpack.c.l.b16 %v4250
    %v4682 = vunpack.c.h.b16 %v4250
    %v4683 = vunpack.c.l.b16 %v4251
    %v4684 = vunpack.c.l.b16 %v4252
    %v4685 = vunpack.c.h.b16 %v4252
    %v4686 = vunpack.c.l.b16 %v4253
    %v4687 = vunpack.c.l.b16 %v4254
    %v4688 = vunpack.c.h.b16 %v4254
    %v4689 = vunpack.c.l.b16 %v4255
    %v4690 = vunpack.c.l.b16 %v4256
    %v4691 = vunpack.c.h.b16 %v4256
    %v4692 = vunpack.c.l.b16 %v4257
    %v4693 = vunpack.c.l.b16 %v4258
    %v4694 = vunpack.c.h.b16 %v4258
    %v4695 = vunpack.c.l.b16 %v4259
    %v4696 = vunpack.c.l.b16 %v4260
    %v4697 = vunpack.c.h.b16 %v4260
    %v4698 = vunpack.c.l.b16 %v4261
    %v4699 = vunpack.c.l.b16 %v4262
    %v4700 = vunpack.c.h.b16 %v4262
    %v4701 = vunpack.c.l.b16 %v4263
    %v4702 = vunpack.c.l.b16 %v4264
    %v4703 = vunpack.c.h.b16 %v4264
    %v4704 = vunpack.c.l.b16 %v4265
    %v4705 = vunpack.c.l.b16 %v4266
    %v4706 = vunpack.c.h.b16 %v4266
    %v4707 = vunpack.c.l.b16 %v4267
    %v4708 = vunpack.c.l.b16 %v4268
    %v4709 = vunpack.c.h.b16 %v4268
    %v4710 = vunpack.c.l.b16 %v4269
    %v4711 = vunpack.c.l.b16 %v4270
    %v4712 = vunpack.c.h.b16 %v4270
    %v4713 = vunpack.c.l.b16 %v4271
    %v4714 = vunpack.c.l.b16 %v4272
    %v4715 = vunpack.c.h.b16 %v4272
    %v4716 = vunpack.c.l.b16 %v4273
    %v4717 = vunpack.c.l.b16 %v4274
    %v4718 = vunpack.c.h.b16 %v4274
    %v4719 = vunpack.c.l.b16 %v4275
    %v4720 = vunpack.c.l.b16 %v4276
    %v4721 = vunpack.c.h.b16 %v4276
    %v4722 = vunpack.c.l.b16 %v4277
    %v4723 = vunpack.c.l.b16 %v4278
    %v4724 = vunpack.c.h.b16 %v4278
    %v4725 = vunpack.c.l.b16 %v4279
    %v4726 = vunpack.c.l.b16 %v4280
    %v4727 = vunpack.c.h.b16 %v4280
    %v4728 = vunpack.c.l.b16 %v4281
    %v4729 = vunpack.c.l.b16 %v4282
    %v4730 = vunpack.c.h.b16 %v4282
    %v4731 = vunpack.c.l.b16 %v4283
    %v4732 = vunpack.c.l.b16 %v4284
    %v4733 = vunpack.c.h.b16 %v4284
    %v4734 = vunpack.c.l.b16 %v4285
    %v4735 = vunpack.c.l.b16 %v4286
    %v4736 = vunpack.c.h.b16 %v4286
    %v4737 = vunpack.c.l.b16 %v4287
    %v4738 = vunpack.c.l.b16 %v4288
    %v4739 = vunpack.c.h.b16 %v4288
    %v4740 = vunpack.c.l.b16 %v4289
    %v4741 = vunpack.c.l.b16 %v4290
    %v4742 = vunpack.c.h.b16 %v4290
    %v4743 = vunpack.c.l.b16 %v4291
    %v4744 = vunpack.c.l.b16 %v4292
    %v4745 = vunpack.c.h.b16 %v4292
    %v4746 = vunpack.c.l.b16 %v4293
    %v4747 = vunpack.c.l.b16 %v4294
    %v4748 = vunpack.c.h.b16 %v4294
    %v4749 = vunpack.c.l.b16 %v4295
    %v4750 = vunpack.c.l.b16 %v4296
    %v4751 = vunpack.c.h.b16 %v4296
    %v4752 = vunpack.c.l.b16 %v4297
    %v4753 = vunpack.c.l.b16 %v4298
    %v4754 = vunpack.c.h.b16 %v4298
    %v4755 = vunpack.c.l.b16 %v4299
    %v4756 = vunpack.c.l.b16 %v4300
    %v4757 = vunpack.c.h.b16 %v4300
    %v4758 = vunpack.c.l.b16 %v4301
    %v4759 = vunpack.c.l.b16 %v4302
    %v4760 = vunpack.c.h.b16 %v4302
    %v4761 = vunpack.c.l.b16 %v4303
    %v4762 = vunpack.c.l.b16 %v4304
    %v4763 = vunpack.c.h.b16 %v4304
    %v4764 = vunpack.c.l.b16 %v4305
    %v4765 = vunpack.c.l.b16 %v4306
    %v4766 = vunpack.c.h.b16 %v4306
    %v4767 = vunpack.c.l.b16 %v4307
    %v4768 = vunpack.c.l.b16 %v4308
    %v4769 = vunpack.c.h.b16 %v4308
    %v4770 = vunpack.c.l.b16 %v4309
    %v4771 = vunpack.c.l.b16 %v4310
    %v4772 = vunpack.c.h.b16 %v4310
    %v4773 = vunpack.c.l.b16 %v4311
    %v4774 = vunpack.c.l.b16 %v4312
    %v4775 = vunpack.c.h.b16 %v4312
    %v4776 = vunpack.c.l.b16 %v4313
    %v4777 = vunpack.c.l.b16 %v4314
    %v4778 = vunpack.c.h.b16 %v4314
    %v4779 = vunpack.c.l.b16 %v4315
    %v4780 = vunpack.c.l.b16 %v4316
    %v4781 = vunpack.c.h.b16 %v4316
    %v4782 = vunpack.c.l.b16 %v4317
    %v4783 = vunpack.c.l.b16 %v4318
    %v4784 = vunpack.c.h.b16 %v4318
    %v4785 = vunpack.c.l.b16 %v4319
    %v4786 = vunpack.c.l.b16 %v4320
    %v4787 = vunpack.c.h.b16 %v4320
    %v4788 = vunpack.c.l.b16 %v4321
    %v4789 = vpack.c.b16 %v4522, %v4519
    %v4790 = vpack.c.b16 %v4523, %v4520
    %v4791 = vpack.c.b16 %v4524, %v4521
    %v4792 = vpack.c.b16 %v4528, %v4525
    %v4793 = vpack.c.b16 %v4529, %v4526
    %v4794 = vpack.c.b16 %v4530, %v4527
    %v4795 = vpack.c.b16 %v4534, %v4531
    %v4796 = vpack.c.b16 %v4535, %v4532
    %v4797 = vpack.c.b16 %v4536, %v4533
    %v4798 = vpack.c.b16 %v4540, %v4537
    %v4799 = vpack.c.b16 %v4541, %v4538
    %v4800 = vpack.c.b16 %v4542, %v4539
    %v4801 = vpack.c.b16 %v4546, %v4543
    %v4802 = vpack.c.b16 %v4547, %v4544
    %v4803 = vpack.c.b16 %v4548, %v4545
    %v4804 = vpack.c.b16 %v4552, %v4549
    %v4805 = vpack.c.b16 %v4553, %v4550
    %v4806 = vpack.c.b16 %v4554, %v4551
    %v4807 = vpack.c.b16 %v4558, %v4555
    %v4808 = vpack.c.b16 %v4559, %v4556
    %v4809 = vpack.c.b16 %v4560, %v4557
    %v4810 = vpack.c.b16 %v4564, %v4561
    %v4811 = vpack.c.b16 %v4565, %v4562
    %v4812 = vpack.c.b16 %v4566, %v4563
    %v4813 = vpack.c.b16 %v4570, %v4567
    %v4814 = vpack.c.b16 %v4571, %v4568
    %v4815 = vpack.c.b16 %v4572, %v4569
    %v4816 = vpack.c.b16 %v4576, %v4573
    %v4817 = vpack.c.b16 %v4577, %v4574
    %v4818 = vpack.c.b16 %v4578, %v4575
    %v4819 = vpack.c.b16 %v4582, %v4579
    %v4820 = vpack.c.b16 %v4583, %v4580
    %v4821 = vpack.c.b16 %v4584, %v4581
    %v4822 = vpack.c.b16 %v4588, %v4585
    %v4823 = vpack.c.b16 %v4589, %v4586
    %v4824 = vpack.c.b16 %v4590, %v4587
    %v4825 = vpack.c.b16 %v4594, %v4591
    %v4826 = vpack.c.b16 %v4595, %v4592
    %v4827 = vpack.c.b16 %v4596, %v4593
    %v4828 = vpack.c.b16 %v4600, %v4597
    %v4829 = vpack.c.b16 %v4601, %v4598
    %v4830 = vpack.c.b16 %v4602, %v4599
    %v4831 = vpack.c.b16 %v4606, %v4603
    %v4832 = vpack.c.b16 %v4607, %v4604
    %v4833 = vpack.c.b16 %v4608, %v4605
    %v4834 = vpack.c.b16 %v4612, %v4609
    %v4835 = vpack.c.b16 %v4613, %v4610
    %v4836 = vpack.c.b16 %v4614, %v4611
    %v4837 = vpack.c.b16 %v4618, %v4615
    %v4838 = vpack.c.b16 %v4619, %v4616
    %v4839 = vpack.c.b16 %v4620, %v4617
    %v4840 = vpack.c.b16 %v4624, %v4621
    %v4841 = vpack.c.b16 %v4625, %v4622
    %v4842 = vpack.c.b16 %v4626, %v4623
    %v4843 = vpack.c.b16 %v4630, %v4627
    %v4844 = vpack.c.b16 %v4631, %v4628
    %v4845 = vpack.c.b16 %v4632, %v4629
    %v4846 = vpack.c.b16 %v4636, %v4633
    %v4847 = vpack.c.b16 %v4637, %v4634
    %v4848 = vpack.c.b16 %v4638, %v4635
    %v4849 = vpack.c.b16 %v4642, %v4639
    %v4850 = vpack.c.b16 %v4643, %v4640
    %v4851 = vpack.c.b16 %v4644, %v4641
    %v4852 = vpack.c.b16 %v4648, %v4645
    %v4853 = vpack.c.b16 %v4649, %v4646
    %v4854 = vpack.c.b16 %v4650, %v4647
    %v4855 = vpack.c.b16 %v4654, %v4651
    %v4856 = vpack.c.b16 %v4655, %v4652
    %v4857 = vpack.c.b16 %v4656, %v4653
    %v4858 = vpack.c.b16 %v4660, %v4657
    %v4859 = vpack.c.b16 %v4661, %v4658
    %v4860 = vpack.c.b16 %v4662, %v4659
    %v4861 = vpack.c.b16 %v4666, %v4663
    %v4862 = vpack.c.b16 %v4667, %v4664
    %v4863 = vpack.c.b16 %v4668, %v4665
    %v4864 = vpack.c.b16 %v4672, %v4669
    %v4865 = vpack.c.b16 %v4673, %v4670
    %v4866 = vpack.c.b16 %v4674, %v4671
    %v4867 = vpack.c.b16 %v4678, %v4675
    %v4868 = vpack.c.b16 %v4679, %v4676
    %v4869 = vpack.c.b16 %v4680, %v4677
    %v4870 = vpack.c.b16 %v4684, %v4681
    %v4871 = vpack.c.b16 %v4685, %v4682
    %v4872 = vpack.c.b16 %v4686, %v4683
    %v4873 = vpack.c.b16 %v4690, %v4687
    %v4874 = vpack.c.b16 %v4691, %v4688
    %v4875 = vpack.c.b16 %v4692, %v4689
    %v4876 = vpack.c.b16 %v4696, %v4693
    %v4877 = vpack.c.b16 %v4697, %v4694
    %v4878 = vpack.c.b16 %v4698, %v4695
    %v4879 = vpack.c.b16 %v4702, %v4699
    %v4880 = vpack.c.b16 %v4703, %v4700
    %v4881 = vpack.c.b16 %v4704, %v4701
    %v4882 = vpack.c.b16 %v4708, %v4705
    %v4883 = vpack.c.b16 %v4709, %v4706
    %v4884 = vpack.c.b16 %v4710, %v4707
    %v4885 = vpack.c.b16 %v4714, %v4711
    %v4886 = vpack.c.b16 %v4715, %v4712
    %v4887 = vpack.c.b16 %v4716, %v4713
    %v4888 = vpack.c.b16 %v4720, %v4717
    %v4889 = vpack.c.b16 %v4721, %v4718
    %v4890 = vpack.c.b16 %v4722, %v4719
    %v4891 = vpack.c.b16 %v4726, %v4723
    %v4892 = vpack.c.b16 %v4727, %v4724
    %v4893 = vpack.c.b16 %v4728, %v4725
    %v4894 = vpack.c.b16 %v4732, %v4729
    %v4895 = vpack.c.b16 %v4733, %v4730
    %v4896 = vpack.c.b16 %v4734, %v4731
    %v4897 = vpack.c.b16 %v4738, %v4735
    %v4898 = vpack.c.b16 %v4739, %v4736
    %v4899 = vpack.c.b16 %v4740, %v4737
    %v4900 = vpack.c.b16 %v4744, %v4741
    %v4901 = vpack.c.b16 %v4745, %v4742
    %v4902 = vpack.c.b16 %v4746, %v4743
    %v4903 = vpack.c.b16 %v4750, %v4747
    %v4904 = vpack.c.b16 %v4751, %v4748
    %v4905 = vpack.c.b16 %v4752, %v4749
    %v4906 = vpack.c.b16 %v4756, %v4753
    %v4907 = vpack.c.b16 %v4757, %v4754
    %v4908 = vpack.c.b16 %v4758, %v4755
    %v4909 = vpack.c.b16 %v4762, %v4759
    %v4910 = vpack.c.b16 %v4763, %v4760
    %v4911 = vpack.c.b16 %v4764, %v4761
    %v4912 = vpack.c.b16 %v4768, %v4765
    %v4913 = vpack.c.b16 %v4769, %v4766
    %v4914 = vpack.c.b16 %v4770, %v4767
    %v4915 = vpack.c.b16 %v4774, %v4771
    %v4916 = vpack.c.b16 %v4775, %v4772
    %v4917 = vpack.c.b16 %v4776, %v4773
    %v4918 = vpack.c.b16 %v4780, %v4777
    %v4919 = vpack.c.b16 %v4781, %v4778
    %v4920 = vpack.c.b16 %v4782, %v4779
    %v4921 = vpack.c.b16 %v4786, %v4783
    %v4922 = vpack.c.b16 %v4787, %v4784
    %v4923 = vpack.c.b16 %v4788, %v4785
    %vm5059 = vcmask 654336
    %v5061 = vsel %vm5059, %v4141, 0
    %5063 = vmatprep.subr.bf16.mxu0 %v4790
    %5064 = vmatpush1.bf16.msra.mxu0 %v4789
    %5065 = vmatprep.subr.bf16.mxu0 %v4793
    %5066 = vmatpush1.bf16.msra.mxu0 %v4792
    %5067 = vmatprep.subr.bf16.mxu0 %v4796
    %5068 = vmatpush1.bf16.msra.mxu0 %v4795
    %5069 = vmatprep.subr.bf16.mxu0 %v4799
    %5070 = vmatpush1.bf16.msra.mxu0 %v4798
    %5071 = vmatprep.subr.bf16.mxu0 %v4802
    %5072 = vmatpush1.bf16.msra.mxu0 %v4801
    %5073 = vmatprep.subr.bf16.mxu0 %v4805
    %5074 = vmatpush1.bf16.msra.mxu0 %v4804
    %5075 = vmatprep.subr.bf16.mxu0 %v4808
    %5076 = vmatpush1.bf16.msra.mxu0 %v4807
    %5077 = vmatprep.subr.bf16.mxu0 %v4811
    %5078 = vmatpush1.bf16.msra.mxu0 %v4810
    %5079 = vmatprep.subr.bf16.mxu0 %v4814
    %5080 = vmatpush1.bf16.msra.mxu0 %v4813
    %5081 = vmatprep.subr.bf16.mxu0 %v4817
    %5082 = vmatpush1.bf16.msra.mxu0 %v4816
    %5083 = vmatprep.subr.bf16.mxu0 %v4820
    %5084 = vmatpush1.bf16.msra.mxu0 %v4819
    %5085 = vmatprep.subr.bf16.mxu0 %v4823
    %5086 = vmatpush1.bf16.msra.mxu0 %v4822
    %5087 = vmatprep.subr.bf16.mxu0 %v4826
    %5088 = vmatpush1.bf16.msra.mxu0 %v4825
    %5089 = vmatprep.subr.bf16.mxu0 %v4829
    %5090 = vmatpush1.bf16.msra.mxu0 %v4828
    %5091 = vmatprep.subr.bf16.mxu0 %v4832
    %5092 = vmatpush1.bf16.msra.mxu0 %v4831
    %5093 = vmatprep.subr.bf16.mxu0 %v4835
    %5094 = vmatpush1.bf16.msra.mxu0 %v4834
    %5095 = vmatprep.mubr.bf16.mxu0 %v4137
    %5096 = vmatmul.mubr.bf16.gmra.mrb[0].mxu0 %v4136
    %v5097 = vpop.f32.mrb[0].mxu0
    %v5098 = vadd.f32 %v4327, %v5097
    %v5099 = vpop.f32.mrb[0].mxu0
    %v5100 = vadd.f32 %v4331, %v5099
    %v5101 = vpop.f32.mrb[0].mxu0
    %v5102 = vpop.f32.mrb[0].mxu0
    %5103 = vdwg.mxu0
    %5104 = vmatprep.subr.bf16.mxu0 %v4838
    %5105 = vmatpush1.bf16.msra.mxu0 %v4837
    %5106 = vmatprep.subr.bf16.mxu0 %v4841
    %5107 = vmatpush1.bf16.msra.mxu0 %v4840
    %5108 = vmatprep.subr.bf16.mxu0 %v4844
    %5109 = vmatpush1.bf16.msra.mxu0 %v4843
    %5110 = vmatprep.subr.bf16.mxu0 %v4847
    %5111 = vmatpush1.bf16.msra.mxu0 %v4846
    %5112 = vmatprep.subr.bf16.mxu0 %v4850
    %5113 = vmatpush1.bf16.msra.mxu0 %v4849
    %5114 = vmatprep.subr.bf16.mxu0 %v4853
    %5115 = vmatpush1.bf16.msra.mxu0 %v4852
    %5116 = vmatprep.subr.bf16.mxu0 %v4856
    %5117 = vmatpush1.bf16.msra.mxu0 %v4855
    %5118 = vmatprep.subr.bf16.mxu0 %v4859
    %5119 = vmatpush1.bf16.msra.mxu0 %v4858
    %5120 = vmatprep.subr.bf16.mxu0 %v4862
    %5121 = vmatpush1.bf16.msra.mxu0 %v4861
    %5122 = vmatprep.subr.bf16.mxu0 %v4865
    %5123 = vmatpush1.bf16.msra.mxu0 %v4864
    %5124 = vmatprep.subr.bf16.mxu0 %v4868
    %5125 = vmatpush1.bf16.msra.mxu0 %v4867
    %5126 = vmatprep.subr.bf16.mxu0 %v4871
    %5127 = vmatpush1.bf16.msra.mxu0 %v4870
    %5128 = vmatprep.subr.bf16.mxu0 %v4874
    %5129 = vmatpush1.bf16.msra.mxu0 %v4873
    %5130 = vmatprep.subr.bf16.mxu0 %v4877
    %5131 = vmatpush1.bf16.msra.mxu0 %v4876
    %5132 = vmatprep.subr.bf16.mxu0 %v4880
    %5133 = vmatpush1.bf16.msra.mxu0 %v4879
    %5134 = vmatprep.subr.bf16.mxu0 %v4883
    %5135 = vmatpush1.bf16.msra.mxu0 %v4882
    %5136 = vmatprep.mubr.bf16.mxu0 %v4139
    %5137 = vmatmul.mubr.bf16.gmra.mrb[0].mxu0 %v4138
    %v5138 = vpop.f32.mrb[0].mxu0
    %v5139 = vadd.f32 %v5098, %v5138
    %v5140 = vpop.f32.mrb[0].mxu0
    %v5141 = vadd.f32 %v5100, %v5140
    %v5142 = vpop.f32.mrb[0].mxu0
    %v5143 = vpop.f32.mrb[0].mxu0
    %5144 = vdwg.mxu0
    %5145 = vmatprep.subr.bf16.mxu0 %v4886
    %5146 = vmatpush1.bf16.msra.mxu0 %v4885
    %5147 = vmatprep.subr.bf16.mxu0 %v4889
    %5148 = vmatpush1.bf16.msra.mxu0 %v4888
    %5149 = vmatprep.subr.bf16.mxu0 %v4892
    %5150 = vmatpush1.bf16.msra.mxu0 %v4891
    %5151 = vmatprep.subr.bf16.mxu0 %v4895
    %5152 = vmatpush1.bf16.msra.mxu0 %v4894
    %5153 = vmatprep.subr.bf16.mxu0 %v4898
    %5154 = vmatpush1.bf16.msra.mxu0 %v4897
    %5155 = vmatprep.subr.bf16.mxu0 %v4901
    %5156 = vmatpush1.bf16.msra.mxu0 %v4900
    %5157 = vmatprep.subr.bf16.mxu0 %v4904
    %5158 = vmatpush1.bf16.msra.mxu0 %v4903
    %5159 = vmatprep.subr.bf16.mxu0 %v4907
    %5160 = vmatpush1.bf16.msra.mxu0 %v4906
    %5161 = vmatprep.subr.bf16.mxu0 %v4910
    %5162 = vmatpush1.bf16.msra.mxu0 %v4909
    %5163 = vmatprep.subr.bf16.mxu0 %v4913
    %5164 = vmatpush1.bf16.msra.mxu0 %v4912
    %5165 = vmatprep.subr.bf16.mxu0 %v4916
    %5166 = vmatpush1.bf16.msra.mxu0 %v4915
    %5167 = vmatprep.subr.bf16.mxu0 %v4919
    %5168 = vmatpush1.bf16.msra.mxu0 %v4918
    %5169 = vmatprep.subr.bf16.mxu0 %v4922
    %5170 = vmatpush1.bf16.msra.mxu0 %v4921
    %5171 = vmatprep.subr.bf16.mxu0 0
    %5172 = vmatpush1.bf16.msra.mxu0 0
    %5173 = vmatprep.subr.bf16.mxu0 0
    %5174 = vmatpush1.bf16.msra.mxu0 0
    %5175 = vmatprep.subr.bf16.mxu0 0
    %5176 = vmatpush1.bf16.msra.mxu0 0
    %5177 = vmatprep.mubr.bf16.mxu0 %v5061
    %5178 = vmatmul.mubr.bf16.gmra.mrb[0].mxu0 %v4140
    %v5179 = vpop.f32.mrb[0].mxu0
    %v5180 = vadd.f32 %v5139, %v5179
    %v5181 = vpop.f32.mrb[0].mxu0
    %v5182 = vadd.f32 %v5141, %v5181
    %v5183 = vpop.f32.mrb[0].mxu0
    %v5184 = vpop.f32.mrb[0].mxu0
    %5185 = vdwg.mxu0
    %5186 = vmatprep.subr.bf16.mxu0 0
    %5187 = vmatpush1.bf16.msra.mxu0 %v4791
    %5188 = vmatprep.subr.bf16.mxu0 0
    %5189 = vmatpush1.bf16.msra.mxu0 %v4794
    %5190 = vmatprep.subr.bf16.mxu0 0
    %5191 = vmatpush1.bf16.msra.mxu0 %v4797
    %5192 = vmatprep.subr.bf16.mxu0 0
    %5193 = vmatpush1.bf16.msra.mxu0 %v4800
    %5194 = vmatprep.subr.bf16.mxu0 0
    %5195 = vmatpush1.bf16.msra.mxu0 %v4803
    %5196 = vmatprep.subr.bf16.mxu0 0
    %5197 = vmatpush1.bf16.msra.mxu0 %v4806
    %5198 = vmatprep.subr.bf16.mxu0 0
    %5199 = vmatpush1.bf16.msra.mxu0 %v4809
    %5200 = vmatprep.subr.bf16.mxu0 0
    %5201 = vmatpush1.bf16.msra.mxu0 %v4812
    %5202 = vmatprep.subr.bf16.mxu0 0
    %5203 = vmatpush1.bf16.msra.mxu0 %v4815
    %5204 = vmatprep.subr.bf16.mxu0 0
    %5205 = vmatpush1.bf16.msra.mxu0 %v4818
    %5206 = vmatprep.subr.bf16.mxu0 0
    %5207 = vmatpush1.bf16.msra.mxu0 %v4821
    %5208 = vmatprep.subr.bf16.mxu0 0
    %5209 = vmatpush1.bf16.msra.mxu0 %v4824
    %5210 = vmatprep.subr.bf16.mxu0 0
    %5211 = vmatpush1.bf16.msra.mxu0 %v4827
    %5212 = vmatprep.subr.bf16.mxu0 0
    %5213 = vmatpush1.bf16.msra.mxu0 %v4830
    %5214 = vmatprep.subr.bf16.mxu0 0
    %5215 = vmatpush1.bf16.msra.mxu0 %v4833
    %5216 = vmatprep.subr.bf16.mxu0 0
    %5217 = vmatpush1.bf16.msra.mxu0 %v4836
    %5218 = vmatprep.mubr.bf16.mxu0 %v4137
    %5219 = vmatmul.mubr.bf16.gmra.mrb[0].mxu0 %v4136
    %v5220 = vpop.f32.mrb[0].mxu0
    %v5221 = vadd.f32 %v4335, %v5220
    %v5222 = vpop.f32.mrb[0].mxu0
    %v5223 = vpop.f32.mrb[0].mxu0
    %v5224 = vpop.f32.mrb[0].mxu0
    %5225 = vdwg.mxu0
    %5226 = vmatprep.subr.bf16.mxu0 0
    %5227 = vmatpush1.bf16.msra.mxu0 %v4839
    %5228 = vmatprep.subr.bf16.mxu0 0
    %5229 = vmatpush1.bf16.msra.mxu0 %v4842
    %5230 = vmatprep.subr.bf16.mxu0 0
    %5231 = vmatpush1.bf16.msra.mxu0 %v4845
    %5232 = vmatprep.subr.bf16.mxu0 0
    %5233 = vmatpush1.bf16.msra.mxu0 %v4848
    %5234 = vmatprep.subr.bf16.mxu0 0
    %5235 = vmatpush1.bf16.msra.mxu0 %v4851
    %5236 = vmatprep.subr.bf16.mxu0 0
    %5237 = vmatpush1.bf16.msra.mxu0 %v4854
    %5238 = vmatprep.subr.bf16.mxu0 0
    %5239 = vmatpush1.bf16.msra.mxu0 %v4857
    %5240 = vmatprep.subr.bf16.mxu0 0
    %5241 = vmatpush1.bf16.msra.mxu0 %v4860
    %5242 = vmatprep.subr.bf16.mxu0 0
    %5243 = vmatpush1.bf16.msra.mxu0 %v4863
    %5244 = vmatprep.subr.bf16.mxu0 0
    %5245 = vmatpush1.bf16.msra.mxu0 %v4866
    %5246 = vmatprep.subr.bf16.mxu0 0
    %5247 = vmatpush1.bf16.msra.mxu0 %v4869
    %5248 = vmatprep.subr.bf16.mxu0 0
    %5249 = vmatpush1.bf16.msra.mxu0 %v4872
    %5250 = vmatprep.subr.bf16.mxu0 0
    %5251 = vmatpush1.bf16.msra.mxu0 %v4875
    %5252 = vmatprep.subr.bf16.mxu0 0
    %5253 = vmatpush1.bf16.msra.mxu0 %v4878
    %5254 = vmatprep.subr.bf16.mxu0 0
    %5255 = vmatpush1.bf16.msra.mxu0 %v4881
    %5256 = vmatprep.subr.bf16.mxu0 0
    %5257 = vmatpush1.bf16.msra.mxu0 %v4884
    %5258 = vmatprep.mubr.bf16.mxu0 %v4139
    %5259 = vmatmul.mubr.bf16.gmra.mrb[0].mxu0 %v4138
    %v5260 = vpop.f32.mrb[0].mxu0
    %v5261 = vadd.f32 %v5221, %v5260
    %v5262 = vpop.f32.mrb[0].mxu0
    %v5263 = vpop.f32.mrb[0].mxu0
    %v5264 = vpop.f32.mrb[0].mxu0
    %5265 = vdwg.mxu0
    %5266 = vmatprep.subr.bf16.mxu0 0
    %5267 = vmatpush1.bf16.msra.mxu0 %v4887
    %5268 = vmatprep.subr.bf16.mxu0 0
    %5269 = vmatpush1.bf16.msra.mxu0 %v4890
    %5270 = vmatprep.subr.bf16.mxu0 0
    %5271 = vmatpush1.bf16.msra.mxu0 %v4893
    %5272 = vmatprep.subr.bf16.mxu0 0
    %5273 = vmatpush1.bf16.msra.mxu0 %v4896
    %5274 = vmatprep.subr.bf16.mxu0 0
    %5275 = vmatpush1.bf16.msra.mxu0 %v4899
    %5276 = vmatprep.subr.bf16.mxu0 0
    %5277 = vmatpush1.bf16.msra.mxu0 %v4902
    %5278 = vmatprep.subr.bf16.mxu0 0
    %5279 = vmatpush1.bf16.msra.mxu0 %v4905
    %5280 = vmatprep.subr.bf16.mxu0 0
    %5281 = vmatpush1.bf16.msra.mxu0 %v4908
    %5282 = vmatprep.subr.bf16.mxu0 0
    %5283 = vmatpush1.bf16.msra.mxu0 %v4911
    %5284 = vmatprep.subr.bf16.mxu0 0
    %5285 = vmatpush1.bf16.msra.mxu0 %v4914
    %5286 = vmatprep.subr.bf16.mxu0 0
    %5287 = vmatpush1.bf16.msra.mxu0 %v4917
    %5288 = vmatprep.subr.bf16.mxu0 0
    %5289 = vmatpush1.bf16.msra.mxu0 %v4920
    %5290 = vmatprep.subr.bf16.mxu0 0
    %5291 = vmatpush1.bf16.msra.mxu0 %v4923
    %5292 = vmatprep.subr.bf16.mxu0 0
    %5293 = vmatpush1.bf16.msra.mxu0 0
    %5294 = vmatprep.subr.bf16.mxu0 0
    %5295 = vmatpush1.bf16.msra.mxu0 0
    %5296 = vmatprep.subr.bf16.mxu0 0
    %5297 = vmatpush1.bf16.msra.mxu0 0
    %5298 = vmatprep.mubr.bf16.mxu0 %v5061
    %5299 = vmatmul.mubr.bf16.gmra.mrb[0].mxu0 %v4140
    %v5300 = vpop.f32.mrb[0].mxu0
    %v5301 = vadd.f32 %v5261, %v5300
    %v5302 = vpop.f32.mrb[0].mxu0
    %v5303 = vpop.f32.mrb[0].mxu0
    %v5304 = vpop.f32.mrb[0].mxu0
    %5305 = vdwg.mxu0
    %v5306 = vpack.c.bf16 %v5180, %v5180
    %v5307 = vpack.c.bf16 %v5182, %v5182
    %v5308 = vpack.c.bf16 %v5301, %v5301
    %v5309 = vld [vmem:[%s5] sm:$0xf]
    %v5310 = vld [vmem:[%s5 + $0x4] sm:$0xf]
    %v5311 = vld [vmem:[%s5 + $0x8] sm:$0xf]
    %v5312 = vld [vmem:[%s5 + $0xc] sm:$0xf]
    %v5313 = vld [vmem:[%s5 + $0x10] sm:$0xf]
    %v5314 = vld [vmem:[%s5 + $0x14] sm:$0xf]
    %v5315 = vld [vmem:[%s5 + $0x18] sm:$0xf]
    %v5316 = vld [vmem:[%s5 + $0x1c] sm:$0xf]
    %v5317 = vld [vmem:[%s5 + $0x20] sm:$0xf]
    %v5318 = vld [vmem:[%s5 + $0x24] sm:$0xf]
    %v5319 = vld [vmem:[%s5 + $0x28] sm:$0xf]
    %v5320 = vld [vmem:[%s5 + $0x2c] sm:$0xf]
    %v5321 = vld [vmem:[%s5 + $0x30] sm:$0xf]
    %v5322 = vld [vmem:[%s5 + $0x34] sm:$0xf]
    %v5323 = vld [vmem:[%s5 + $0x38] sm:$0xf]
    %v5324 = vld [vmem:[%s5 + $0x3c] sm:$0xf]
    %v5325 = vld [vmem:[%s5 + $0x40] sm:$0xf]
    %v5326 = vld [vmem:[%s5 + $0x44] sm:$0xf]
    %v5327 = vld [vmem:[%s5 + $0x48] sm:$0xf]
    %v5328 = vld [vmem:[%s5 + $0x4c] sm:$0xf]
    %v5329 = vld [vmem:[%s5 + $0x50] sm:$0xf]
    %v5330 = vld [vmem:[%s5 + $0x54] sm:$0xf]
    %v5331 = vld [vmem:[%s5 + $0x58] sm:$0xf]
    %v5332 = vld [vmem:[%s5 + $0x5c] sm:$0xf]
    %v5333 = vld [vmem:[%s5 + $0x60] sm:$0xf]
    %v5334 = vld [vmem:[%s5 + $0x64] sm:$0xf]
    %v5335 = vld [vmem:[%s5 + $0x68] sm:$0xf]
    %v5336 = vld [vmem:[%s5 + $0x6c] sm:$0xf]
    %v5337 = vld [vmem:[%s5 + $0x70] sm:$0xf]
    %v5338 = vld [vmem:[%s5 + $0x74] sm:$0xf]
    %v5339 = vld [vmem:[%s5 + $0x78] sm:$0xf]
    %v5340 = vld [vmem:[%s5 + $0x7c] sm:$0xf]
    %v5341 = vld [vmem:[%s5 + $0x80] sm:$0xf]
    %v5342 = vld [vmem:[%s5 + $0x84] sm:$0xf]
    %v5343 = vld [vmem:[%s5 + $0x88] sm:$0xf]
    %v5344 = vld [vmem:[%s5 + $0x8c] sm:$0xf]
    %v5345 = vld [vmem:[%s5 + $0x90] sm:$0xf]
    %v5346 = vld [vmem:[%s5 + $0x94] sm:$0xf]
    %v5347 = vld [vmem:[%s5 + $0x98] sm:$0xf]
    %v5348 = vld [vmem:[%s5 + $0x9c] sm:$0xf]
    %v5349 = vld [vmem:[%s5 + $0xa0] sm:$0xf]
    %v5350 = vld [vmem:[%s5 + $0xa4] sm:$0xf]
    %v5351 = vld [vmem:[%s5 + $0xa8] sm:$0xf]
    %v5352 = vld [vmem:[%s5 + $0xac] sm:$0xf]
    %v5353 = vld [vmem:[%s5 + $0xb0] sm:$0xf]
    %v5354 = vld [vmem:[%s6] sm:$0x1]
    %v5356 = vlaneseq
    %v5357 = vshrl.u32 %v5356, 7
    %v5358 = vsub.s32 0, %v5357
    %v5359 = vrot.slane %v5354, %v5358
    %v5406 = vunpack.c.l.b16 %v5309
    %v5407 = vunpack.c.l.b16 %v5310
    %v5408 = vunpack.c.l.b16 %v5311
    %v5409 = vunpack.c.l.b16 %v5312
    %v5410 = vunpack.c.l.b16 %v5313
    %v5411 = vunpack.c.l.b16 %v5314
    %v5412 = vunpack.c.l.b16 %v5315
    %v5413 = vunpack.c.l.b16 %v5316
    %v5414 = vunpack.c.l.b16 %v5317
    %v5415 = vunpack.c.l.b16 %v5318
    %v5416 = vunpack.c.l.b16 %v5319
    %v5417 = vunpack.c.l.b16 %v5320
    %v5418 = vunpack.c.l.b16 %v5321
    %v5419 = vunpack.c.l.b16 %v5322
    %v5420 = vunpack.c.l.b16 %v5323
    %v5421 = vunpack.c.l.b16 %v5324
    %v5422 = vunpack.c.l.b16 %v5325
    %v5423 = vunpack.c.l.b16 %v5326
    %v5424 = vunpack.c.l.b16 %v5327
    %v5425 = vunpack.c.l.b16 %v5328
    %v5426 = vunpack.c.l.b16 %v5329
    %v5427 = vunpack.c.l.b16 %v5330
    %v5428 = vunpack.c.l.b16 %v5331
    %v5429 = vunpack.c.l.b16 %v5332
    %v5430 = vunpack.c.l.b16 %v5333
    %v5431 = vunpack.c.l.b16 %v5334
    %v5432 = vunpack.c.l.b16 %v5335
    %v5433 = vunpack.c.l.b16 %v5336
    %v5434 = vunpack.c.l.b16 %v5337
    %v5435 = vunpack.c.l.b16 %v5338
    %v5436 = vunpack.c.l.b16 %v5339
    %v5437 = vunpack.c.l.b16 %v5340
    %v5438 = vunpack.c.l.b16 %v5341
    %v5439 = vunpack.c.l.b16 %v5342
    %v5440 = vunpack.c.l.b16 %v5343
    %v5441 = vunpack.c.l.b16 %v5344
    %v5442 = vunpack.c.l.b16 %v5345
    %v5443 = vunpack.c.l.b16 %v5346
    %v5444 = vunpack.c.l.b16 %v5347
    %v5445 = vunpack.c.l.b16 %v5348
    %v5446 = vunpack.c.l.b16 %v5349
    %v5447 = vunpack.c.l.b16 %v5350
    %v5448 = vunpack.c.l.b16 %v5351
    %v5449 = vunpack.c.l.b16 %v5352
    %v5450 = vunpack.c.l.b16 %v5353
    %v5451 = vpack.c.b16 %v5407, %v5406
    %v5452 = vpack.c.b16 %v5409, %v5408
    %v5453 = vpack.c.b16 %v5411, %v5410
    %v5454 = vpack.c.b16 %v5413, %v5412
    %v5455 = vpack.c.b16 %v5415, %v5414
    %v5456 = vpack.c.b16 %v5417, %v5416
    %v5457 = vpack.c.b16 %v5419, %v5418
    %v5458 = vpack.c.b16 %v5421, %v5420
    %v5459 = vpack.c.b16 %v5423, %v5422
    %v5460 = vpack.c.b16 %v5425, %v5424
    %v5461 = vpack.c.b16 %v5427, %v5426
    %v5462 = vpack.c.b16 %v5429, %v5428
    %v5463 = vpack.c.b16 %v5431, %v5430
    %v5464 = vpack.c.b16 %v5433, %v5432
    %v5465 = vpack.c.b16 %v5435, %v5434
    %v5466 = vpack.c.b16 %v5437, %v5436
    %v5467 = vpack.c.b16 %v5439, %v5438
    %v5468 = vpack.c.b16 %v5441, %v5440
    %v5469 = vpack.c.b16 %v5443, %v5442
    %v5470 = vpack.c.b16 %v5445, %v5444
    %v5471 = vpack.c.b16 %v5447, %v5446
    %v5472 = vpack.c.b16 %v5449, %v5448
    %v5473 = vpack.c.b16 %v5450, %v5450
    %vm5496 = vcmask 850944
    %v5498 = vsel %vm5496, %v5308, 0
    %vm5500 = vcmask 1043456
    %v5502 = vsel %vm5500, %v5473, 0
    %5504 = vmatprep.subr.bf16.mxu0 0
    %5505 = vmatpush1.bf16.msra.mxu0 %v5451
    %5506 = vmatprep.subr.bf16.mxu0 0
    %5507 = vmatpush1.bf16.msra.mxu0 %v5452
    %5508 = vmatprep.subr.bf16.mxu0 0
    %5509 = vmatpush1.bf16.msra.mxu0 %v5453
    %5510 = vmatprep.subr.bf16.mxu0 0
    %5511 = vmatpush1.bf16.msra.mxu0 %v5454
    %5512 = vmatprep.subr.bf16.mxu0 0
    %5513 = vmatpush1.bf16.msra.mxu0 %v5455
    %5514 = vmatprep.subr.bf16.mxu0 0
    %5515 = vmatpush1.bf16.msra.mxu0 %v5456
    %5516 = vmatprep.subr.bf16.mxu0 0
    %5517 = vmatpush1.bf16.msra.mxu0 %v5457
    %5518 = vmatprep.subr.bf16.mxu0 0
    %5519 = vmatpush1.bf16.msra.mxu0 %v5458
    %5520 = vmatprep.subr.bf16.mxu0 0
    %5521 = vmatpush1.bf16.msra.mxu0 %v5459
    %5522 = vmatprep.subr.bf16.mxu0 0
    %5523 = vmatpush1.bf16.msra.mxu0 %v5460
    %5524 = vmatprep.subr.bf16.mxu0 0
    %5525 = vmatpush1.bf16.msra.mxu0 %v5461
    %5526 = vmatprep.subr.bf16.mxu0 0
    %5527 = vmatpush1.bf16.msra.mxu0 %v5462
    %5528 = vmatprep.subr.bf16.mxu0 0
    %5529 = vmatpush1.bf16.msra.mxu0 %v5463
    %5530 = vmatprep.subr.bf16.mxu0 0
    %5531 = vmatpush1.bf16.msra.mxu0 %v5464
    %5532 = vmatprep.subr.bf16.mxu0 0
    %5533 = vmatpush1.bf16.msra.mxu0 %v5465
    %5534 = vmatprep.subr.bf16.mxu0 0
    %5535 = vmatpush1.bf16.msra.mxu0 %v5466
    %5536 = vmatprep.mubr.bf16.mxu0 %v5307
    %5537 = vmatmul.mubr.bf16.gmra.mrb[0].mxu0 %v5306
    %v5538 = vpop.f32.mrb[0].mxu0
    %v5539 = vadd.f32 %v5359, %v5538
    %v5540 = vpop.f32.mrb[0].mxu0
    %v5541 = vpop.f32.mrb[0].mxu0
    %v5542 = vpop.f32.mrb[0].mxu0
    %5543 = vdwg.mxu0
    %5544 = vmatprep.subr.bf16.mxu0 0
    %5545 = vmatpush1.bf16.msra.mxu0 %v5467
    %5546 = vmatprep.subr.bf16.mxu0 0
    %5547 = vmatpush1.bf16.msra.mxu0 %v5468
    %5548 = vmatprep.subr.bf16.mxu0 0
    %5549 = vmatpush1.bf16.msra.mxu0 %v5469
    %5550 = vmatprep.subr.bf16.mxu0 0
    %5551 = vmatpush1.bf16.msra.mxu0 %v5470
    %5552 = vmatprep.subr.bf16.mxu0 0
    %5553 = vmatpush1.bf16.msra.mxu0 %v5471
    %5554 = vmatprep.subr.bf16.mxu0 0
    %5555 = vmatpush1.bf16.msra.mxu0 %v5472
    %5556 = vmatprep.subr.bf16.mxu0 0
    %5557 = vmatpush1.bf16.msra.mxu0 %v5502
    %5558 = vmatprep.subr.bf16.mxu0 0
    %5559 = vmatpush1.bf16.msra.mxu0 0
    %5560 = vmatprep.subr.bf16.mxu0 0
    %5561 = vmatpush1.bf16.msra.mxu0 0
    %5562 = vmatprep.subr.bf16.mxu0 0
    %5563 = vmatpush1.bf16.msra.mxu0 0
    %5564 = vmatprep.subr.bf16.mxu0 0
    %5565 = vmatpush1.bf16.msra.mxu0 0
    %5566 = vmatprep.subr.bf16.mxu0 0
    %5567 = vmatpush1.bf16.msra.mxu0 0
    %5568 = vmatprep.subr.bf16.mxu0 0
    %5569 = vmatpush1.bf16.msra.mxu0 0
    %5570 = vmatprep.subr.bf16.mxu0 0
    %5571 = vmatpush1.bf16.msra.mxu0 0
    %5572 = vmatprep.subr.bf16.mxu0 0
    %5573 = vmatpush1.bf16.msra.mxu0 0
    %5574 = vmatprep.subr.bf16.mxu0 0
    %5575 = vmatpush1.bf16.msra.mxu0 0
    %5576 = vmatprep.mubr.bf16.mxu0 0
    %5577 = vmatmul.mubr.bf16.gmra.mrb[0].mxu0 %v5498
    %v5578 = vpop.f32.mrb[0].mxu0
    %v5579 = vadd.f32 %v5539, %v5578
    %v5580 = vpop.f32.mrb[0].mxu0
    %v5581 = vpop.f32.mrb[0].mxu0
    %v5582 = vpop.f32.mrb[0].mxu0
    %5583 = vdwg.mxu0
    %vm5584 = vcmask 140288
    %5585 = vst.msk [vmem:[#allocation2] sm:$0x3] %vm5584, %v5579
    // Predicated region
    $region30: #{multiclass_cnn_forward.3} parent=1 // pred_check
      _
    $region31: #{multiclass_cnn_forward.3} parent=1 // pred_check_branch
      %5587 = sbr.rel (0) target = $region33
    $region32: #{multiclass_cnn_forward.3} parent=1 // pred_region
      %s5589 = ssub.s32 32, 32
      %5590 = vsyncadd [#allocation3], %s5589
      %s5592 = sshll.u32 [#allocation2], 4
      %s5593 = int_to_ptr.vmem [resolvable:$true] %s5592
      %5595 = dma.vmem_to_hbm [thread:$0]  %s5593, 32, %s7, [#allocation3]
    $region33: #{multiclass_cnn_forward.3} parent=1 // pred_fallthru
      _
    // Predicated region
    $region34: #{multiclass_cnn_forward.3} parent=1 // pred_check
      _
    $region35: #{multiclass_cnn_forward.3} parent=1 // pred_check_branch
      %5597 = sbr.rel (0) target = $region37
    $region36: #{multiclass_cnn_forward.3} parent=1 // pred_region
      %5598 = dma.done [#allocation3], 32
    $region37: #{multiclass_cnn_forward.3} parent=1 // pred_fallthru
      _
    %5599 = vsyncpa [#allocation3], 1

</llo_original>
